<compile_context>
chip_gen: v7x
topology: tpu7x:2x2x1
jax: 0.10.0
libtpu: 0.0.40
codegen_flags: <defaults>
</compile_context>

<pallas_src>
import functools

import jax
import jax.numpy as jnp
from jax.experimental import pallas as pl
from jax.experimental.pallas import tpu as pltpu

MAX_CRACKS = 10
GROWTH = 8                   # DenseNet-121: 32
INIT_FEATURES = 16           # DenseNet-121: 64
BN_SIZE = 4
BLOCK_CONFIG = (2, 2, 2, 2)  # DenseNet-121: (6, 12, 24, 16)
BN_EPS = 1e-5


def _choose_tile(dim, candidates):
    """Largest preferred tile that exactly divides `dim`; else the full dim.

    Exact-divisor (or full-dim) blocks avoid any operand padding copies and
    full-dim blocks are exempt from the (8,128) divisibility constraint.
    """
    for t in candidates:
        if t <= dim and dim % t == 0:
            return t
    return dim


# ----------------------------------------------------------------------------
# Fused matmul kernel:  out = epilogue( prologue(x) @ w )
#   prologue (optional): per-K-column affine (folded BN) + optional ReLU
#   epilogue (always)  : per-N-column affine (folded BN / bias)  + optional ReLU
# ----------------------------------------------------------------------------

def _make_mm_kernel(has_in_affine, in_relu, out_relu):
    def kernel(*refs):
        if has_in_affine:
            x_ref, w_ref, isc_ref, ish_ref, osc_ref, osh_ref, o_ref, acc_ref = refs
        else:
            x_ref, w_ref, osc_ref, osh_ref, o_ref, acc_ref = refs
            isc_ref = ish_ref = None
        k = pl.program_id(2)

        @pl.when(k == 0)
        def _():
            acc_ref[...] = jnp.zeros_like(acc_ref)

        x = x_ref[...]
        if has_in_affine:
            xf = x.astype(jnp.float32) * isc_ref[...] + ish_ref[...]
            if in_relu:
                xf = jnp.maximum(xf, 0.0)
            x = xf.astype(x_ref.dtype)
        acc_ref[...] += jnp.dot(x, w_ref[...],
                                preferred_element_type=jnp.float32)

        @pl.when(k == pl.num_programs(2) - 1)
        def _():
            out = acc_ref[...] * osc_ref[...] + osh_ref[...]
            if out_relu:
                out = jnp.maximum(out, 0.0)
            o_ref[...] = out.astype(o_ref.dtype)

    return kernel


def pallas_matmul(x, w, *, in_affine=None, in_relu=True,
                  out_scale=None, out_shift=None, out_relu=False,
                  out_dtype=jnp.bfloat16):
    """(M, K) @ (K, N) with fused BN/bias/ReLU, bf16 inputs, f32 accumulation."""
    M, K = x.shape
    K2, N = w.shape
    assert K == K2
    x = x.astype(jnp.bfloat16)
    w = w.astype(jnp.bfloat16)

    # 256-row M tiles first so M>=512 yields >=2 parallel blocks (v7x: 2 TCs).
    tm = _choose_tile(M, (256, 512, 128, 64, 32, 16, 8))
    tk = _choose_tile(K, (512, 256, 128))
    tn = _choose_tile(N, (256, 512, 128))

    osc = jnp.ones((N,), jnp.float32) if out_scale is None else out_scale
    osh = jnp.zeros((N,), jnp.float32) if out_shift is None else out_shift
    osc = osc.reshape(1, N).astype(jnp.float32)
    osh = osh.reshape(1, N).astype(jnp.float32)

    operands = [x, w]
    in_specs = [pl.BlockSpec((tm, tk), lambda i, j, k: (i, k)),
                pl.BlockSpec((tk, tn), lambda i, j, k: (k, j))]
    if in_affine is not None:
        isc, ish = in_affine
        operands += [isc.reshape(1, K).astype(jnp.float32),
                     ish.reshape(1, K).astype(jnp.float32)]
        in_specs += [pl.BlockSpec((1, tk), lambda i, j, k: (0, k)),
                     pl.BlockSpec((1, tk), lambda i, j, k: (0, k))]
    operands += [osc, osh]
    in_specs += [pl.BlockSpec((1, tn), lambda i, j, k: (0, j)),
                 pl.BlockSpec((1, tn), lambda i, j, k: (0, j))]

    kernel = _make_mm_kernel(in_affine is not None, in_relu, out_relu)
    return pl.pallas_call(
        kernel,
        out_shape=jax.ShapeDtypeStruct((M, N), out_dtype),
        grid_spec=pltpu.PrefetchScalarGridSpec(
            num_scalar_prefetch=0,
            grid=(M // tm, N // tn, K // tk),
            in_specs=in_specs,
            out_specs=pl.BlockSpec((tm, tn), lambda i, j, k: (i, j)),
            scratch_shapes=[pltpu.VMEM((tm, tn), jnp.float32)]),
        compiler_params=pltpu.CompilerParams(
            dimension_semantics=("parallel", "parallel", "arbitrary")),
    )(*operands)


# ----------------------------------------------------------------------------
# Pooling kernel: window offset is an "arbitrary" grid reduction axis,
# rows are tiled and "parallel"; accumulation in f32 VMEM scratch.
# ----------------------------------------------------------------------------

def _pool_kernel(w_ref, o_ref, acc_ref, *, op, nwin):
    wv = pl.program_id(1)
    cur = w_ref[0].astype(jnp.float32)

    @pl.when(wv == 0)
    def _():
        acc_ref[...] = cur

    @pl.when(wv > 0)
    def _():
        if op == "max":
            acc_ref[...] = jnp.maximum(acc_ref[...], cur)
        else:
            acc_ref[...] = acc_ref[...] + cur

    @pl.when(wv == nwin - 1)
    def _():
        res = acc_ref[...]
        if op == "mean":
            res = res * (1.0 / nwin)
        o_ref[...] = res.astype(o_ref.dtype)


def pallas_pool(x, k, stride, pad, op):
    B, H, W, C = x.shape
    if pad > 0:
        pad_val = -jnp.inf if op == "max" else 0.0
        x = jnp.pad(x, ((0, 0), (pad, pad), (pad, pad), (0, 0)),
                    constant_values=pad_val)
    OH = (H + 2 * pad - k) // stride + 1
    OW = (W + 2 * pad - k) // stride + 1
    # TODO(synk): the k*k shifted copies still duplicate the feature map in
    # HBM; fold the offsets into a strided/shifted BlockSpec to remove it.
    wins = [x[:, i:i + stride * OH:stride, j:j + stride * OW:stride, :]
            for i in range(k) for j in range(k)]
    w = jnp.stack(wins, axis=0).reshape(k * k, B * OH * OW, C)
    M = B * OH * OW
    tmp = _choose_tile(M, (1024, 512, 256, 128, 64, 32, 16, 8))
    out = pl.pallas_call(
        functools.partial(_pool_kernel, op=op, nwin=k * k),
        out_shape=jax.ShapeDtypeStruct((M, C), x.dtype),
        grid_spec=pltpu.PrefetchScalarGridSpec(
            num_scalar_prefetch=0,
            grid=(M // tmp, k * k),
            in_specs=[pl.BlockSpec((1, tmp, C), lambda m, wv: (wv, m, 0))],
            out_specs=pl.BlockSpec((tmp, C), lambda m, wv: (m, 0)),
            scratch_shapes=[pltpu.VMEM((tmp, C), jnp.float32)]),
        compiler_params=pltpu.CompilerParams(
            dimension_semantics=("parallel", "arbitrary")),
    )(w)
    return out.reshape(B, OH, OW, C)


# ----------------------------------------------------------------------------
# JAX glue (data movement only: spatial padding, window slicing, concat)
# ----------------------------------------------------------------------------

def _extract_patches(x, kh, kw, stride, pad):
    B, H, W, C = x.shape
    xp = jnp.pad(x, ((0, 0), (pad, pad), (pad, pad), (0, 0)))
    OH = (H + 2 * pad - kh) // stride + 1
    OW = (W + 2 * pad - kw) // stride + 1
    cols = [xp[:, i:i + stride * OH:stride, j:j + stride * OW:stride, :]
            for i in range(kh) for j in range(kw)]
    return jnp.concatenate(cols, axis=-1), OH, OW


def conv2d(x, w_mat, kh, kw, stride, pad, *, in_affine=None, in_relu=True,
           out_scale=None, out_shift=None, out_relu=False):
    """Conv (no bias, as in DenseNet) via fused Pallas matmul.

    TODO(synk): fold the kh*kw window offsets into the matmul grid (shifted
    window accumulation) instead of materializing im2col in HBM; at real
    DenseNet scale the 9x/49x expansion of the spatial convs dominates traffic.
    """
    B, H, W, C = x.shape
    cout = w_mat.shape[1]
    if kh == 1 and kw == 1 and stride == 1 and pad == 0:
        flat, OH, OW = x.reshape(B * H * W, C), H, W
    else:
        # Prologue BN would also transform the conv's zero padding -> keep the
        # BN of spatial convs fused into the *previous* matmul's epilogue.
        assert in_affine is None
        patches, OH, OW = _extract_patches(x, kh, kw, stride, pad)
        flat = patches.reshape(B * OH * OW, kh * kw * C)
    out = pallas_matmul(flat, w_mat, in_affine=in_affine, in_relu=in_relu,
                        out_scale=out_scale, out_shift=out_shift,
                        out_relu=out_relu, out_dtype=jnp.bfloat16)
    return out.reshape(B, OH, OW, cout)


def _fold_bn(p):
    scale = p["gamma"] / jnp.sqrt(p["var"] + BN_EPS)
    shift = p["beta"] - p["mean"] * scale
    return scale, shift


# ----------------------------------------------------------------------------
# Deterministic parameter init (synthetic weights; no checkpoint loading)
# ----------------------------------------------------------------------------

def init_params(key, img_size):
    keys = list(jax.random.split(key, 1024))
    idx = [0]

    def nk():
        k = keys[idx[0]]
        idx[0] += 1
        return k

    def conv_w(kh, kw, cin, cout):
        fan_in = kh * kw * cin
        w = jax.random.normal(nk(), (kh * kw * cin, cout), jnp.float32)
        # TODO(synk): a real DenseNet-121 checkpoint stores (Cout, Cin, KH, KW)
        # and would need reshaping into this (KH, KW, Cin) x Cout im2col layout.
        return (w * (2.0 / fan_in) ** 0.5).astype(jnp.bfloat16)

    def bn_p(c):
        return dict(
            gamma=1.0 + 0.1 * jax.random.normal(nk(), (c,), jnp.float32),
            beta=0.1 * jax.random.normal(nk(), (c,), jnp.float32),
            mean=0.1 * jax.random.normal(nk(), (c,), jnp.float32),
            var=jax.random.uniform(nk(), (c,), jnp.float32, 0.5, 1.5),
        )

    params = {"conv0": conv_w(7, 7, 3, INIT_FEATURES), "bn0": bn_p(INIT_FEATURES)}
    c = INIT_FEATURES
    blocks = []
    for bi, nlayers in enumerate(BLOCK_CONFIG):
        layers = []
        for _ in range(nlayers):
            layers.append(dict(
                bn1=bn_p(c),
                w1=conv_w(1, 1, c, BN_SIZE * GROWTH),
                bn2=bn_p(BN_SIZE * GROWTH),
                w2=conv_w(3, 3, BN_SIZE * GROWTH, GROWTH),
            ))
            c += GROWTH
        block = dict(layers=layers)
        if bi != len(BLOCK_CONFIG) - 1:
            block["trans"] = dict(bn=bn_p(c), w=conv_w(1, 1, c, c // 2))
            c = c // 2
        blocks.append(block)
    params["blocks"] = blocks
    params["bn_final"] = bn_p(c)

    final_hw = img_size // 4 // (2 ** (len(BLOCK_CONFIG) - 1))
    n_features = c * final_hw * final_hw  # mirrors the sample-input probe
    params["fc1_w"] = (jax.random.normal(nk(), (n_features, 512), jnp.float32)
                       * 0.02).astype(jnp.bfloat16)
    params["fc1_b"] = 0.01 * jax.random.normal(nk(), (512,), jnp.float32)
    params["bn1d"] = bn_p(512)
    params["fc2_w"] = (jax.random.normal(nk(), (512, MAX_CRACKS * 4), jnp.float32)
                       * 0.02).astype(jnp.bfloat16)
    params["fc2_b"] = 0.01 * jax.random.normal(nk(), (MAX_CRACKS * 4,), jnp.float32)
    return params


# ----------------------------------------------------------------------------
# Forward pass
# ----------------------------------------------------------------------------

def forward(params, x_nchw):
    x = jnp.transpose(x_nchw, (0, 2, 3, 1)).astype(jnp.bfloat16)  # NCHW -> NHWC

    # stem: conv7x7/2 with BN0+ReLU fused into the matmul epilogue -> maxpool
    s0, sh0 = _fold_bn(params["bn0"])
    x = conv2d(x, params["conv0"], 7, 7, 2, 3,
               out_scale=s0, out_shift=sh0, out_relu=True)
    x = pallas_pool(x, 3, 2, 1, "max")

    # dense blocks + transitions
    for block in params["blocks"]:
        for layer in block["layers"]:
            s1, b1 = _fold_bn(layer["bn1"])
            s2, b2 = _fold_bn(layer["bn2"])
            # BN1+ReLU fused as prologue and BN2+ReLU as epilogue of the 1x1
            # bottleneck conv, so the whole BN->ReLU->Conv1x1->BN->ReLU chain
            # is one matmul pass over HBM.
            y = conv2d(x, layer["w1"], 1, 1, 1, 0,
                       in_affine=(s1, b1), in_relu=True,
                       out_scale=s2, out_shift=b2, out_relu=True)
            y = conv2d(y, layer["w2"], 3, 3, 1, 1)       # 3x3 growth conv
            # TODO(synk): write the new GROWTH channels straight into a
            # pre-allocated channel-padded concat buffer (input_output_aliases)
            # instead of re-copying the growing feature map every layer.
            x = jnp.concatenate([x, y], axis=-1)
        if "trans" in block:
            st, bt = _fold_bn(block["trans"]["bn"])
            x = conv2d(x, block["trans"]["w"], 1, 1, 1, 0,
                       in_affine=(st, bt), in_relu=True)
            x = pallas_pool(x, 2, 2, 0, "avg")

    # flatten(1) in NCHW order exactly like PyTorch; the final BatchNorm
    # (no ReLU: backbone = densenet.features only) is fused into fc1's
    # prologue with its per-channel scale repeated H*W times.
    B, Hf, Wf, Cf = x.shape
    feats = jnp.transpose(x, (0, 3, 1, 2)).reshape(B, Cf * Hf * Wf)
    sf, bfin = _fold_bn(params["bn_final"])
    sf_flat = jnp.repeat(sf, Hf * Wf)
    bf_flat = jnp.repeat(bfin, Hf * Wf)

    # regressor: Linear -> BatchNorm1d -> ReLU -> Dropout -> Linear
    # (fc1 bias + BN1d + ReLU folded into the fc1 epilogue).
    s1d, b1d = _fold_bn(params["bn1d"])
    h = pallas_matmul(feats, params["fc1_w"],
                      in_affine=(sf_flat, bf_flat), in_relu=False,
                      out_scale=s1d,
                      out_shift=params["fc1_b"] * s1d + b1d,
                      out_relu=True, out_dtype=jnp.bfloat16)
    # TODO(synk): Dropout(p=0.5) is identity under eval-mode semantics
    # (training-mode RNG masking intentionally not emulated).
    out = pallas_matmul(h, params["fc2_w"],
                        out_shift=params["fc2_b"], out_relu=False,
                        out_dtype=jnp.float32)
    return out.reshape(B, MAX_CRACKS, 4)


if __name__ == "__main__":
    key = jax.random.PRNGKey(0)
    pkey, xkey = jax.random.split(key)
    IMG = 32
    params = init_params(pkey, IMG)
    x = jax.random.normal(xkey, (2, 3, IMG, IMG), jnp.float32)  # NCHW, like PyTorch

    fwd = jax.jit(forward)
    out = jax.block_until_ready(fwd(params, x))

    assert out.shape == (2, MAX_CRACKS, 4), out.shape
    assert bool(jnp.all(jnp.isfinite(out)))
    print("KERNEL_OK")
</pallas_src>

<mosaic_0001>
module attributes {stable_mosaic.version = 11 : i64} {
  func.func @kernel(%arg0: i32, %arg1: i32, %arg2: i32, %arg3: memref<256x147xbf16, #tpu.memory_space<vmem>>, %arg4: memref<147x16xbf16, #tpu.memory_space<vmem>>, %arg5: memref<1x16xf32, #tpu.memory_space<vmem>>, %arg6: memref<1x16xf32, #tpu.memory_space<vmem>>, %arg7: memref<256x16xbf16, #tpu.memory_space<vmem>>, %arg8: memref<256x16xf32, #tpu.memory_space<vmem>>) attributes {dimension_semantics = [#tpu.dimension_semantics<parallel>, #tpu.dimension_semantics<parallel>, #tpu.dimension_semantics<arbitrary>], iteration_bounds = array<i64: 2, 1, 1>, scalar_prefetch = 0 : i64, scratch_operands = 1 : i64, tpu.core_type = #tpu.core_type<tc>, window_params = [{transform_indices = @transform_0, window_bounds = array<i64: 256, 147>}, {transform_indices = @transform_1, window_bounds = array<i64: 147, 16>}, {transform_indices = @transform_2, window_bounds = array<i64: 1, 16>}, {transform_indices = @transform_3, window_bounds = array<i64: 1, 16>}, {transform_indices = @transform_4, window_bounds = array<i64: 256, 16>}]} {
    %c0_i32 = arith.constant 0 : i32
    %0 = arith.cmpi eq, %arg2, %c0_i32 : i32
    %1 = arith.extui %0 : i1 to i32
    %c0_i32_0 = arith.constant 0 : i32
    %2 = arith.cmpi ne, %1, %c0_i32_0 : i32
    scf.if %2 {
      %cst_10 = arith.constant 0.000000e+00 : f32
      %12 = vector.broadcast %cst_10 : f32 to vector<256x16xf32>
      %c0_11 = arith.constant 0 : index
      %c0_12 = arith.constant 0 : index
      %13 = vector.load %arg8[%c0_11, %c0_12] : memref<256x16xf32, #tpu.memory_space<vmem>>, vector<256x16xf32>
      tpu.vector_store %arg8[%c0_11, %c0_12], %12 {strides = array<i32>} : memref<256x16xf32, #tpu.memory_space<vmem>>, vector<256x16xf32>,
    } else {
    }
    %c0 = arith.constant 0 : index
    %c0_1 = arith.constant 0 : index
    %3 = vector.load %arg3[%c0, %c0_1] : memref<256x147xbf16, #tpu.memory_space<vmem>>, vector<256x147xbf16>
    %c0_2 = arith.constant 0 : index
    %c0_3 = arith.constant 0 : index
    %4 = vector.load %arg8[%c0_2, %c0_3] : memref<256x16xf32, #tpu.memory_space<vmem>>, vector<256x16xf32>
    %c0_4 = arith.constant 0 : index
    %c0_5 = arith.constant 0 : index
    %5 = vector.load %arg4[%c0_4, %c0_5] : memref<147x16xbf16, #tpu.memory_space<vmem>>, vector<147x16xbf16>
    %cst = arith.constant dense<0.000000e+00> : vector<256x16xf32>
    %6 = tpu.matmul %3, %5, %cst {dimension_numbers = #tpu.dot_dimension_numbers<[1], [0], [0], [1], [0, 0, 1, 1], [], []>} : vector<256x147xbf16>, vector<147x16xbf16>, vector<256x16xf32> -> vector<256x16xf32>
    %7 = arith.addf %4, %6 : vector<256x16xf32>
    %c0_6 = arith.constant 0 : index
    %c0_7 = arith.constant 0 : index
    %8 = vector.load %arg8[%c0_6, %c0_7] : memref<256x16xf32, #tpu.memory_space<vmem>>, vector<256x16xf32>
    tpu.vector_store %arg8[%c0_6, %c0_7], %7 {strides = array<i32>} : memref<256x16xf32, #tpu.memory_space<vmem>>, vector<256x16xf32>,
    %c0_i32_8 = arith.constant 0 : i32
    %9 = arith.cmpi eq, %arg2, %c0_i32_8 : i32
    %10 = arith.extui %9 : i1 to i32
    %c0_i32_9 = arith.constant 0 : i32
    %11 = arith.cmpi ne, %10, %c0_i32_9 : i32
    scf.if %11 {
      %c0_10 = arith.constant 0 : index
      %c0_11 = arith.constant 0 : index
      %12 = vector.load %arg8[%c0_10, %c0_11] : memref<256x16xf32, #tpu.memory_space<vmem>>, vector<256x16xf32>
      %c0_12 = arith.constant 0 : index
      %c0_13 = arith.constant 0 : index
      %13 = vector.load %arg5[%c0_12, %c0_13] : memref<1x16xf32, #tpu.memory_space<vmem>>, vector<1x16xf32>
      %14 = vector.broadcast %13 : vector<1x16xf32> to vector<256x16xf32>
      %15 = arith.mulf %12, %14 : vector<256x16xf32>
      %c0_14 = arith.constant 0 : index
      %c0_15 = arith.constant 0 : index
      %16 = vector.load %arg6[%c0_14, %c0_15] : memref<1x16xf32, #tpu.memory_space<vmem>>, vector<1x16xf32>
      %17 = vector.broadcast %16 : vector<1x16xf32> to vector<256x16xf32>
      %18 = arith.addf %15, %17 : vector<256x16xf32>
      %cst_16 = arith.constant 0.000000e+00 : f32
      %19 = vector.broadcast %cst_16 : f32 to vector<256x16xf32>
      %20 = arith.maximumf %18, %19 : vector<256x16xf32>
      %21 = arith.truncf %20 : vector<256x16xf32> to vector<256x16xbf16>
      %c0_17 = arith.constant 0 : index
      %c0_18 = arith.constant 0 : index
      %22 = vector.load %arg7[%c0_17, %c0_18] : memref<256x16xbf16, #tpu.memory_space<vmem>>, vector<256x16xbf16>
      tpu.vector_store %arg7[%c0_17, %c0_18], %21 {strides = array<i32>} : memref<256x16xbf16, #tpu.memory_space<vmem>>, vector<256x16xbf16>,
    } else {
    }
    return
  }
  func.func @transform_0(%arg0: i32, %arg1: i32, %arg2: i32) -> (i32, i32) {
    %c0_i32 = arith.constant 0 : i32
    return %arg0, %arg2 : i32, i32
  }
  func.func @transform_1(%arg0: i32, %arg1: i32, %arg2: i32) -> (i32, i32) {
    %c0_i32 = arith.constant 0 : i32
    return %arg2, %arg1 : i32, i32
  }
  func.func @transform_2(%arg0: i32, %arg1: i32, %arg2: i32) -> (i32, i32) {
    %c0_i32 = arith.constant 0 : i32
    %c0_i32_0 = arith.constant 0 : i32
    return %c0_i32, %arg1 : i32, i32
  }
  func.func @transform_3(%arg0: i32, %arg1: i32, %arg2: i32) -> (i32, i32) {
    %c0_i32 = arith.constant 0 : i32
    %c0_i32_0 = arith.constant 0 : i32
    return %c0_i32, %arg1 : i32, i32
  }
  func.func @transform_4(%arg0: i32, %arg1: i32, %arg2: i32) -> (i32, i32) {
    %c0_i32 = arith.constant 0 : i32
    return %arg0, %arg1 : i32, i32
  }
}

module attributes {stable_mosaic.version = 11 : i64} {
  func.func @_pool_kernel(%arg0: i32, %arg1: i32, %arg2: memref<1x128x16xbf16, #tpu.memory_space<vmem>>, %arg3: memref<128x16xbf16, #tpu.memory_space<vmem>>, %arg4: memref<128x16xf32, #tpu.memory_space<vmem>>) attributes {dimension_semantics = [#tpu.dimension_semantics<parallel>, #tpu.dimension_semantics<arbitrary>], iteration_bounds = array<i64: 1, 9>, scalar_prefetch = 0 : i64, scratch_operands = 1 : i64, tpu.core_type = #tpu.core_type<tc>, window_params = [{transform_indices = @transform_0, window_bounds = array<i64: 1, 128, 16>}, {transform_indices = @transform_1, window_bounds = array<i64: 128, 16>}]} {
    %c0 = arith.constant 0 : index
    %c0_0 = arith.constant 0 : index
    %c0_1 = arith.constant 0 : index
    %0 = vector.load %arg2[%c0, %c0_0, %c0_1] : memref<1x128x16xbf16, #tpu.memory_space<vmem>>, vector<1x128x16xbf16>
    %1 = vector.shape_cast %0 : vector<1x128x16xbf16> to vector<128x16xbf16>
    %2 = arith.extf %1 : vector<128x16xbf16> to vector<128x16xf32>
    %c0_i32 = arith.constant 0 : i32
    %3 = arith.cmpi eq, %arg1, %c0_i32 : i32
    %4 = arith.extui %3 : i1 to i32
    %c0_i32_2 = arith.constant 0 : i32
    %5 = arith.cmpi ne, %4, %c0_i32_2 : i32
    scf.if %5 {
      %c0_6 = arith.constant 0 : index
      %c0_7 = arith.constant 0 : index
      %12 = vector.load %arg4[%c0_6, %c0_7] : memref<128x16xf32, #tpu.memory_space<vmem>>, vector<128x16xf32>
      tpu.vector_store %arg4[%c0_6, %c0_7], %2 {strides = array<i32>} : memref<128x16xf32, #tpu.memory_space<vmem>>, vector<128x16xf32>,
    } else {
    }
    %c0_i32_3 = arith.constant 0 : i32
    %6 = arith.cmpi sgt, %arg1, %c0_i32_3 : i32
    %7 = arith.extui %6 : i1 to i32
    %c0_i32_4 = arith.constant 0 : i32
    %8 = arith.cmpi ne, %7, %c0_i32_4 : i32
    scf.if %8 {
      %c0_6 = arith.constant 0 : index
      %c0_7 = arith.constant 0 : index
      %12 = vector.load %arg4[%c0_6, %c0_7] : memref<128x16xf32, #tpu.memory_space<vmem>>, vector<128x16xf32>
      %13 = arith.maximumf %12, %2 : vector<128x16xf32>
      %c0_8 = arith.constant 0 : index
      %c0_9 = arith.constant 0 : index
      %14 = vector.load %arg4[%c0_8, %c0_9] : memref<128x16xf32, #tpu.memory_space<vmem>>, vector<128x16xf32>
      tpu.vector_store %arg4[%c0_8, %c0_9], %13 {strides = array<i32>} : memref<128x16xf32, #tpu.memory_space<vmem>>, vector<128x16xf32>,
    } else {
    }
    %c8_i32 = arith.constant 8 : i32
    %9 = arith.cmpi eq, %arg1, %c8_i32 : i32
    %10 = arith.extui %9 : i1 to i32
    %c0_i32_5 = arith.constant 0 : i32
    %11 = arith.cmpi ne, %10, %c0_i32_5 : i32
    scf.if %11 {
      %c0_6 = arith.constant 0 : index
      %c0_7 = arith.constant 0 : index
      %12 = vector.load %arg4[%c0_6, %c0_7] : memref<128x16xf32, #tpu.memory_space<vmem>>, vector<128x16xf32>
      %13 = arith.truncf %12 : vector<128x16xf32> to vector<128x16xbf16>
      %c0_8 = arith.constant 0 : index
      %c0_9 = arith.constant 0 : index
      %14 = vector.load %arg3[%c0_8, %c0_9] : memref<128x16xbf16, #tpu.memory_space<vmem>>, vector<128x16xbf16>
      tpu.vector_store %arg3[%c0_8, %c0_9], %13 {strides = array<i32>} : memref<128x16xbf16, #tpu.memory_space<vmem>>, vector<128x16xbf16>,
    } else {
    }
    return
  }
  func.func @transform_0(%arg0: i32, %arg1: i32) -> (i32, i32, i32) {
    %c0_i32 = arith.constant 0 : i32
    %c0_i32_0 = arith.constant 0 : i32
    return %arg1, %arg0, %c0_i32 : i32, i32, i32
  }
  func.func @transform_1(%arg0: i32, %arg1: i32) -> (i32, i32) {
    %c0_i32 = arith.constant 0 : i32
    %c0_i32_0 = arith.constant 0 : i32
    return %arg0, %c0_i32 : i32, i32
  }
}

module attributes {stable_mosaic.version = 11 : i64} {
  func.func @kernel(%arg0: i32, %arg1: i32, %arg2: i32, %arg3: memref<128x16xbf16, #tpu.memory_space<vmem>>, %arg4: memref<16x32xbf16, #tpu.memory_space<vmem>>, %arg5: memref<1x16xf32, #tpu.memory_space<vmem>>, %arg6: memref<1x16xf32, #tpu.memory_space<vmem>>, %arg7: memref<1x32xf32, #tpu.memory_space<vmem>>, %arg8: memref<1x32xf32, #tpu.memory_space<vmem>>, %arg9: memref<128x32xbf16, #tpu.memory_space<vmem>>, %arg10: memref<128x32xf32, #tpu.memory_space<vmem>>) attributes {dimension_semantics = [#tpu.dimension_semantics<parallel>, #tpu.dimension_semantics<parallel>, #tpu.dimension_semantics<arbitrary>], iteration_bounds = array<i64: 1, 1, 1>, scalar_prefetch = 0 : i64, scratch_operands = 1 : i64, tpu.core_type = #tpu.core_type<tc>, window_params = [{transform_indices = @transform_0, window_bounds = array<i64: 128, 16>}, {transform_indices = @transform_1, window_bounds = array<i64: 16, 32>}, {transform_indices = @transform_2, window_bounds = array<i64: 1, 16>}, {transform_indices = @transform_3, window_bounds = array<i64: 1, 16>}, {transform_indices = @transform_4, window_bounds = array<i64: 1, 32>}, {transform_indices = @transform_5, window_bounds = array<i64: 1, 32>}, {transform_indices = @transform_6, window_bounds = array<i64: 128, 32>}]} {
    %c0_i32 = arith.constant 0 : i32
    %0 = arith.cmpi eq, %arg2, %c0_i32 : i32
    %1 = arith.extui %0 : i1 to i32
    %c0_i32_0 = arith.constant 0 : i32
    %2 = arith.cmpi ne, %1, %c0_i32_0 : i32
    scf.if %2 {
      %cst_15 = arith.constant 0.000000e+00 : f32
      %22 = vector.broadcast %cst_15 : f32 to vector<128x32xf32>
      %c0_16 = arith.constant 0 : index
      %c0_17 = arith.constant 0 : index
      %23 = vector.load %arg10[%c0_16, %c0_17] : memref<128x32xf32, #tpu.memory_space<vmem>>, vector<128x32xf32>
      tpu.vector_store %arg10[%c0_16, %c0_17], %22 {strides = array<i32>} : memref<128x32xf32, #tpu.memory_space<vmem>>, vector<128x32xf32>,
    } else {
    }
    %c0 = arith.constant 0 : index
    %c0_1 = arith.constant 0 : index
    %3 = vector.load %arg3[%c0, %c0_1] : memref<128x16xbf16, #tpu.memory_space<vmem>>, vector<128x16xbf16>
    %4 = arith.extf %3 : vector<128x16xbf16> to vector<128x16xf32>
    %c0_2 = arith.constant 0 : index
    %c0_3 = arith.constant 0 : index
    %5 = vector.load %arg5[%c0_2, %c0_3] : memref<1x16xf32, #tpu.memory_space<vmem>>, vector<1x16xf32>
    %6 = vector.broadcast %5 : vector<1x16xf32> to vector<128x16xf32>
    %7 = arith.mulf %4, %6 : vector<128x16xf32>
    %c0_4 = arith.constant 0 : index
    %c0_5 = arith.constant 0 : index
    %8 = vector.load %arg6[%c0_4, %c0_5] : memref<1x16xf32, #tpu.memory_space<vmem>>, vector<1x16xf32>
    %9 = vector.broadcast %8 : vector<1x16xf32> to vector<128x16xf32>
    %10 = arith.addf %7, %9 : vector<128x16xf32>
    %cst = arith.constant 0.000000e+00 : f32
    %11 = vector.broadcast %cst : f32 to vector<128x16xf32>
    %12 = arith.maximumf %10, %11 : vector<128x16xf32>
    %13 = arith.truncf %12 : vector<128x16xf32> to vector<128x16xbf16>
    %c0_6 = arith.constant 0 : index
    %c0_7 = arith.constant 0 : index
    %14 = vector.load %arg10[%c0_6, %c0_7] : memref<128x32xf32, #tpu.memory_space<vmem>>, vector<128x32xf32>
    %c0_8 = arith.constant 0 : index
    %c0_9 = arith.constant 0 : index
    %15 = vector.load %arg4[%c0_8, %c0_9] : memref<16x32xbf16, #tpu.memory_space<vmem>>, vector<16x32xbf16>
    %cst_10 = arith.constant dense<0.000000e+00> : vector<128x32xf32>
    %16 = tpu.matmul %13, %15, %cst_10 {dimension_numbers = #tpu.dot_dimension_numbers<[1], [0], [0], [1], [0, 0, 1, 1], [], []>} : vector<128x16xbf16>, vector<16x32xbf16>, vector<128x32xf32> -> vector<128x32xf32>
    %17 = arith.addf %14, %16 : vector<128x32xf32>
    %c0_11 = arith.constant 0 : index
    %c0_12 = arith.constant 0 : index
    %18 = vector.load %arg10[%c0_11, %c0_12] : memref<128x32xf32, #tpu.memory_space<vmem>>, vector<128x32xf32>
    tpu.vector_store %arg10[%c0_11, %c0_12], %17 {strides = array<i32>} : memref<128x32xf32, #tpu.memory_space<vmem>>, vector<128x32xf32>,
    %c0_i32_13 = arith.constant 0 : i32
    %19 = arith.cmpi eq, %arg2, %c0_i32_13 : i32
    %20 = arith.extui %19 : i1 to i32
    %c0_i32_14 = arith.constant 0 : i32
    %21 = arith.cmpi ne, %20, %c0_i32_14 : i32
    scf.if %21 {
      %c0_15 = arith.constant 0 : index
      %c0_16 = arith.constant 0 : index
      %22 = vector.load %arg10[%c0_15, %c0_16] : memref<128x32xf32, #tpu.memory_space<vmem>>, vector<128x32xf32>
      %c0_17 = arith.constant 0 : index
      %c0_18 = arith.constant 0 : index
      %23 = vector.load %arg7[%c0_17, %c0_18] : memref<1x32xf32, #tpu.memory_space<vmem>>, vector<1x32xf32>
      %24 = vector.broadcast %23 : vector<1x32xf32> to vector<128x32xf32>
      %25 = arith.mulf %22, %24 : vector<128x32xf32>
      %c0_19 = arith.constant 0 : index
      %c0_20 = arith.constant 0 : index
      %26 = vector.load %arg8[%c0_19, %c0_20] : memref<1x32xf32, #tpu.memory_space<vmem>>, vector<1x32xf32>
      %27 = vector.broadcast %26 : vector<1x32xf32> to vector<128x32xf32>
      %28 = arith.addf %25, %27 : vector<128x32xf32>
      %cst_21 = arith.constant 0.000000e+00 : f32
      %29 = vector.broadcast %cst_21 : f32 to vector<128x32xf32>
      %30 = arith.maximumf %28, %29 : vector<128x32xf32>
      %31 = arith.truncf %30 : vector<128x32xf32> to vector<128x32xbf16>
      %c0_22 = arith.constant 0 : index
      %c0_23 = arith.constant 0 : index
      %32 = vector.load %arg9[%c0_22, %c0_23] : memref<128x32xbf16, #tpu.memory_space<vmem>>, vector<128x32xbf16>
      tpu.vector_store %arg9[%c0_22, %c0_23], %31 {strides = array<i32>} : memref<128x32xbf16, #tpu.memory_space<vmem>>, vector<128x32xbf16>,
    } else {
    }
    return
  }
  func.func @transform_0(%arg0: i32, %arg1: i32, %arg2: i32) -> (i32, i32) {
    %c0_i32 = arith.constant 0 : i32
    return %arg0, %arg2 : i32, i32
  }
  func.func @transform_1(%arg0: i32, %arg1: i32, %arg2: i32) -> (i32, i32) {
    %c0_i32 = arith.constant 0 : i32
    return %arg2, %arg1 : i32, i32
  }
  func.func @transform_2(%arg0: i32, %arg1: i32, %arg2: i32) -> (i32, i32) {
    %c0_i32 = arith.constant 0 : i32
    %c0_i32_0 = arith.constant 0 : i32
    return %c0_i32, %arg2 : i32, i32
  }
  func.func @transform_3(%arg0: i32, %arg1: i32, %arg2: i32) -> (i32, i32) {
    %c0_i32 = arith.constant 0 : i32
    %c0_i32_0 = arith.constant 0 : i32
    return %c0_i32, %arg2 : i32, i32
  }
  func.func @transform_4(%arg0: i32, %arg1: i32, %arg2: i32) -> (i32, i32) {
    %c0_i32 = arith.constant 0 : i32
    %c0_i32_0 = arith.constant 0 : i32
    return %c0_i32, %arg1 : i32, i32
  }
  func.func @transform_5(%arg0: i32, %arg1: i32, %arg2: i32) -> (i32, i32) {
    %c0_i32 = arith.constant 0 : i32
    %c0_i32_0 = arith.constant 0 : i32
    return %c0_i32, %arg1 : i32, i32
  }
  func.func @transform_6(%arg0: i32, %arg1: i32, %arg2: i32) -> (i32, i32) {
    %c0_i32 = arith.constant 0 : i32
    return %arg0, %arg1 : i32, i32
  }
}

module attributes {stable_mosaic.version = 11 : i64} {
  func.func @kernel(%arg0: i32, %arg1: i32, %arg2: i32, %arg3: memref<128x288xbf16, #tpu.memory_space<vmem>>, %arg4: memref<288x8xbf16, #tpu.memory_space<vmem>>, %arg5: memref<1x8xf32, #tpu.memory_space<vmem>>, %arg6: memref<1x8xf32, #tpu.memory_space<vmem>>, %arg7: memref<128x8xbf16, #tpu.memory_space<vmem>>, %arg8: memref<128x8xf32, #tpu.memory_space<vmem>>) attributes {dimension_semantics = [#tpu.dimension_semantics<parallel>, #tpu.dimension_semantics<parallel>, #tpu.dimension_semantics<arbitrary>], iteration_bounds = array<i64: 1, 1, 1>, scalar_prefetch = 0 : i64, scratch_operands = 1 : i64, tpu.core_type = #tpu.core_type<tc>, window_params = [{transform_indices = @transform_0, window_bounds = array<i64: 128, 288>}, {transform_indices = @transform_1, window_bounds = array<i64: 288, 8>}, {transform_indices = @transform_2, window_bounds = array<i64: 1, 8>}, {transform_indices = @transform_3, window_bounds = array<i64: 1, 8>}, {transform_indices = @transform_4, window_bounds = array<i64: 128, 8>}]} {
    %c0_i32 = arith.constant 0 : i32
    %0 = arith.cmpi eq, %arg2, %c0_i32 : i32
    %1 = arith.extui %0 : i1 to i32
    %c0_i32_0 = arith.constant 0 : i32
    %2 = arith.cmpi ne, %1, %c0_i32_0 : i32
    scf.if %2 {
      %cst_10 = arith.constant 0.000000e+00 : f32
      %12 = vector.broadcast %cst_10 : f32 to vector<128x8xf32>
      %c0_11 = arith.constant 0 : index
      %c0_12 = arith.constant 0 : index
      %13 = vector.load %arg8[%c0_11, %c0_12] : memref<128x8xf32, #tpu.memory_space<vmem>>, vector<128x8xf32>
      tpu.vector_store %arg8[%c0_11, %c0_12], %12 {strides = array<i32>} : memref<128x8xf32, #tpu.memory_space<vmem>>, vector<128x8xf32>,
    } else {
    }
    %c0 = arith.constant 0 : index
    %c0_1 = arith.constant 0 : index
    %3 = vector.load %arg3[%c0, %c0_1] : memref<128x288xbf16, #tpu.memory_space<vmem>>, vector<128x288xbf16>
    %c0_2 = arith.constant 0 : index
    %c0_3 = arith.constant 0 : index
    %4 = vector.load %arg8[%c0_2, %c0_3] : memref<128x8xf32, #tpu.memory_space<vmem>>, vector<128x8xf32>
    %c0_4 = arith.constant 0 : index
    %c0_5 = arith.constant 0 : index
    %5 = vector.load %arg4[%c0_4, %c0_5] : memref<288x8xbf16, #tpu.memory_space<vmem>>, vector<288x8xbf16>
    %cst = arith.constant dense<0.000000e+00> : vector<128x8xf32>
    %6 = tpu.matmul %3, %5, %cst {dimension_numbers = #tpu.dot_dimension_numbers<[1], [0], [0], [1], [0, 0, 1, 1], [], []>} : vector<128x288xbf16>, vector<288x8xbf16>, vector<128x8xf32> -> vector<128x8xf32>
    %7 = arith.addf %4, %6 : vector<128x8xf32>
    %c0_6 = arith.constant 0 : index
    %c0_7 = arith.constant 0 : index
    %8 = vector.load %arg8[%c0_6, %c0_7] : memref<128x8xf32, #tpu.memory_space<vmem>>, vector<128x8xf32>
    tpu.vector_store %arg8[%c0_6, %c0_7], %7 {strides = array<i32>} : memref<128x8xf32, #tpu.memory_space<vmem>>, vector<128x8xf32>,
    %c0_i32_8 = arith.constant 0 : i32
    %9 = arith.cmpi eq, %arg2, %c0_i32_8 : i32
    %10 = arith.extui %9 : i1 to i32
    %c0_i32_9 = arith.constant 0 : i32
    %11 = arith.cmpi ne, %10, %c0_i32_9 : i32
    scf.if %11 {
      %c0_10 = arith.constant 0 : index
      %c0_11 = arith.constant 0 : index
      %12 = vector.load %arg8[%c0_10, %c0_11] : memref<128x8xf32, #tpu.memory_space<vmem>>, vector<128x8xf32>
      %c0_12 = arith.constant 0 : index
      %c0_13 = arith.constant 0 : index
      %13 = vector.load %arg5[%c0_12, %c0_13] : memref<1x8xf32, #tpu.memory_space<vmem>>, vector<1x8xf32>
      %14 = vector.broadcast %13 : vector<1x8xf32> to vector<128x8xf32>
      %15 = arith.mulf %12, %14 : vector<128x8xf32>
      %c0_14 = arith.constant 0 : index
      %c0_15 = arith.constant 0 : index
      %16 = vector.load %arg6[%c0_14, %c0_15] : memref<1x8xf32, #tpu.memory_space<vmem>>, vector<1x8xf32>
      %17 = vector.broadcast %16 : vector<1x8xf32> to vector<128x8xf32>
      %18 = arith.addf %15, %17 : vector<128x8xf32>
      %19 = arith.truncf %18 : vector<128x8xf32> to vector<128x8xbf16>
      %c0_16 = arith.constant 0 : index
      %c0_17 = arith.constant 0 : index
      %20 = vector.load %arg7[%c0_16, %c0_17] : memref<128x8xbf16, #tpu.memory_space<vmem>>, vector<128x8xbf16>
      tpu.vector_store %arg7[%c0_16, %c0_17], %19 {strides = array<i32>} : memref<128x8xbf16, #tpu.memory_space<vmem>>, vector<128x8xbf16>,
    } else {
    }
    return
  }
  func.func @transform_0(%arg0: i32, %arg1: i32, %arg2: i32) -> (i32, i32) {
    %c0_i32 = arith.constant 0 : i32
    return %arg0, %arg2 : i32, i32
  }
  func.func @transform_1(%arg0: i32, %arg1: i32, %arg2: i32) -> (i32, i32) {
    %c0_i32 = arith.constant 0 : i32
    return %arg2, %arg1 : i32, i32
  }
  func.func @transform_2(%arg0: i32, %arg1: i32, %arg2: i32) -> (i32, i32) {
    %c0_i32 = arith.constant 0 : i32
    %c0_i32_0 = arith.constant 0 : i32
    return %c0_i32, %arg1 : i32, i32
  }
  func.func @transform_3(%arg0: i32, %arg1: i32, %arg2: i32) -> (i32, i32) {
    %c0_i32 = arith.constant 0 : i32
    %c0_i32_0 = arith.constant 0 : i32
    return %c0_i32, %arg1 : i32, i32
  }
  func.func @transform_4(%arg0: i32, %arg1: i32, %arg2: i32) -> (i32, i32) {
    %c0_i32 = arith.constant 0 : i32
    return %arg0, %arg1 : i32, i32
  }
}

module attributes {stable_mosaic.version = 11 : i64} {
  func.func @kernel(%arg0: i32, %arg1: i32, %arg2: i32, %arg3: memref<128x24xbf16, #tpu.memory_space<vmem>>, %arg4: memref<24x32xbf16, #tpu.memory_space<vmem>>, %arg5: memref<1x24xf32, #tpu.memory_space<vmem>>, %arg6: memref<1x24xf32, #tpu.memory_space<vmem>>, %arg7: memref<1x32xf32, #tpu.memory_space<vmem>>, %arg8: memref<1x32xf32, #tpu.memory_space<vmem>>, %arg9: memref<128x32xbf16, #tpu.memory_space<vmem>>, %arg10: memref<128x32xf32, #tpu.memory_space<vmem>>) attributes {dimension_semantics = [#tpu.dimension_semantics<parallel>, #tpu.dimension_semantics<parallel>, #tpu.dimension_semantics<arbitrary>], iteration_bounds = array<i64: 1, 1, 1>, scalar_prefetch = 0 : i64, scratch_operands = 1 : i64, tpu.core_type = #tpu.core_type<tc>, window_params = [{transform_indices = @transform_0, window_bounds = array<i64: 128, 24>}, {transform_indices = @transform_1, window_bounds = array<i64: 24, 32>}, {transform_indices = @transform_2, window_bounds = array<i64: 1, 24>}, {transform_indices = @transform_3, window_bounds = array<i64: 1, 24>}, {transform_indices = @transform_4, window_bounds = array<i64: 1, 32>}, {transform_indices = @transform_5, window_bounds = array<i64: 1, 32>}, {transform_indices = @transform_6, window_bounds = array<i64: 128, 32>}]} {
    %c0_i32 = arith.constant 0 : i32
    %0 = arith.cmpi eq, %arg2, %c0_i32 : i32
    %1 = arith.extui %0 : i1 to i32
    %c0_i32_0 = arith.constant 0 : i32
    %2 = arith.cmpi ne, %1, %c0_i32_0 : i32
    scf.if %2 {
      %cst_15 = arith.constant 0.000000e+00 : f32
      %22 = vector.broadcast %cst_15 : f32 to vector<128x32xf32>
      %c0_16 = arith.constant 0 : index
      %c0_17 = arith.constant 0 : index
      %23 = vector.load %arg10[%c0_16, %c0_17] : memref<128x32xf32, #tpu.memory_space<vmem>>, vector<128x32xf32>
      tpu.vector_store %arg10[%c0_16, %c0_17], %22 {strides = array<i32>} : memref<128x32xf32, #tpu.memory_space<vmem>>, vector<128x32xf32>,
    } else {
    }
    %c0 = arith.constant 0 : index
    %c0_1 = arith.constant 0 : index
    %3 = vector.load %arg3[%c0, %c0_1] : memref<128x24xbf16, #tpu.memory_space<vmem>>, vector<128x24xbf16>
    %4 = arith.extf %3 : vector<128x24xbf16> to vector<128x24xf32>
    %c0_2 = arith.constant 0 : index
    %c0_3 = arith.constant 0 : index
    %5 = vector.load %arg5[%c0_2, %c0_3] : memref<1x24xf32, #tpu.memory_space<vmem>>, vector<1x24xf32>
    %6 = vector.broadcast %5 : vector<1x24xf32> to vector<128x24xf32>
    %7 = arith.mulf %4, %6 : vector<128x24xf32>
    %c0_4 = arith.constant 0 : index
    %c0_5 = arith.constant 0 : index
    %8 = vector.load %arg6[%c0_4, %c0_5] : memref<1x24xf32, #tpu.memory_space<vmem>>, vector<1x24xf32>
    %9 = vector.broadcast %8 : vector<1x24xf32> to vector<128x24xf32>
    %10 = arith.addf %7, %9 : vector<128x24xf32>
    %cst = arith.constant 0.000000e+00 : f32
    %11 = vector.broadcast %cst : f32 to vector<128x24xf32>
    %12 = arith.maximumf %10, %11 : vector<128x24xf32>
    %13 = arith.truncf %12 : vector<128x24xf32> to vector<128x24xbf16>
    %c0_6 = arith.constant 0 : index
    %c0_7 = arith.constant 0 : index
    %14 = vector.load %arg10[%c0_6, %c0_7] : memref<128x32xf32, #tpu.memory_space<vmem>>, vector<128x32xf32>
    %c0_8 = arith.constant 0 : index
    %c0_9 = arith.constant 0 : index
    %15 = vector.load %arg4[%c0_8, %c0_9] : memref<24x32xbf16, #tpu.memory_space<vmem>>, vector<24x32xbf16>
    %cst_10 = arith.constant dense<0.000000e+00> : vector<128x32xf32>
    %16 = tpu.matmul %13, %15, %cst_10 {dimension_numbers = #tpu.dot_dimension_numbers<[1], [0], [0], [1], [0, 0, 1, 1], [], []>} : vector<128x24xbf16>, vector<24x32xbf16>, vector<128x32xf32> -> vector<128x32xf32>
    %17 = arith.addf %14, %16 : vector<128x32xf32>
    %c0_11 = arith.constant 0 : index
    %c0_12 = arith.constant 0 : index
    %18 = vector.load %arg10[%c0_11, %c0_12] : memref<128x32xf32, #tpu.memory_space<vmem>>, vector<128x32xf32>
    tpu.vector_store %arg10[%c0_11, %c0_12], %17 {strides = array<i32>} : memref<128x32xf32, #tpu.memory_space<vmem>>, vector<128x32xf32>,
    %c0_i32_13 = arith.constant 0 : i32
    %19 = arith.cmpi eq, %arg2, %c0_i32_13 : i32
    %20 = arith.extui %19 : i1 to i32
    %c0_i32_14 = arith.constant 0 : i32
    %21 = arith.cmpi ne, %20, %c0_i32_14 : i32
    scf.if %21 {
      %c0_15 = arith.constant 0 : index
      %c0_16 = arith.constant 0 : index
      %22 = vector.load %arg10[%c0_15, %c0_16] : memref<128x32xf32, #tpu.memory_space<vmem>>, vector<128x32xf32>
      %c0_17 = arith.constant 0 : index
      %c0_18 = arith.constant 0 : index
      %23 = vector.load %arg7[%c0_17, %c0_18] : memref<1x32xf32, #tpu.memory_space<vmem>>, vector<1x32xf32>
      %24 = vector.broadcast %23 : vector<1x32xf32> to vector<128x32xf32>
      %25 = arith.mulf %22, %24 : vector<128x32xf32>
      %c0_19 = arith.constant 0 : index
      %c0_20 = arith.constant 0 : index
      %26 = vector.load %arg8[%c0_19, %c0_20] : memref<1x32xf32, #tpu.memory_space<vmem>>, vector<1x32xf32>
      %27 = vector.broadcast %26 : vector<1x32xf32> to vector<128x32xf32>
      %28 = arith.addf %25, %27 : vector<128x32xf32>
      %cst_21 = arith.constant 0.000000e+00 : f32
      %29 = vector.broadcast %cst_21 : f32 to vector<128x32xf32>
      %30 = arith.maximumf %28, %29 : vector<128x32xf32>
      %31 = arith.truncf %30 : vector<128x32xf32> to vector<128x32xbf16>
      %c0_22 = arith.constant 0 : index
      %c0_23 = arith.constant 0 : index
      %32 = vector.load %arg9[%c0_22, %c0_23] : memref<128x32xbf16, #tpu.memory_space<vmem>>, vector<128x32xbf16>
      tpu.vector_store %arg9[%c0_22, %c0_23], %31 {strides = array<i32>} : memref<128x32xbf16, #tpu.memory_space<vmem>>, vector<128x32xbf16>,
    } else {
    }
    return
  }
  func.func @transform_0(%arg0: i32, %arg1: i32, %arg2: i32) -> (i32, i32) {
    %c0_i32 = arith.constant 0 : i32
    return %arg0, %arg2 : i32, i32
  }
  func.func @transform_1(%arg0: i32, %arg1: i32, %arg2: i32) -> (i32, i32) {
    %c0_i32 = arith.constant 0 : i32
    return %arg2, %arg1 : i32, i32
  }
  func.func @transform_2(%arg0: i32, %arg1: i32, %arg2: i32) -> (i32, i32) {
    %c0_i32 = arith.constant 0 : i32
    %c0_i32_0 = arith.constant 0 : i32
    return %c0_i32, %arg2 : i32, i32
  }
  func.func @transform_3(%arg0: i32, %arg1: i32, %arg2: i32) -> (i32, i32) {
    %c0_i32 = arith.constant 0 : i32
    %c0_i32_0 = arith.constant 0 : i32
    return %c0_i32, %arg2 : i32, i32
  }
  func.func @transform_4(%arg0: i32, %arg1: i32, %arg2: i32) -> (i32, i32) {
    %c0_i32 = arith.constant 0 : i32
    %c0_i32_0 = arith.constant 0 : i32
    return %c0_i32, %arg1 : i32, i32
  }
  func.func @transform_5(%arg0: i32, %arg1: i32, %arg2: i32) -> (i32, i32) {
    %c0_i32 = arith.constant 0 : i32
    %c0_i32_0 = arith.constant 0 : i32
    return %c0_i32, %arg1 : i32, i32
  }
  func.func @transform_6(%arg0: i32, %arg1: i32, %arg2: i32) -> (i32, i32) {
    %c0_i32 = arith.constant 0 : i32
    return %arg0, %arg1 : i32, i32
  }
}

module attributes {stable_mosaic.version = 11 : i64} {
  func.func @kernel(%arg0: i32, %arg1: i32, %arg2: i32, %arg3: memref<128x32xbf16, #tpu.memory_space<vmem>>, %arg4: memref<32x16xbf16, #tpu.memory_space<vmem>>, %arg5: memref<1x32xf32, #tpu.memory_space<vmem>>, %arg6: memref<1x32xf32, #tpu.memory_space<vmem>>, %arg7: memref<1x16xf32, #tpu.memory_space<vmem>>, %arg8: memref<1x16xf32, #tpu.memory_space<vmem>>, %arg9: memref<128x16xbf16, #tpu.memory_space<vmem>>, %arg10: memref<128x16xf32, #tpu.memory_space<vmem>>) attributes {dimension_semantics = [#tpu.dimension_semantics<parallel>, #tpu.dimension_semantics<parallel>, #tpu.dimension_semantics<arbitrary>], iteration_bounds = array<i64: 1, 1, 1>, scalar_prefetch = 0 : i64, scratch_operands = 1 : i64, tpu.core_type = #tpu.core_type<tc>, window_params = [{transform_indices = @transform_0, window_bounds = array<i64: 128, 32>}, {transform_indices = @transform_1, window_bounds = array<i64: 32, 16>}, {transform_indices = @transform_2, window_bounds = array<i64: 1, 32>}, {transform_indices = @transform_3, window_bounds = array<i64: 1, 32>}, {transform_indices = @transform_4, window_bounds = array<i64: 1, 16>}, {transform_indices = @transform_5, window_bounds = array<i64: 1, 16>}, {transform_indices = @transform_6, window_bounds = array<i64: 128, 16>}]} {
    %c0_i32 = arith.constant 0 : i32
    %0 = arith.cmpi eq, %arg2, %c0_i32 : i32
    %1 = arith.extui %0 : i1 to i32
    %c0_i32_0 = arith.constant 0 : i32
    %2 = arith.cmpi ne, %1, %c0_i32_0 : i32
    scf.if %2 {
      %cst_15 = arith.constant 0.000000e+00 : f32
      %22 = vector.broadcast %cst_15 : f32 to vector<128x16xf32>
      %c0_16 = arith.constant 0 : index
      %c0_17 = arith.constant 0 : index
      %23 = vector.load %arg10[%c0_16, %c0_17] : memref<128x16xf32, #tpu.memory_space<vmem>>, vector<128x16xf32>
      tpu.vector_store %arg10[%c0_16, %c0_17], %22 {strides = array<i32>} : memref<128x16xf32, #tpu.memory_space<vmem>>, vector<128x16xf32>,
    } else {
    }
    %c0 = arith.constant 0 : index
    %c0_1 = arith.constant 0 : index
    %3 = vector.load %arg3[%c0, %c0_1] : memref<128x32xbf16, #tpu.memory_space<vmem>>, vector<128x32xbf16>
    %4 = arith.extf %3 : vector<128x32xbf16> to vector<128x32xf32>
    %c0_2 = arith.constant 0 : index
    %c0_3 = arith.constant 0 : index
    %5 = vector.load %arg5[%c0_2, %c0_3] : memref<1x32xf32, #tpu.memory_space<vmem>>, vector<1x32xf32>
    %6 = vector.broadcast %5 : vector<1x32xf32> to vector<128x32xf32>
    %7 = arith.mulf %4, %6 : vector<128x32xf32>
    %c0_4 = arith.constant 0 : index
    %c0_5 = arith.constant 0 : index
    %8 = vector.load %arg6[%c0_4, %c0_5] : memref<1x32xf32, #tpu.memory_space<vmem>>, vector<1x32xf32>
    %9 = vector.broadcast %8 : vector<1x32xf32> to vector<128x32xf32>
    %10 = arith.addf %7, %9 : vector<128x32xf32>
    %cst = arith.constant 0.000000e+00 : f32
    %11 = vector.broadcast %cst : f32 to vector<128x32xf32>
    %12 = arith.maximumf %10, %11 : vector<128x32xf32>
    %13 = arith.truncf %12 : vector<128x32xf32> to vector<128x32xbf16>
    %c0_6 = arith.constant 0 : index
    %c0_7 = arith.constant 0 : index
    %14 = vector.load %arg10[%c0_6, %c0_7] : memref<128x16xf32, #tpu.memory_space<vmem>>, vector<128x16xf32>
    %c0_8 = arith.constant 0 : index
    %c0_9 = arith.constant 0 : index
    %15 = vector.load %arg4[%c0_8, %c0_9] : memref<32x16xbf16, #tpu.memory_space<vmem>>, vector<32x16xbf16>
    %cst_10 = arith.constant dense<0.000000e+00> : vector<128x16xf32>
    %16 = tpu.matmul %13, %15, %cst_10 {dimension_numbers = #tpu.dot_dimension_numbers<[1], [0], [0], [1], [0, 0, 1, 1], [], []>} : vector<128x32xbf16>, vector<32x16xbf16>, vector<128x16xf32> -> vector<128x16xf32>
    %17 = arith.addf %14, %16 : vector<128x16xf32>
    %c0_11 = arith.constant 0 : index
    %c0_12 = arith.constant 0 : index
    %18 = vector.load %arg10[%c0_11, %c0_12] : memref<128x16xf32, #tpu.memory_space<vmem>>, vector<128x16xf32>
    tpu.vector_store %arg10[%c0_11, %c0_12], %17 {strides = array<i32>} : memref<128x16xf32, #tpu.memory_space<vmem>>, vector<128x16xf32>,
    %c0_i32_13 = arith.constant 0 : i32
    %19 = arith.cmpi eq, %arg2, %c0_i32_13 : i32
    %20 = arith.extui %19 : i1 to i32
    %c0_i32_14 = arith.constant 0 : i32
    %21 = arith.cmpi ne, %20, %c0_i32_14 : i32
    scf.if %21 {
      %c0_15 = arith.constant 0 : index
      %c0_16 = arith.constant 0 : index
      %22 = vector.load %arg10[%c0_15, %c0_16] : memref<128x16xf32, #tpu.memory_space<vmem>>, vector<128x16xf32>
      %c0_17 = arith.constant 0 : index
      %c0_18 = arith.constant 0 : index
      %23 = vector.load %arg7[%c0_17, %c0_18] : memref<1x16xf32, #tpu.memory_space<vmem>>, vector<1x16xf32>
      %24 = vector.broadcast %23 : vector<1x16xf32> to vector<128x16xf32>
      %25 = arith.mulf %22, %24 : vector<128x16xf32>
      %c0_19 = arith.constant 0 : index
      %c0_20 = arith.constant 0 : index
      %26 = vector.load %arg8[%c0_19, %c0_20] : memref<1x16xf32, #tpu.memory_space<vmem>>, vector<1x16xf32>
      %27 = vector.broadcast %26 : vector<1x16xf32> to vector<128x16xf32>
      %28 = arith.addf %25, %27 : vector<128x16xf32>
      %29 = arith.truncf %28 : vector<128x16xf32> to vector<128x16xbf16>
      %c0_21 = arith.constant 0 : index
      %c0_22 = arith.constant 0 : index
      %30 = vector.load %arg9[%c0_21, %c0_22] : memref<128x16xbf16, #tpu.memory_space<vmem>>, vector<128x16xbf16>
      tpu.vector_store %arg9[%c0_21, %c0_22], %29 {strides = array<i32>} : memref<128x16xbf16, #tpu.memory_space<vmem>>, vector<128x16xbf16>,
    } else {
    }
    return
  }
  func.func @transform_0(%arg0: i32, %arg1: i32, %arg2: i32) -> (i32, i32) {
    %c0_i32 = arith.constant 0 : i32
    return %arg0, %arg2 : i32, i32
  }
  func.func @transform_1(%arg0: i32, %arg1: i32, %arg2: i32) -> (i32, i32) {
    %c0_i32 = arith.constant 0 : i32
    return %arg2, %arg1 : i32, i32
  }
  func.func @transform_2(%arg0: i32, %arg1: i32, %arg2: i32) -> (i32, i32) {
    %c0_i32 = arith.constant 0 : i32
    %c0_i32_0 = arith.constant 0 : i32
    return %c0_i32, %arg2 : i32, i32
  }
  func.func @transform_3(%arg0: i32, %arg1: i32, %arg2: i32) -> (i32, i32) {
    %c0_i32 = arith.constant 0 : i32
    %c0_i32_0 = arith.constant 0 : i32
    return %c0_i32, %arg2 : i32, i32
  }
  func.func @transform_4(%arg0: i32, %arg1: i32, %arg2: i32) -> (i32, i32) {
    %c0_i32 = arith.constant 0 : i32
    %c0_i32_0 = arith.constant 0 : i32
    return %c0_i32, %arg1 : i32, i32
  }
  func.func @transform_5(%arg0: i32, %arg1: i32, %arg2: i32) -> (i32, i32) {
    %c0_i32 = arith.constant 0 : i32
    %c0_i32_0 = arith.constant 0 : i32
    return %c0_i32, %arg1 : i32, i32
  }
  func.func @transform_6(%arg0: i32, %arg1: i32, %arg2: i32) -> (i32, i32) {
    %c0_i32 = arith.constant 0 : i32
    return %arg0, %arg1 : i32, i32
  }
}

module attributes {stable_mosaic.version = 11 : i64} {
  func.func @_pool_kernel(%arg0: i32, %arg1: i32, %arg2: memref<1x32x16xbf16, #tpu.memory_space<vmem>>, %arg3: memref<32x16xbf16, #tpu.memory_space<vmem>>, %arg4: memref<32x16xf32, #tpu.memory_space<vmem>>) attributes {dimension_semantics = [#tpu.dimension_semantics<parallel>, #tpu.dimension_semantics<arbitrary>], iteration_bounds = array<i64: 1, 4>, scalar_prefetch = 0 : i64, scratch_operands = 1 : i64, tpu.core_type = #tpu.core_type<tc>, window_params = [{transform_indices = @transform_0, window_bounds = array<i64: 1, 32, 16>}, {transform_indices = @transform_1, window_bounds = array<i64: 32, 16>}]} {
    %c0 = arith.constant 0 : index
    %c0_0 = arith.constant 0 : index
    %c0_1 = arith.constant 0 : index
    %0 = vector.load %arg2[%c0, %c0_0, %c0_1] : memref<1x32x16xbf16, #tpu.memory_space<vmem>>, vector<1x32x16xbf16>
    %1 = vector.shape_cast %0 : vector<1x32x16xbf16> to vector<32x16xbf16>
    %2 = arith.extf %1 : vector<32x16xbf16> to vector<32x16xf32>
    %c0_i32 = arith.constant 0 : i32
    %3 = arith.cmpi eq, %arg1, %c0_i32 : i32
    %4 = arith.extui %3 : i1 to i32
    %c0_i32_2 = arith.constant 0 : i32
    %5 = arith.cmpi ne, %4, %c0_i32_2 : i32
    scf.if %5 {
      %c0_6 = arith.constant 0 : index
      %c0_7 = arith.constant 0 : index
      %12 = vector.load %arg4[%c0_6, %c0_7] : memref<32x16xf32, #tpu.memory_space<vmem>>, vector<32x16xf32>
      tpu.vector_store %arg4[%c0_6, %c0_7], %2 {strides = array<i32>} : memref<32x16xf32, #tpu.memory_space<vmem>>, vector<32x16xf32>,
    } else {
    }
    %c0_i32_3 = arith.constant 0 : i32
    %6 = arith.cmpi sgt, %arg1, %c0_i32_3 : i32
    %7 = arith.extui %6 : i1 to i32
    %c0_i32_4 = arith.constant 0 : i32
    %8 = arith.cmpi ne, %7, %c0_i32_4 : i32
    scf.if %8 {
      %c0_6 = arith.constant 0 : index
      %c0_7 = arith.constant 0 : index
      %12 = vector.load %arg4[%c0_6, %c0_7] : memref<32x16xf32, #tpu.memory_space<vmem>>, vector<32x16xf32>
      %13 = arith.addf %12, %2 : vector<32x16xf32>
      %c0_8 = arith.constant 0 : index
      %c0_9 = arith.constant 0 : index
      %14 = vector.load %arg4[%c0_8, %c0_9] : memref<32x16xf32, #tpu.memory_space<vmem>>, vector<32x16xf32>
      tpu.vector_store %arg4[%c0_8, %c0_9], %13 {strides = array<i32>} : memref<32x16xf32, #tpu.memory_space<vmem>>, vector<32x16xf32>,
    } else {
    }
    %c3_i32 = arith.constant 3 : i32
    %9 = arith.cmpi eq, %arg1, %c3_i32 : i32
    %10 = arith.extui %9 : i1 to i32
    %c0_i32_5 = arith.constant 0 : i32
    %11 = arith.cmpi ne, %10, %c0_i32_5 : i32
    scf.if %11 {
      %c0_6 = arith.constant 0 : index
      %c0_7 = arith.constant 0 : index
      %12 = vector.load %arg4[%c0_6, %c0_7] : memref<32x16xf32, #tpu.memory_space<vmem>>, vector<32x16xf32>
      %13 = arith.truncf %12 : vector<32x16xf32> to vector<32x16xbf16>
      %c0_8 = arith.constant 0 : index
      %c0_9 = arith.constant 0 : index
      %14 = vector.load %arg3[%c0_8, %c0_9] : memref<32x16xbf16, #tpu.memory_space<vmem>>, vector<32x16xbf16>
      tpu.vector_store %arg3[%c0_8, %c0_9], %13 {strides = array<i32>} : memref<32x16xbf16, #tpu.memory_space<vmem>>, vector<32x16xbf16>,
    } else {
    }
    return
  }
  func.func @transform_0(%arg0: i32, %arg1: i32) -> (i32, i32, i32) {
    %c0_i32 = arith.constant 0 : i32
    %c0_i32_0 = arith.constant 0 : i32
    return %arg1, %arg0, %c0_i32 : i32, i32, i32
  }
  func.func @transform_1(%arg0: i32, %arg1: i32) -> (i32, i32) {
    %c0_i32 = arith.constant 0 : i32
    %c0_i32_0 = arith.constant 0 : i32
    return %arg0, %c0_i32 : i32, i32
  }
}

module attributes {stable_mosaic.version = 11 : i64} {
  func.func @kernel(%arg0: i32, %arg1: i32, %arg2: i32, %arg3: memref<32x16xbf16, #tpu.memory_space<vmem>>, %arg4: memref<16x32xbf16, #tpu.memory_space<vmem>>, %arg5: memref<1x16xf32, #tpu.memory_space<vmem>>, %arg6: memref<1x16xf32, #tpu.memory_space<vmem>>, %arg7: memref<1x32xf32, #tpu.memory_space<vmem>>, %arg8: memref<1x32xf32, #tpu.memory_space<vmem>>, %arg9: memref<32x32xbf16, #tpu.memory_space<vmem>>, %arg10: memref<32x32xf32, #tpu.memory_space<vmem>>) attributes {dimension_semantics = [#tpu.dimension_semantics<parallel>, #tpu.dimension_semantics<parallel>, #tpu.dimension_semantics<arbitrary>], iteration_bounds = array<i64: 1, 1, 1>, scalar_prefetch = 0 : i64, scratch_operands = 1 : i64, tpu.core_type = #tpu.core_type<tc>, window_params = [{transform_indices = @transform_0, window_bounds = array<i64: 32, 16>}, {transform_indices = @transform_1, window_bounds = array<i64: 16, 32>}, {transform_indices = @transform_2, window_bounds = array<i64: 1, 16>}, {transform_indices = @transform_3, window_bounds = array<i64: 1, 16>}, {transform_indices = @transform_4, window_bounds = array<i64: 1, 32>}, {transform_indices = @transform_5, window_bounds = array<i64: 1, 32>}, {transform_indices = @transform_6, window_bounds = array<i64: 32, 32>}]} {
    %c0_i32 = arith.constant 0 : i32
    %0 = arith.cmpi eq, %arg2, %c0_i32 : i32
    %1 = arith.extui %0 : i1 to i32
    %c0_i32_0 = arith.constant 0 : i32
    %2 = arith.cmpi ne, %1, %c0_i32_0 : i32
    scf.if %2 {
      %cst_15 = arith.constant 0.000000e+00 : f32
      %22 = vector.broadcast %cst_15 : f32 to vector<32x32xf32>
      %c0_16 = arith.constant 0 : index
      %c0_17 = arith.constant 0 : index
      %23 = vector.load %arg10[%c0_16, %c0_17] : memref<32x32xf32, #tpu.memory_space<vmem>>, vector<32x32xf32>
      tpu.vector_store %arg10[%c0_16, %c0_17], %22 {strides = array<i32>} : memref<32x32xf32, #tpu.memory_space<vmem>>, vector<32x32xf32>,
    } else {
    }
    %c0 = arith.constant 0 : index
    %c0_1 = arith.constant 0 : index
    %3 = vector.load %arg3[%c0, %c0_1] : memref<32x16xbf16, #tpu.memory_space<vmem>>, vector<32x16xbf16>
    %4 = arith.extf %3 : vector<32x16xbf16> to vector<32x16xf32>
    %c0_2 = arith.constant 0 : index
    %c0_3 = arith.constant 0 : index
    %5 = vector.load %arg5[%c0_2, %c0_3] : memref<1x16xf32, #tpu.memory_space<vmem>>, vector<1x16xf32>
    %6 = vector.broadcast %5 : vector<1x16xf32> to vector<32x16xf32>
    %7 = arith.mulf %4, %6 : vector<32x16xf32>
    %c0_4 = arith.constant 0 : index
    %c0_5 = arith.constant 0 : index
    %8 = vector.load %arg6[%c0_4, %c0_5] : memref<1x16xf32, #tpu.memory_space<vmem>>, vector<1x16xf32>
    %9 = vector.broadcast %8 : vector<1x16xf32> to vector<32x16xf32>
    %10 = arith.addf %7, %9 : vector<32x16xf32>
    %cst = arith.constant 0.000000e+00 : f32
    %11 = vector.broadcast %cst : f32 to vector<32x16xf32>
    %12 = arith.maximumf %10, %11 : vector<32x16xf32>
    %13 = arith.truncf %12 : vector<32x16xf32> to vector<32x16xbf16>
    %c0_6 = arith.constant 0 : index
    %c0_7 = arith.constant 0 : index
    %14 = vector.load %arg10[%c0_6, %c0_7] : memref<32x32xf32, #tpu.memory_space<vmem>>, vector<32x32xf32>
    %c0_8 = arith.constant 0 : index
    %c0_9 = arith.constant 0 : index
    %15 = vector.load %arg4[%c0_8, %c0_9] : memref<16x32xbf16, #tpu.memory_space<vmem>>, vector<16x32xbf16>
    %cst_10 = arith.constant dense<0.000000e+00> : vector<32x32xf32>
    %16 = tpu.matmul %13, %15, %cst_10 {dimension_numbers = #tpu.dot_dimension_numbers<[1], [0], [0], [1], [0, 0, 1, 1], [], []>} : vector<32x16xbf16>, vector<16x32xbf16>, vector<32x32xf32> -> vector<32x32xf32>
    %17 = arith.addf %14, %16 : vector<32x32xf32>
    %c0_11 = arith.constant 0 : index
    %c0_12 = arith.constant 0 : index
    %18 = vector.load %arg10[%c0_11, %c0_12] : memref<32x32xf32, #tpu.memory_space<vmem>>, vector<32x32xf32>
    tpu.vector_store %arg10[%c0_11, %c0_12], %17 {strides = array<i32>} : memref<32x32xf32, #tpu.memory_space<vmem>>, vector<32x32xf32>,
    %c0_i32_13 = arith.constant 0 : i32
    %19 = arith.cmpi eq, %arg2, %c0_i32_13 : i32
    %20 = arith.extui %19 : i1 to i32
    %c0_i32_14 = arith.constant 0 : i32
    %21 = arith.cmpi ne, %20, %c0_i32_14 : i32
    scf.if %21 {
      %c0_15 = arith.constant 0 : index
      %c0_16 = arith.constant 0 : index
      %22 = vector.load %arg10[%c0_15, %c0_16] : memref<32x32xf32, #tpu.memory_space<vmem>>, vector<32x32xf32>
      %c0_17 = arith.constant 0 : index
      %c0_18 = arith.constant 0 : index
      %23 = vector.load %arg7[%c0_17, %c0_18] : memref<1x32xf32, #tpu.memory_space<vmem>>, vector<1x32xf32>
      %24 = vector.broadcast %23 : vector<1x32xf32> to vector<32x32xf32>
      %25 = arith.mulf %22, %24 : vector<32x32xf32>
      %c0_19 = arith.constant 0 : index
      %c0_20 = arith.constant 0 : index
      %26 = vector.load %arg8[%c0_19, %c0_20] : memref<1x32xf32, #tpu.memory_space<vmem>>, vector<1x32xf32>
      %27 = vector.broadcast %26 : vector<1x32xf32> to vector<32x32xf32>
      %28 = arith.addf %25, %27 : vector<32x32xf32>
      %cst_21 = arith.constant 0.000000e+00 : f32
      %29 = vector.broadcast %cst_21 : f32 to vector<32x32xf32>
      %30 = arith.maximumf %28, %29 : vector<32x32xf32>
      %31 = arith.truncf %30 : vector<32x32xf32> to vector<32x32xbf16>
      %c0_22 = arith.constant 0 : index
      %c0_23 = arith.constant 0 : index
      %32 = vector.load %arg9[%c0_22, %c0_23] : memref<32x32xbf16, #tpu.memory_space<vmem>>, vector<32x32xbf16>
      tpu.vector_store %arg9[%c0_22, %c0_23], %31 {strides = array<i32>} : memref<32x32xbf16, #tpu.memory_space<vmem>>, vector<32x32xbf16>,
    } else {
    }
    return
  }
  func.func @transform_0(%arg0: i32, %arg1: i32, %arg2: i32) -> (i32, i32) {
    %c0_i32 = arith.constant 0 : i32
    return %arg0, %arg2 : i32, i32
  }
  func.func @transform_1(%arg0: i32, %arg1: i32, %arg2: i32) -> (i32, i32) {
    %c0_i32 = arith.constant 0 : i32
    return %arg2, %arg1 : i32, i32
  }
  func.func @transform_2(%arg0: i32, %arg1: i32, %arg2: i32) -> (i32, i32) {
    %c0_i32 = arith.constant 0 : i32
    %c0_i32_0 = arith.constant 0 : i32
    return %c0_i32, %arg2 : i32, i32
  }
  func.func @transform_3(%arg0: i32, %arg1: i32, %arg2: i32) -> (i32, i32) {
    %c0_i32 = arith.constant 0 : i32
    %c0_i32_0 = arith.constant 0 : i32
    return %c0_i32, %arg2 : i32, i32
  }
  func.func @transform_4(%arg0: i32, %arg1: i32, %arg2: i32) -> (i32, i32) {
    %c0_i32 = arith.constant 0 : i32
    %c0_i32_0 = arith.constant 0 : i32
    return %c0_i32, %arg1 : i32, i32
  }
  func.func @transform_5(%arg0: i32, %arg1: i32, %arg2: i32) -> (i32, i32) {
    %c0_i32 = arith.constant 0 : i32
    %c0_i32_0 = arith.constant 0 : i32
    return %c0_i32, %arg1 : i32, i32
  }
  func.func @transform_6(%arg0: i32, %arg1: i32, %arg2: i32) -> (i32, i32) {
    %c0_i32 = arith.constant 0 : i32
    return %arg0, %arg1 : i32, i32
  }
}

module attributes {stable_mosaic.version = 11 : i64} {
  func.func @kernel(%arg0: i32, %arg1: i32, %arg2: i32, %arg3: memref<32x288xbf16, #tpu.memory_space<vmem>>, %arg4: memref<288x8xbf16, #tpu.memory_space<vmem>>, %arg5: memref<1x8xf32, #tpu.memory_space<vmem>>, %arg6: memref<1x8xf32, #tpu.memory_space<vmem>>, %arg7: memref<32x8xbf16, #tpu.memory_space<vmem>>, %arg8: memref<32x8xf32, #tpu.memory_space<vmem>>) attributes {dimension_semantics = [#tpu.dimension_semantics<parallel>, #tpu.dimension_semantics<parallel>, #tpu.dimension_semantics<arbitrary>], iteration_bounds = array<i64: 1, 1, 1>, scalar_prefetch = 0 : i64, scratch_operands = 1 : i64, tpu.core_type = #tpu.core_type<tc>, window_params = [{transform_indices = @transform_0, window_bounds = array<i64: 32, 288>}, {transform_indices = @transform_1, window_bounds = array<i64: 288, 8>}, {transform_indices = @transform_2, window_bounds = array<i64: 1, 8>}, {transform_indices = @transform_3, window_bounds = array<i64: 1, 8>}, {transform_indices = @transform_4, window_bounds = array<i64: 32, 8>}]} {
    %c0_i32 = arith.constant 0 : i32
    %0 = arith.cmpi eq, %arg2, %c0_i32 : i32
    %1 = arith.extui %0 : i1 to i32
    %c0_i32_0 = arith.constant 0 : i32
    %2 = arith.cmpi ne, %1, %c0_i32_0 : i32
    scf.if %2 {
      %cst_10 = arith.constant 0.000000e+00 : f32
      %12 = vector.broadcast %cst_10 : f32 to vector<32x8xf32>
      %c0_11 = arith.constant 0 : index
      %c0_12 = arith.constant 0 : index
      %13 = vector.load %arg8[%c0_11, %c0_12] : memref<32x8xf32, #tpu.memory_space<vmem>>, vector<32x8xf32>
      tpu.vector_store %arg8[%c0_11, %c0_12], %12 {strides = array<i32>} : memref<32x8xf32, #tpu.memory_space<vmem>>, vector<32x8xf32>,
    } else {
    }
    %c0 = arith.constant 0 : index
    %c0_1 = arith.constant 0 : index
    %3 = vector.load %arg3[%c0, %c0_1] : memref<32x288xbf16, #tpu.memory_space<vmem>>, vector<32x288xbf16>
    %c0_2 = arith.constant 0 : index
    %c0_3 = arith.constant 0 : index
    %4 = vector.load %arg8[%c0_2, %c0_3] : memref<32x8xf32, #tpu.memory_space<vmem>>, vector<32x8xf32>
    %c0_4 = arith.constant 0 : index
    %c0_5 = arith.constant 0 : index
    %5 = vector.load %arg4[%c0_4, %c0_5] : memref<288x8xbf16, #tpu.memory_space<vmem>>, vector<288x8xbf16>
    %cst = arith.constant dense<0.000000e+00> : vector<32x8xf32>
    %6 = tpu.matmul %3, %5, %cst {dimension_numbers = #tpu.dot_dimension_numbers<[1], [0], [0], [1], [0, 0, 1, 1], [], []>} : vector<32x288xbf16>, vector<288x8xbf16>, vector<32x8xf32> -> vector<32x8xf32>
    %7 = arith.addf %4, %6 : vector<32x8xf32>
    %c0_6 = arith.constant 0 : index
    %c0_7 = arith.constant 0 : index
    %8 = vector.load %arg8[%c0_6, %c0_7] : memref<32x8xf32, #tpu.memory_space<vmem>>, vector<32x8xf32>
    tpu.vector_store %arg8[%c0_6, %c0_7], %7 {strides = array<i32>} : memref<32x8xf32, #tpu.memory_space<vmem>>, vector<32x8xf32>,
    %c0_i32_8 = arith.constant 0 : i32
    %9 = arith.cmpi eq, %arg2, %c0_i32_8 : i32
    %10 = arith.extui %9 : i1 to i32
    %c0_i32_9 = arith.constant 0 : i32
    %11 = arith.cmpi ne, %10, %c0_i32_9 : i32
    scf.if %11 {
      %c0_10 = arith.constant 0 : index
      %c0_11 = arith.constant 0 : index
      %12 = vector.load %arg8[%c0_10, %c0_11] : memref<32x8xf32, #tpu.memory_space<vmem>>, vector<32x8xf32>
      %c0_12 = arith.constant 0 : index
      %c0_13 = arith.constant 0 : index
      %13 = vector.load %arg5[%c0_12, %c0_13] : memref<1x8xf32, #tpu.memory_space<vmem>>, vector<1x8xf32>
      %14 = vector.broadcast %13 : vector<1x8xf32> to vector<32x8xf32>
      %15 = arith.mulf %12, %14 : vector<32x8xf32>
      %c0_14 = arith.constant 0 : index
      %c0_15 = arith.constant 0 : index
      %16 = vector.load %arg6[%c0_14, %c0_15] : memref<1x8xf32, #tpu.memory_space<vmem>>, vector<1x8xf32>
      %17 = vector.broadcast %16 : vector<1x8xf32> to vector<32x8xf32>
      %18 = arith.addf %15, %17 : vector<32x8xf32>
      %19 = arith.truncf %18 : vector<32x8xf32> to vector<32x8xbf16>
      %c0_16 = arith.constant 0 : index
      %c0_17 = arith.constant 0 : index
      %20 = vector.load %arg7[%c0_16, %c0_17] : memref<32x8xbf16, #tpu.memory_space<vmem>>, vector<32x8xbf16>
      tpu.vector_store %arg7[%c0_16, %c0_17], %19 {strides = array<i32>} : memref<32x8xbf16, #tpu.memory_space<vmem>>, vector<32x8xbf16>,
    } else {
    }
    return
  }
  func.func @transform_0(%arg0: i32, %arg1: i32, %arg2: i32) -> (i32, i32) {
    %c0_i32 = arith.constant 0 : i32
    return %arg0, %arg2 : i32, i32
  }
  func.func @transform_1(%arg0: i32, %arg1: i32, %arg2: i32) -> (i32, i32) {
    %c0_i32 = arith.constant 0 : i32
    return %arg2, %arg1 : i32, i32
  }
  func.func @transform_2(%arg0: i32, %arg1: i32, %arg2: i32) -> (i32, i32) {
    %c0_i32 = arith.constant 0 : i32
    %c0_i32_0 = arith.constant 0 : i32
    return %c0_i32, %arg1 : i32, i32
  }
  func.func @transform_3(%arg0: i32, %arg1: i32, %arg2: i32) -> (i32, i32) {
    %c0_i32 = arith.constant 0 : i32
    %c0_i32_0 = arith.constant 0 : i32
    return %c0_i32, %arg1 : i32, i32
  }
  func.func @transform_4(%arg0: i32, %arg1: i32, %arg2: i32) -> (i32, i32) {
    %c0_i32 = arith.constant 0 : i32
    return %arg0, %arg1 : i32, i32
  }
}

module attributes {stable_mosaic.version = 11 : i64} {
  func.func @kernel(%arg0: i32, %arg1: i32, %arg2: i32, %arg3: memref<32x24xbf16, #tpu.memory_space<vmem>>, %arg4: memref<24x32xbf16, #tpu.memory_space<vmem>>, %arg5: memref<1x24xf32, #tpu.memory_space<vmem>>, %arg6: memref<1x24xf32, #tpu.memory_space<vmem>>, %arg7: memref<1x32xf32, #tpu.memory_space<vmem>>, %arg8: memref<1x32xf32, #tpu.memory_space<vmem>>, %arg9: memref<32x32xbf16, #tpu.memory_space<vmem>>, %arg10: memref<32x32xf32, #tpu.memory_space<vmem>>) attributes {dimension_semantics = [#tpu.dimension_semantics<parallel>, #tpu.dimension_semantics<parallel>, #tpu.dimension_semantics<arbitrary>], iteration_bounds = array<i64: 1, 1, 1>, scalar_prefetch = 0 : i64, scratch_operands = 1 : i64, tpu.core_type = #tpu.core_type<tc>, window_params = [{transform_indices = @transform_0, window_bounds = array<i64: 32, 24>}, {transform_indices = @transform_1, window_bounds = array<i64: 24, 32>}, {transform_indices = @transform_2, window_bounds = array<i64: 1, 24>}, {transform_indices = @transform_3, window_bounds = array<i64: 1, 24>}, {transform_indices = @transform_4, window_bounds = array<i64: 1, 32>}, {transform_indices = @transform_5, window_bounds = array<i64: 1, 32>}, {transform_indices = @transform_6, window_bounds = array<i64: 32, 32>}]} {
    %c0_i32 = arith.constant 0 : i32
    %0 = arith.cmpi eq, %arg2, %c0_i32 : i32
    %1 = arith.extui %0 : i1 to i32
    %c0_i32_0 = arith.constant 0 : i32
    %2 = arith.cmpi ne, %1, %c0_i32_0 : i32
    scf.if %2 {
      %cst_15 = arith.constant 0.000000e+00 : f32
      %22 = vector.broadcast %cst_15 : f32 to vector<32x32xf32>
      %c0_16 = arith.constant 0 : index
      %c0_17 = arith.constant 0 : index
      %23 = vector.load %arg10[%c0_16, %c0_17] : memref<32x32xf32, #tpu.memory_space<vmem>>, vector<32x32xf32>
      tpu.vector_store %arg10[%c0_16, %c0_17], %22 {strides = array<i32>} : memref<32x32xf32, #tpu.memory_space<vmem>>, vector<32x32xf32>,
    } else {
    }
    %c0 = arith.constant 0 : index
    %c0_1 = arith.constant 0 : index
    %3 = vector.load %arg3[%c0, %c0_1] : memref<32x24xbf16, #tpu.memory_space<vmem>>, vector<32x24xbf16>
    %4 = arith.extf %3 : vector<32x24xbf16> to vector<32x24xf32>
    %c0_2 = arith.constant 0 : index
    %c0_3 = arith.constant 0 : index
    %5 = vector.load %arg5[%c0_2, %c0_3] : memref<1x24xf32, #tpu.memory_space<vmem>>, vector<1x24xf32>
    %6 = vector.broadcast %5 : vector<1x24xf32> to vector<32x24xf32>
    %7 = arith.mulf %4, %6 : vector<32x24xf32>
    %c0_4 = arith.constant 0 : index
    %c0_5 = arith.constant 0 : index
    %8 = vector.load %arg6[%c0_4, %c0_5] : memref<1x24xf32, #tpu.memory_space<vmem>>, vector<1x24xf32>
    %9 = vector.broadcast %8 : vector<1x24xf32> to vector<32x24xf32>
    %10 = arith.addf %7, %9 : vector<32x24xf32>
    %cst = arith.constant 0.000000e+00 : f32
    %11 = vector.broadcast %cst : f32 to vector<32x24xf32>
    %12 = arith.maximumf %10, %11 : vector<32x24xf32>
    %13 = arith.truncf %12 : vector<32x24xf32> to vector<32x24xbf16>
    %c0_6 = arith.constant 0 : index
    %c0_7 = arith.constant 0 : index
    %14 = vector.load %arg10[%c0_6, %c0_7] : memref<32x32xf32, #tpu.memory_space<vmem>>, vector<32x32xf32>
    %c0_8 = arith.constant 0 : index
    %c0_9 = arith.constant 0 : index
    %15 = vector.load %arg4[%c0_8, %c0_9] : memref<24x32xbf16, #tpu.memory_space<vmem>>, vector<24x32xbf16>
    %cst_10 = arith.constant dense<0.000000e+00> : vector<32x32xf32>
    %16 = tpu.matmul %13, %15, %cst_10 {dimension_numbers = #tpu.dot_dimension_numbers<[1], [0], [0], [1], [0, 0, 1, 1], [], []>} : vector<32x24xbf16>, vector<24x32xbf16>, vector<32x32xf32> -> vector<32x32xf32>
    %17 = arith.addf %14, %16 : vector<32x32xf32>
    %c0_11 = arith.constant 0 : index
    %c0_12 = arith.constant 0 : index
    %18 = vector.load %arg10[%c0_11, %c0_12] : memref<32x32xf32, #tpu.memory_space<vmem>>, vector<32x32xf32>
    tpu.vector_store %arg10[%c0_11, %c0_12], %17 {strides = array<i32>} : memref<32x32xf32, #tpu.memory_space<vmem>>, vector<32x32xf32>,
    %c0_i32_13 = arith.constant 0 : i32
    %19 = arith.cmpi eq, %arg2, %c0_i32_13 : i32
    %20 = arith.extui %19 : i1 to i32
    %c0_i32_14 = arith.constant 0 : i32
    %21 = arith.cmpi ne, %20, %c0_i32_14 : i32
    scf.if %21 {
      %c0_15 = arith.constant 0 : index
      %c0_16 = arith.constant 0 : index
      %22 = vector.load %arg10[%c0_15, %c0_16] : memref<32x32xf32, #tpu.memory_space<vmem>>, vector<32x32xf32>
      %c0_17 = arith.constant 0 : index
      %c0_18 = arith.constant 0 : index
      %23 = vector.load %arg7[%c0_17, %c0_18] : memref<1x32xf32, #tpu.memory_space<vmem>>, vector<1x32xf32>
      %24 = vector.broadcast %23 : vector<1x32xf32> to vector<32x32xf32>
      %25 = arith.mulf %22, %24 : vector<32x32xf32>
      %c0_19 = arith.constant 0 : index
      %c0_20 = arith.constant 0 : index
      %26 = vector.load %arg8[%c0_19, %c0_20] : memref<1x32xf32, #tpu.memory_space<vmem>>, vector<1x32xf32>
      %27 = vector.broadcast %26 : vector<1x32xf32> to vector<32x32xf32>
      %28 = arith.addf %25, %27 : vector<32x32xf32>
      %cst_21 = arith.constant 0.000000e+00 : f32
      %29 = vector.broadcast %cst_21 : f32 to vector<32x32xf32>
      %30 = arith.maximumf %28, %29 : vector<32x32xf32>
      %31 = arith.truncf %30 : vector<32x32xf32> to vector<32x32xbf16>
      %c0_22 = arith.constant 0 : index
      %c0_23 = arith.constant 0 : index
      %32 = vector.load %arg9[%c0_22, %c0_23] : memref<32x32xbf16, #tpu.memory_space<vmem>>, vector<32x32xbf16>
      tpu.vector_store %arg9[%c0_22, %c0_23], %31 {strides = array<i32>} : memref<32x32xbf16, #tpu.memory_space<vmem>>, vector<32x32xbf16>,
    } else {
    }
    return
  }
  func.func @transform_0(%arg0: i32, %arg1: i32, %arg2: i32) -> (i32, i32) {
    %c0_i32 = arith.constant 0 : i32
    return %arg0, %arg2 : i32, i32
  }
  func.func @transform_1(%arg0: i32, %arg1: i32, %arg2: i32) -> (i32, i32) {
    %c0_i32 = arith.constant 0 : i32
    return %arg2, %arg1 : i32, i32
  }
  func.func @transform_2(%arg0: i32, %arg1: i32, %arg2: i32) -> (i32, i32) {
    %c0_i32 = arith.constant 0 : i32
    %c0_i32_0 = arith.constant 0 : i32
    return %c0_i32, %arg2 : i32, i32
  }
  func.func @transform_3(%arg0: i32, %arg1: i32, %arg2: i32) -> (i32, i32) {
    %c0_i32 = arith.constant 0 : i32
    %c0_i32_0 = arith.constant 0 : i32
    return %c0_i32, %arg2 : i32, i32
  }
  func.func @transform_4(%arg0: i32, %arg1: i32, %arg2: i32) -> (i32, i32) {
    %c0_i32 = arith.constant 0 : i32
    %c0_i32_0 = arith.constant 0 : i32
    return %c0_i32, %arg1 : i32, i32
  }
  func.func @transform_5(%arg0: i32, %arg1: i32, %arg2: i32) -> (i32, i32) {
    %c0_i32 = arith.constant 0 : i32
    %c0_i32_0 = arith.constant 0 : i32
    return %c0_i32, %arg1 : i32, i32
  }
  func.func @transform_6(%arg0: i32, %arg1: i32, %arg2: i32) -> (i32, i32) {
    %c0_i32 = arith.constant 0 : i32
    return %arg0, %arg1 : i32, i32
  }
}

module attributes {stable_mosaic.version = 11 : i64} {
  func.func @kernel(%arg0: i32, %arg1: i32, %arg2: i32, %arg3: memref<32x32xbf16, #tpu.memory_space<vmem>>, %arg4: memref<32x16xbf16, #tpu.memory_space<vmem>>, %arg5: memref<1x32xf32, #tpu.memory_space<vmem>>, %arg6: memref<1x32xf32, #tpu.memory_space<vmem>>, %arg7: memref<1x16xf32, #tpu.memory_space<vmem>>, %arg8: memref<1x16xf32, #tpu.memory_space<vmem>>, %arg9: memref<32x16xbf16, #tpu.memory_space<vmem>>, %arg10: memref<32x16xf32, #tpu.memory_space<vmem>>) attributes {dimension_semantics = [#tpu.dimension_semantics<parallel>, #tpu.dimension_semantics<parallel>, #tpu.dimension_semantics<arbitrary>], iteration_bounds = array<i64: 1, 1, 1>, scalar_prefetch = 0 : i64, scratch_operands = 1 : i64, tpu.core_type = #tpu.core_type<tc>, window_params = [{transform_indices = @transform_0, window_bounds = array<i64: 32, 32>}, {transform_indices = @transform_1, window_bounds = array<i64: 32, 16>}, {transform_indices = @transform_2, window_bounds = array<i64: 1, 32>}, {transform_indices = @transform_3, window_bounds = array<i64: 1, 32>}, {transform_indices = @transform_4, window_bounds = array<i64: 1, 16>}, {transform_indices = @transform_5, window_bounds = array<i64: 1, 16>}, {transform_indices = @transform_6, window_bounds = array<i64: 32, 16>}]} {
    %c0_i32 = arith.constant 0 : i32
    %0 = arith.cmpi eq, %arg2, %c0_i32 : i32
    %1 = arith.extui %0 : i1 to i32
    %c0_i32_0 = arith.constant 0 : i32
    %2 = arith.cmpi ne, %1, %c0_i32_0 : i32
    scf.if %2 {
      %cst_15 = arith.constant 0.000000e+00 : f32
      %22 = vector.broadcast %cst_15 : f32 to vector<32x16xf32>
      %c0_16 = arith.constant 0 : index
      %c0_17 = arith.constant 0 : index
      %23 = vector.load %arg10[%c0_16, %c0_17] : memref<32x16xf32, #tpu.memory_space<vmem>>, vector<32x16xf32>
      tpu.vector_store %arg10[%c0_16, %c0_17], %22 {strides = array<i32>} : memref<32x16xf32, #tpu.memory_space<vmem>>, vector<32x16xf32>,
    } else {
    }
    %c0 = arith.constant 0 : index
    %c0_1 = arith.constant 0 : index
    %3 = vector.load %arg3[%c0, %c0_1] : memref<32x32xbf16, #tpu.memory_space<vmem>>, vector<32x32xbf16>
    %4 = arith.extf %3 : vector<32x32xbf16> to vector<32x32xf32>
    %c0_2 = arith.constant 0 : index
    %c0_3 = arith.constant 0 : index
    %5 = vector.load %arg5[%c0_2, %c0_3] : memref<1x32xf32, #tpu.memory_space<vmem>>, vector<1x32xf32>
    %6 = vector.broadcast %5 : vector<1x32xf32> to vector<32x32xf32>
    %7 = arith.mulf %4, %6 : vector<32x32xf32>
    %c0_4 = arith.constant 0 : index
    %c0_5 = arith.constant 0 : index
    %8 = vector.load %arg6[%c0_4, %c0_5] : memref<1x32xf32, #tpu.memory_space<vmem>>, vector<1x32xf32>
    %9 = vector.broadcast %8 : vector<1x32xf32> to vector<32x32xf32>
    %10 = arith.addf %7, %9 : vector<32x32xf32>
    %cst = arith.constant 0.000000e+00 : f32
    %11 = vector.broadcast %cst : f32 to vector<32x32xf32>
    %12 = arith.maximumf %10, %11 : vector<32x32xf32>
    %13 = arith.truncf %12 : vector<32x32xf32> to vector<32x32xbf16>
    %c0_6 = arith.constant 0 : index
    %c0_7 = arith.constant 0 : index
    %14 = vector.load %arg10[%c0_6, %c0_7] : memref<32x16xf32, #tpu.memory_space<vmem>>, vector<32x16xf32>
    %c0_8 = arith.constant 0 : index
    %c0_9 = arith.constant 0 : index
    %15 = vector.load %arg4[%c0_8, %c0_9] : memref<32x16xbf16, #tpu.memory_space<vmem>>, vector<32x16xbf16>
    %cst_10 = arith.constant dense<0.000000e+00> : vector<32x16xf32>
    %16 = tpu.matmul %13, %15, %cst_10 {dimension_numbers = #tpu.dot_dimension_numbers<[1], [0], [0], [1], [0, 0, 1, 1], [], []>} : vector<32x32xbf16>, vector<32x16xbf16>, vector<32x16xf32> -> vector<32x16xf32>
    %17 = arith.addf %14, %16 : vector<32x16xf32>
    %c0_11 = arith.constant 0 : index
    %c0_12 = arith.constant 0 : index
    %18 = vector.load %arg10[%c0_11, %c0_12] : memref<32x16xf32, #tpu.memory_space<vmem>>, vector<32x16xf32>
    tpu.vector_store %arg10[%c0_11, %c0_12], %17 {strides = array<i32>} : memref<32x16xf32, #tpu.memory_space<vmem>>, vector<32x16xf32>,
    %c0_i32_13 = arith.constant 0 : i32
    %19 = arith.cmpi eq, %arg2, %c0_i32_13 : i32
    %20 = arith.extui %19 : i1 to i32
    %c0_i32_14 = arith.constant 0 : i32
    %21 = arith.cmpi ne, %20, %c0_i32_14 : i32
    scf.if %21 {
      %c0_15 = arith.constant 0 : index
      %c0_16 = arith.constant 0 : index
      %22 = vector.load %arg10[%c0_15, %c0_16] : memref<32x16xf32, #tpu.memory_space<vmem>>, vector<32x16xf32>
      %c0_17 = arith.constant 0 : index
      %c0_18 = arith.constant 0 : index
      %23 = vector.load %arg7[%c0_17, %c0_18] : memref<1x16xf32, #tpu.memory_space<vmem>>, vector<1x16xf32>
      %24 = vector.broadcast %23 : vector<1x16xf32> to vector<32x16xf32>
      %25 = arith.mulf %22, %24 : vector<32x16xf32>
      %c0_19 = arith.constant 0 : index
      %c0_20 = arith.constant 0 : index
      %26 = vector.load %arg8[%c0_19, %c0_20] : memref<1x16xf32, #tpu.memory_space<vmem>>, vector<1x16xf32>
      %27 = vector.broadcast %26 : vector<1x16xf32> to vector<32x16xf32>
      %28 = arith.addf %25, %27 : vector<32x16xf32>
      %29 = arith.truncf %28 : vector<32x16xf32> to vector<32x16xbf16>
      %c0_21 = arith.constant 0 : index
      %c0_22 = arith.constant 0 : index
      %30 = vector.load %arg9[%c0_21, %c0_22] : memref<32x16xbf16, #tpu.memory_space<vmem>>, vector<32x16xbf16>
      tpu.vector_store %arg9[%c0_21, %c0_22], %29 {strides = array<i32>} : memref<32x16xbf16, #tpu.memory_space<vmem>>, vector<32x16xbf16>,
    } else {
    }
    return
  }
  func.func @transform_0(%arg0: i32, %arg1: i32, %arg2: i32) -> (i32, i32) {
    %c0_i32 = arith.constant 0 : i32
    return %arg0, %arg2 : i32, i32
  }
  func.func @transform_1(%arg0: i32, %arg1: i32, %arg2: i32) -> (i32, i32) {
    %c0_i32 = arith.constant 0 : i32
    return %arg2, %arg1 : i32, i32
  }
  func.func @transform_2(%arg0: i32, %arg1: i32, %arg2: i32) -> (i32, i32) {
    %c0_i32 = arith.constant 0 : i32
    %c0_i32_0 = arith.constant 0 : i32
    return %c0_i32, %arg2 : i32, i32
  }
  func.func @transform_3(%arg0: i32, %arg1: i32, %arg2: i32) -> (i32, i32) {
    %c0_i32 = arith.constant 0 : i32
    %c0_i32_0 = arith.constant 0 : i32
    return %c0_i32, %arg2 : i32, i32
  }
  func.func @transform_4(%arg0: i32, %arg1: i32, %arg2: i32) -> (i32, i32) {
    %c0_i32 = arith.constant 0 : i32
    %c0_i32_0 = arith.constant 0 : i32
    return %c0_i32, %arg1 : i32, i32
  }
  func.func @transform_5(%arg0: i32, %arg1: i32, %arg2: i32) -> (i32, i32) {
    %c0_i32 = arith.constant 0 : i32
    %c0_i32_0 = arith.constant 0 : i32
    return %c0_i32, %arg1 : i32, i32
  }
  func.func @transform_6(%arg0: i32, %arg1: i32, %arg2: i32) -> (i32, i32) {
    %c0_i32 = arith.constant 0 : i32
    return %arg0, %arg1 : i32, i32
  }
}

module attributes {stable_mosaic.version = 11 : i64} {
  func.func @kernel(%arg0: i32, %arg1: i32, %arg2: i32, %arg3: memref<8x16xbf16, #tpu.memory_space<vmem>>, %arg4: memref<16x32xbf16, #tpu.memory_space<vmem>>, %arg5: memref<1x16xf32, #tpu.memory_space<vmem>>, %arg6: memref<1x16xf32, #tpu.memory_space<vmem>>, %arg7: memref<1x32xf32, #tpu.memory_space<vmem>>, %arg8: memref<1x32xf32, #tpu.memory_space<vmem>>, %arg9: memref<8x32xbf16, #tpu.memory_space<vmem>>, %arg10: memref<8x32xf32, #tpu.memory_space<vmem>>) attributes {dimension_semantics = [#tpu.dimension_semantics<parallel>, #tpu.dimension_semantics<parallel>, #tpu.dimension_semantics<arbitrary>], iteration_bounds = array<i64: 1, 1, 1>, scalar_prefetch = 0 : i64, scratch_operands = 1 : i64, tpu.core_type = #tpu.core_type<tc>, window_params = [{transform_indices = @transform_0, window_bounds = array<i64: 8, 16>}, {transform_indices = @transform_1, window_bounds = array<i64: 16, 32>}, {transform_indices = @transform_2, window_bounds = array<i64: 1, 16>}, {transform_indices = @transform_3, window_bounds = array<i64: 1, 16>}, {transform_indices = @transform_4, window_bounds = array<i64: 1, 32>}, {transform_indices = @transform_5, window_bounds = array<i64: 1, 32>}, {transform_indices = @transform_6, window_bounds = array<i64: 8, 32>}]} {
    %c0_i32 = arith.constant 0 : i32
    %0 = arith.cmpi eq, %arg2, %c0_i32 : i32
    %1 = arith.extui %0 : i1 to i32
    %c0_i32_0 = arith.constant 0 : i32
    %2 = arith.cmpi ne, %1, %c0_i32_0 : i32
    scf.if %2 {
      %cst_15 = arith.constant 0.000000e+00 : f32
      %22 = vector.broadcast %cst_15 : f32 to vector<8x32xf32>
      %c0_16 = arith.constant 0 : index
      %c0_17 = arith.constant 0 : index
      %23 = vector.load %arg10[%c0_16, %c0_17] : memref<8x32xf32, #tpu.memory_space<vmem>>, vector<8x32xf32>
      tpu.vector_store %arg10[%c0_16, %c0_17], %22 {strides = array<i32>} : memref<8x32xf32, #tpu.memory_space<vmem>>, vector<8x32xf32>,
    } else {
    }
    %c0 = arith.constant 0 : index
    %c0_1 = arith.constant 0 : index
    %3 = vector.load %arg3[%c0, %c0_1] : memref<8x16xbf16, #tpu.memory_space<vmem>>, vector<8x16xbf16>
    %4 = arith.extf %3 : vector<8x16xbf16> to vector<8x16xf32>
    %c0_2 = arith.constant 0 : index
    %c0_3 = arith.constant 0 : index
    %5 = vector.load %arg5[%c0_2, %c0_3] : memref<1x16xf32, #tpu.memory_space<vmem>>, vector<1x16xf32>
    %6 = vector.broadcast %5 : vector<1x16xf32> to vector<8x16xf32>
    %7 = arith.mulf %4, %6 : vector<8x16xf32>
    %c0_4 = arith.constant 0 : index
    %c0_5 = arith.constant 0 : index
    %8 = vector.load %arg6[%c0_4, %c0_5] : memref<1x16xf32, #tpu.memory_space<vmem>>, vector<1x16xf32>
    %9 = vector.broadcast %8 : vector<1x16xf32> to vector<8x16xf32>
    %10 = arith.addf %7, %9 : vector<8x16xf32>
    %cst = arith.constant 0.000000e+00 : f32
    %11 = vector.broadcast %cst : f32 to vector<8x16xf32>
    %12 = arith.maximumf %10, %11 : vector<8x16xf32>
    %13 = arith.truncf %12 : vector<8x16xf32> to vector<8x16xbf16>
    %c0_6 = arith.constant 0 : index
    %c0_7 = arith.constant 0 : index
    %14 = vector.load %arg10[%c0_6, %c0_7] : memref<8x32xf32, #tpu.memory_space<vmem>>, vector<8x32xf32>
    %c0_8 = arith.constant 0 : index
    %c0_9 = arith.constant 0 : index
    %15 = vector.load %arg4[%c0_8, %c0_9] : memref<16x32xbf16, #tpu.memory_space<vmem>>, vector<16x32xbf16>
    %cst_10 = arith.constant dense<0.000000e+00> : vector<8x32xf32>
    %16 = tpu.matmul %13, %15, %cst_10 {dimension_numbers = #tpu.dot_dimension_numbers<[1], [0], [0], [1], [0, 0, 1, 1], [], []>} : vector<8x16xbf16>, vector<16x32xbf16>, vector<8x32xf32> -> vector<8x32xf32>
    %17 = arith.addf %14, %16 : vector<8x32xf32>
    %c0_11 = arith.constant 0 : index
    %c0_12 = arith.constant 0 : index
    %18 = vector.load %arg10[%c0_11, %c0_12] : memref<8x32xf32, #tpu.memory_space<vmem>>, vector<8x32xf32>
    tpu.vector_store %arg10[%c0_11, %c0_12], %17 {strides = array<i32>} : memref<8x32xf32, #tpu.memory_space<vmem>>, vector<8x32xf32>,
    %c0_i32_13 = arith.constant 0 : i32
    %19 = arith.cmpi eq, %arg2, %c0_i32_13 : i32
    %20 = arith.extui %19 : i1 to i32
    %c0_i32_14 = arith.constant 0 : i32
    %21 = arith.cmpi ne, %20, %c0_i32_14 : i32
    scf.if %21 {
      %c0_15 = arith.constant 0 : index
      %c0_16 = arith.constant 0 : index
      %22 = vector.load %arg10[%c0_15, %c0_16] : memref<8x32xf32, #tpu.memory_space<vmem>>, vector<8x32xf32>
      %c0_17 = arith.constant 0 : index
      %c0_18 = arith.constant 0 : index
      %23 = vector.load %arg7[%c0_17, %c0_18] : memref<1x32xf32, #tpu.memory_space<vmem>>, vector<1x32xf32>
      %24 = vector.broadcast %23 : vector<1x32xf32> to vector<8x32xf32>
      %25 = arith.mulf %22, %24 : vector<8x32xf32>
      %c0_19 = arith.constant 0 : index
      %c0_20 = arith.constant 0 : index
      %26 = vector.load %arg8[%c0_19, %c0_20] : memref<1x32xf32, #tpu.memory_space<vmem>>, vector<1x32xf32>
      %27 = vector.broadcast %26 : vector<1x32xf32> to vector<8x32xf32>
      %28 = arith.addf %25, %27 : vector<8x32xf32>
      %cst_21 = arith.constant 0.000000e+00 : f32
      %29 = vector.broadcast %cst_21 : f32 to vector<8x32xf32>
      %30 = arith.maximumf %28, %29 : vector<8x32xf32>
      %31 = arith.truncf %30 : vector<8x32xf32> to vector<8x32xbf16>
      %c0_22 = arith.constant 0 : index
      %c0_23 = arith.constant 0 : index
      %32 = vector.load %arg9[%c0_22, %c0_23] : memref<8x32xbf16, #tpu.memory_space<vmem>>, vector<8x32xbf16>
      tpu.vector_store %arg9[%c0_22, %c0_23], %31 {strides = array<i32>} : memref<8x32xbf16, #tpu.memory_space<vmem>>, vector<8x32xbf16>,
    } else {
    }
    return
  }
  func.func @transform_0(%arg0: i32, %arg1: i32, %arg2: i32) -> (i32, i32) {
    %c0_i32 = arith.constant 0 : i32
    return %arg0, %arg2 : i32, i32
  }
  func.func @transform_1(%arg0: i32, %arg1: i32, %arg2: i32) -> (i32, i32) {
    %c0_i32 = arith.constant 0 : i32
    return %arg2, %arg1 : i32, i32
  }
  func.func @transform_2(%arg0: i32, %arg1: i32, %arg2: i32) -> (i32, i32) {
    %c0_i32 = arith.constant 0 : i32
    %c0_i32_0 = arith.constant 0 : i32
    return %c0_i32, %arg2 : i32, i32
  }
  func.func @transform_3(%arg0: i32, %arg1: i32, %arg2: i32) -> (i32, i32) {
    %c0_i32 = arith.constant 0 : i32
    %c0_i32_0 = arith.constant 0 : i32
    return %c0_i32, %arg2 : i32, i32
  }
  func.func @transform_4(%arg0: i32, %arg1: i32, %arg2: i32) -> (i32, i32) {
    %c0_i32 = arith.constant 0 : i32
    %c0_i32_0 = arith.constant 0 : i32
    return %c0_i32, %arg1 : i32, i32
  }
  func.func @transform_5(%arg0: i32, %arg1: i32, %arg2: i32) -> (i32, i32) {
    %c0_i32 = arith.constant 0 : i32
    %c0_i32_0 = arith.constant 0 : i32
    return %c0_i32, %arg1 : i32, i32
  }
  func.func @transform_6(%arg0: i32, %arg1: i32, %arg2: i32) -> (i32, i32) {
    %c0_i32 = arith.constant 0 : i32
    return %arg0, %arg1 : i32, i32
  }
}

module attributes {stable_mosaic.version = 11 : i64} {
  func.func @_pool_kernel(%arg0: i32, %arg1: i32, %arg2: memref<1x8x16xbf16, #tpu.memory_space<vmem>>, %arg3: memref<8x16xbf16, #tpu.memory_space<vmem>>, %arg4: memref<8x16xf32, #tpu.memory_space<vmem>>) attributes {dimension_semantics = [#tpu.dimension_semantics<parallel>, #tpu.dimension_semantics<arbitrary>], iteration_bounds = array<i64: 1, 4>, scalar_prefetch = 0 : i64, scratch_operands = 1 : i64, tpu.core_type = #tpu.core_type<tc>, window_params = [{transform_indices = @transform_0, window_bounds = array<i64: 1, 8, 16>}, {transform_indices = @transform_1, window_bounds = array<i64: 8, 16>}]} {
    %c0 = arith.constant 0 : index
    %c0_0 = arith.constant 0 : index
    %c0_1 = arith.constant 0 : index
    %0 = vector.load %arg2[%c0, %c0_0, %c0_1] : memref<1x8x16xbf16, #tpu.memory_space<vmem>>, vector<1x8x16xbf16>
    %1 = vector.shape_cast %0 : vector<1x8x16xbf16> to vector<8x16xbf16>
    %2 = arith.extf %1 : vector<8x16xbf16> to vector<8x16xf32>
    %c0_i32 = arith.constant 0 : i32
    %3 = arith.cmpi eq, %arg1, %c0_i32 : i32
    %4 = arith.extui %3 : i1 to i32
    %c0_i32_2 = arith.constant 0 : i32
    %5 = arith.cmpi ne, %4, %c0_i32_2 : i32
    scf.if %5 {
      %c0_6 = arith.constant 0 : index
      %c0_7 = arith.constant 0 : index
      %12 = vector.load %arg4[%c0_6, %c0_7] : memref<8x16xf32, #tpu.memory_space<vmem>>, vector<8x16xf32>
      tpu.vector_store %arg4[%c0_6, %c0_7], %2 {strides = array<i32>} : memref<8x16xf32, #tpu.memory_space<vmem>>, vector<8x16xf32>,
    } else {
    }
    %c0_i32_3 = arith.constant 0 : i32
    %6 = arith.cmpi sgt, %arg1, %c0_i32_3 : i32
    %7 = arith.extui %6 : i1 to i32
    %c0_i32_4 = arith.constant 0 : i32
    %8 = arith.cmpi ne, %7, %c0_i32_4 : i32
    scf.if %8 {
      %c0_6 = arith.constant 0 : index
      %c0_7 = arith.constant 0 : index
      %12 = vector.load %arg4[%c0_6, %c0_7] : memref<8x16xf32, #tpu.memory_space<vmem>>, vector<8x16xf32>
      %13 = arith.addf %12, %2 : vector<8x16xf32>
      %c0_8 = arith.constant 0 : index
      %c0_9 = arith.constant 0 : index
      %14 = vector.load %arg4[%c0_8, %c0_9] : memref<8x16xf32, #tpu.memory_space<vmem>>, vector<8x16xf32>
      tpu.vector_store %arg4[%c0_8, %c0_9], %13 {strides = array<i32>} : memref<8x16xf32, #tpu.memory_space<vmem>>, vector<8x16xf32>,
    } else {
    }
    %c3_i32 = arith.constant 3 : i32
    %9 = arith.cmpi eq, %arg1, %c3_i32 : i32
    %10 = arith.extui %9 : i1 to i32
    %c0_i32_5 = arith.constant 0 : i32
    %11 = arith.cmpi ne, %10, %c0_i32_5 : i32
    scf.if %11 {
      %c0_6 = arith.constant 0 : index
      %c0_7 = arith.constant 0 : index
      %12 = vector.load %arg4[%c0_6, %c0_7] : memref<8x16xf32, #tpu.memory_space<vmem>>, vector<8x16xf32>
      %13 = arith.truncf %12 : vector<8x16xf32> to vector<8x16xbf16>
      %c0_8 = arith.constant 0 : index
      %c0_9 = arith.constant 0 : index
      %14 = vector.load %arg3[%c0_8, %c0_9] : memref<8x16xbf16, #tpu.memory_space<vmem>>, vector<8x16xbf16>
      tpu.vector_store %arg3[%c0_8, %c0_9], %13 {strides = array<i32>} : memref<8x16xbf16, #tpu.memory_space<vmem>>, vector<8x16xbf16>,
    } else {
    }
    return
  }
  func.func @transform_0(%arg0: i32, %arg1: i32) -> (i32, i32, i32) {
    %c0_i32 = arith.constant 0 : i32
    %c0_i32_0 = arith.constant 0 : i32
    return %arg1, %arg0, %c0_i32 : i32, i32, i32
  }
  func.func @transform_1(%arg0: i32, %arg1: i32) -> (i32, i32) {
    %c0_i32 = arith.constant 0 : i32
    %c0_i32_0 = arith.constant 0 : i32
    return %arg0, %c0_i32 : i32, i32
  }
}

module attributes {stable_mosaic.version = 11 : i64} {
  func.func @kernel(%arg0: i32, %arg1: i32, %arg2: i32, %arg3: memref<8x288xbf16, #tpu.memory_space<vmem>>, %arg4: memref<288x8xbf16, #tpu.memory_space<vmem>>, %arg5: memref<1x8xf32, #tpu.memory_space<vmem>>, %arg6: memref<1x8xf32, #tpu.memory_space<vmem>>, %arg7: memref<8x8xbf16, #tpu.memory_space<vmem>>, %arg8: memref<8x8xf32, #tpu.memory_space<vmem>>) attributes {dimension_semantics = [#tpu.dimension_semantics<parallel>, #tpu.dimension_semantics<parallel>, #tpu.dimension_semantics<arbitrary>], iteration_bounds = array<i64: 1, 1, 1>, scalar_prefetch = 0 : i64, scratch_operands = 1 : i64, tpu.core_type = #tpu.core_type<tc>, window_params = [{transform_indices = @transform_0, window_bounds = array<i64: 8, 288>}, {transform_indices = @transform_1, window_bounds = array<i64: 288, 8>}, {transform_indices = @transform_2, window_bounds = array<i64: 1, 8>}, {transform_indices = @transform_3, window_bounds = array<i64: 1, 8>}, {transform_indices = @transform_4, window_bounds = array<i64: 8, 8>}]} {
    %c0_i32 = arith.constant 0 : i32
    %0 = arith.cmpi eq, %arg2, %c0_i32 : i32
    %1 = arith.extui %0 : i1 to i32
    %c0_i32_0 = arith.constant 0 : i32
    %2 = arith.cmpi ne, %1, %c0_i32_0 : i32
    scf.if %2 {
      %cst_10 = arith.constant 0.000000e+00 : f32
      %12 = vector.broadcast %cst_10 : f32 to vector<8x8xf32>
      %c0_11 = arith.constant 0 : index
      %c0_12 = arith.constant 0 : index
      %13 = vector.load %arg8[%c0_11, %c0_12] : memref<8x8xf32, #tpu.memory_space<vmem>>, vector<8x8xf32>
      tpu.vector_store %arg8[%c0_11, %c0_12], %12 {strides = array<i32>} : memref<8x8xf32, #tpu.memory_space<vmem>>, vector<8x8xf32>,
    } else {
    }
    %c0 = arith.constant 0 : index
    %c0_1 = arith.constant 0 : index
    %3 = vector.load %arg3[%c0, %c0_1] : memref<8x288xbf16, #tpu.memory_space<vmem>>, vector<8x288xbf16>
    %c0_2 = arith.constant 0 : index
    %c0_3 = arith.constant 0 : index
    %4 = vector.load %arg8[%c0_2, %c0_3] : memref<8x8xf32, #tpu.memory_space<vmem>>, vector<8x8xf32>
    %c0_4 = arith.constant 0 : index
    %c0_5 = arith.constant 0 : index
    %5 = vector.load %arg4[%c0_4, %c0_5] : memref<288x8xbf16, #tpu.memory_space<vmem>>, vector<288x8xbf16>
    %cst = arith.constant dense<0.000000e+00> : vector<8x8xf32>
    %6 = tpu.matmul %3, %5, %cst {dimension_numbers = #tpu.dot_dimension_numbers<[1], [0], [0], [1], [0, 0, 1, 1], [], []>} : vector<8x288xbf16>, vector<288x8xbf16>, vector<8x8xf32> -> vector<8x8xf32>
    %7 = arith.addf %4, %6 : vector<8x8xf32>
    %c0_6 = arith.constant 0 : index
    %c0_7 = arith.constant 0 : index
    %8 = vector.load %arg8[%c0_6, %c0_7] : memref<8x8xf32, #tpu.memory_space<vmem>>, vector<8x8xf32>
    tpu.vector_store %arg8[%c0_6, %c0_7], %7 {strides = array<i32>} : memref<8x8xf32, #tpu.memory_space<vmem>>, vector<8x8xf32>,
    %c0_i32_8 = arith.constant 0 : i32
    %9 = arith.cmpi eq, %arg2, %c0_i32_8 : i32
    %10 = arith.extui %9 : i1 to i32
    %c0_i32_9 = arith.constant 0 : i32
    %11 = arith.cmpi ne, %10, %c0_i32_9 : i32
    scf.if %11 {
      %c0_10 = arith.constant 0 : index
      %c0_11 = arith.constant 0 : index
      %12 = vector.load %arg8[%c0_10, %c0_11] : memref<8x8xf32, #tpu.memory_space<vmem>>, vector<8x8xf32>
      %c0_12 = arith.constant 0 : index
      %c0_13 = arith.constant 0 : index
      %13 = vector.load %arg5[%c0_12, %c0_13] : memref<1x8xf32, #tpu.memory_space<vmem>>, vector<1x8xf32>
      %14 = vector.broadcast %13 : vector<1x8xf32> to vector<8x8xf32>
      %15 = arith.mulf %12, %14 : vector<8x8xf32>
      %c0_14 = arith.constant 0 : index
      %c0_15 = arith.constant 0 : index
      %16 = vector.load %arg6[%c0_14, %c0_15] : memref<1x8xf32, #tpu.memory_space<vmem>>, vector<1x8xf32>
      %17 = vector.broadcast %16 : vector<1x8xf32> to vector<8x8xf32>
      %18 = arith.addf %15, %17 : vector<8x8xf32>
      %19 = arith.truncf %18 : vector<8x8xf32> to vector<8x8xbf16>
      %c0_16 = arith.constant 0 : index
      %c0_17 = arith.constant 0 : index
      %20 = vector.load %arg7[%c0_16, %c0_17] : memref<8x8xbf16, #tpu.memory_space<vmem>>, vector<8x8xbf16>
      tpu.vector_store %arg7[%c0_16, %c0_17], %19 {strides = array<i32>} : memref<8x8xbf16, #tpu.memory_space<vmem>>, vector<8x8xbf16>,
    } else {
    }
    return
  }
  func.func @transform_0(%arg0: i32, %arg1: i32, %arg2: i32) -> (i32, i32) {
    %c0_i32 = arith.constant 0 : i32
    return %arg0, %arg2 : i32, i32
  }
  func.func @transform_1(%arg0: i32, %arg1: i32, %arg2: i32) -> (i32, i32) {
    %c0_i32 = arith.constant 0 : i32
    return %arg2, %arg1 : i32, i32
  }
  func.func @transform_2(%arg0: i32, %arg1: i32, %arg2: i32) -> (i32, i32) {
    %c0_i32 = arith.constant 0 : i32
    %c0_i32_0 = arith.constant 0 : i32
    return %c0_i32, %arg1 : i32, i32
  }
  func.func @transform_3(%arg0: i32, %arg1: i32, %arg2: i32) -> (i32, i32) {
    %c0_i32 = arith.constant 0 : i32
    %c0_i32_0 = arith.constant 0 : i32
    return %c0_i32, %arg1 : i32, i32
  }
  func.func @transform_4(%arg0: i32, %arg1: i32, %arg2: i32) -> (i32, i32) {
    %c0_i32 = arith.constant 0 : i32
    return %arg0, %arg1 : i32, i32
  }
}

module attributes {stable_mosaic.version = 11 : i64} {
  func.func @kernel(%arg0: i32, %arg1: i32, %arg2: i32, %arg3: memref<8x32xbf16, #tpu.memory_space<vmem>>, %arg4: memref<32x16xbf16, #tpu.memory_space<vmem>>, %arg5: memref<1x32xf32, #tpu.memory_space<vmem>>, %arg6: memref<1x32xf32, #tpu.memory_space<vmem>>, %arg7: memref<1x16xf32, #tpu.memory_space<vmem>>, %arg8: memref<1x16xf32, #tpu.memory_space<vmem>>, %arg9: memref<8x16xbf16, #tpu.memory_space<vmem>>, %arg10: memref<8x16xf32, #tpu.memory_space<vmem>>) attributes {dimension_semantics = [#tpu.dimension_semantics<parallel>, #tpu.dimension_semantics<parallel>, #tpu.dimension_semantics<arbitrary>], iteration_bounds = array<i64: 1, 1, 1>, scalar_prefetch = 0 : i64, scratch_operands = 1 : i64, tpu.core_type = #tpu.core_type<tc>, window_params = [{transform_indices = @transform_0, window_bounds = array<i64: 8, 32>}, {transform_indices = @transform_1, window_bounds = array<i64: 32, 16>}, {transform_indices = @transform_2, window_bounds = array<i64: 1, 32>}, {transform_indices = @transform_3, window_bounds = array<i64: 1, 32>}, {transform_indices = @transform_4, window_bounds = array<i64: 1, 16>}, {transform_indices = @transform_5, window_bounds = array<i64: 1, 16>}, {transform_indices = @transform_6, window_bounds = array<i64: 8, 16>}]} {
    %c0_i32 = arith.constant 0 : i32
    %0 = arith.cmpi eq, %arg2, %c0_i32 : i32
    %1 = arith.extui %0 : i1 to i32
    %c0_i32_0 = arith.constant 0 : i32
    %2 = arith.cmpi ne, %1, %c0_i32_0 : i32
    scf.if %2 {
      %cst_15 = arith.constant 0.000000e+00 : f32
      %22 = vector.broadcast %cst_15 : f32 to vector<8x16xf32>
      %c0_16 = arith.constant 0 : index
      %c0_17 = arith.constant 0 : index
      %23 = vector.load %arg10[%c0_16, %c0_17] : memref<8x16xf32, #tpu.memory_space<vmem>>, vector<8x16xf32>
      tpu.vector_store %arg10[%c0_16, %c0_17], %22 {strides = array<i32>} : memref<8x16xf32, #tpu.memory_space<vmem>>, vector<8x16xf32>,
    } else {
    }
    %c0 = arith.constant 0 : index
    %c0_1 = arith.constant 0 : index
    %3 = vector.load %arg3[%c0, %c0_1] : memref<8x32xbf16, #tpu.memory_space<vmem>>, vector<8x32xbf16>
    %4 = arith.extf %3 : vector<8x32xbf16> to vector<8x32xf32>
    %c0_2 = arith.constant 0 : index
    %c0_3 = arith.constant 0 : index
    %5 = vector.load %arg5[%c0_2, %c0_3] : memref<1x32xf32, #tpu.memory_space<vmem>>, vector<1x32xf32>
    %6 = vector.broadcast %5 : vector<1x32xf32> to vector<8x32xf32>
    %7 = arith.mulf %4, %6 : vector<8x32xf32>
    %c0_4 = arith.constant 0 : index
    %c0_5 = arith.constant 0 : index
    %8 = vector.load %arg6[%c0_4, %c0_5] : memref<1x32xf32, #tpu.memory_space<vmem>>, vector<1x32xf32>
    %9 = vector.broadcast %8 : vector<1x32xf32> to vector<8x32xf32>
    %10 = arith.addf %7, %9 : vector<8x32xf32>
    %cst = arith.constant 0.000000e+00 : f32
    %11 = vector.broadcast %cst : f32 to vector<8x32xf32>
    %12 = arith.maximumf %10, %11 : vector<8x32xf32>
    %13 = arith.truncf %12 : vector<8x32xf32> to vector<8x32xbf16>
    %c0_6 = arith.constant 0 : index
    %c0_7 = arith.constant 0 : index
    %14 = vector.load %arg10[%c0_6, %c0_7] : memref<8x16xf32, #tpu.memory_space<vmem>>, vector<8x16xf32>
    %c0_8 = arith.constant 0 : index
    %c0_9 = arith.constant 0 : index
    %15 = vector.load %arg4[%c0_8, %c0_9] : memref<32x16xbf16, #tpu.memory_space<vmem>>, vector<32x16xbf16>
    %cst_10 = arith.constant dense<0.000000e+00> : vector<8x16xf32>
    %16 = tpu.matmul %13, %15, %cst_10 {dimension_numbers = #tpu.dot_dimension_numbers<[1], [0], [0], [1], [0, 0, 1, 1], [], []>} : vector<8x32xbf16>, vector<32x16xbf16>, vector<8x16xf32> -> vector<8x16xf32>
    %17 = arith.addf %14, %16 : vector<8x16xf32>
    %c0_11 = arith.constant 0 : index
    %c0_12 = arith.constant 0 : index
    %18 = vector.load %arg10[%c0_11, %c0_12] : memref<8x16xf32, #tpu.memory_space<vmem>>, vector<8x16xf32>
    tpu.vector_store %arg10[%c0_11, %c0_12], %17 {strides = array<i32>} : memref<8x16xf32, #tpu.memory_space<vmem>>, vector<8x16xf32>,
    %c0_i32_13 = arith.constant 0 : i32
    %19 = arith.cmpi eq, %arg2, %c0_i32_13 : i32
    %20 = arith.extui %19 : i1 to i32
    %c0_i32_14 = arith.constant 0 : i32
    %21 = arith.cmpi ne, %20, %c0_i32_14 : i32
    scf.if %21 {
      %c0_15 = arith.constant 0 : index
      %c0_16 = arith.constant 0 : index
      %22 = vector.load %arg10[%c0_15, %c0_16] : memref<8x16xf32, #tpu.memory_space<vmem>>, vector<8x16xf32>
      %c0_17 = arith.constant 0 : index
      %c0_18 = arith.constant 0 : index
      %23 = vector.load %arg7[%c0_17, %c0_18] : memref<1x16xf32, #tpu.memory_space<vmem>>, vector<1x16xf32>
      %24 = vector.broadcast %23 : vector<1x16xf32> to vector<8x16xf32>
      %25 = arith.mulf %22, %24 : vector<8x16xf32>
      %c0_19 = arith.constant 0 : index
      %c0_20 = arith.constant 0 : index
      %26 = vector.load %arg8[%c0_19, %c0_20] : memref<1x16xf32, #tpu.memory_space<vmem>>, vector<1x16xf32>
      %27 = vector.broadcast %26 : vector<1x16xf32> to vector<8x16xf32>
      %28 = arith.addf %25, %27 : vector<8x16xf32>
      %29 = arith.truncf %28 : vector<8x16xf32> to vector<8x16xbf16>
      %c0_21 = arith.constant 0 : index
      %c0_22 = arith.constant 0 : index
      %30 = vector.load %arg9[%c0_21, %c0_22] : memref<8x16xbf16, #tpu.memory_space<vmem>>, vector<8x16xbf16>
      tpu.vector_store %arg9[%c0_21, %c0_22], %29 {strides = array<i32>} : memref<8x16xbf16, #tpu.memory_space<vmem>>, vector<8x16xbf16>,
    } else {
    }
    return
  }
  func.func @transform_0(%arg0: i32, %arg1: i32, %arg2: i32) -> (i32, i32) {
    %c0_i32 = arith.constant 0 : i32
    return %arg0, %arg2 : i32, i32
  }
  func.func @transform_1(%arg0: i32, %arg1: i32, %arg2: i32) -> (i32, i32) {
    %c0_i32 = arith.constant 0 : i32
    return %arg2, %arg1 : i32, i32
  }
  func.func @transform_2(%arg0: i32, %arg1: i32, %arg2: i32) -> (i32, i32) {
    %c0_i32 = arith.constant 0 : i32
    %c0_i32_0 = arith.constant 0 : i32
    return %c0_i32, %arg2 : i32, i32
  }
  func.func @transform_3(%arg0: i32, %arg1: i32, %arg2: i32) -> (i32, i32) {
    %c0_i32 = arith.constant 0 : i32
    %c0_i32_0 = arith.constant 0 : i32
    return %c0_i32, %arg2 : i32, i32
  }
  func.func @transform_4(%arg0: i32, %arg1: i32, %arg2: i32) -> (i32, i32) {
    %c0_i32 = arith.constant 0 : i32
    %c0_i32_0 = arith.constant 0 : i32
    return %c0_i32, %arg1 : i32, i32
  }
  func.func @transform_5(%arg0: i32, %arg1: i32, %arg2: i32) -> (i32, i32) {
    %c0_i32 = arith.constant 0 : i32
    %c0_i32_0 = arith.constant 0 : i32
    return %c0_i32, %arg1 : i32, i32
  }
  func.func @transform_6(%arg0: i32, %arg1: i32, %arg2: i32) -> (i32, i32) {
    %c0_i32 = arith.constant 0 : i32
    return %arg0, %arg1 : i32, i32
  }
}

module attributes {stable_mosaic.version = 11 : i64} {
  func.func @kernel(%arg0: i32, %arg1: i32, %arg2: i32, %arg3: memref<8x24xbf16, #tpu.memory_space<vmem>>, %arg4: memref<24x32xbf16, #tpu.memory_space<vmem>>, %arg5: memref<1x24xf32, #tpu.memory_space<vmem>>, %arg6: memref<1x24xf32, #tpu.memory_space<vmem>>, %arg7: memref<1x32xf32, #tpu.memory_space<vmem>>, %arg8: memref<1x32xf32, #tpu.memory_space<vmem>>, %arg9: memref<8x32xbf16, #tpu.memory_space<vmem>>, %arg10: memref<8x32xf32, #tpu.memory_space<vmem>>) attributes {dimension_semantics = [#tpu.dimension_semantics<parallel>, #tpu.dimension_semantics<parallel>, #tpu.dimension_semantics<arbitrary>], iteration_bounds = array<i64: 1, 1, 1>, scalar_prefetch = 0 : i64, scratch_operands = 1 : i64, tpu.core_type = #tpu.core_type<tc>, window_params = [{transform_indices = @transform_0, window_bounds = array<i64: 8, 24>}, {transform_indices = @transform_1, window_bounds = array<i64: 24, 32>}, {transform_indices = @transform_2, window_bounds = array<i64: 1, 24>}, {transform_indices = @transform_3, window_bounds = array<i64: 1, 24>}, {transform_indices = @transform_4, window_bounds = array<i64: 1, 32>}, {transform_indices = @transform_5, window_bounds = array<i64: 1, 32>}, {transform_indices = @transform_6, window_bounds = array<i64: 8, 32>}]} {
    %c0_i32 = arith.constant 0 : i32
    %0 = arith.cmpi eq, %arg2, %c0_i32 : i32
    %1 = arith.extui %0 : i1 to i32
    %c0_i32_0 = arith.constant 0 : i32
    %2 = arith.cmpi ne, %1, %c0_i32_0 : i32
    scf.if %2 {
      %cst_15 = arith.constant 0.000000e+00 : f32
      %22 = vector.broadcast %cst_15 : f32 to vector<8x32xf32>
      %c0_16 = arith.constant 0 : index
      %c0_17 = arith.constant 0 : index
      %23 = vector.load %arg10[%c0_16, %c0_17] : memref<8x32xf32, #tpu.memory_space<vmem>>, vector<8x32xf32>
      tpu.vector_store %arg10[%c0_16, %c0_17], %22 {strides = array<i32>} : memref<8x32xf32, #tpu.memory_space<vmem>>, vector<8x32xf32>,
    } else {
    }
    %c0 = arith.constant 0 : index
    %c0_1 = arith.constant 0 : index
    %3 = vector.load %arg3[%c0, %c0_1] : memref<8x24xbf16, #tpu.memory_space<vmem>>, vector<8x24xbf16>
    %4 = arith.extf %3 : vector<8x24xbf16> to vector<8x24xf32>
    %c0_2 = arith.constant 0 : index
    %c0_3 = arith.constant 0 : index
    %5 = vector.load %arg5[%c0_2, %c0_3] : memref<1x24xf32, #tpu.memory_space<vmem>>, vector<1x24xf32>
    %6 = vector.broadcast %5 : vector<1x24xf32> to vector<8x24xf32>
    %7 = arith.mulf %4, %6 : vector<8x24xf32>
    %c0_4 = arith.constant 0 : index
    %c0_5 = arith.constant 0 : index
    %8 = vector.load %arg6[%c0_4, %c0_5] : memref<1x24xf32, #tpu.memory_space<vmem>>, vector<1x24xf32>
    %9 = vector.broadcast %8 : vector<1x24xf32> to vector<8x24xf32>
    %10 = arith.addf %7, %9 : vector<8x24xf32>
    %cst = arith.constant 0.000000e+00 : f32
    %11 = vector.broadcast %cst : f32 to vector<8x24xf32>
    %12 = arith.maximumf %10, %11 : vector<8x24xf32>
    %13 = arith.truncf %12 : vector<8x24xf32> to vector<8x24xbf16>
    %c0_6 = arith.constant 0 : index
    %c0_7 = arith.constant 0 : index
    %14 = vector.load %arg10[%c0_6, %c0_7] : memref<8x32xf32, #tpu.memory_space<vmem>>, vector<8x32xf32>
    %c0_8 = arith.constant 0 : index
    %c0_9 = arith.constant 0 : index
    %15 = vector.load %arg4[%c0_8, %c0_9] : memref<24x32xbf16, #tpu.memory_space<vmem>>, vector<24x32xbf16>
    %cst_10 = arith.constant dense<0.000000e+00> : vector<8x32xf32>
    %16 = tpu.matmul %13, %15, %cst_10 {dimension_numbers = #tpu.dot_dimension_numbers<[1], [0], [0], [1], [0, 0, 1, 1], [], []>} : vector<8x24xbf16>, vector<24x32xbf16>, vector<8x32xf32> -> vector<8x32xf32>
    %17 = arith.addf %14, %16 : vector<8x32xf32>
    %c0_11 = arith.constant 0 : index
    %c0_12 = arith.constant 0 : index
    %18 = vector.load %arg10[%c0_11, %c0_12] : memref<8x32xf32, #tpu.memory_space<vmem>>, vector<8x32xf32>
    tpu.vector_store %arg10[%c0_11, %c0_12], %17 {strides = array<i32>} : memref<8x32xf32, #tpu.memory_space<vmem>>, vector<8x32xf32>,
    %c0_i32_13 = arith.constant 0 : i32
    %19 = arith.cmpi eq, %arg2, %c0_i32_13 : i32
    %20 = arith.extui %19 : i1 to i32
    %c0_i32_14 = arith.constant 0 : i32
    %21 = arith.cmpi ne, %20, %c0_i32_14 : i32
    scf.if %21 {
      %c0_15 = arith.constant 0 : index
      %c0_16 = arith.constant 0 : index
      %22 = vector.load %arg10[%c0_15, %c0_16] : memref<8x32xf32, #tpu.memory_space<vmem>>, vector<8x32xf32>
      %c0_17 = arith.constant 0 : index
      %c0_18 = arith.constant 0 : index
      %23 = vector.load %arg7[%c0_17, %c0_18] : memref<1x32xf32, #tpu.memory_space<vmem>>, vector<1x32xf32>
      %24 = vector.broadcast %23 : vector<1x32xf32> to vector<8x32xf32>
      %25 = arith.mulf %22, %24 : vector<8x32xf32>
      %c0_19 = arith.constant 0 : index
      %c0_20 = arith.constant 0 : index
      %26 = vector.load %arg8[%c0_19, %c0_20] : memref<1x32xf32, #tpu.memory_space<vmem>>, vector<1x32xf32>
      %27 = vector.broadcast %26 : vector<1x32xf32> to vector<8x32xf32>
      %28 = arith.addf %25, %27 : vector<8x32xf32>
      %cst_21 = arith.constant 0.000000e+00 : f32
      %29 = vector.broadcast %cst_21 : f32 to vector<8x32xf32>
      %30 = arith.maximumf %28, %29 : vector<8x32xf32>
      %31 = arith.truncf %30 : vector<8x32xf32> to vector<8x32xbf16>
      %c0_22 = arith.constant 0 : index
      %c0_23 = arith.constant 0 : index
      %32 = vector.load %arg9[%c0_22, %c0_23] : memref<8x32xbf16, #tpu.memory_space<vmem>>, vector<8x32xbf16>
      tpu.vector_store %arg9[%c0_22, %c0_23], %31 {strides = array<i32>} : memref<8x32xbf16, #tpu.memory_space<vmem>>, vector<8x32xbf16>,
    } else {
    }
    return
  }
  func.func @transform_0(%arg0: i32, %arg1: i32, %arg2: i32) -> (i32, i32) {
    %c0_i32 = arith.constant 0 : i32
    return %arg0, %arg2 : i32, i32
  }
  func.func @transform_1(%arg0: i32, %arg1: i32, %arg2: i32) -> (i32, i32) {
    %c0_i32 = arith.constant 0 : i32
    return %arg2, %arg1 : i32, i32
  }
  func.func @transform_2(%arg0: i32, %arg1: i32, %arg2: i32) -> (i32, i32) {
    %c0_i32 = arith.constant 0 : i32
    %c0_i32_0 = arith.constant 0 : i32
    return %c0_i32, %arg2 : i32, i32
  }
  func.func @transform_3(%arg0: i32, %arg1: i32, %arg2: i32) -> (i32, i32) {
    %c0_i32 = arith.constant 0 : i32
    %c0_i32_0 = arith.constant 0 : i32
    return %c0_i32, %arg2 : i32, i32
  }
  func.func @transform_4(%arg0: i32, %arg1: i32, %arg2: i32) -> (i32, i32) {
    %c0_i32 = arith.constant 0 : i32
    %c0_i32_0 = arith.constant 0 : i32
    return %c0_i32, %arg1 : i32, i32
  }
  func.func @transform_5(%arg0: i32, %arg1: i32, %arg2: i32) -> (i32, i32) {
    %c0_i32 = arith.constant 0 : i32
    %c0_i32_0 = arith.constant 0 : i32
    return %c0_i32, %arg1 : i32, i32
  }
  func.func @transform_6(%arg0: i32, %arg1: i32, %arg2: i32) -> (i32, i32) {
    %c0_i32 = arith.constant 0 : i32
    return %arg0, %arg1 : i32, i32
  }
}

module attributes {stable_mosaic.version = 11 : i64} {
  func.func @_pool_kernel(%arg0: i32, %arg1: i32, %arg2: memref<1x2x16xbf16, #tpu.memory_space<vmem>>, %arg3: memref<2x16xbf16, #tpu.memory_space<vmem>>, %arg4: memref<2x16xf32, #tpu.memory_space<vmem>>) attributes {dimension_semantics = [#tpu.dimension_semantics<parallel>, #tpu.dimension_semantics<arbitrary>], iteration_bounds = array<i64: 1, 4>, scalar_prefetch = 0 : i64, scratch_operands = 1 : i64, tpu.core_type = #tpu.core_type<tc>, window_params = [{transform_indices = @transform_0, window_bounds = array<i64: 1, 2, 16>}, {transform_indices = @transform_1, window_bounds = array<i64: 2, 16>}]} {
    %c0 = arith.constant 0 : index
    %c0_0 = arith.constant 0 : index
    %c0_1 = arith.constant 0 : index
    %0 = vector.load %arg2[%c0, %c0_0, %c0_1] : memref<1x2x16xbf16, #tpu.memory_space<vmem>>, vector<1x2x16xbf16>
    %1 = vector.shape_cast %0 : vector<1x2x16xbf16> to vector<2x16xbf16>
    %2 = arith.extf %1 : vector<2x16xbf16> to vector<2x16xf32>
    %c0_i32 = arith.constant 0 : i32
    %3 = arith.cmpi eq, %arg1, %c0_i32 : i32
    %4 = arith.extui %3 : i1 to i32
    %c0_i32_2 = arith.constant 0 : i32
    %5 = arith.cmpi ne, %4, %c0_i32_2 : i32
    scf.if %5 {
      %c0_6 = arith.constant 0 : index
      %c0_7 = arith.constant 0 : index
      %12 = vector.load %arg4[%c0_6, %c0_7] : memref<2x16xf32, #tpu.memory_space<vmem>>, vector<2x16xf32>
      tpu.vector_store %arg4[%c0_6, %c0_7], %2 {strides = array<i32>} : memref<2x16xf32, #tpu.memory_space<vmem>>, vector<2x16xf32>,
    } else {
    }
    %c0_i32_3 = arith.constant 0 : i32
    %6 = arith.cmpi sgt, %arg1, %c0_i32_3 : i32
    %7 = arith.extui %6 : i1 to i32
    %c0_i32_4 = arith.constant 0 : i32
    %8 = arith.cmpi ne, %7, %c0_i32_4 : i32
    scf.if %8 {
      %c0_6 = arith.constant 0 : index
      %c0_7 = arith.constant 0 : index
      %12 = vector.load %arg4[%c0_6, %c0_7] : memref<2x16xf32, #tpu.memory_space<vmem>>, vector<2x16xf32>
      %13 = arith.addf %12, %2 : vector<2x16xf32>
      %c0_8 = arith.constant 0 : index
      %c0_9 = arith.constant 0 : index
      %14 = vector.load %arg4[%c0_8, %c0_9] : memref<2x16xf32, #tpu.memory_space<vmem>>, vector<2x16xf32>
      tpu.vector_store %arg4[%c0_8, %c0_9], %13 {strides = array<i32>} : memref<2x16xf32, #tpu.memory_space<vmem>>, vector<2x16xf32>,
    } else {
    }
    %c3_i32 = arith.constant 3 : i32
    %9 = arith.cmpi eq, %arg1, %c3_i32 : i32
    %10 = arith.extui %9 : i1 to i32
    %c0_i32_5 = arith.constant 0 : i32
    %11 = arith.cmpi ne, %10, %c0_i32_5 : i32
    scf.if %11 {
      %c0_6 = arith.constant 0 : index
      %c0_7 = arith.constant 0 : index
      %12 = vector.load %arg4[%c0_6, %c0_7] : memref<2x16xf32, #tpu.memory_space<vmem>>, vector<2x16xf32>
      %13 = arith.truncf %12 : vector<2x16xf32> to vector<2x16xbf16>
      %c0_8 = arith.constant 0 : index
      %c0_9 = arith.constant 0 : index
      %14 = vector.load %arg3[%c0_8, %c0_9] : memref<2x16xbf16, #tpu.memory_space<vmem>>, vector<2x16xbf16>
      tpu.vector_store %arg3[%c0_8, %c0_9], %13 {strides = array<i32>} : memref<2x16xbf16, #tpu.memory_space<vmem>>, vector<2x16xbf16>,
    } else {
    }
    return
  }
  func.func @transform_0(%arg0: i32, %arg1: i32) -> (i32, i32, i32) {
    %c0_i32 = arith.constant 0 : i32
    %c0_i32_0 = arith.constant 0 : i32
    return %arg1, %arg0, %c0_i32 : i32, i32, i32
  }
  func.func @transform_1(%arg0: i32, %arg1: i32) -> (i32, i32) {
    %c0_i32 = arith.constant 0 : i32
    %c0_i32_0 = arith.constant 0 : i32
    return %arg0, %c0_i32 : i32, i32
  }
}

module attributes {stable_mosaic.version = 11 : i64} {
  func.func @kernel(%arg0: i32, %arg1: i32, %arg2: i32, %arg3: memref<2x16xbf16, #tpu.memory_space<vmem>>, %arg4: memref<16x32xbf16, #tpu.memory_space<vmem>>, %arg5: memref<1x16xf32, #tpu.memory_space<vmem>>, %arg6: memref<1x16xf32, #tpu.memory_space<vmem>>, %arg7: memref<1x32xf32, #tpu.memory_space<vmem>>, %arg8: memref<1x32xf32, #tpu.memory_space<vmem>>, %arg9: memref<2x32xbf16, #tpu.memory_space<vmem>>, %arg10: memref<2x32xf32, #tpu.memory_space<vmem>>) attributes {dimension_semantics = [#tpu.dimension_semantics<parallel>, #tpu.dimension_semantics<parallel>, #tpu.dimension_semantics<arbitrary>], iteration_bounds = array<i64: 1, 1, 1>, scalar_prefetch = 0 : i64, scratch_operands = 1 : i64, tpu.core_type = #tpu.core_type<tc>, window_params = [{transform_indices = @transform_0, window_bounds = array<i64: 2, 16>}, {transform_indices = @transform_1, window_bounds = array<i64: 16, 32>}, {transform_indices = @transform_2, window_bounds = array<i64: 1, 16>}, {transform_indices = @transform_3, window_bounds = array<i64: 1, 16>}, {transform_indices = @transform_4, window_bounds = array<i64: 1, 32>}, {transform_indices = @transform_5, window_bounds = array<i64: 1, 32>}, {transform_indices = @transform_6, window_bounds = array<i64: 2, 32>}]} {
    %c0_i32 = arith.constant 0 : i32
    %0 = arith.cmpi eq, %arg2, %c0_i32 : i32
    %1 = arith.extui %0 : i1 to i32
    %c0_i32_0 = arith.constant 0 : i32
    %2 = arith.cmpi ne, %1, %c0_i32_0 : i32
    scf.if %2 {
      %cst_15 = arith.constant 0.000000e+00 : f32
      %22 = vector.broadcast %cst_15 : f32 to vector<2x32xf32>
      %c0_16 = arith.constant 0 : index
      %c0_17 = arith.constant 0 : index
      %23 = vector.load %arg10[%c0_16, %c0_17] : memref<2x32xf32, #tpu.memory_space<vmem>>, vector<2x32xf32>
      tpu.vector_store %arg10[%c0_16, %c0_17], %22 {strides = array<i32>} : memref<2x32xf32, #tpu.memory_space<vmem>>, vector<2x32xf32>,
    } else {
    }
    %c0 = arith.constant 0 : index
    %c0_1 = arith.constant 0 : index
    %3 = vector.load %arg3[%c0, %c0_1] : memref<2x16xbf16, #tpu.memory_space<vmem>>, vector<2x16xbf16>
    %4 = arith.extf %3 : vector<2x16xbf16> to vector<2x16xf32>
    %c0_2 = arith.constant 0 : index
    %c0_3 = arith.constant 0 : index
    %5 = vector.load %arg5[%c0_2, %c0_3] : memref<1x16xf32, #tpu.memory_space<vmem>>, vector<1x16xf32>
    %6 = vector.broadcast %5 : vector<1x16xf32> to vector<2x16xf32>
    %7 = arith.mulf %4, %6 : vector<2x16xf32>
    %c0_4 = arith.constant 0 : index
    %c0_5 = arith.constant 0 : index
    %8 = vector.load %arg6[%c0_4, %c0_5] : memref<1x16xf32, #tpu.memory_space<vmem>>, vector<1x16xf32>
    %9 = vector.broadcast %8 : vector<1x16xf32> to vector<2x16xf32>
    %10 = arith.addf %7, %9 : vector<2x16xf32>
    %cst = arith.constant 0.000000e+00 : f32
    %11 = vector.broadcast %cst : f32 to vector<2x16xf32>
    %12 = arith.maximumf %10, %11 : vector<2x16xf32>
    %13 = arith.truncf %12 : vector<2x16xf32> to vector<2x16xbf16>
    %c0_6 = arith.constant 0 : index
    %c0_7 = arith.constant 0 : index
    %14 = vector.load %arg10[%c0_6, %c0_7] : memref<2x32xf32, #tpu.memory_space<vmem>>, vector<2x32xf32>
    %c0_8 = arith.constant 0 : index
    %c0_9 = arith.constant 0 : index
    %15 = vector.load %arg4[%c0_8, %c0_9] : memref<16x32xbf16, #tpu.memory_space<vmem>>, vector<16x32xbf16>
    %cst_10 = arith.constant dense<0.000000e+00> : vector<2x32xf32>
    %16 = tpu.matmul %13, %15, %cst_10 {dimension_numbers = #tpu.dot_dimension_numbers<[1], [0], [0], [1], [0, 0, 1, 1], [], []>} : vector<2x16xbf16>, vector<16x32xbf16>, vector<2x32xf32> -> vector<2x32xf32>
    %17 = arith.addf %14, %16 : vector<2x32xf32>
    %c0_11 = arith.constant 0 : index
    %c0_12 = arith.constant 0 : index
    %18 = vector.load %arg10[%c0_11, %c0_12] : memref<2x32xf32, #tpu.memory_space<vmem>>, vector<2x32xf32>
    tpu.vector_store %arg10[%c0_11, %c0_12], %17 {strides = array<i32>} : memref<2x32xf32, #tpu.memory_space<vmem>>, vector<2x32xf32>,
    %c0_i32_13 = arith.constant 0 : i32
    %19 = arith.cmpi eq, %arg2, %c0_i32_13 : i32
    %20 = arith.extui %19 : i1 to i32
    %c0_i32_14 = arith.constant 0 : i32
    %21 = arith.cmpi ne, %20, %c0_i32_14 : i32
    scf.if %21 {
      %c0_15 = arith.constant 0 : index
      %c0_16 = arith.constant 0 : index
      %22 = vector.load %arg10[%c0_15, %c0_16] : memref<2x32xf32, #tpu.memory_space<vmem>>, vector<2x32xf32>
      %c0_17 = arith.constant 0 : index
      %c0_18 = arith.constant 0 : index
      %23 = vector.load %arg7[%c0_17, %c0_18] : memref<1x32xf32, #tpu.memory_space<vmem>>, vector<1x32xf32>
      %24 = vector.broadcast %23 : vector<1x32xf32> to vector<2x32xf32>
      %25 = arith.mulf %22, %24 : vector<2x32xf32>
      %c0_19 = arith.constant 0 : index
      %c0_20 = arith.constant 0 : index
      %26 = vector.load %arg8[%c0_19, %c0_20] : memref<1x32xf32, #tpu.memory_space<vmem>>, vector<1x32xf32>
      %27 = vector.broadcast %26 : vector<1x32xf32> to vector<2x32xf32>
      %28 = arith.addf %25, %27 : vector<2x32xf32>
      %cst_21 = arith.constant 0.000000e+00 : f32
      %29 = vector.broadcast %cst_21 : f32 to vector<2x32xf32>
      %30 = arith.maximumf %28, %29 : vector<2x32xf32>
      %31 = arith.truncf %30 : vector<2x32xf32> to vector<2x32xbf16>
      %c0_22 = arith.constant 0 : index
      %c0_23 = arith.constant 0 : index
      %32 = vector.load %arg9[%c0_22, %c0_23] : memref<2x32xbf16, #tpu.memory_space<vmem>>, vector<2x32xbf16>
      tpu.vector_store %arg9[%c0_22, %c0_23], %31 {strides = array<i32>} : memref<2x32xbf16, #tpu.memory_space<vmem>>, vector<2x32xbf16>,
    } else {
    }
    return
  }
  func.func @transform_0(%arg0: i32, %arg1: i32, %arg2: i32) -> (i32, i32) {
    %c0_i32 = arith.constant 0 : i32
    return %arg0, %arg2 : i32, i32
  }
  func.func @transform_1(%arg0: i32, %arg1: i32, %arg2: i32) -> (i32, i32) {
    %c0_i32 = arith.constant 0 : i32
    return %arg2, %arg1 : i32, i32
  }
  func.func @transform_2(%arg0: i32, %arg1: i32, %arg2: i32) -> (i32, i32) {
    %c0_i32 = arith.constant 0 : i32
    %c0_i32_0 = arith.constant 0 : i32
    return %c0_i32, %arg2 : i32, i32
  }
  func.func @transform_3(%arg0: i32, %arg1: i32, %arg2: i32) -> (i32, i32) {
    %c0_i32 = arith.constant 0 : i32
    %c0_i32_0 = arith.constant 0 : i32
    return %c0_i32, %arg2 : i32, i32
  }
  func.func @transform_4(%arg0: i32, %arg1: i32, %arg2: i32) -> (i32, i32) {
    %c0_i32 = arith.constant 0 : i32
    %c0_i32_0 = arith.constant 0 : i32
    return %c0_i32, %arg1 : i32, i32
  }
  func.func @transform_5(%arg0: i32, %arg1: i32, %arg2: i32) -> (i32, i32) {
    %c0_i32 = arith.constant 0 : i32
    %c0_i32_0 = arith.constant 0 : i32
    return %c0_i32, %arg1 : i32, i32
  }
  func.func @transform_6(%arg0: i32, %arg1: i32, %arg2: i32) -> (i32, i32) {
    %c0_i32 = arith.constant 0 : i32
    return %arg0, %arg1 : i32, i32
  }
}

module attributes {stable_mosaic.version = 11 : i64} {
  func.func @kernel(%arg0: i32, %arg1: i32, %arg2: i32, %arg3: memref<2x288xbf16, #tpu.memory_space<vmem>>, %arg4: memref<288x8xbf16, #tpu.memory_space<vmem>>, %arg5: memref<1x8xf32, #tpu.memory_space<vmem>>, %arg6: memref<1x8xf32, #tpu.memory_space<vmem>>, %arg7: memref<2x8xbf16, #tpu.memory_space<vmem>>, %arg8: memref<2x8xf32, #tpu.memory_space<vmem>>) attributes {dimension_semantics = [#tpu.dimension_semantics<parallel>, #tpu.dimension_semantics<parallel>, #tpu.dimension_semantics<arbitrary>], iteration_bounds = array<i64: 1, 1, 1>, scalar_prefetch = 0 : i64, scratch_operands = 1 : i64, tpu.core_type = #tpu.core_type<tc>, window_params = [{transform_indices = @transform_0, window_bounds = array<i64: 2, 288>}, {transform_indices = @transform_1, window_bounds = array<i64: 288, 8>}, {transform_indices = @transform_2, window_bounds = array<i64: 1, 8>}, {transform_indices = @transform_3, window_bounds = array<i64: 1, 8>}, {transform_indices = @transform_4, window_bounds = array<i64: 2, 8>}]} {
    %c0_i32 = arith.constant 0 : i32
    %0 = arith.cmpi eq, %arg2, %c0_i32 : i32
    %1 = arith.extui %0 : i1 to i32
    %c0_i32_0 = arith.constant 0 : i32
    %2 = arith.cmpi ne, %1, %c0_i32_0 : i32
    scf.if %2 {
      %cst_10 = arith.constant 0.000000e+00 : f32
      %12 = vector.broadcast %cst_10 : f32 to vector<2x8xf32>
      %c0_11 = arith.constant 0 : index
      %c0_12 = arith.constant 0 : index
      %13 = vector.load %arg8[%c0_11, %c0_12] : memref<2x8xf32, #tpu.memory_space<vmem>>, vector<2x8xf32>
      tpu.vector_store %arg8[%c0_11, %c0_12], %12 {strides = array<i32>} : memref<2x8xf32, #tpu.memory_space<vmem>>, vector<2x8xf32>,
    } else {
    }
    %c0 = arith.constant 0 : index
    %c0_1 = arith.constant 0 : index
    %3 = vector.load %arg3[%c0, %c0_1] : memref<2x288xbf16, #tpu.memory_space<vmem>>, vector<2x288xbf16>
    %c0_2 = arith.constant 0 : index
    %c0_3 = arith.constant 0 : index
    %4 = vector.load %arg8[%c0_2, %c0_3] : memref<2x8xf32, #tpu.memory_space<vmem>>, vector<2x8xf32>
    %c0_4 = arith.constant 0 : index
    %c0_5 = arith.constant 0 : index
    %5 = vector.load %arg4[%c0_4, %c0_5] : memref<288x8xbf16, #tpu.memory_space<vmem>>, vector<288x8xbf16>
    %cst = arith.constant dense<0.000000e+00> : vector<2x8xf32>
    %6 = tpu.matmul %3, %5, %cst {dimension_numbers = #tpu.dot_dimension_numbers<[1], [0], [0], [1], [0, 0, 1, 1], [], []>} : vector<2x288xbf16>, vector<288x8xbf16>, vector<2x8xf32> -> vector<2x8xf32>
    %7 = arith.addf %4, %6 : vector<2x8xf32>
    %c0_6 = arith.constant 0 : index
    %c0_7 = arith.constant 0 : index
    %8 = vector.load %arg8[%c0_6, %c0_7] : memref<2x8xf32, #tpu.memory_space<vmem>>, vector<2x8xf32>
    tpu.vector_store %arg8[%c0_6, %c0_7], %7 {strides = array<i32>} : memref<2x8xf32, #tpu.memory_space<vmem>>, vector<2x8xf32>,
    %c0_i32_8 = arith.constant 0 : i32
    %9 = arith.cmpi eq, %arg2, %c0_i32_8 : i32
    %10 = arith.extui %9 : i1 to i32
    %c0_i32_9 = arith.constant 0 : i32
    %11 = arith.cmpi ne, %10, %c0_i32_9 : i32
    scf.if %11 {
      %c0_10 = arith.constant 0 : index
      %c0_11 = arith.constant 0 : index
      %12 = vector.load %arg8[%c0_10, %c0_11] : memref<2x8xf32, #tpu.memory_space<vmem>>, vector<2x8xf32>
      %c0_12 = arith.constant 0 : index
      %c0_13 = arith.constant 0 : index
      %13 = vector.load %arg5[%c0_12, %c0_13] : memref<1x8xf32, #tpu.memory_space<vmem>>, vector<1x8xf32>
      %14 = vector.broadcast %13 : vector<1x8xf32> to vector<2x8xf32>
      %15 = arith.mulf %12, %14 : vector<2x8xf32>
      %c0_14 = arith.constant 0 : index
      %c0_15 = arith.constant 0 : index
      %16 = vector.load %arg6[%c0_14, %c0_15] : memref<1x8xf32, #tpu.memory_space<vmem>>, vector<1x8xf32>
      %17 = vector.broadcast %16 : vector<1x8xf32> to vector<2x8xf32>
      %18 = arith.addf %15, %17 : vector<2x8xf32>
      %19 = arith.truncf %18 : vector<2x8xf32> to vector<2x8xbf16>
      %c0_16 = arith.constant 0 : index
      %c0_17 = arith.constant 0 : index
      %20 = vector.load %arg7[%c0_16, %c0_17] : memref<2x8xbf16, #tpu.memory_space<vmem>>, vector<2x8xbf16>
      tpu.vector_store %arg7[%c0_16, %c0_17], %19 {strides = array<i32>} : memref<2x8xbf16, #tpu.memory_space<vmem>>, vector<2x8xbf16>,
    } else {
    }
    return
  }
  func.func @transform_0(%arg0: i32, %arg1: i32, %arg2: i32) -> (i32, i32) {
    %c0_i32 = arith.constant 0 : i32
    return %arg0, %arg2 : i32, i32
  }
  func.func @transform_1(%arg0: i32, %arg1: i32, %arg2: i32) -> (i32, i32) {
    %c0_i32 = arith.constant 0 : i32
    return %arg2, %arg1 : i32, i32
  }
  func.func @transform_2(%arg0: i32, %arg1: i32, %arg2: i32) -> (i32, i32) {
    %c0_i32 = arith.constant 0 : i32
    %c0_i32_0 = arith.constant 0 : i32
    return %c0_i32, %arg1 : i32, i32
  }
  func.func @transform_3(%arg0: i32, %arg1: i32, %arg2: i32) -> (i32, i32) {
    %c0_i32 = arith.constant 0 : i32
    %c0_i32_0 = arith.constant 0 : i32
    return %c0_i32, %arg1 : i32, i32
  }
  func.func @transform_4(%arg0: i32, %arg1: i32, %arg2: i32) -> (i32, i32) {
    %c0_i32 = arith.constant 0 : i32
    return %arg0, %arg1 : i32, i32
  }
}

module attributes {stable_mosaic.version = 11 : i64} {
  func.func @kernel(%arg0: i32, %arg1: i32, %arg2: i32, %arg3: memref<2x24xbf16, #tpu.memory_space<vmem>>, %arg4: memref<24x32xbf16, #tpu.memory_space<vmem>>, %arg5: memref<1x24xf32, #tpu.memory_space<vmem>>, %arg6: memref<1x24xf32, #tpu.memory_space<vmem>>, %arg7: memref<1x32xf32, #tpu.memory_space<vmem>>, %arg8: memref<1x32xf32, #tpu.memory_space<vmem>>, %arg9: memref<2x32xbf16, #tpu.memory_space<vmem>>, %arg10: memref<2x32xf32, #tpu.memory_space<vmem>>) attributes {dimension_semantics = [#tpu.dimension_semantics<parallel>, #tpu.dimension_semantics<parallel>, #tpu.dimension_semantics<arbitrary>], iteration_bounds = array<i64: 1, 1, 1>, scalar_prefetch = 0 : i64, scratch_operands = 1 : i64, tpu.core_type = #tpu.core_type<tc>, window_params = [{transform_indices = @transform_0, window_bounds = array<i64: 2, 24>}, {transform_indices = @transform_1, window_bounds = array<i64: 24, 32>}, {transform_indices = @transform_2, window_bounds = array<i64: 1, 24>}, {transform_indices = @transform_3, window_bounds = array<i64: 1, 24>}, {transform_indices = @transform_4, window_bounds = array<i64: 1, 32>}, {transform_indices = @transform_5, window_bounds = array<i64: 1, 32>}, {transform_indices = @transform_6, window_bounds = array<i64: 2, 32>}]} {
    %c0_i32 = arith.constant 0 : i32
    %0 = arith.cmpi eq, %arg2, %c0_i32 : i32
    %1 = arith.extui %0 : i1 to i32
    %c0_i32_0 = arith.constant 0 : i32
    %2 = arith.cmpi ne, %1, %c0_i32_0 : i32
    scf.if %2 {
      %cst_15 = arith.constant 0.000000e+00 : f32
      %22 = vector.broadcast %cst_15 : f32 to vector<2x32xf32>
      %c0_16 = arith.constant 0 : index
      %c0_17 = arith.constant 0 : index
      %23 = vector.load %arg10[%c0_16, %c0_17] : memref<2x32xf32, #tpu.memory_space<vmem>>, vector<2x32xf32>
      tpu.vector_store %arg10[%c0_16, %c0_17], %22 {strides = array<i32>} : memref<2x32xf32, #tpu.memory_space<vmem>>, vector<2x32xf32>,
    } else {
    }
    %c0 = arith.constant 0 : index
    %c0_1 = arith.constant 0 : index
    %3 = vector.load %arg3[%c0, %c0_1] : memref<2x24xbf16, #tpu.memory_space<vmem>>, vector<2x24xbf16>
    %4 = arith.extf %3 : vector<2x24xbf16> to vector<2x24xf32>
    %c0_2 = arith.constant 0 : index
    %c0_3 = arith.constant 0 : index
    %5 = vector.load %arg5[%c0_2, %c0_3] : memref<1x24xf32, #tpu.memory_space<vmem>>, vector<1x24xf32>
    %6 = vector.broadcast %5 : vector<1x24xf32> to vector<2x24xf32>
    %7 = arith.mulf %4, %6 : vector<2x24xf32>
    %c0_4 = arith.constant 0 : index
    %c0_5 = arith.constant 0 : index
    %8 = vector.load %arg6[%c0_4, %c0_5] : memref<1x24xf32, #tpu.memory_space<vmem>>, vector<1x24xf32>
    %9 = vector.broadcast %8 : vector<1x24xf32> to vector<2x24xf32>
    %10 = arith.addf %7, %9 : vector<2x24xf32>
    %cst = arith.constant 0.000000e+00 : f32
    %11 = vector.broadcast %cst : f32 to vector<2x24xf32>
    %12 = arith.maximumf %10, %11 : vector<2x24xf32>
    %13 = arith.truncf %12 : vector<2x24xf32> to vector<2x24xbf16>
    %c0_6 = arith.constant 0 : index
    %c0_7 = arith.constant 0 : index
    %14 = vector.load %arg10[%c0_6, %c0_7] : memref<2x32xf32, #tpu.memory_space<vmem>>, vector<2x32xf32>
    %c0_8 = arith.constant 0 : index
    %c0_9 = arith.constant 0 : index
    %15 = vector.load %arg4[%c0_8, %c0_9] : memref<24x32xbf16, #tpu.memory_space<vmem>>, vector<24x32xbf16>
    %cst_10 = arith.constant dense<0.000000e+00> : vector<2x32xf32>
    %16 = tpu.matmul %13, %15, %cst_10 {dimension_numbers = #tpu.dot_dimension_numbers<[1], [0], [0], [1], [0, 0, 1, 1], [], []>} : vector<2x24xbf16>, vector<24x32xbf16>, vector<2x32xf32> -> vector<2x32xf32>
    %17 = arith.addf %14, %16 : vector<2x32xf32>
    %c0_11 = arith.constant 0 : index
    %c0_12 = arith.constant 0 : index
    %18 = vector.load %arg10[%c0_11, %c0_12] : memref<2x32xf32, #tpu.memory_space<vmem>>, vector<2x32xf32>
    tpu.vector_store %arg10[%c0_11, %c0_12], %17 {strides = array<i32>} : memref<2x32xf32, #tpu.memory_space<vmem>>, vector<2x32xf32>,
    %c0_i32_13 = arith.constant 0 : i32
    %19 = arith.cmpi eq, %arg2, %c0_i32_13 : i32
    %20 = arith.extui %19 : i1 to i32
    %c0_i32_14 = arith.constant 0 : i32
    %21 = arith.cmpi ne, %20, %c0_i32_14 : i32
    scf.if %21 {
      %c0_15 = arith.constant 0 : index
      %c0_16 = arith.constant 0 : index
      %22 = vector.load %arg10[%c0_15, %c0_16] : memref<2x32xf32, #tpu.memory_space<vmem>>, vector<2x32xf32>
      %c0_17 = arith.constant 0 : index
      %c0_18 = arith.constant 0 : index
      %23 = vector.load %arg7[%c0_17, %c0_18] : memref<1x32xf32, #tpu.memory_space<vmem>>, vector<1x32xf32>
      %24 = vector.broadcast %23 : vector<1x32xf32> to vector<2x32xf32>
      %25 = arith.mulf %22, %24 : vector<2x32xf32>
      %c0_19 = arith.constant 0 : index
      %c0_20 = arith.constant 0 : index
      %26 = vector.load %arg8[%c0_19, %c0_20] : memref<1x32xf32, #tpu.memory_space<vmem>>, vector<1x32xf32>
      %27 = vector.broadcast %26 : vector<1x32xf32> to vector<2x32xf32>
      %28 = arith.addf %25, %27 : vector<2x32xf32>
      %cst_21 = arith.constant 0.000000e+00 : f32
      %29 = vector.broadcast %cst_21 : f32 to vector<2x32xf32>
      %30 = arith.maximumf %28, %29 : vector<2x32xf32>
      %31 = arith.truncf %30 : vector<2x32xf32> to vector<2x32xbf16>
      %c0_22 = arith.constant 0 : index
      %c0_23 = arith.constant 0 : index
      %32 = vector.load %arg9[%c0_22, %c0_23] : memref<2x32xbf16, #tpu.memory_space<vmem>>, vector<2x32xbf16>
      tpu.vector_store %arg9[%c0_22, %c0_23], %31 {strides = array<i32>} : memref<2x32xbf16, #tpu.memory_space<vmem>>, vector<2x32xbf16>,
    } else {
    }
    return
  }
  func.func @transform_0(%arg0: i32, %arg1: i32, %arg2: i32) -> (i32, i32) {
    %c0_i32 = arith.constant 0 : i32
    return %arg0, %arg2 : i32, i32
  }
  func.func @transform_1(%arg0: i32, %arg1: i32, %arg2: i32) -> (i32, i32) {
    %c0_i32 = arith.constant 0 : i32
    return %arg2, %arg1 : i32, i32
  }
  func.func @transform_2(%arg0: i32, %arg1: i32, %arg2: i32) -> (i32, i32) {
    %c0_i32 = arith.constant 0 : i32
    %c0_i32_0 = arith.constant 0 : i32
    return %c0_i32, %arg2 : i32, i32
  }
  func.func @transform_3(%arg0: i32, %arg1: i32, %arg2: i32) -> (i32, i32) {
    %c0_i32 = arith.constant 0 : i32
    %c0_i32_0 = arith.constant 0 : i32
    return %c0_i32, %arg2 : i32, i32
  }
  func.func @transform_4(%arg0: i32, %arg1: i32, %arg2: i32) -> (i32, i32) {
    %c0_i32 = arith.constant 0 : i32
    %c0_i32_0 = arith.constant 0 : i32
    return %c0_i32, %arg1 : i32, i32
  }
  func.func @transform_5(%arg0: i32, %arg1: i32, %arg2: i32) -> (i32, i32) {
    %c0_i32 = arith.constant 0 : i32
    %c0_i32_0 = arith.constant 0 : i32
    return %c0_i32, %arg1 : i32, i32
  }
  func.func @transform_6(%arg0: i32, %arg1: i32, %arg2: i32) -> (i32, i32) {
    %c0_i32 = arith.constant 0 : i32
    return %arg0, %arg1 : i32, i32
  }
}

module attributes {stable_mosaic.version = 11 : i64} {
  func.func @kernel(%arg0: i32, %arg1: i32, %arg2: i32, %arg3: memref<2x32xbf16, #tpu.memory_space<vmem>>, %arg4: memref<32x256xbf16, #tpu.memory_space<vmem>>, %arg5: memref<1x32xf32, #tpu.memory_space<vmem>>, %arg6: memref<1x32xf32, #tpu.memory_space<vmem>>, %arg7: memref<1x256xf32, #tpu.memory_space<vmem>>, %arg8: memref<1x256xf32, #tpu.memory_space<vmem>>, %arg9: memref<2x256xbf16, #tpu.memory_space<vmem>>, %arg10: memref<2x256xf32, #tpu.memory_space<vmem>>) attributes {dimension_semantics = [#tpu.dimension_semantics<parallel>, #tpu.dimension_semantics<parallel>, #tpu.dimension_semantics<arbitrary>], iteration_bounds = array<i64: 1, 2, 1>, scalar_prefetch = 0 : i64, scratch_operands = 1 : i64, tpu.core_type = #tpu.core_type<tc>, window_params = [{transform_indices = @transform_0, window_bounds = array<i64: 2, 32>}, {transform_indices = @transform_1, window_bounds = array<i64: 32, 256>}, {transform_indices = @transform_2, window_bounds = array<i64: 1, 32>}, {transform_indices = @transform_3, window_bounds = array<i64: 1, 32>}, {transform_indices = @transform_4, window_bounds = array<i64: 1, 256>}, {transform_indices = @transform_5, window_bounds = array<i64: 1, 256>}, {transform_indices = @transform_6, window_bounds = array<i64: 2, 256>}]} {
    %c0_i32 = arith.constant 0 : i32
    %0 = arith.cmpi eq, %arg2, %c0_i32 : i32
    %1 = arith.extui %0 : i1 to i32
    %c0_i32_0 = arith.constant 0 : i32
    %2 = arith.cmpi ne, %1, %c0_i32_0 : i32
    scf.if %2 {
      %cst_14 = arith.constant 0.000000e+00 : f32
      %20 = vector.broadcast %cst_14 : f32 to vector<2x256xf32>
      %c0_15 = arith.constant 0 : index
      %c0_16 = arith.constant 0 : index
      %21 = vector.load %arg10[%c0_15, %c0_16] : memref<2x256xf32, #tpu.memory_space<vmem>>, vector<2x256xf32>
      tpu.vector_store %arg10[%c0_15, %c0_16], %20 {strides = array<i32>} : memref<2x256xf32, #tpu.memory_space<vmem>>, vector<2x256xf32>,
    } else {
    }
    %c0 = arith.constant 0 : index
    %c0_1 = arith.constant 0 : index
    %3 = vector.load %arg3[%c0, %c0_1] : memref<2x32xbf16, #tpu.memory_space<vmem>>, vector<2x32xbf16>
    %4 = arith.extf %3 : vector<2x32xbf16> to vector<2x32xf32>
    %c0_2 = arith.constant 0 : index
    %c0_3 = arith.constant 0 : index
    %5 = vector.load %arg5[%c0_2, %c0_3] : memref<1x32xf32, #tpu.memory_space<vmem>>, vector<1x32xf32>
    %6 = vector.broadcast %5 : vector<1x32xf32> to vector<2x32xf32>
    %7 = arith.mulf %4, %6 : vector<2x32xf32>
    %c0_4 = arith.constant 0 : index
    %c0_5 = arith.constant 0 : index
    %8 = vector.load %arg6[%c0_4, %c0_5] : memref<1x32xf32, #tpu.memory_space<vmem>>, vector<1x32xf32>
    %9 = vector.broadcast %8 : vector<1x32xf32> to vector<2x32xf32>
    %10 = arith.addf %7, %9 : vector<2x32xf32>
    %11 = arith.truncf %10 : vector<2x32xf32> to vector<2x32xbf16>
    %c0_6 = arith.constant 0 : index
    %c0_7 = arith.constant 0 : index
    %12 = vector.load %arg10[%c0_6, %c0_7] : memref<2x256xf32, #tpu.memory_space<vmem>>, vector<2x256xf32>
    %c0_8 = arith.constant 0 : index
    %c0_9 = arith.constant 0 : index
    %13 = vector.load %arg4[%c0_8, %c0_9] : memref<32x256xbf16, #tpu.memory_space<vmem>>, vector<32x256xbf16>
    %cst = arith.constant dense<0.000000e+00> : vector<2x256xf32>
    %14 = tpu.matmul %11, %13, %cst {dimension_numbers = #tpu.dot_dimension_numbers<[1], [0], [0], [1], [0, 0, 1, 1], [], []>} : vector<2x32xbf16>, vector<32x256xbf16>, vector<2x256xf32> -> vector<2x256xf32>
    %15 = arith.addf %12, %14 : vector<2x256xf32>
    %c0_10 = arith.constant 0 : index
    %c0_11 = arith.constant 0 : index
    %16 = vector.load %arg10[%c0_10, %c0_11] : memref<2x256xf32, #tpu.memory_space<vmem>>, vector<2x256xf32>
    tpu.vector_store %arg10[%c0_10, %c0_11], %15 {strides = array<i32>} : memref<2x256xf32, #tpu.memory_space<vmem>>, vector<2x256xf32>,
    %c0_i32_12 = arith.constant 0 : i32
    %17 = arith.cmpi eq, %arg2, %c0_i32_12 : i32
    %18 = arith.extui %17 : i1 to i32
    %c0_i32_13 = arith.constant 0 : i32
    %19 = arith.cmpi ne, %18, %c0_i32_13 : i32
    scf.if %19 {
      %c0_14 = arith.constant 0 : index
      %c0_15 = arith.constant 0 : index
      %20 = vector.load %arg10[%c0_14, %c0_15] : memref<2x256xf32, #tpu.memory_space<vmem>>, vector<2x256xf32>
      %c0_16 = arith.constant 0 : index
      %c0_17 = arith.constant 0 : index
      %21 = vector.load %arg7[%c0_16, %c0_17] : memref<1x256xf32, #tpu.memory_space<vmem>>, vector<1x256xf32>
      %22 = vector.broadcast %21 : vector<1x256xf32> to vector<2x256xf32>
      %23 = arith.mulf %20, %22 : vector<2x256xf32>
      %c0_18 = arith.constant 0 : index
      %c0_19 = arith.constant 0 : index
      %24 = vector.load %arg8[%c0_18, %c0_19] : memref<1x256xf32, #tpu.memory_space<vmem>>, vector<1x256xf32>
      %25 = vector.broadcast %24 : vector<1x256xf32> to vector<2x256xf32>
      %26 = arith.addf %23, %25 : vector<2x256xf32>
      %cst_20 = arith.constant 0.000000e+00 : f32
      %27 = vector.broadcast %cst_20 : f32 to vector<2x256xf32>
      %28 = arith.maximumf %26, %27 : vector<2x256xf32>
      %29 = arith.truncf %28 : vector<2x256xf32> to vector<2x256xbf16>
      %c0_21 = arith.constant 0 : index
      %c0_22 = arith.constant 0 : index
      %30 = vector.load %arg9[%c0_21, %c0_22] : memref<2x256xbf16, #tpu.memory_space<vmem>>, vector<2x256xbf16>
      tpu.vector_store %arg9[%c0_21, %c0_22], %29 {strides = array<i32>} : memref<2x256xbf16, #tpu.memory_space<vmem>>, vector<2x256xbf16>,
    } else {
    }
    return
  }
  func.func @transform_0(%arg0: i32, %arg1: i32, %arg2: i32) -> (i32, i32) {
    %c0_i32 = arith.constant 0 : i32
    return %arg0, %arg2 : i32, i32
  }
  func.func @transform_1(%arg0: i32, %arg1: i32, %arg2: i32) -> (i32, i32) {
    %c0_i32 = arith.constant 0 : i32
    return %arg2, %arg1 : i32, i32
  }
  func.func @transform_2(%arg0: i32, %arg1: i32, %arg2: i32) -> (i32, i32) {
    %c0_i32 = arith.constant 0 : i32
    %c0_i32_0 = arith.constant 0 : i32
    return %c0_i32, %arg2 : i32, i32
  }
  func.func @transform_3(%arg0: i32, %arg1: i32, %arg2: i32) -> (i32, i32) {
    %c0_i32 = arith.constant 0 : i32
    %c0_i32_0 = arith.constant 0 : i32
    return %c0_i32, %arg2 : i32, i32
  }
  func.func @transform_4(%arg0: i32, %arg1: i32, %arg2: i32) -> (i32, i32) {
    %c0_i32 = arith.constant 0 : i32
    %c0_i32_0 = arith.constant 0 : i32
    return %c0_i32, %arg1 : i32, i32
  }
  func.func @transform_5(%arg0: i32, %arg1: i32, %arg2: i32) -> (i32, i32) {
    %c0_i32 = arith.constant 0 : i32
    %c0_i32_0 = arith.constant 0 : i32
    return %c0_i32, %arg1 : i32, i32
  }
  func.func @transform_6(%arg0: i32, %arg1: i32, %arg2: i32) -> (i32, i32) {
    %c0_i32 = arith.constant 0 : i32
    return %arg0, %arg1 : i32, i32
  }
}

module attributes {stable_mosaic.version = 11 : i64} {
  func.func @kernel(%arg0: i32, %arg1: i32, %arg2: i32, %arg3: memref<2x512xbf16, #tpu.memory_space<vmem>>, %arg4: memref<512x40xbf16, #tpu.memory_space<vmem>>, %arg5: memref<1x40xf32, #tpu.memory_space<vmem>>, %arg6: memref<1x40xf32, #tpu.memory_space<vmem>>, %arg7: memref<2x40xf32, #tpu.memory_space<vmem>>, %arg8: memref<2x40xf32, #tpu.memory_space<vmem>>) attributes {dimension_semantics = [#tpu.dimension_semantics<parallel>, #tpu.dimension_semantics<parallel>, #tpu.dimension_semantics<arbitrary>], iteration_bounds = array<i64: 1, 1, 1>, scalar_prefetch = 0 : i64, scratch_operands = 1 : i64, tpu.core_type = #tpu.core_type<tc>, window_params = [{transform_indices = @transform_0, window_bounds = array<i64: 2, 512>}, {transform_indices = @transform_1, window_bounds = array<i64: 512, 40>}, {transform_indices = @transform_2, window_bounds = array<i64: 1, 40>}, {transform_indices = @transform_3, window_bounds = array<i64: 1, 40>}, {transform_indices = @transform_4, window_bounds = array<i64: 2, 40>}]} {
    %c0_i32 = arith.constant 0 : i32
    %0 = arith.cmpi eq, %arg2, %c0_i32 : i32
    %1 = arith.extui %0 : i1 to i32
    %c0_i32_0 = arith.constant 0 : i32
    %2 = arith.cmpi ne, %1, %c0_i32_0 : i32
    scf.if %2 {
      %cst_10 = arith.constant 0.000000e+00 : f32
      %12 = vector.broadcast %cst_10 : f32 to vector<2x40xf32>
      %c0_11 = arith.constant 0 : index
      %c0_12 = arith.constant 0 : index
      %13 = vector.load %arg8[%c0_11, %c0_12] : memref<2x40xf32, #tpu.memory_space<vmem>>, vector<2x40xf32>
      tpu.vector_store %arg8[%c0_11, %c0_12], %12 {strides = array<i32>} : memref<2x40xf32, #tpu.memory_space<vmem>>, vector<2x40xf32>,
    } else {
    }
    %c0 = arith.constant 0 : index
    %c0_1 = arith.constant 0 : index
    %3 = vector.load %arg3[%c0, %c0_1] : memref<2x512xbf16, #tpu.memory_space<vmem>>, vector<2x512xbf16>
    %c0_2 = arith.constant 0 : index
    %c0_3 = arith.constant 0 : index
    %4 = vector.load %arg8[%c0_2, %c0_3] : memref<2x40xf32, #tpu.memory_space<vmem>>, vector<2x40xf32>
    %c0_4 = arith.constant 0 : index
    %c0_5 = arith.constant 0 : index
    %5 = vector.load %arg4[%c0_4, %c0_5] : memref<512x40xbf16, #tpu.memory_space<vmem>>, vector<512x40xbf16>
    %cst = arith.constant dense<0.000000e+00> : vector<2x40xf32>
    %6 = tpu.matmul %3, %5, %cst {dimension_numbers = #tpu.dot_dimension_numbers<[1], [0], [0], [1], [0, 0, 1, 1], [], []>} : vector<2x512xbf16>, vector<512x40xbf16>, vector<2x40xf32> -> vector<2x40xf32>
    %7 = arith.addf %4, %6 : vector<2x40xf32>
    %c0_6 = arith.constant 0 : index
    %c0_7 = arith.constant 0 : index
    %8 = vector.load %arg8[%c0_6, %c0_7] : memref<2x40xf32, #tpu.memory_space<vmem>>, vector<2x40xf32>
    tpu.vector_store %arg8[%c0_6, %c0_7], %7 {strides = array<i32>} : memref<2x40xf32, #tpu.memory_space<vmem>>, vector<2x40xf32>,
    %c0_i32_8 = arith.constant 0 : i32
    %9 = arith.cmpi eq, %arg2, %c0_i32_8 : i32
    %10 = arith.extui %9 : i1 to i32
    %c0_i32_9 = arith.constant 0 : i32
    %11 = arith.cmpi ne, %10, %c0_i32_9 : i32
    scf.if %11 {
      %c0_10 = arith.constant 0 : index
      %c0_11 = arith.constant 0 : index
      %12 = vector.load %arg8[%c0_10, %c0_11] : memref<2x40xf32, #tpu.memory_space<vmem>>, vector<2x40xf32>
      %c0_12 = arith.constant 0 : index
      %c0_13 = arith.constant 0 : index
      %13 = vector.load %arg5[%c0_12, %c0_13] : memref<1x40xf32, #tpu.memory_space<vmem>>, vector<1x40xf32>
      %14 = vector.broadcast %13 : vector<1x40xf32> to vector<2x40xf32>
      %15 = arith.mulf %12, %14 : vector<2x40xf32>
      %c0_14 = arith.constant 0 : index
      %c0_15 = arith.constant 0 : index
      %16 = vector.load %arg6[%c0_14, %c0_15] : memref<1x40xf32, #tpu.memory_space<vmem>>, vector<1x40xf32>
      %17 = vector.broadcast %16 : vector<1x40xf32> to vector<2x40xf32>
      %18 = arith.addf %15, %17 : vector<2x40xf32>
      %c0_16 = arith.constant 0 : index
      %c0_17 = arith.constant 0 : index
      %19 = vector.load %arg7[%c0_16, %c0_17] : memref<2x40xf32, #tpu.memory_space<vmem>>, vector<2x40xf32>
      tpu.vector_store %arg7[%c0_16, %c0_17], %18 {strides = array<i32>} : memref<2x40xf32, #tpu.memory_space<vmem>>, vector<2x40xf32>,
    } else {
    }
    return
  }
  func.func @transform_0(%arg0: i32, %arg1: i32, %arg2: i32) -> (i32, i32) {
    %c0_i32 = arith.constant 0 : i32
    return %arg0, %arg2 : i32, i32
  }
  func.func @transform_1(%arg0: i32, %arg1: i32, %arg2: i32) -> (i32, i32) {
    %c0_i32 = arith.constant 0 : i32
    return %arg2, %arg1 : i32, i32
  }
  func.func @transform_2(%arg0: i32, %arg1: i32, %arg2: i32) -> (i32, i32) {
    %c0_i32 = arith.constant 0 : i32
    %c0_i32_0 = arith.constant 0 : i32
    return %c0_i32, %arg1 : i32, i32
  }
  func.func @transform_3(%arg0: i32, %arg1: i32, %arg2: i32) -> (i32, i32) {
    %c0_i32 = arith.constant 0 : i32
    %c0_i32_0 = arith.constant 0 : i32
    return %c0_i32, %arg1 : i32, i32
  }
  func.func @transform_4(%arg0: i32, %arg1: i32, %arg2: i32) -> (i32, i32) {
    %c0_i32 = arith.constant 0 : i32
    return %arg0, %arg1 : i32, i32
  }
}

</mosaic_0001>

<llo_original>
// kernel: forward.27
$region0: #{forward.27}
  #allocation0 [shape = 'u32[]', space=smem, size = 0x4, offset = 0x4, fixed_abs, tag = 'smem constant byte address 0x4 - core index']
  #allocation1 [shape = 'u32[144,128]{1,0:T(1,128)}', space=vmem, size = 0x12000, scoped, tag = 'internal scratch']
  #allocation2 [shape = 'f32[128,16]{1,0:T(8,128)}', space=vmem, size = 0x10000, scoped, tag = 'scratch operand']
  %s0 = inlined_call_operand.vmem [shape: bf16[9,128,16], index: 0, kind: input, shape index: {}]
  %s1 = inlined_call_operand.vmem [shape: bf16[128,16], index: 1, kind: output, shape index: {}]
  %s2 = sld [smem:[#allocation0]]
  $region49: #{forward.27} parent=0
    _
  %s4 = ssub.s32 1, %s2
  %s5 = scalar_select 0, %s4, %s2
  loop: start=0, step=1, limit=11
  $region2: #{forward.27} parent=0 // loop_pre_header
    _
  $region3: #{forward.27} parent=0 // loop_header
    %s7 = sphi 0, %s11
    %p8 = scmp.ge.s32.totalorder %s7, 11
    %s14 = sphi 0, %s26
    %s15 = sphi 0, %s22
    %s16 = sphi 0, %s14
    %s17 = sphi 0, %s15
    %s18 = sphi 0, %s16
    %s19 = sphi 0, %s17
    %s31 = sphi 0, %s33
    %s34 = sphi 0, %s31
    %s35 = sphi 0, %s34
    %s51 = sphi 0, %s35
    %s57 = sphi 0, %s59
    %s60 = sphi 0, %s57
    %s61 = sphi 0, %s60
    %s77 = sphi 0, %s61
  $region4: #{forward.27} parent=0 // loop_header_branch
    %10 = sbr.rel (%p8) target = $region8
  $region5: #{forward.27} parent=0 // loop_body
    %s12 = ssub.s32 %s7, 1
    %s13 = ssub.s32 %s7, 2
    %s20 = sadd.s32 1, %s15
    %p21 = scmp.ge.s32.totalorder %s20, 9
    %s22 = scalar_select %p21, 0, %s20
    %s23 = sadd.s32 1, %s14
    %s24 = scalar_select %p21, %s23, %s14
    %p25 = scmp.ge.s32.totalorder %s24, 1
    %s26 = scalar_select %p25, 0, %s24
    %s27 = ssub.s32 %s15, %s22
    %s28 = ssub.s32 %s14, %s26
    %s29 = sor.u32 %s27, %s28
    %p30 = scmp.eq.s32.totalorder %s29, 0
    %s32 = sadd.s32 %s31, 1
    %s33 = scalar_select %p30, %s31, %s32
    %p36 = pneg %p30
    %p37 = scmp.eq.s32.totalorder %s7, 8
    %p38 = por %p36, %p37
    %p39 = scmp.ne.s32.totalorder %s31, %s34
    %p40 = scmp.eq.s32.totalorder %s7, 0
    %p41 = por %p39, %p40
    %p42 = scmp.ne.s32.totalorder %s31, %s34
    %p43 = scmp.eq.s32.totalorder %s12, 8
    %p44 = por %p42, %p43
    %p45 = scmp.ne.s32.totalorder %s34, %s35
    %p46 = scmp.eq.s32.totalorder %s12, 0
    %p47 = por %p45, %p46
    %p48 = scmp.ne.s32.totalorder %s34, %s35
    %p49 = scmp.eq.s32.totalorder %s13, 8
    %p50 = por %p48, %p49
    %p52 = scmp.ne.s32.totalorder %s35, %s51
    %p53 = scmp.eq.s32.totalorder %s13, 0
    %p54 = por %p52, %p53
    %s55 = ssub.s32 %s14, %s26
    %p56 = scmp.eq.s32.totalorder %s55, 0
    %s58 = sadd.s32 %s57, 1
    %s59 = scalar_select %p56, %s57, %s58
    %p62 = pneg %p56
    %p63 = scmp.eq.s32.totalorder %s7, 8
    %p64 = por %p62, %p63
    %p65 = scmp.ne.s32.totalorder %s57, %s60
    %p66 = scmp.eq.s32.totalorder %s7, 0
    %p67 = por %p65, %p66
    %p68 = scmp.ne.s32.totalorder %s57, %s60
    %p69 = scmp.eq.s32.totalorder %s12, 8
    %p70 = por %p68, %p69
    %p71 = scmp.ne.s32.totalorder %s60, %s61
    %p72 = scmp.eq.s32.totalorder %s12, 0
    %p73 = por %p71, %p72
    %p74 = scmp.ne.s32.totalorder %s60, %s61
    %p75 = scmp.eq.s32.totalorder %s13, 8
    %p76 = por %p74, %p75
    %p78 = scmp.ne.s32.totalorder %s61, %s77
    %p79 = scmp.eq.s32.totalorder %s13, 0
    %p80 = por %p78, %p79
    %p81 = scmp.le.s32.totalorder 1, %s7
    %p82 = scmp.lt.s32.totalorder %s7, 10
    %p83 = pnand %p81, %p82
    %p84 = pneg %p83
    // Predicated region
    $region9: #{forward.27} parent=5 // pred_check
      _
    $region10: #{forward.27} parent=5 // pred_check_branch
      %86 = sbr.rel (%p83) target = $region12
    $region11: #{forward.27} parent=5 // pred_region
      %s87 = ssub.s32 %s7, 1
    $region12: #{forward.27} parent=5 // pred_fallthru
      _
    %p88 = scmp.lt.s32.totalorder %s7, 9
    // Predicated region
    $region13: #{forward.27} parent=5 // pred_check
      %p89 = pneg %p88
    $region14: #{forward.27} parent=5 // pred_check_branch
      %91 = sbr.rel (%p89) target = $region16
    $region15: #{forward.27} parent=5 // pred_region
      // Predicated region
      $region17: #{forward.27} parent=15 // pred_check
        %p92 = pneg %p41
      $region18: #{forward.27} parent=15 // pred_check_branch
        %94 = sbr.rel (%p92) target = $region20
      $region19: #{forward.27} parent=15 // pred_region
        %s95 = smul.u32 16, %s14
        %p96 = scmp.lt.s32.totalorder %s15, 8
        %s97 = scalar_select %p96, %s15, 8
        %p98 = scmp.lt.s32.totalorder %s95, 15
        %s99 = scalar_select %p98, %s95, 15
        %s100 = smul.addr %s97, 16
        %s101 = sadd.s32 %s99, %s100
        %s102 = smul.addr %s101, 4
        %s103 = scalar_lea.vmem %s0, %s102
        %s104 = smul.u32 16, %s14
      $region20: #{forward.27} parent=15 // pred_fallthru
        _
    $region16: #{forward.27} parent=5 // pred_fallthru
      _
    %p105 = scmp.le.s32.totalorder 1, %s7
    %p106 = scmp.lt.s32.totalorder %s7, 10
    %p107 = pnand %p105, %p106
    %p108 = pneg %p107
    // Predicated region
    $region21: #{forward.27} parent=5 // pred_check
      _
    $region22: #{forward.27} parent=5 // pred_check_branch
      %110 = sbr.rel (%p107) target = $region24
    $region23: #{forward.27} parent=5 // pred_region
      %s111 = ssub.s32 %s7, 1
      %s112 = smul.u32 16, %s16
      %p113 = scmp.lt.s32.totalorder %s17, 8
      %s114 = scalar_select %p113, %s17, 8
      %p115 = scmp.lt.s32.totalorder %s112, 15
      %s116 = scalar_select %p115, %s112, 15
      %s117 = smul.addr %s114, 16
      %s118 = sadd.s32 %s116, %s117
      %s119 = smul.addr %s118, 4
      %s120 = scalar_lea.vmem %s0, %s119
      %p121 = pneg %p47
      %p122 = pneg %p44
      %p123 = pneg %p73
      %p124 = pneg %p70
      %s125 = smul.u32 16, %s16
      %p126 = scmp.lt.s32.totalorder %s125, 15
      %s127 = scalar_select %p126, %s125, 15
      %s128 = smul.addr %s127, 4
      %s129 = scalar_lea.vmem %s1, %s128
      %s130 = smul.u32 16, %s16
      %p131 = scmp.lt.s32.totalorder %s17, 8
      %s132 = scalar_select %p131, %s17, 8
      %p133 = scmp.lt.s32.totalorder %s130, 15
      %s134 = scalar_select %p133, %s130, 15
      %s135 = smul.addr %s132, 16
      %s136 = sadd.s32 %s134, %s135
      %s137 = smul.addr %s136, 4
      %s138 = scalar_lea.vmem %s0, %s137
      %s139 = smul.u32 16, %s16
      %s140 = smul.u32 16, %s16
      %p141 = scmp.lt.s32.totalorder %s140, 15
      %s142 = scalar_select %p141, %s140, 15
      %s143 = smul.addr %s142, 4
      %s144 = scalar_lea.vmem %s1, %s143
      %s145 = smul.u32 16, %s16
      %v146 = vld [vmem:[%s138] sm:$0xf]
      %v147 = vld [vmem:[%s138 + $0x4] sm:$0xf]
      %v148 = vld [vmem:[%s138 + $0x8] sm:$0xf]
      %v149 = vld [vmem:[%s138 + $0xc] sm:$0xf]
      %v150 = vld [vmem:[%s138 + $0x10] sm:$0xf]
      %v151 = vld [vmem:[%s138 + $0x14] sm:$0xf]
      %v152 = vld [vmem:[%s138 + $0x18] sm:$0xf]
      %v153 = vld [vmem:[%s138 + $0x1c] sm:$0xf]
      %v154 = vld [vmem:[%s138 + $0x20] sm:$0xf]
      %v155 = vld [vmem:[%s138 + $0x24] sm:$0xf]
      %v156 = vld [vmem:[%s138 + $0x28] sm:$0xf]
      %v157 = vld [vmem:[%s138 + $0x2c] sm:$0xf]
      %v158 = vld [vmem:[%s138 + $0x30] sm:$0xf]
      %v159 = vld [vmem:[%s138 + $0x34] sm:$0xf]
      %v160 = vld [vmem:[%s138 + $0x38] sm:$0xf]
      %v161 = vld [vmem:[%s138 + $0x3c] sm:$0xf]
      %v162 = vunpack.c.l.bf16 %v146
      %v163 = vunpack.c.l.bf16 %v147
      %v164 = vunpack.c.l.bf16 %v148
      %v165 = vunpack.c.l.bf16 %v149
      %v166 = vunpack.c.l.bf16 %v150
      %v167 = vunpack.c.l.bf16 %v151
      %v168 = vunpack.c.l.bf16 %v152
      %v169 = vunpack.c.l.bf16 %v153
      %v170 = vunpack.c.l.bf16 %v154
      %v171 = vunpack.c.l.bf16 %v155
      %v172 = vunpack.c.l.bf16 %v156
      %v173 = vunpack.c.l.bf16 %v157
      %v174 = vunpack.c.l.bf16 %v158
      %v175 = vunpack.c.l.bf16 %v159
      %v176 = vunpack.c.l.bf16 %v160
      %v177 = vunpack.c.l.bf16 %v161
      %p178 = scmp.eq.s32.totalorder %s17, 0
      // Predicated region
      $region25: #{forward.27} parent=23 // pred_check
        %p179 = pneg %p178
      $region26: #{forward.27} parent=23 // pred_check_branch
        %181 = sbr.rel (%p179) target = $region28
      $region27: #{forward.27} parent=23 // pred_region
        %vm182 = vcmask 130048
        %183 = vst.msk [vmem:[#allocation2] sm:$0xff] %vm182, %v162
        %184 = vst.msk [vmem:[#allocation2 + $0x8] sm:$0xff] %vm182, %v163
        %185 = vst.msk [vmem:[#allocation2 + $0x10] sm:$0xff] %vm182, %v164
        %186 = vst.msk [vmem:[#allocation2 + $0x18] sm:$0xff] %vm182, %v165
        %187 = vst.msk [vmem:[#allocation2 + $0x20] sm:$0xff] %vm182, %v166
        %188 = vst.msk [vmem:[#allocation2 + $0x28] sm:$0xff] %vm182, %v167
        %189 = vst.msk [vmem:[#allocation2 + $0x30] sm:$0xff] %vm182, %v168
        %190 = vst.msk [vmem:[#allocation2 + $0x38] sm:$0xff] %vm182, %v169
        %191 = vst.msk [vmem:[#allocation2 + $0x40] sm:$0xff] %vm182, %v170
        %192 = vst.msk [vmem:[#allocation2 + $0x48] sm:$0xff] %vm182, %v171
        %193 = vst.msk [vmem:[#allocation2 + $0x50] sm:$0xff] %vm182, %v172
        %194 = vst.msk [vmem:[#allocation2 + $0x58] sm:$0xff] %vm182, %v173
        %195 = vst.msk [vmem:[#allocation2 + $0x60] sm:$0xff] %vm182, %v174
        %196 = vst.msk [vmem:[#allocation2 + $0x68] sm:$0xff] %vm182, %v175
        %197 = vst.msk [vmem:[#allocation2 + $0x70] sm:$0xff] %vm182, %v176
        %198 = vst.msk [vmem:[#allocation2 + $0x78] sm:$0xff] %vm182, %v177
      $region28: #{forward.27} parent=23 // pred_fallthru
        _
      %p199 = scmp.gt.s32.totalorder %s17, 0
      // Predicated region
      $region29: #{forward.27} parent=23 // pred_check
        %p200 = pneg %p199
      $region30: #{forward.27} parent=23 // pred_check_branch
        %202 = sbr.rel (%p200) target = $region32
      $region31: #{forward.27} parent=23 // pred_region
        %v203 = vld [vmem:[#allocation2] sm:$0xff]
        %v204 = vld [vmem:[#allocation2 + $0x8] sm:$0xff]
        %v205 = vld [vmem:[#allocation2 + $0x10] sm:$0xff]
        %v206 = vld [vmem:[#allocation2 + $0x18] sm:$0xff]
        %v207 = vld [vmem:[#allocation2 + $0x20] sm:$0xff]
        %v208 = vld [vmem:[#allocation2 + $0x28] sm:$0xff]
        %v209 = vld [vmem:[#allocation2 + $0x30] sm:$0xff]
        %v210 = vld [vmem:[#allocation2 + $0x38] sm:$0xff]
        %v211 = vld [vmem:[#allocation2 + $0x40] sm:$0xff]
        %v212 = vld [vmem:[#allocation2 + $0x48] sm:$0xff]
        %v213 = vld [vmem:[#allocation2 + $0x50] sm:$0xff]
        %v214 = vld [vmem:[#allocation2 + $0x58] sm:$0xff]
        %v215 = vld [vmem:[#allocation2 + $0x60] sm:$0xff]
        %v216 = vld [vmem:[#allocation2 + $0x68] sm:$0xff]
        %v217 = vld [vmem:[#allocation2 + $0x70] sm:$0xff]
        %v218 = vld [vmem:[#allocation2 + $0x78] sm:$0xff]
        %v219 = vmax.f32 %v203, %v162
        %v220 = vmax.f32 %v204, %v163
        %v221 = vmax.f32 %v205, %v164
        %v222 = vmax.f32 %v206, %v165
        %v223 = vmax.f32 %v207, %v166
        %v224 = vmax.f32 %v208, %v167
        %v225 = vmax.f32 %v209, %v168
        %v226 = vmax.f32 %v210, %v169
        %v227 = vmax.f32 %v211, %v170
        %v228 = vmax.f32 %v212, %v171
        %v229 = vmax.f32 %v213, %v172
        %v230 = vmax.f32 %v214, %v173
        %v231 = vmax.f32 %v215, %v174
        %v232 = vmax.f32 %v216, %v175
        %v233 = vmax.f32 %v217, %v176
        %v234 = vmax.f32 %v218, %v177
        %vm235 = vcmask 130048
        %236 = vst.msk [vmem:[#allocation2] sm:$0xff] %vm235, %v219
        %237 = vst.msk [vmem:[#allocation2 + $0x8] sm:$0xff] %vm235, %v220
        %238 = vst.msk [vmem:[#allocation2 + $0x10] sm:$0xff] %vm235, %v221
        %239 = vst.msk [vmem:[#allocation2 + $0x18] sm:$0xff] %vm235, %v222
        %240 = vst.msk [vmem:[#allocation2 + $0x20] sm:$0xff] %vm235, %v223
        %241 = vst.msk [vmem:[#allocation2 + $0x28] sm:$0xff] %vm235, %v224
        %242 = vst.msk [vmem:[#allocation2 + $0x30] sm:$0xff] %vm235, %v225
        %243 = vst.msk [vmem:[#allocation2 + $0x38] sm:$0xff] %vm235, %v226
        %244 = vst.msk [vmem:[#allocation2 + $0x40] sm:$0xff] %vm235, %v227
        %245 = vst.msk [vmem:[#allocation2 + $0x48] sm:$0xff] %vm235, %v228
        %246 = vst.msk [vmem:[#allocation2 + $0x50] sm:$0xff] %vm235, %v229
        %247 = vst.msk [vmem:[#allocation2 + $0x58] sm:$0xff] %vm235, %v230
        %248 = vst.msk [vmem:[#allocation2 + $0x60] sm:$0xff] %vm235, %v231
        %249 = vst.msk [vmem:[#allocation2 + $0x68] sm:$0xff] %vm235, %v232
        %250 = vst.msk [vmem:[#allocation2 + $0x70] sm:$0xff] %vm235, %v233
        %251 = vst.msk [vmem:[#allocation2 + $0x78] sm:$0xff] %vm235, %v234
      $region32: #{forward.27} parent=23 // pred_fallthru
        _
      %p252 = scmp.eq.s32.totalorder %s17, 8
      // Predicated region
      $region33: #{forward.27} parent=23 // pred_check
        %p253 = pneg %p252
      $region34: #{forward.27} parent=23 // pred_check_branch
        %255 = sbr.rel (%p253) target = $region36
      $region35: #{forward.27} parent=23 // pred_region
        %v256 = vld [vmem:[#allocation2] sm:$0xff]
        %v257 = vld [vmem:[#allocation2 + $0x8] sm:$0xff]
        %v258 = vld [vmem:[#allocation2 + $0x10] sm:$0xff]
        %v259 = vld [vmem:[#allocation2 + $0x18] sm:$0xff]
        %v260 = vld [vmem:[#allocation2 + $0x20] sm:$0xff]
        %v261 = vld [vmem:[#allocation2 + $0x28] sm:$0xff]
        %v262 = vld [vmem:[#allocation2 + $0x30] sm:$0xff]
        %v263 = vld [vmem:[#allocation2 + $0x38] sm:$0xff]
        %v264 = vld [vmem:[#allocation2 + $0x40] sm:$0xff]
        %v265 = vld [vmem:[#allocation2 + $0x48] sm:$0xff]
        %v266 = vld [vmem:[#allocation2 + $0x50] sm:$0xff]
        %v267 = vld [vmem:[#allocation2 + $0x58] sm:$0xff]
        %v268 = vld [vmem:[#allocation2 + $0x60] sm:$0xff]
        %v269 = vld [vmem:[#allocation2 + $0x68] sm:$0xff]
        %v270 = vld [vmem:[#allocation2 + $0x70] sm:$0xff]
        %v271 = vld [vmem:[#allocation2 + $0x78] sm:$0xff]
        %v272 = vpack.c.bf16 %v257, %v256
        %v273 = vpack.c.bf16 %v259, %v258
        %v274 = vpack.c.bf16 %v261, %v260
        %v275 = vpack.c.bf16 %v263, %v262
        %v276 = vpack.c.bf16 %v265, %v264
        %v277 = vpack.c.bf16 %v267, %v266
        %v278 = vpack.c.bf16 %v269, %v268
        %v279 = vpack.c.bf16 %v271, %v270
        %v288 = vunpack.c.l.b16 %v272
        %v289 = vunpack.c.h.b16 %v272
        %v290 = vunpack.c.l.b16 %v273
        %v291 = vunpack.c.h.b16 %v273
        %v292 = vunpack.c.l.b16 %v274
        %v293 = vunpack.c.h.b16 %v274
        %v294 = vunpack.c.l.b16 %v275
        %v295 = vunpack.c.h.b16 %v275
        %v296 = vunpack.c.l.b16 %v276
        %v297 = vunpack.c.h.b16 %v276
        %v298 = vunpack.c.l.b16 %v277
        %v299 = vunpack.c.h.b16 %v277
        %v300 = vunpack.c.l.b16 %v278
        %v301 = vunpack.c.h.b16 %v278
        %v302 = vunpack.c.l.b16 %v279
        %v303 = vunpack.c.h.b16 %v279
        %v304 = vpack.c.b16 %v288, %v288
        %v305 = vpack.c.b16 %v289, %v289
        %v306 = vpack.c.b16 %v290, %v290
        %v307 = vpack.c.b16 %v291, %v291
        %v308 = vpack.c.b16 %v292, %v292
        %v309 = vpack.c.b16 %v293, %v293
        %v310 = vpack.c.b16 %v294, %v294
        %v311 = vpack.c.b16 %v295, %v295
        %v312 = vpack.c.b16 %v296, %v296
        %v313 = vpack.c.b16 %v297, %v297
        %v314 = vpack.c.b16 %v298, %v298
        %v315 = vpack.c.b16 %v299, %v299
        %v316 = vpack.c.b16 %v300, %v300
        %v317 = vpack.c.b16 %v301, %v301
        %v318 = vpack.c.b16 %v302, %v302
        %v319 = vpack.c.b16 %v303, %v303
        %vm336 = vcmask 125952
        %337 = vst.msk [vmem:[%s144] sm:$0xf] %vm336, %v304
        %338 = vst.msk [vmem:[%s144 + $0x4] sm:$0xf] %vm336, %v305
        %339 = vst.msk [vmem:[%s144 + $0x8] sm:$0xf] %vm336, %v306
        %340 = vst.msk [vmem:[%s144 + $0xc] sm:$0xf] %vm336, %v307
        %341 = vst.msk [vmem:[%s144 + $0x10] sm:$0xf] %vm336, %v308
        %342 = vst.msk [vmem:[%s144 + $0x14] sm:$0xf] %vm336, %v309
        %343 = vst.msk [vmem:[%s144 + $0x18] sm:$0xf] %vm336, %v310
        %344 = vst.msk [vmem:[%s144 + $0x1c] sm:$0xf] %vm336, %v311
        %345 = vst.msk [vmem:[%s144 + $0x20] sm:$0xf] %vm336, %v312
        %346 = vst.msk [vmem:[%s144 + $0x24] sm:$0xf] %vm336, %v313
        %347 = vst.msk [vmem:[%s144 + $0x28] sm:$0xf] %vm336, %v314
        %348 = vst.msk [vmem:[%s144 + $0x2c] sm:$0xf] %vm336, %v315
        %349 = vst.msk [vmem:[%s144 + $0x30] sm:$0xf] %vm336, %v316
        %350 = vst.msk [vmem:[%s144 + $0x34] sm:$0xf] %vm336, %v317
        %351 = vst.msk [vmem:[%s144 + $0x38] sm:$0xf] %vm336, %v318
        %352 = vst.msk [vmem:[%s144 + $0x3c] sm:$0xf] %vm336, %v319
      $region36: #{forward.27} parent=23 // pred_fallthru
        _
      %s353 = smul.u32 16, %s16
      %p354 = scmp.lt.s32.totalorder %s353, 15
      %s355 = scalar_select %p354, %s353, 15
      %s356 = smul.addr %s355, 4
      %s357 = scalar_lea.vmem %s1, %s356
      // Predicated region
      $region37: #{forward.27} parent=23 // pred_check
        %p358 = pneg %p70
      $region38: #{forward.27} parent=23 // pred_check_branch
        %360 = sbr.rel (%p358) target = $region40
      $region39: #{forward.27} parent=23 // pred_region
        %s361 = smul.u32 16, %s16
      $region40: #{forward.27} parent=23 // pred_fallthru
        _
      // Predicated region
      $region41: #{forward.27} parent=23 // pred_check
        %p362 = pneg %p70
      $region42: #{forward.27} parent=23 // pred_check_branch
        %364 = sbr.rel (%p362) target = $region44
      $region43: #{forward.27} parent=23 // pred_region
        %s365 = smul.u32 16, %s16
        %p366 = scmp.lt.s32.totalorder %s365, 15
        %s367 = scalar_select %p366, %s365, 15
        %s368 = smul.addr %s367, 4
        %s369 = scalar_lea.vmem %s1, %s368
      $region44: #{forward.27} parent=23 // pred_fallthru
        _
    $region24: #{forward.27} parent=5 // pred_fallthru
      _
    %p370 = scmp.le.s32.totalorder 2, %s7
    // Predicated region
    $region45: #{forward.27} parent=5 // pred_check
      %p371 = pneg %p370
    $region46: #{forward.27} parent=5 // pred_check_branch
      %373 = sbr.rel (%p371) target = $region48
    $region47: #{forward.27} parent=5 // pred_region
      %s374 = ssub.s32 %s7, 2
    $region48: #{forward.27} parent=5 // pred_fallthru
      _
  $region6: #{forward.27} parent=0 // loop_footer
    %s11 = sadd.s32 1, %s7
  $region7: #{forward.27} parent=0 // loop_footer_branch
    %6 = sbr.rel target = $region3
  $region8: #{forward.27} parent=0 // loop_exit
    _

// kernel: forward.26
$region0: #{forward.26}
  #allocation0 [shape = 'u32[]', space=smem, size = 0x4, offset = 0x4, fixed_abs, tag = 'smem constant byte address 0x4 - core index']
  #allocation1 [shape = 'u32[144,128]{1,0:T(1,128)}', space=vmem, size = 0x12000, scoped, tag = 'internal scratch']
  #allocation2 [shape = 'f32[256,16]{1,0:T(8,128)}', space=vmem, size = 0x20000, scoped, tag = 'scratch operand']
  %s0 = inlined_call_operand.vmem [shape: bf16[512,147], index: 0, kind: input, shape index: {}]
  %s1 = inlined_call_operand.vmem [shape: bf16[147,16], index: 1, kind: input, shape index: {}]
  %s2 = inlined_call_operand.vmem [shape: f32[1,16], index: 2, kind: input, shape index: {}]
  %s3 = inlined_call_operand.vmem [shape: f32[1,16], index: 3, kind: input, shape index: {}]
  %s4 = inlined_call_operand.vmem [shape: bf16[512,16], index: 4, kind: output, shape index: {}]
  %s5 = sld [smem:[#allocation0]]
  $region57: #{forward.26} parent=0
    _
  %s7 = ssub.s32 1, %s5
  %s8 = scalar_select 0, %s7, %s5
  loop: start=0, step=1, limit=4
  $region2: #{forward.26} parent=0 // loop_pre_header
    _
  $region3: #{forward.26} parent=0 // loop_header
    %s10 = sphi 0, %s14
    %p11 = scmp.ge.s32.totalorder %s10, 4
    %s17 = sphi 0, %s36
    %s18 = sphi 0, %s32
    %s19 = sphi 0, %s28
    %s20 = sphi 0, %s17
    %s21 = sphi 0, %s18
    %s22 = sphi 0, %s19
    %s23 = sphi 0, %s20
    %s24 = sphi 0, %s21
    %s25 = sphi 0, %s22
    %s41 = sphi 0, %s43
    %s44 = sphi 0, %s41
    %s45 = sphi 0, %s44
    %s61 = sphi 0, %s45
    %s69 = sphi 0, %s71
    %s72 = sphi 0, %s69
    %s73 = sphi 0, %s72
    %s89 = sphi 0, %s73
    %s95 = sphi 0, %s97
    %s98 = sphi 0, %s95
    %s99 = sphi 0, %s98
    %s115 = sphi 0, %s99
    %s121 = sphi 0, %s123
    %s124 = sphi 0, %s121
    %s125 = sphi 0, %s124
    %s141 = sphi 0, %s125
    %s149 = sphi 0, %s151
    %s152 = sphi 0, %s149
    %s153 = sphi 0, %s152
    %s169 = sphi 0, %s153
  $region4: #{forward.26} parent=0 // loop_header_branch
    %13 = sbr.rel (%p11) target = $region8
  $region5: #{forward.26} parent=0 // loop_body
    %s15 = ssub.s32 %s10, 1
    %s16 = ssub.s32 %s10, 2
    %s26 = sadd.s32 1, %s19
    %p27 = scmp.ge.s32.totalorder %s26, 1
    %s28 = scalar_select %p27, 0, %s26
    %s29 = sadd.s32 1, %s18
    %s30 = scalar_select %p27, %s29, %s18
    %p31 = scmp.ge.s32.totalorder %s30, 1
    %s32 = scalar_select %p31, 0, %s30
    %s33 = sadd.s32 1, %s17
    %s34 = scalar_select %p31, %s33, %s17
    %p35 = scmp.ge.s32.totalorder %s34, 2
    %s36 = scalar_select %p35, 0, %s34
    %s37 = ssub.s32 %s17, %s36
    %s38 = ssub.s32 %s19, %s28
    %s39 = sor.u32 %s37, %s38
    %p40 = scmp.eq.s32.totalorder %s39, 0
    %s42 = sadd.s32 %s41, 1
    %s43 = scalar_select %p40, %s41, %s42
    %p46 = pneg %p40
    %p47 = scmp.eq.s32.totalorder %s10, 1
    %p48 = por %p46, %p47
    %p49 = scmp.ne.s32.totalorder %s41, %s44
    %p50 = scmp.eq.s32.totalorder %s10, 0
    %p51 = por %p49, %p50
    %p52 = scmp.ne.s32.totalorder %s41, %s44
    %p53 = scmp.eq.s32.totalorder %s15, 1
    %p54 = por %p52, %p53
    %p55 = scmp.ne.s32.totalorder %s44, %s45
    %p56 = scmp.eq.s32.totalorder %s15, 0
    %p57 = por %p55, %p56
    %p58 = scmp.ne.s32.totalorder %s44, %s45
    %p59 = scmp.eq.s32.totalorder %s16, 1
    %p60 = por %p58, %p59
    %p62 = scmp.ne.s32.totalorder %s45, %s61
    %p63 = scmp.eq.s32.totalorder %s16, 0
    %p64 = por %p62, %p63
    %s65 = ssub.s32 %s19, %s28
    %s66 = ssub.s32 %s18, %s32
    %s67 = sor.u32 %s65, %s66
    %p68 = scmp.eq.s32.totalorder %s67, 0
    %s70 = sadd.s32 %s69, 1
    %s71 = scalar_select %p68, %s69, %s70
    %p74 = pneg %p68
    %p75 = scmp.eq.s32.totalorder %s10, 1
    %p76 = por %p74, %p75
    %p77 = scmp.ne.s32.totalorder %s69, %s72
    %p78 = scmp.eq.s32.totalorder %s10, 0
    %p79 = por %p77, %p78
    %p80 = scmp.ne.s32.totalorder %s69, %s72
    %p81 = scmp.eq.s32.totalorder %s15, 1
    %p82 = por %p80, %p81
    %p83 = scmp.ne.s32.totalorder %s72, %s73
    %p84 = scmp.eq.s32.totalorder %s15, 0
    %p85 = por %p83, %p84
    %p86 = scmp.ne.s32.totalorder %s72, %s73
    %p87 = scmp.eq.s32.totalorder %s16, 1
    %p88 = por %p86, %p87
    %p90 = scmp.ne.s32.totalorder %s73, %s89
    %p91 = scmp.eq.s32.totalorder %s16, 0
    %p92 = por %p90, %p91
    %s93 = ssub.s32 %s18, %s32
    %p94 = scmp.eq.s32.totalorder %s93, 0
    %s96 = sadd.s32 %s95, 1
    %s97 = scalar_select %p94, %s95, %s96
    %p100 = pneg %p94
    %p101 = scmp.eq.s32.totalorder %s10, 1
    %p102 = por %p100, %p101
    %p103 = scmp.ne.s32.totalorder %s95, %s98
    %p104 = scmp.eq.s32.totalorder %s10, 0
    %p105 = por %p103, %p104
    %p106 = scmp.ne.s32.totalorder %s95, %s98
    %p107 = scmp.eq.s32.totalorder %s15, 1
    %p108 = por %p106, %p107
    %p109 = scmp.ne.s32.totalorder %s98, %s99
    %p110 = scmp.eq.s32.totalorder %s15, 0
    %p111 = por %p109, %p110
    %p112 = scmp.ne.s32.totalorder %s98, %s99
    %p113 = scmp.eq.s32.totalorder %s16, 1
    %p114 = por %p112, %p113
    %p116 = scmp.ne.s32.totalorder %s99, %s115
    %p117 = scmp.eq.s32.totalorder %s16, 0
    %p118 = por %p116, %p117
    %s119 = ssub.s32 %s18, %s32
    %p120 = scmp.eq.s32.totalorder %s119, 0
    %s122 = sadd.s32 %s121, 1
    %s123 = scalar_select %p120, %s121, %s122
    %p126 = pneg %p120
    %p127 = scmp.eq.s32.totalorder %s10, 1
    %p128 = por %p126, %p127
    %p129 = scmp.ne.s32.totalorder %s121, %s124
    %p130 = scmp.eq.s32.totalorder %s10, 0
    %p131 = por %p129, %p130
    %p132 = scmp.ne.s32.totalorder %s121, %s124
    %p133 = scmp.eq.s32.totalorder %s15, 1
    %p134 = por %p132, %p133
    %p135 = scmp.ne.s32.totalorder %s124, %s125
    %p136 = scmp.eq.s32.totalorder %s15, 0
    %p137 = por %p135, %p136
    %p138 = scmp.ne.s32.totalorder %s124, %s125
    %p139 = scmp.eq.s32.totalorder %s16, 1
    %p140 = por %p138, %p139
    %p142 = scmp.ne.s32.totalorder %s125, %s141
    %p143 = scmp.eq.s32.totalorder %s16, 0
    %p144 = por %p142, %p143
    %s145 = ssub.s32 %s17, %s36
    %s146 = ssub.s32 %s18, %s32
    %s147 = sor.u32 %s145, %s146
    %p148 = scmp.eq.s32.totalorder %s147, 0
    %s150 = sadd.s32 %s149, 1
    %s151 = scalar_select %p148, %s149, %s150
    %p154 = pneg %p148
    %p155 = scmp.eq.s32.totalorder %s10, 1
    %p156 = por %p154, %p155
    %p157 = scmp.ne.s32.totalorder %s149, %s152
    %p158 = scmp.eq.s32.totalorder %s10, 0
    %p159 = por %p157, %p158
    %p160 = scmp.ne.s32.totalorder %s149, %s152
    %p161 = scmp.eq.s32.totalorder %s15, 1
    %p162 = por %p160, %p161
    %p163 = scmp.ne.s32.totalorder %s152, %s153
    %p164 = scmp.eq.s32.totalorder %s15, 0
    %p165 = por %p163, %p164
    %p166 = scmp.ne.s32.totalorder %s152, %s153
    %p167 = scmp.eq.s32.totalorder %s16, 1
    %p168 = por %p166, %p167
    %p170 = scmp.ne.s32.totalorder %s153, %s169
    %p171 = scmp.eq.s32.totalorder %s16, 0
    %p172 = por %p170, %p171
    %p173 = scmp.le.s32.totalorder 1, %s10
    %p174 = scmp.lt.s32.totalorder %s10, 3
    %p175 = pnand %p173, %p174
    %p176 = pneg %p175
    // Predicated region
    $region9: #{forward.26} parent=5 // pred_check
      _
    $region10: #{forward.26} parent=5 // pred_check_branch
      %178 = sbr.rel (%p175) target = $region12
    $region11: #{forward.26} parent=5 // pred_region
      %s179 = ssub.s32 %s10, 1
      // Predicated region
      $region13: #{forward.26} parent=11 // pred_check
        %p180 = pneg %p85
      $region14: #{forward.26} parent=11 // pred_check_branch
        %182 = sbr.rel (%p180) target = $region16
      $region15: #{forward.26} parent=11 // pred_region
        %s183 = smul.u32 19, %s22
        %p184 = scmp.lt.s32.totalorder %s183, 18
        %s185 = scalar_select %p184, %s183, 18
        %p186 = scmp.lt.s32.totalorder %s21, 0
        %s187 = scalar_select %p186, %s21, 0
        %s188 = sadd.s32 %s187, %s185
        %s189 = smul.addr %s188, 4
        %s190 = scalar_lea.vmem %s1, %s189
        %s191 = smul.u32 19, %s22
      $region16: #{forward.26} parent=11 // pred_fallthru
        _
      // Predicated region
      $region17: #{forward.26} parent=11 // pred_check
        %p192 = pneg %p111
      $region18: #{forward.26} parent=11 // pred_check_branch
        %194 = sbr.rel (%p192) target = $region20
      $region19: #{forward.26} parent=11 // pred_region
        %p195 = scmp.lt.s32.totalorder %s21, 0
        %s196 = scalar_select %p195, %s21, 0
        %s197 = scalar_lea.vmem %s2, %s196
      $region20: #{forward.26} parent=11 // pred_fallthru
        _
      // Predicated region
      $region21: #{forward.26} parent=11 // pred_check
        %p198 = pneg %p137
      $region22: #{forward.26} parent=11 // pred_check_branch
        %200 = sbr.rel (%p198) target = $region24
      $region23: #{forward.26} parent=11 // pred_region
        %p201 = scmp.lt.s32.totalorder %s21, 0
        %s202 = scalar_select %p201, %s21, 0
        %s203 = scalar_lea.vmem %s3, %s202
      $region24: #{forward.26} parent=11 // pred_fallthru
        _
    $region12: #{forward.26} parent=5 // pred_fallthru
      _
    %p204 = scmp.lt.s32.totalorder %s10, 2
    // Predicated region
    $region25: #{forward.26} parent=5 // pred_check
      %p205 = pneg %p204
    $region26: #{forward.26} parent=5 // pred_check_branch
      %207 = sbr.rel (%p205) target = $region28
    $region27: #{forward.26} parent=5 // pred_region
      // Predicated region
      $region29: #{forward.26} parent=27 // pred_check
        %p208 = pneg %p51
      $region30: #{forward.26} parent=27 // pred_check_branch
        %210 = sbr.rel (%p208) target = $region32
      $region31: #{forward.26} parent=27 // pred_region
        %s211 = smul.u32 32, %s17
        %s212 = smul.u32 2, %s19
        %p213 = scmp.lt.s32.totalorder %s211, 63
        %s214 = scalar_select %p213, %s211, 63
        %p215 = scmp.lt.s32.totalorder %s212, 1
        %s216 = scalar_select %p215, %s212, 1
        %s217 = smul.addr %s214, 2
        %s218 = sadd.s32 %s216, %s217
        %s219 = smul.addr %s218, 4
        %s220 = scalar_lea.vmem %s0, %s219
        %s221 = smul.u32 32, %s17
        %s222 = smul.u32 2, %s19
      $region32: #{forward.26} parent=27 // pred_fallthru
        _
    $region28: #{forward.26} parent=5 // pred_fallthru
      _
    %p223 = scmp.le.s32.totalorder 1, %s10
    %p224 = scmp.lt.s32.totalorder %s10, 3
    %p225 = pnand %p223, %p224
    %p226 = pneg %p225
    // Predicated region
    $region33: #{forward.26} parent=5 // pred_check
      _
    $region34: #{forward.26} parent=5 // pred_check_branch
      %228 = sbr.rel (%p225) target = $region36
    $region35: #{forward.26} parent=5 // pred_region
      %s229 = ssub.s32 %s10, 1
      %s230 = smul.u32 32, %s20
      %s231 = smul.u32 2, %s22
      %p232 = scmp.lt.s32.totalorder %s230, 63
      %s233 = scalar_select %p232, %s230, 63
      %p234 = scmp.lt.s32.totalorder %s231, 1
      %s235 = scalar_select %p234, %s231, 1
      %s236 = smul.addr %s233, 2
      %s237 = sadd.s32 %s235, %s236
      %s238 = smul.addr %s237, 4
      %s239 = scalar_lea.vmem %s0, %s238
      %p240 = pneg %p57
      %p241 = pneg %p54
      %s242 = smul.u32 19, %s22
      %p243 = scmp.lt.s32.totalorder %s242, 18
      %s244 = scalar_select %p243, %s242, 18
      %p245 = scmp.lt.s32.totalorder %s21, 0
      %s246 = scalar_select %p245, %s21, 0
      %s247 = sadd.s32 %s246, %s244
      %s248 = smul.addr %s247, 4
      %s249 = scalar_lea.vmem %s1, %s248
      %p250 = pneg %p85
      %p251 = pneg %p82
      %p252 = scmp.lt.s32.totalorder %s21, 0
      %s253 = scalar_select %p252, %s21, 0
      %s254 = scalar_lea.vmem %s2, %s253
      %p255 = pneg %p111
      %p256 = pneg %p108
      %p257 = scmp.lt.s32.totalorder %s21, 0
      %s258 = scalar_select %p257, %s21, 0
      %s259 = scalar_lea.vmem %s3, %s258
      %p260 = pneg %p137
      %p261 = pneg %p134
      %p262 = pneg %p165
      %p263 = pneg %p162
      %s264 = smul.u32 32, %s20
      %p265 = scmp.lt.s32.totalorder %s264, 63
      %s266 = scalar_select %p265, %s264, 63
      %p267 = scmp.lt.s32.totalorder %s21, 0
      %s268 = scalar_select %p267, %s21, 0
      %s269 = sadd.s32 %s268, %s266
      %s270 = smul.addr %s269, 4
      %s271 = scalar_lea.vmem %s4, %s270
      %s272 = smul.u32 32, %s20
      %s273 = smul.u32 2, %s22
      %p274 = scmp.lt.s32.totalorder %s272, 63
      %s275 = scalar_select %p274, %s272, 63
      %p276 = scmp.lt.s32.totalorder %s273, 1
      %s277 = scalar_select %p276, %s273, 1
      %s278 = smul.addr %s275, 2
      %s279 = sadd.s32 %s277, %s278
      %s280 = smul.addr %s279, 4
      %s281 = scalar_lea.vmem %s0, %s280
      %s282 = smul.u32 32, %s20
      %s283 = smul.u32 2, %s22
      %s284 = smul.u32 19, %s22
      %p285 = scmp.lt.s32.totalorder %s284, 18
      %s286 = scalar_select %p285, %s284, 18
      %p287 = scmp.lt.s32.totalorder %s21, 0
      %s288 = scalar_select %p287, %s21, 0
      %s289 = sadd.s32 %s288, %s286
      %s290 = smul.addr %s289, 4
      %s291 = scalar_lea.vmem %s1, %s290
      %s292 = smul.u32 19, %s22
      %p293 = scmp.lt.s32.totalorder %s21, 0
      %s294 = scalar_select %p293, %s21, 0
      %s295 = scalar_lea.vmem %s2, %s294
      %p296 = scmp.lt.s32.totalorder %s21, 0
      %s297 = scalar_select %p296, %s21, 0
      %s298 = scalar_lea.vmem %s3, %s297
      %s299 = smul.u32 32, %s20
      %p300 = scmp.lt.s32.totalorder %s299, 63
      %s301 = scalar_select %p300, %s299, 63
      %p302 = scmp.lt.s32.totalorder %s21, 0
      %s303 = scalar_select %p302, %s21, 0
      %s304 = sadd.s32 %s303, %s301
      %s305 = smul.addr %s304, 4
      %s306 = scalar_lea.vmem %s4, %s305
      %s307 = smul.u32 32, %s20
      %p309 = scmp.eq.s32.totalorder %s22, 0
      // Predicated region
      $region37: #{forward.26} parent=35 // pred_check
        %p310 = pneg %p309
      $region38: #{forward.26} parent=35 // pred_check_branch
        %312 = sbr.rel (%p310) target = $region40
      $region39: #{forward.26} parent=35 // pred_region
        %vm313 = vcmask 130048
        %314 = vst.msk [vmem:[#allocation2] sm:$0xff] %vm313, 0.0
        %315 = vst.msk [vmem:[#allocation2 + $0x8] sm:$0xff] %vm313, 0.0
        %316 = vst.msk [vmem:[#allocation2 + $0x10] sm:$0xff] %vm313, 0.0
        %317 = vst.msk [vmem:[#allocation2 + $0x18] sm:$0xff] %vm313, 0.0
        %318 = vst.msk [vmem:[#allocation2 + $0x20] sm:$0xff] %vm313, 0.0
        %319 = vst.msk [vmem:[#allocation2 + $0x28] sm:$0xff] %vm313, 0.0
        %320 = vst.msk [vmem:[#allocation2 + $0x30] sm:$0xff] %vm313, 0.0
        %321 = vst.msk [vmem:[#allocation2 + $0x38] sm:$0xff] %vm313, 0.0
        %322 = vst.msk [vmem:[#allocation2 + $0x40] sm:$0xff] %vm313, 0.0
        %323 = vst.msk [vmem:[#allocation2 + $0x48] sm:$0xff] %vm313, 0.0
        %324 = vst.msk [vmem:[#allocation2 + $0x50] sm:$0xff] %vm313, 0.0
        %325 = vst.msk [vmem:[#allocation2 + $0x58] sm:$0xff] %vm313, 0.0
        %326 = vst.msk [vmem:[#allocation2 + $0x60] sm:$0xff] %vm313, 0.0
        %327 = vst.msk [vmem:[#allocation2 + $0x68] sm:$0xff] %vm313, 0.0
        %328 = vst.msk [vmem:[#allocation2 + $0x70] sm:$0xff] %vm313, 0.0
        %329 = vst.msk [vmem:[#allocation2 + $0x78] sm:$0xff] %vm313, 0.0
        %330 = vst.msk [vmem:[#allocation2 + $0x80] sm:$0xff] %vm313, 0.0
        %331 = vst.msk [vmem:[#allocation2 + $0x88] sm:$0xff] %vm313, 0.0
        %332 = vst.msk [vmem:[#allocation2 + $0x90] sm:$0xff] %vm313, 0.0
        %333 = vst.msk [vmem:[#allocation2 + $0x98] sm:$0xff] %vm313, 0.0
        %334 = vst.msk [vmem:[#allocation2 + $0xa0] sm:$0xff] %vm313, 0.0
        %335 = vst.msk [vmem:[#allocation2 + $0xa8] sm:$0xff] %vm313, 0.0
        %336 = vst.msk [vmem:[#allocation2 + $0xb0] sm:$0xff] %vm313, 0.0
        %337 = vst.msk [vmem:[#allocation2 + $0xb8] sm:$0xff] %vm313, 0.0
        %338 = vst.msk [vmem:[#allocation2 + $0xc0] sm:$0xff] %vm313, 0.0
        %339 = vst.msk [vmem:[#allocation2 + $0xc8] sm:$0xff] %vm313, 0.0
        %340 = vst.msk [vmem:[#allocation2 + $0xd0] sm:$0xff] %vm313, 0.0
        %341 = vst.msk [vmem:[#allocation2 + $0xd8] sm:$0xff] %vm313, 0.0
        %342 = vst.msk [vmem:[#allocation2 + $0xe0] sm:$0xff] %vm313, 0.0
        %343 = vst.msk [vmem:[#allocation2 + $0xe8] sm:$0xff] %vm313, 0.0
        %344 = vst.msk [vmem:[#allocation2 + $0xf0] sm:$0xff] %vm313, 0.0
        %345 = vst.msk [vmem:[#allocation2 + $0xf8] sm:$0xff] %vm313, 0.0
      $region40: #{forward.26} parent=35 // pred_fallthru
        _
      %v346 = vld [vmem:[%s281] sm:$0xff]
      %v347 = vld [vmem:[%s281 + $0x8] sm:$0xff]
      %v348 = vld [vmem:[%s281 + $0x10] sm:$0xff]
      %v349 = vld [vmem:[%s281 + $0x18] sm:$0xff]
      %v350 = vld [vmem:[%s281 + $0x20] sm:$0xff]
      %v351 = vld [vmem:[%s281 + $0x28] sm:$0xff]
      %v352 = vld [vmem:[%s281 + $0x30] sm:$0xff]
      %v353 = vld [vmem:[%s281 + $0x38] sm:$0xff]
      %v354 = vld [vmem:[%s281 + $0x40] sm:$0xff]
      %v355 = vld [vmem:[%s281 + $0x48] sm:$0xff]
      %v356 = vld [vmem:[%s281 + $0x50] sm:$0xff]
      %v357 = vld [vmem:[%s281 + $0x58] sm:$0xff]
      %v358 = vld [vmem:[%s281 + $0x60] sm:$0xff]
      %v359 = vld [vmem:[%s281 + $0x68] sm:$0xff]
      %v360 = vld [vmem:[%s281 + $0x70] sm:$0xff]
      %v361 = vld [vmem:[%s281 + $0x78] sm:$0xff]
      %v362 = vld [vmem:[%s281 + $0x80] sm:$0xff]
      %v363 = vld [vmem:[%s281 + $0x88] sm:$0xff]
      %v364 = vld [vmem:[%s281 + $0x90] sm:$0xff]
      %v365 = vld [vmem:[%s281 + $0x98] sm:$0xff]
      %v366 = vld [vmem:[%s281 + $0xa0] sm:$0xff]
      %v367 = vld [vmem:[%s281 + $0xa8] sm:$0xff]
      %v368 = vld [vmem:[%s281 + $0xb0] sm:$0xff]
      %v369 = vld [vmem:[%s281 + $0xb8] sm:$0xff]
      %v370 = vld [vmem:[%s281 + $0xc0] sm:$0xff]
      %v371 = vld [vmem:[%s281 + $0xc8] sm:$0xff]
      %v372 = vld [vmem:[%s281 + $0xd0] sm:$0xff]
      %v373 = vld [vmem:[%s281 + $0xd8] sm:$0xff]
      %v374 = vld [vmem:[%s281 + $0xe0] sm:$0xff]
      %v375 = vld [vmem:[%s281 + $0xe8] sm:$0xff]
      %v376 = vld [vmem:[%s281 + $0xf0] sm:$0xff]
      %v377 = vld [vmem:[%s281 + $0xf8] sm:$0xff]
      %v378 = vld [vmem:[#allocation2] sm:$0xff]
      %v379 = vld [vmem:[#allocation2 + $0x8] sm:$0xff]
      %v380 = vld [vmem:[#allocation2 + $0x10] sm:$0xff]
      %v381 = vld [vmem:[#allocation2 + $0x18] sm:$0xff]
      %v382 = vld [vmem:[#allocation2 + $0x20] sm:$0xff]
      %v383 = vld [vmem:[#allocation2 + $0x28] sm:$0xff]
      %v384 = vld [vmem:[#allocation2 + $0x30] sm:$0xff]
      %v385 = vld [vmem:[#allocation2 + $0x38] sm:$0xff]
      %v386 = vld [vmem:[#allocation2 + $0x40] sm:$0xff]
      %v387 = vld [vmem:[#allocation2 + $0x48] sm:$0xff]
      %v388 = vld [vmem:[#allocation2 + $0x50] sm:$0xff]
      %v389 = vld [vmem:[#allocation2 + $0x58] sm:$0xff]
      %v390 = vld [vmem:[#allocation2 + $0x60] sm:$0xff]
      %v391 = vld [vmem:[#allocation2 + $0x68] sm:$0xff]
      %v392 = vld [vmem:[#allocation2 + $0x70] sm:$0xff]
      %v393 = vld [vmem:[#allocation2 + $0x78] sm:$0xff]
      %v394 = vld [vmem:[#allocation2 + $0x80] sm:$0xff]
      %v395 = vld [vmem:[#allocation2 + $0x88] sm:$0xff]
      %v396 = vld [vmem:[#allocation2 + $0x90] sm:$0xff]
      %v397 = vld [vmem:[#allocation2 + $0x98] sm:$0xff]
      %v398 = vld [vmem:[#allocation2 + $0xa0] sm:$0xff]
      %v399 = vld [vmem:[#allocation2 + $0xa8] sm:$0xff]
      %v400 = vld [vmem:[#allocation2 + $0xb0] sm:$0xff]
      %v401 = vld [vmem:[#allocation2 + $0xb8] sm:$0xff]
      %v402 = vld [vmem:[#allocation2 + $0xc0] sm:$0xff]
      %v403 = vld [vmem:[#allocation2 + $0xc8] sm:$0xff]
      %v404 = vld [vmem:[#allocation2 + $0xd0] sm:$0xff]
      %v405 = vld [vmem:[#allocation2 + $0xd8] sm:$0xff]
      %v406 = vld [vmem:[#allocation2 + $0xe0] sm:$0xff]
      %v407 = vld [vmem:[#allocation2 + $0xe8] sm:$0xff]
      %v408 = vld [vmem:[#allocation2 + $0xf0] sm:$0xff]
      %v409 = vld [vmem:[#allocation2 + $0xf8] sm:$0xff]
      %v410 = vld [vmem:[%s291] sm:$0xf]
      %v411 = vld [vmem:[%s291 + $0x4] sm:$0xf]
      %v412 = vld [vmem:[%s291 + $0x8] sm:$0xf]
      %v413 = vld [vmem:[%s291 + $0xc] sm:$0xf]
      %v414 = vld [vmem:[%s291 + $0x10] sm:$0xf]
      %v415 = vld [vmem:[%s291 + $0x14] sm:$0xf]
      %v416 = vld [vmem:[%s291 + $0x18] sm:$0xf]
      %v417 = vld [vmem:[%s291 + $0x1c] sm:$0xf]
      %v418 = vld [vmem:[%s291 + $0x20] sm:$0xf]
      %v419 = vld [vmem:[%s291 + $0x24] sm:$0xf]
      %v420 = vld [vmem:[%s291 + $0x28] sm:$0xf]
      %v421 = vld [vmem:[%s291 + $0x2c] sm:$0xf]
      %v422 = vld [vmem:[%s291 + $0x30] sm:$0xf]
      %v423 = vld [vmem:[%s291 + $0x34] sm:$0xf]
      %v424 = vld [vmem:[%s291 + $0x38] sm:$0xf]
      %v425 = vld [vmem:[%s291 + $0x3c] sm:$0xf]
      %v426 = vld [vmem:[%s291 + $0x40] sm:$0xf]
      %v427 = vld [vmem:[%s291 + $0x44] sm:$0xf]
      %v428 = vld [vmem:[%s291 + $0x48] sm:$0x3]
      %v461 = vunpack.c.l.b16 %v346
      %v462 = vunpack.c.h.b16 %v346
      %v463 = vunpack.c.l.b16 %v347
      %v464 = vunpack.c.h.b16 %v347
      %v465 = vunpack.c.l.b16 %v348
      %v466 = vunpack.c.h.b16 %v348
      %v467 = vunpack.c.l.b16 %v349
      %v468 = vunpack.c.h.b16 %v349
      %v469 = vunpack.c.l.b16 %v350
      %v470 = vunpack.c.h.b16 %v350
      %v471 = vunpack.c.l.b16 %v351
      %v472 = vunpack.c.h.b16 %v351
      %v473 = vunpack.c.l.b16 %v352
      %v474 = vunpack.c.h.b16 %v352
      %v475 = vunpack.c.l.b16 %v353
      %v476 = vunpack.c.h.b16 %v353
      %v477 = vunpack.c.l.b16 %v354
      %v478 = vunpack.c.h.b16 %v354
      %v479 = vunpack.c.l.b16 %v355
      %v480 = vunpack.c.h.b16 %v355
      %v481 = vunpack.c.l.b16 %v356
      %v482 = vunpack.c.h.b16 %v356
      %v483 = vunpack.c.l.b16 %v357
      %v484 = vunpack.c.h.b16 %v357
      %v485 = vunpack.c.l.b16 %v358
      %v486 = vunpack.c.h.b16 %v358
      %v487 = vunpack.c.l.b16 %v359
      %v488 = vunpack.c.h.b16 %v359
      %v489 = vunpack.c.l.b16 %v360
      %v490 = vunpack.c.h.b16 %v360
      %v491 = vunpack.c.l.b16 %v361
      %v492 = vunpack.c.h.b16 %v361
      %v493 = vunpack.c.l.b16 %v362
      %v494 = vunpack.c.h.b16 %v362
      %v495 = vunpack.c.l.b16 %v363
      %v496 = vunpack.c.h.b16 %v363
      %v497 = vunpack.c.l.b16 %v364
      %v498 = vunpack.c.h.b16 %v364
      %v499 = vunpack.c.l.b16 %v365
      %v500 = vunpack.c.h.b16 %v365
      %v501 = vunpack.c.l.b16 %v366
      %v502 = vunpack.c.h.b16 %v366
      %v503 = vunpack.c.l.b16 %v367
      %v504 = vunpack.c.h.b16 %v367
      %v505 = vunpack.c.l.b16 %v368
      %v506 = vunpack.c.h.b16 %v368
      %v507 = vunpack.c.l.b16 %v369
      %v508 = vunpack.c.h.b16 %v369
      %v509 = vunpack.c.l.b16 %v370
      %v510 = vunpack.c.h.b16 %v370
      %v511 = vunpack.c.l.b16 %v371
      %v512 = vunpack.c.h.b16 %v371
      %v513 = vunpack.c.l.b16 %v372
      %v514 = vunpack.c.h.b16 %v372
      %v515 = vunpack.c.l.b16 %v373
      %v516 = vunpack.c.h.b16 %v373
      %v517 = vunpack.c.l.b16 %v374
      %v518 = vunpack.c.h.b16 %v374
      %v519 = vunpack.c.l.b16 %v375
      %v520 = vunpack.c.h.b16 %v375
      %v521 = vunpack.c.l.b16 %v376
      %v522 = vunpack.c.h.b16 %v376
      %v523 = vunpack.c.l.b16 %v377
      %v524 = vunpack.c.h.b16 %v377
      %v525 = vpack.c.b16 %v463, %v461
      %v526 = vpack.c.b16 %v464, %v462
      %v527 = vpack.c.b16 %v467, %v465
      %v528 = vpack.c.b16 %v468, %v466
      %v529 = vpack.c.b16 %v471, %v469
      %v530 = vpack.c.b16 %v472, %v470
      %v531 = vpack.c.b16 %v475, %v473
      %v532 = vpack.c.b16 %v476, %v474
      %v533 = vpack.c.b16 %v479, %v477
      %v534 = vpack.c.b16 %v480, %v478
      %v535 = vpack.c.b16 %v483, %v481
      %v536 = vpack.c.b16 %v484, %v482
      %v537 = vpack.c.b16 %v487, %v485
      %v538 = vpack.c.b16 %v488, %v486
      %v539 = vpack.c.b16 %v491, %v489
      %v540 = vpack.c.b16 %v492, %v490
      %v541 = vpack.c.b16 %v495, %v493
      %v542 = vpack.c.b16 %v496, %v494
      %v543 = vpack.c.b16 %v499, %v497
      %v544 = vpack.c.b16 %v500, %v498
      %v545 = vpack.c.b16 %v503, %v501
      %v546 = vpack.c.b16 %v504, %v502
      %v547 = vpack.c.b16 %v507, %v505
      %v548 = vpack.c.b16 %v508, %v506
      %v549 = vpack.c.b16 %v511, %v509
      %v550 = vpack.c.b16 %v512, %v510
      %v551 = vpack.c.b16 %v515, %v513
      %v552 = vpack.c.b16 %v516, %v514
      %v553 = vpack.c.b16 %v519, %v517
      %v554 = vpack.c.b16 %v520, %v518
      %v555 = vpack.c.b16 %v523, %v521
      %v556 = vpack.c.b16 %v524, %v522
      %v592 = vunpack.c.l.b16 %v410
      %v593 = vunpack.c.l.b16 %v411
      %v594 = vunpack.c.l.b16 %v412
      %v595 = vunpack.c.l.b16 %v413
      %v596 = vunpack.c.l.b16 %v414
      %v597 = vunpack.c.l.b16 %v415
      %v598 = vunpack.c.l.b16 %v416
      %v599 = vunpack.c.l.b16 %v417
      %v600 = vunpack.c.l.b16 %v418
      %v601 = vunpack.c.l.b16 %v419
      %v602 = vunpack.c.l.b16 %v420
      %v603 = vunpack.c.l.b16 %v421
      %v604 = vunpack.c.l.b16 %v422
      %v605 = vunpack.c.l.b16 %v423
      %v606 = vunpack.c.l.b16 %v424
      %v607 = vunpack.c.l.b16 %v425
      %v608 = vunpack.c.l.b16 %v426
      %v609 = vunpack.c.l.b16 %v427
      %v610 = vunpack.c.l.b16 %v428
      %v611 = vpack.c.b16 %v593, %v592
      %v612 = vpack.c.b16 %v595, %v594
      %v613 = vpack.c.b16 %v597, %v596
      %v614 = vpack.c.b16 %v599, %v598
      %v615 = vpack.c.b16 %v601, %v600
      %v616 = vpack.c.b16 %v603, %v602
      %v617 = vpack.c.b16 %v605, %v604
      %v618 = vpack.c.b16 %v607, %v606
      %v619 = vpack.c.b16 %v609, %v608
      %v620 = vpack.c.b16 %v610, %v610
      %vm630 = vcmask 154624
      %v632 = vsel %vm630, %v526, 0
      %v635 = vsel %vm630, %v528, 0
      %v638 = vsel %vm630, %v530, 0
      %v641 = vsel %vm630, %v532, 0
      %v644 = vsel %vm630, %v534, 0
      %v647 = vsel %vm630, %v536, 0
      %v650 = vsel %vm630, %v538, 0
      %v653 = vsel %vm630, %v540, 0
      %v656 = vsel %vm630, %v542, 0
      %v659 = vsel %vm630, %v544, 0
      %v662 = vsel %vm630, %v546, 0
      %v665 = vsel %vm630, %v548, 0
      %v668 = vsel %vm630, %v550, 0
      %v671 = vsel %vm630, %v552, 0
      %v674 = vsel %vm630, %v554, 0
      %v677 = vsel %vm630, %v556, 0
      %vm679 = vcmask 1040384
      %vm680 = vcmask 1041408
      %v681 = vsel %vm679, 4294967295, 65535
      %v682 = vsel %vm680, %v681, 0
      %v684 = vand.u32 %v620, %v682
      %686 = vmatprep.subr.bf16.mxu0 0
      %687 = vmatpush1.bf16.msra.mxu0 %v611
      %688 = vmatprep.subr.bf16.mxu0 0
      %689 = vmatpush1.bf16.msra.mxu0 %v612
      %690 = vmatprep.subr.bf16.mxu0 0
      %691 = vmatpush1.bf16.msra.mxu0 %v613
      %692 = vmatprep.subr.bf16.mxu0 0
      %693 = vmatpush1.bf16.msra.mxu0 %v614
      %694 = vmatprep.subr.bf16.mxu0 0
      %695 = vmatpush1.bf16.msra.mxu0 %v615
      %696 = vmatprep.subr.bf16.mxu0 0
      %697 = vmatpush1.bf16.msra.mxu0 %v616
      %698 = vmatprep.subr.bf16.mxu0 0
      %699 = vmatpush1.bf16.msra.mxu0 %v617
      %700 = vmatprep.subr.bf16.mxu0 0
      %701 = vmatpush1.bf16.msra.mxu0 %v618
      %702 = vmatprep.subr.bf16.mxu0 0
      %703 = vmatpush1.bf16.msra.mxu0 %v619
      %704 = vmatprep.subr.bf16.mxu0 0
      %705 = vmatpush1.bf16.msra.mxu0 %v684
      %706 = vmatprep.subr.bf16.mxu0 0
      %707 = vmatpush1.bf16.msra.mxu0 0
      %708 = vmatprep.subr.bf16.mxu0 0
      %709 = vmatpush1.bf16.msra.mxu0 0
      %710 = vmatprep.subr.bf16.mxu0 0
      %711 = vmatpush1.bf16.msra.mxu0 0
      %712 = vmatprep.subr.bf16.mxu0 0
      %713 = vmatpush1.bf16.msra.mxu0 0
      %714 = vmatprep.subr.bf16.mxu0 0
      %715 = vmatpush1.bf16.msra.mxu0 0
      %716 = vmatprep.subr.bf16.mxu0 0
      %717 = vmatpush1.bf16.msra.mxu0 0
      %718 = vmatprep.mubr.bf16.mxu0 %v632
      %719 = vmatmul.mubr.bf16.gmra.mrb[0].mxu0 %v525
      %v720 = vpop.f32.mrb[0].mxu0
      %v721 = vadd.f32 0.0, %v720
      %v722 = vpop.f32.mrb[0].mxu0
      %v723 = vpop.f32.mrb[0].mxu0
      %v724 = vadd.f32 0.0, %v723
      %v725 = vpop.f32.mrb[0].mxu0
      %726 = vmatprep.mubr.bf16.mxu0 %v635
      %727 = vmatmul.mubr.bf16.gmra.mrb[0].mxu0 %v527
      %v728 = vpop.f32.mrb[0].mxu0
      %v729 = vadd.f32 0.0, %v728
      %v730 = vpop.f32.mrb[0].mxu0
      %v731 = vpop.f32.mrb[0].mxu0
      %v732 = vadd.f32 0.0, %v731
      %v733 = vpop.f32.mrb[0].mxu0
      %734 = vmatprep.mubr.bf16.mxu0 %v638
      %735 = vmatmul.mubr.bf16.gmra.mrb[0].mxu0 %v529
      %v736 = vpop.f32.mrb[0].mxu0
      %v737 = vadd.f32 0.0, %v736
      %v738 = vpop.f32.mrb[0].mxu0
      %v739 = vpop.f32.mrb[0].mxu0
      %v740 = vadd.f32 0.0, %v739
      %v741 = vpop.f32.mrb[0].mxu0
      %742 = vmatprep.mubr.bf16.mxu0 %v641
      %743 = vmatmul.mubr.bf16.gmra.mrb[0].mxu0 %v531
      %v744 = vpop.f32.mrb[0].mxu0
      %v745 = vadd.f32 0.0, %v744
      %v746 = vpop.f32.mrb[0].mxu0
      %v747 = vpop.f32.mrb[0].mxu0
      %v748 = vadd.f32 0.0, %v747
      %v749 = vpop.f32.mrb[0].mxu0
      %750 = vmatprep.mubr.bf16.mxu0 %v644
      %751 = vmatmul.mubr.bf16.gmra.mrb[0].mxu0 %v533
      %v752 = vpop.f32.mrb[0].mxu0
      %v753 = vadd.f32 0.0, %v752
      %v754 = vpop.f32.mrb[0].mxu0
      %v755 = vpop.f32.mrb[0].mxu0
      %v756 = vadd.f32 0.0, %v755
      %v757 = vpop.f32.mrb[0].mxu0
      %758 = vmatprep.mubr.bf16.mxu0 %v647
      %759 = vmatmul.mubr.bf16.gmra.mrb[0].mxu0 %v535
      %v760 = vpop.f32.mrb[0].mxu0
      %v761 = vadd.f32 0.0, %v760
      %v762 = vpop.f32.mrb[0].mxu0
      %v763 = vpop.f32.mrb[0].mxu0
      %v764 = vadd.f32 0.0, %v763
      %v765 = vpop.f32.mrb[0].mxu0
      %766 = vmatprep.mubr.bf16.mxu0 %v650
      %767 = vmatmul.mubr.bf16.gmra.mrb[0].mxu0 %v537
      %v768 = vpop.f32.mrb[0].mxu0
      %v769 = vadd.f32 0.0, %v768
      %v770 = vpop.f32.mrb[0].mxu0
      %v771 = vpop.f32.mrb[0].mxu0
      %v772 = vadd.f32 0.0, %v771
      %v773 = vpop.f32.mrb[0].mxu0
      %774 = vmatprep.mubr.bf16.mxu0 %v653
      %775 = vmatmul.mubr.bf16.gmra.mrb[0].mxu0 %v539
      %v776 = vpop.f32.mrb[0].mxu0
      %v777 = vadd.f32 0.0, %v776
      %v778 = vpop.f32.mrb[0].mxu0
      %v779 = vpop.f32.mrb[0].mxu0
      %v780 = vadd.f32 0.0, %v779
      %v781 = vpop.f32.mrb[0].mxu0
      %782 = vmatprep.mubr.bf16.mxu0 %v656
      %783 = vmatmul.mubr.bf16.gmra.mrb[0].mxu0 %v541
      %v784 = vpop.f32.mrb[0].mxu0
      %v785 = vadd.f32 0.0, %v784
      %v786 = vpop.f32.mrb[0].mxu0
      %v787 = vpop.f32.mrb[0].mxu0
      %v788 = vadd.f32 0.0, %v787
      %v789 = vpop.f32.mrb[0].mxu0
      %790 = vmatprep.mubr.bf16.mxu0 %v659
      %791 = vmatmul.mubr.bf16.gmra.mrb[0].mxu0 %v543
      %v792 = vpop.f32.mrb[0].mxu0
      %v793 = vadd.f32 0.0, %v792
      %v794 = vpop.f32.mrb[0].mxu0
      %v795 = vpop.f32.mrb[0].mxu0
      %v796 = vadd.f32 0.0, %v795
      %v797 = vpop.f32.mrb[0].mxu0
      %798 = vmatprep.mubr.bf16.mxu0 %v662
      %799 = vmatmul.mubr.bf16.gmra.mrb[0].mxu0 %v545
      %v800 = vpop.f32.mrb[0].mxu0
      %v801 = vadd.f32 0.0, %v800
      %v802 = vpop.f32.mrb[0].mxu0
      %v803 = vpop.f32.mrb[0].mxu0
      %v804 = vadd.f32 0.0, %v803
      %v805 = vpop.f32.mrb[0].mxu0
      %806 = vmatprep.mubr.bf16.mxu0 %v665
      %807 = vmatmul.mubr.bf16.gmra.mrb[0].mxu0 %v547
      %v808 = vpop.f32.mrb[0].mxu0
      %v809 = vadd.f32 0.0, %v808
      %v810 = vpop.f32.mrb[0].mxu0
      %v811 = vpop.f32.mrb[0].mxu0
      %v812 = vadd.f32 0.0, %v811
      %v813 = vpop.f32.mrb[0].mxu0
      %814 = vmatprep.mubr.bf16.mxu0 %v668
      %815 = vmatmul.mubr.bf16.gmra.mrb[0].mxu0 %v549
      %v816 = vpop.f32.mrb[0].mxu0
      %v817 = vadd.f32 0.0, %v816
      %v818 = vpop.f32.mrb[0].mxu0
      %v819 = vpop.f32.mrb[0].mxu0
      %v820 = vadd.f32 0.0, %v819
      %v821 = vpop.f32.mrb[0].mxu0
      %822 = vmatprep.mubr.bf16.mxu0 %v671
      %823 = vmatmul.mubr.bf16.gmra.mrb[0].mxu0 %v551
      %v824 = vpop.f32.mrb[0].mxu0
      %v825 = vadd.f32 0.0, %v824
      %v826 = vpop.f32.mrb[0].mxu0
      %v827 = vpop.f32.mrb[0].mxu0
      %v828 = vadd.f32 0.0, %v827
      %v829 = vpop.f32.mrb[0].mxu0
      %830 = vmatprep.mubr.bf16.mxu0 %v674
      %831 = vmatmul.mubr.bf16.gmra.mrb[0].mxu0 %v553
      %v832 = vpop.f32.mrb[0].mxu0
      %v833 = vadd.f32 0.0, %v832
      %v834 = vpop.f32.mrb[0].mxu0
      %v835 = vpop.f32.mrb[0].mxu0
      %v836 = vadd.f32 0.0, %v835
      %v837 = vpop.f32.mrb[0].mxu0
      %838 = vmatprep.mubr.bf16.mxu0 %v677
      %839 = vmatmul.mubr.bf16.gmra.mrb[0].mxu0 %v555
      %v840 = vpop.f32.mrb[0].mxu0
      %v841 = vadd.f32 0.0, %v840
      %v842 = vpop.f32.mrb[0].mxu0
      %v843 = vpop.f32.mrb[0].mxu0
      %v844 = vadd.f32 0.0, %v843
      %v845 = vpop.f32.mrb[0].mxu0
      %846 = vdwg.mxu0
      %v847 = vadd.f32 %v378, %v721
      %v848 = vadd.f32 %v379, %v724
      %v849 = vadd.f32 %v380, %v729
      %v850 = vadd.f32 %v381, %v732
      %v851 = vadd.f32 %v382, %v737
      %v852 = vadd.f32 %v383, %v740
      %v853 = vadd.f32 %v384, %v745
      %v854 = vadd.f32 %v385, %v748
      %v855 = vadd.f32 %v386, %v753
      %v856 = vadd.f32 %v387, %v756
      %v857 = vadd.f32 %v388, %v761
      %v858 = vadd.f32 %v389, %v764
      %v859 = vadd.f32 %v390, %v769
      %v860 = vadd.f32 %v391, %v772
      %v861 = vadd.f32 %v392, %v777
      %v862 = vadd.f32 %v393, %v780
      %v863 = vadd.f32 %v394, %v785
      %v864 = vadd.f32 %v395, %v788
      %v865 = vadd.f32 %v396, %v793
      %v866 = vadd.f32 %v397, %v796
      %v867 = vadd.f32 %v398, %v801
      %v868 = vadd.f32 %v399, %v804
      %v869 = vadd.f32 %v400, %v809
      %v870 = vadd.f32 %v401, %v812
      %v871 = vadd.f32 %v402, %v817
      %v872 = vadd.f32 %v403, %v820
      %v873 = vadd.f32 %v404, %v825
      %v874 = vadd.f32 %v405, %v828
      %v875 = vadd.f32 %v406, %v833
      %v876 = vadd.f32 %v407, %v836
      %v877 = vadd.f32 %v408, %v841
      %v878 = vadd.f32 %v409, %v844
      %vm879 = vcmask 130048
      %880 = vst.msk [vmem:[#allocation2] sm:$0xff] %vm879, %v847
      %881 = vst.msk [vmem:[#allocation2 + $0x8] sm:$0xff] %vm879, %v848
      %882 = vst.msk [vmem:[#allocation2 + $0x10] sm:$0xff] %vm879, %v849
      %883 = vst.msk [vmem:[#allocation2 + $0x18] sm:$0xff] %vm879, %v850
      %884 = vst.msk [vmem:[#allocation2 + $0x20] sm:$0xff] %vm879, %v851
      %885 = vst.msk [vmem:[#allocation2 + $0x28] sm:$0xff] %vm879, %v852
      %886 = vst.msk [vmem:[#allocation2 + $0x30] sm:$0xff] %vm879, %v853
      %887 = vst.msk [vmem:[#allocation2 + $0x38] sm:$0xff] %vm879, %v854
      %888 = vst.msk [vmem:[#allocation2 + $0x40] sm:$0xff] %vm879, %v855
      %889 = vst.msk [vmem:[#allocation2 + $0x48] sm:$0xff] %vm879, %v856
      %890 = vst.msk [vmem:[#allocation2 + $0x50] sm:$0xff] %vm879, %v857
      %891 = vst.msk [vmem:[#allocation2 + $0x58] sm:$0xff] %vm879, %v858
      %892 = vst.msk [vmem:[#allocation2 + $0x60] sm:$0xff] %vm879, %v859
      %893 = vst.msk [vmem:[#allocation2 + $0x68] sm:$0xff] %vm879, %v860
      %894 = vst.msk [vmem:[#allocation2 + $0x70] sm:$0xff] %vm879, %v861
      %895 = vst.msk [vmem:[#allocation2 + $0x78] sm:$0xff] %vm879, %v862
      %896 = vst.msk [vmem:[#allocation2 + $0x80] sm:$0xff] %vm879, %v863
      %897 = vst.msk [vmem:[#allocation2 + $0x88] sm:$0xff] %vm879, %v864
      %898 = vst.msk [vmem:[#allocation2 + $0x90] sm:$0xff] %vm879, %v865
      %899 = vst.msk [vmem:[#allocation2 + $0x98] sm:$0xff] %vm879, %v866
      %900 = vst.msk [vmem:[#allocation2 + $0xa0] sm:$0xff] %vm879, %v867
      %901 = vst.msk [vmem:[#allocation2 + $0xa8] sm:$0xff] %vm879, %v868
      %902 = vst.msk [vmem:[#allocation2 + $0xb0] sm:$0xff] %vm879, %v869
      %903 = vst.msk [vmem:[#allocation2 + $0xb8] sm:$0xff] %vm879, %v870
      %904 = vst.msk [vmem:[#allocation2 + $0xc0] sm:$0xff] %vm879, %v871
      %905 = vst.msk [vmem:[#allocation2 + $0xc8] sm:$0xff] %vm879, %v872
      %906 = vst.msk [vmem:[#allocation2 + $0xd0] sm:$0xff] %vm879, %v873
      %907 = vst.msk [vmem:[#allocation2 + $0xd8] sm:$0xff] %vm879, %v874
      %908 = vst.msk [vmem:[#allocation2 + $0xe0] sm:$0xff] %vm879, %v875
      %909 = vst.msk [vmem:[#allocation2 + $0xe8] sm:$0xff] %vm879, %v876
      %910 = vst.msk [vmem:[#allocation2 + $0xf0] sm:$0xff] %vm879, %v877
      %911 = vst.msk [vmem:[#allocation2 + $0xf8] sm:$0xff] %vm879, %v878
      // Predicated region
      $region41: #{forward.26} parent=35 // pred_check
        %p912 = pneg %p309
      $region42: #{forward.26} parent=35 // pred_check_branch
        %914 = sbr.rel (%p912) target = $region44
      $region43: #{forward.26} parent=35 // pred_region
        %v915 = vld [vmem:[#allocation2] sm:$0xff]
        %v916 = vld [vmem:[#allocation2 + $0x8] sm:$0xff]
        %v917 = vld [vmem:[#allocation2 + $0x10] sm:$0xff]
        %v918 = vld [vmem:[#allocation2 + $0x18] sm:$0xff]
        %v919 = vld [vmem:[#allocation2 + $0x20] sm:$0xff]
        %v920 = vld [vmem:[#allocation2 + $0x28] sm:$0xff]
        %v921 = vld [vmem:[#allocation2 + $0x30] sm:$0xff]
        %v922 = vld [vmem:[#allocation2 + $0x38] sm:$0xff]
        %v923 = vld [vmem:[#allocation2 + $0x40] sm:$0xff]
        %v924 = vld [vmem:[#allocation2 + $0x48] sm:$0xff]
        %v925 = vld [vmem:[#allocation2 + $0x50] sm:$0xff]
        %v926 = vld [vmem:[#allocation2 + $0x58] sm:$0xff]
        %v927 = vld [vmem:[#allocation2 + $0x60] sm:$0xff]
        %v928 = vld [vmem:[#allocation2 + $0x68] sm:$0xff]
        %v929 = vld [vmem:[#allocation2 + $0x70] sm:$0xff]
        %v930 = vld [vmem:[#allocation2 + $0x78] sm:$0xff]
        %v931 = vld [vmem:[#allocation2 + $0x80] sm:$0xff]
        %v932 = vld [vmem:[#allocation2 + $0x88] sm:$0xff]
        %v933 = vld [vmem:[#allocation2 + $0x90] sm:$0xff]
        %v934 = vld [vmem:[#allocation2 + $0x98] sm:$0xff]
        %v935 = vld [vmem:[#allocation2 + $0xa0] sm:$0xff]
        %v936 = vld [vmem:[#allocation2 + $0xa8] sm:$0xff]
        %v937 = vld [vmem:[#allocation2 + $0xb0] sm:$0xff]
        %v938 = vld [vmem:[#allocation2 + $0xb8] sm:$0xff]
        %v939 = vld [vmem:[#allocation2 + $0xc0] sm:$0xff]
        %v940 = vld [vmem:[#allocation2 + $0xc8] sm:$0xff]
        %v941 = vld [vmem:[#allocation2 + $0xd0] sm:$0xff]
        %v942 = vld [vmem:[#allocation2 + $0xd8] sm:$0xff]
        %v943 = vld [vmem:[#allocation2 + $0xe0] sm:$0xff]
        %v944 = vld [vmem:[#allocation2 + $0xe8] sm:$0xff]
        %v945 = vld [vmem:[#allocation2 + $0xf0] sm:$0xff]
        %v946 = vld [vmem:[#allocation2 + $0xf8] sm:$0xff]
        %v947 = vld [vmem:[%s295] sm:$0x1]
        %v949 = vlaneseq
        %v950 = vshrl.u32 %v949, 7
        %v951 = vsub.s32 0, %v950
        %v952 = vrot.slane %v947, %v951
        %v954 = vmul.f32 %v915, %v952
        %v955 = vmul.f32 %v916, %v952
        %v956 = vmul.f32 %v917, %v952
        %v957 = vmul.f32 %v918, %v952
        %v958 = vmul.f32 %v919, %v952
        %v959 = vmul.f32 %v920, %v952
        %v960 = vmul.f32 %v921, %v952
        %v961 = vmul.f32 %v922, %v952
        %v962 = vmul.f32 %v923, %v952
        %v963 = vmul.f32 %v924, %v952
        %v964 = vmul.f32 %v925, %v952
        %v965 = vmul.f32 %v926, %v952
        %v966 = vmul.f32 %v927, %v952
        %v967 = vmul.f32 %v928, %v952
        %v968 = vmul.f32 %v929, %v952
        %v969 = vmul.f32 %v930, %v952
        %v970 = vmul.f32 %v931, %v952
        %v971 = vmul.f32 %v932, %v952
        %v972 = vmul.f32 %v933, %v952
        %v973 = vmul.f32 %v934, %v952
        %v974 = vmul.f32 %v935, %v952
        %v975 = vmul.f32 %v936, %v952
        %v976 = vmul.f32 %v937, %v952
        %v977 = vmul.f32 %v938, %v952
        %v978 = vmul.f32 %v939, %v952
        %v979 = vmul.f32 %v940, %v952
        %v980 = vmul.f32 %v941, %v952
        %v981 = vmul.f32 %v942, %v952
        %v982 = vmul.f32 %v943, %v952
        %v983 = vmul.f32 %v944, %v952
        %v984 = vmul.f32 %v945, %v952
        %v985 = vmul.f32 %v946, %v952
        %v986 = vld [vmem:[%s298] sm:$0x1]
        %v988 = vlaneseq
        %v989 = vshrl.u32 %v988, 7
        %v990 = vsub.s32 0, %v989
        %v991 = vrot.slane %v986, %v990
        %v993 = vadd.f32 %v954, %v991
        %v994 = vadd.f32 %v955, %v991
        %v995 = vadd.f32 %v956, %v991
        %v996 = vadd.f32 %v957, %v991
        %v997 = vadd.f32 %v958, %v991
        %v998 = vadd.f32 %v959, %v991
        %v999 = vadd.f32 %v960, %v991
        %v1000 = vadd.f32 %v961, %v991
        %v1001 = vadd.f32 %v962, %v991
        %v1002 = vadd.f32 %v963, %v991
        %v1003 = vadd.f32 %v964, %v991
        %v1004 = vadd.f32 %v965, %v991
        %v1005 = vadd.f32 %v966, %v991
        %v1006 = vadd.f32 %v967, %v991
        %v1007 = vadd.f32 %v968, %v991
        %v1008 = vadd.f32 %v969, %v991
        %v1009 = vadd.f32 %v970, %v991
        %v1010 = vadd.f32 %v971, %v991
        %v1011 = vadd.f32 %v972, %v991
        %v1012 = vadd.f32 %v973, %v991
        %v1013 = vadd.f32 %v974, %v991
        %v1014 = vadd.f32 %v975, %v991
        %v1015 = vadd.f32 %v976, %v991
        %v1016 = vadd.f32 %v977, %v991
        %v1017 = vadd.f32 %v978, %v991
        %v1018 = vadd.f32 %v979, %v991
        %v1019 = vadd.f32 %v980, %v991
        %v1020 = vadd.f32 %v981, %v991
        %v1021 = vadd.f32 %v982, %v991
        %v1022 = vadd.f32 %v983, %v991
        %v1023 = vadd.f32 %v984, %v991
        %v1024 = vadd.f32 %v985, %v991
        %v1025 = vmax.f32 %v993, 0.0
        %v1026 = vmax.f32 %v994, 0.0
        %v1027 = vmax.f32 %v995, 0.0
        %v1028 = vmax.f32 %v996, 0.0
        %v1029 = vmax.f32 %v997, 0.0
        %v1030 = vmax.f32 %v998, 0.0
        %v1031 = vmax.f32 %v999, 0.0
        %v1032 = vmax.f32 %v1000, 0.0
        %v1033 = vmax.f32 %v1001, 0.0
        %v1034 = vmax.f32 %v1002, 0.0
        %v1035 = vmax.f32 %v1003, 0.0
        %v1036 = vmax.f32 %v1004, 0.0
        %v1037 = vmax.f32 %v1005, 0.0
        %v1038 = vmax.f32 %v1006, 0.0
        %v1039 = vmax.f32 %v1007, 0.0
        %v1040 = vmax.f32 %v1008, 0.0
        %v1041 = vmax.f32 %v1009, 0.0
        %v1042 = vmax.f32 %v1010, 0.0
        %v1043 = vmax.f32 %v1011, 0.0
        %v1044 = vmax.f32 %v1012, 0.0
        %v1045 = vmax.f32 %v1013, 0.0
        %v1046 = vmax.f32 %v1014, 0.0
        %v1047 = vmax.f32 %v1015, 0.0
        %v1048 = vmax.f32 %v1016, 0.0
        %v1049 = vmax.f32 %v1017, 0.0
        %v1050 = vmax.f32 %v1018, 0.0
        %v1051 = vmax.f32 %v1019, 0.0
        %v1052 = vmax.f32 %v1020, 0.0
        %v1053 = vmax.f32 %v1021, 0.0
        %v1054 = vmax.f32 %v1022, 0.0
        %v1055 = vmax.f32 %v1023, 0.0
        %v1056 = vmax.f32 %v1024, 0.0
        %v1057 = vpack.c.bf16 %v1026, %v1025
        %v1058 = vpack.c.bf16 %v1028, %v1027
        %v1059 = vpack.c.bf16 %v1030, %v1029
        %v1060 = vpack.c.bf16 %v1032, %v1031
        %v1061 = vpack.c.bf16 %v1034, %v1033
        %v1062 = vpack.c.bf16 %v1036, %v1035
        %v1063 = vpack.c.bf16 %v1038, %v1037
        %v1064 = vpack.c.bf16 %v1040, %v1039
        %v1065 = vpack.c.bf16 %v1042, %v1041
        %v1066 = vpack.c.bf16 %v1044, %v1043
        %v1067 = vpack.c.bf16 %v1046, %v1045
        %v1068 = vpack.c.bf16 %v1048, %v1047
        %v1069 = vpack.c.bf16 %v1050, %v1049
        %v1070 = vpack.c.bf16 %v1052, %v1051
        %v1071 = vpack.c.bf16 %v1054, %v1053
        %v1072 = vpack.c.bf16 %v1056, %v1055
        %v1089 = vunpack.c.l.b16 %v1057
        %v1090 = vunpack.c.h.b16 %v1057
        %v1091 = vunpack.c.l.b16 %v1058
        %v1092 = vunpack.c.h.b16 %v1058
        %v1093 = vunpack.c.l.b16 %v1059
        %v1094 = vunpack.c.h.b16 %v1059
        %v1095 = vunpack.c.l.b16 %v1060
        %v1096 = vunpack.c.h.b16 %v1060
        %v1097 = vunpack.c.l.b16 %v1061
        %v1098 = vunpack.c.h.b16 %v1061
        %v1099 = vunpack.c.l.b16 %v1062
        %v1100 = vunpack.c.h.b16 %v1062
        %v1101 = vunpack.c.l.b16 %v1063
        %v1102 = vunpack.c.h.b16 %v1063
        %v1103 = vunpack.c.l.b16 %v1064
        %v1104 = vunpack.c.h.b16 %v1064
        %v1105 = vunpack.c.l.b16 %v1065
        %v1106 = vunpack.c.h.b16 %v1065
        %v1107 = vunpack.c.l.b16 %v1066
        %v1108 = vunpack.c.h.b16 %v1066
        %v1109 = vunpack.c.l.b16 %v1067
        %v1110 = vunpack.c.h.b16 %v1067
        %v1111 = vunpack.c.l.b16 %v1068
        %v1112 = vunpack.c.h.b16 %v1068
        %v1113 = vunpack.c.l.b16 %v1069
        %v1114 = vunpack.c.h.b16 %v1069
        %v1115 = vunpack.c.l.b16 %v1070
        %v1116 = vunpack.c.h.b16 %v1070
        %v1117 = vunpack.c.l.b16 %v1071
        %v1118 = vunpack.c.h.b16 %v1071
        %v1119 = vunpack.c.l.b16 %v1072
        %v1120 = vunpack.c.h.b16 %v1072
        %v1121 = vpack.c.b16 %v1089, %v1089
        %v1122 = vpack.c.b16 %v1090, %v1090
        %v1123 = vpack.c.b16 %v1091, %v1091
        %v1124 = vpack.c.b16 %v1092, %v1092
        %v1125 = vpack.c.b16 %v1093, %v1093
        %v1126 = vpack.c.b16 %v1094, %v1094
        %v1127 = vpack.c.b16 %v1095, %v1095
        %v1128 = vpack.c.b16 %v1096, %v1096
        %v1129 = vpack.c.b16 %v1097, %v1097
        %v1130 = vpack.c.b16 %v1098, %v1098
        %v1131 = vpack.c.b16 %v1099, %v1099
        %v1132 = vpack.c.b16 %v1100, %v1100
        %v1133 = vpack.c.b16 %v1101, %v1101
        %v1134 = vpack.c.b16 %v1102, %v1102
        %v1135 = vpack.c.b16 %v1103, %v1103
        %v1136 = vpack.c.b16 %v1104, %v1104
        %v1137 = vpack.c.b16 %v1105, %v1105
        %v1138 = vpack.c.b16 %v1106, %v1106
        %v1139 = vpack.c.b16 %v1107, %v1107
        %v1140 = vpack.c.b16 %v1108, %v1108
        %v1141 = vpack.c.b16 %v1109, %v1109
        %v1142 = vpack.c.b16 %v1110, %v1110
        %v1143 = vpack.c.b16 %v1111, %v1111
        %v1144 = vpack.c.b16 %v1112, %v1112
        %v1145 = vpack.c.b16 %v1113, %v1113
        %v1146 = vpack.c.b16 %v1114, %v1114
        %v1147 = vpack.c.b16 %v1115, %v1115
        %v1148 = vpack.c.b16 %v1116, %v1116
        %v1149 = vpack.c.b16 %v1117, %v1117
        %v1150 = vpack.c.b16 %v1118, %v1118
        %v1151 = vpack.c.b16 %v1119, %v1119
        %v1152 = vpack.c.b16 %v1120, %v1120
        %vm1185 = vcmask 125952
        %1186 = vst.msk [vmem:[%s306] sm:$0xf] %vm1185, %v1121
        %1187 = vst.msk [vmem:[%s306 + $0x4] sm:$0xf] %vm1185, %v1122
        %1188 = vst.msk [vmem:[%s306 + $0x8] sm:$0xf] %vm1185, %v1123
        %1189 = vst.msk [vmem:[%s306 + $0xc] sm:$0xf] %vm1185, %v1124
        %1190 = vst.msk [vmem:[%s306 + $0x10] sm:$0xf] %vm1185, %v1125
        %1191 = vst.msk [vmem:[%s306 + $0x14] sm:$0xf] %vm1185, %v1126
        %1192 = vst.msk [vmem:[%s306 + $0x18] sm:$0xf] %vm1185, %v1127
        %1193 = vst.msk [vmem:[%s306 + $0x1c] sm:$0xf] %vm1185, %v1128
        %1194 = vst.msk [vmem:[%s306 + $0x20] sm:$0xf] %vm1185, %v1129
        %1195 = vst.msk [vmem:[%s306 + $0x24] sm:$0xf] %vm1185, %v1130
        %1196 = vst.msk [vmem:[%s306 + $0x28] sm:$0xf] %vm1185, %v1131
        %1197 = vst.msk [vmem:[%s306 + $0x2c] sm:$0xf] %vm1185, %v1132
        %1198 = vst.msk [vmem:[%s306 + $0x30] sm:$0xf] %vm1185, %v1133
        %1199 = vst.msk [vmem:[%s306 + $0x34] sm:$0xf] %vm1185, %v1134
        %1200 = vst.msk [vmem:[%s306 + $0x38] sm:$0xf] %vm1185, %v1135
        %1201 = vst.msk [vmem:[%s306 + $0x3c] sm:$0xf] %vm1185, %v1136
        %1202 = vst.msk [vmem:[%s306 + $0x40] sm:$0xf] %vm1185, %v1137
        %1203 = vst.msk [vmem:[%s306 + $0x44] sm:$0xf] %vm1185, %v1138
        %1204 = vst.msk [vmem:[%s306 + $0x48] sm:$0xf] %vm1185, %v1139
        %1205 = vst.msk [vmem:[%s306 + $0x4c] sm:$0xf] %vm1185, %v1140
        %1206 = vst.msk [vmem:[%s306 + $0x50] sm:$0xf] %vm1185, %v1141
        %1207 = vst.msk [vmem:[%s306 + $0x54] sm:$0xf] %vm1185, %v1142
        %1208 = vst.msk [vmem:[%s306 + $0x58] sm:$0xf] %vm1185, %v1143
        %1209 = vst.msk [vmem:[%s306 + $0x5c] sm:$0xf] %vm1185, %v1144
        %1210 = vst.msk [vmem:[%s306 + $0x60] sm:$0xf] %vm1185, %v1145
        %1211 = vst.msk [vmem:[%s306 + $0x64] sm:$0xf] %vm1185, %v1146
        %1212 = vst.msk [vmem:[%s306 + $0x68] sm:$0xf] %vm1185, %v1147
        %1213 = vst.msk [vmem:[%s306 + $0x6c] sm:$0xf] %vm1185, %v1148
        %1214 = vst.msk [vmem:[%s306 + $0x70] sm:$0xf] %vm1185, %v1149
        %1215 = vst.msk [vmem:[%s306 + $0x74] sm:$0xf] %vm1185, %v1150
        %1216 = vst.msk [vmem:[%s306 + $0x78] sm:$0xf] %vm1185, %v1151
        %1217 = vst.msk [vmem:[%s306 + $0x7c] sm:$0xf] %vm1185, %v1152
      $region44: #{forward.26} parent=35 // pred_fallthru
        _
      %s1218 = smul.u32 32, %s20
      %p1219 = scmp.lt.s32.totalorder %s1218, 63
      %s1220 = scalar_select %p1219, %s1218, 63
      %p1221 = scmp.lt.s32.totalorder %s21, 0
      %s1222 = scalar_select %p1221, %s21, 0
      %s1223 = sadd.s32 %s1222, %s1220
      %s1224 = smul.addr %s1223, 4
      %s1225 = scalar_lea.vmem %s4, %s1224
      // Predicated region
      $region45: #{forward.26} parent=35 // pred_check
        %p1226 = pneg %p162
      $region46: #{forward.26} parent=35 // pred_check_branch
        %1228 = sbr.rel (%p1226) target = $region48
      $region47: #{forward.26} parent=35 // pred_region
        %s1229 = smul.u32 32, %s20
      $region48: #{forward.26} parent=35 // pred_fallthru
        _
    $region36: #{forward.26} parent=5 // pred_fallthru
      _
    %p1230 = scmp.le.s32.totalorder 2, %s10
    // Predicated region
    $region49: #{forward.26} parent=5 // pred_check
      %p1231 = pneg %p1230
    $region50: #{forward.26} parent=5 // pred_check_branch
      %1233 = sbr.rel (%p1231) target = $region52
    $region51: #{forward.26} parent=5 // pred_region
      %s1234 = ssub.s32 %s10, 2
      // Predicated region
      $region53: #{forward.26} parent=51 // pred_check
        %p1235 = pneg %p168
      $region54: #{forward.26} parent=51 // pred_check_branch
        %1237 = sbr.rel (%p1235) target = $region56
      $region55: #{forward.26} parent=51 // pred_region
        %s1238 = smul.u32 32, %s23
        %p1239 = scmp.lt.s32.totalorder %s1238, 63
        %s1240 = scalar_select %p1239, %s1238, 63
        %p1241 = scmp.lt.s32.totalorder %s24, 0
        %s1242 = scalar_select %p1241, %s24, 0
        %s1243 = sadd.s32 %s1242, %s1240
        %s1244 = smul.addr %s1243, 4
        %s1245 = scalar_lea.vmem %s4, %s1244
      $region56: #{forward.26} parent=51 // pred_fallthru
        _
    $region52: #{forward.26} parent=5 // pred_fallthru
      _
  $region6: #{forward.26} parent=0 // loop_footer
    %s14 = sadd.s32 1, %s10
  $region7: #{forward.26} parent=0 // loop_footer_branch
    %9 = sbr.rel target = $region3
  $region8: #{forward.26} parent=0 // loop_exit
    _

// kernel: forward.28
$region0: #{forward.28}
  #allocation0 [shape = 'u32[]', space=smem, size = 0x4, offset = 0x4, fixed_abs, tag = 'smem constant byte address 0x4 - core index']
  #allocation1 [shape = 'u32[144,128]{1,0:T(1,128)}', space=vmem, size = 0x12000, scoped, tag = 'internal scratch']
  #allocation2 [shape = 'f32[128,32]{1,0:T(8,128)}', space=vmem, size = 0x10000, scoped, tag = 'scratch operand']
  %s0 = inlined_call_operand.vmem [shape: bf16[128,16], index: 0, kind: input, shape index: {}]
  %s1 = inlined_call_operand.vmem [shape: bf16[16,32], index: 1, kind: input, shape index: {}]
  %s2 = inlined_call_operand.vmem [shape: f32[1,16], index: 2, kind: input, shape index: {}]
  %s3 = inlined_call_operand.vmem [shape: f32[1,16], index: 3, kind: input, shape index: {}]
  %s4 = inlined_call_operand.vmem [shape: f32[1,32], index: 4, kind: input, shape index: {}]
  %s5 = inlined_call_operand.vmem [shape: f32[1,32], index: 5, kind: input, shape index: {}]
  %s6 = inlined_call_operand.vmem [shape: bf16[128,32], index: 6, kind: output, shape index: {}]
  %s7 = sld [smem:[#allocation0]]
  $region42: #{forward.28} parent=0
    _
  %s9 = ssub.s32 1, %s7
  %s10 = scalar_select 0, %s9, %s7
  // Predicated region
  $region2: #{forward.28} parent=0 // pred_check
    _
  $region3: #{forward.28} parent=0 // pred_check_branch
    %12 = sbr.rel (0) target = $region5
  $region4: #{forward.28} parent=0 // pred_region
    _
  $region5: #{forward.28} parent=0 // pred_fallthru
    _
  // Predicated region
  $region6: #{forward.28} parent=0 // pred_check
    _
  $region7: #{forward.28} parent=0 // pred_check_branch
    %14 = sbr.rel (0) target = $region9
  $region8: #{forward.28} parent=0 // pred_region
    _
  $region9: #{forward.28} parent=0 // pred_fallthru
    _
  // Predicated region
  $region10: #{forward.28} parent=0 // pred_check
    _
  $region11: #{forward.28} parent=0 // pred_check_branch
    %16 = sbr.rel (0) target = $region13
  $region12: #{forward.28} parent=0 // pred_region
    _
  $region13: #{forward.28} parent=0 // pred_fallthru
    _
  // Predicated region
  $region14: #{forward.28} parent=0 // pred_check
    _
  $region15: #{forward.28} parent=0 // pred_check_branch
    %18 = sbr.rel (0) target = $region17
  $region16: #{forward.28} parent=0 // pred_region
    _
  $region17: #{forward.28} parent=0 // pred_fallthru
    _
  // Predicated region
  $region18: #{forward.28} parent=0 // pred_check
    _
  $region19: #{forward.28} parent=0 // pred_check_branch
    %20 = sbr.rel (0) target = $region21
  $region20: #{forward.28} parent=0 // pred_region
    _
  $region21: #{forward.28} parent=0 // pred_fallthru
    _
  // Predicated region
  $region22: #{forward.28} parent=0 // pred_check
    _
  $region23: #{forward.28} parent=0 // pred_check_branch
    %22 = sbr.rel (0) target = $region25
  $region24: #{forward.28} parent=0 // pred_region
    _
  $region25: #{forward.28} parent=0 // pred_fallthru
    _
  %p24 = scmp.eq.s32.totalorder 0, 0
  // Predicated region
  $region26: #{forward.28} parent=0 // pred_check
    %p25 = pneg %p24
  $region27: #{forward.28} parent=0 // pred_check_branch
    %27 = sbr.rel (%p25) target = $region29
  $region28: #{forward.28} parent=0 // pred_region
    %vm28 = vcmask 261120
    %29 = vst.msk [vmem:[#allocation2] sm:$0xff] %vm28, 0.0
    %30 = vst.msk [vmem:[#allocation2 + $0x8] sm:$0xff] %vm28, 0.0
    %31 = vst.msk [vmem:[#allocation2 + $0x10] sm:$0xff] %vm28, 0.0
    %32 = vst.msk [vmem:[#allocation2 + $0x18] sm:$0xff] %vm28, 0.0
    %33 = vst.msk [vmem:[#allocation2 + $0x20] sm:$0xff] %vm28, 0.0
    %34 = vst.msk [vmem:[#allocation2 + $0x28] sm:$0xff] %vm28, 0.0
    %35 = vst.msk [vmem:[#allocation2 + $0x30] sm:$0xff] %vm28, 0.0
    %36 = vst.msk [vmem:[#allocation2 + $0x38] sm:$0xff] %vm28, 0.0
    %37 = vst.msk [vmem:[#allocation2 + $0x40] sm:$0xff] %vm28, 0.0
    %38 = vst.msk [vmem:[#allocation2 + $0x48] sm:$0xff] %vm28, 0.0
    %39 = vst.msk [vmem:[#allocation2 + $0x50] sm:$0xff] %vm28, 0.0
    %40 = vst.msk [vmem:[#allocation2 + $0x58] sm:$0xff] %vm28, 0.0
    %41 = vst.msk [vmem:[#allocation2 + $0x60] sm:$0xff] %vm28, 0.0
    %42 = vst.msk [vmem:[#allocation2 + $0x68] sm:$0xff] %vm28, 0.0
    %43 = vst.msk [vmem:[#allocation2 + $0x70] sm:$0xff] %vm28, 0.0
    %44 = vst.msk [vmem:[#allocation2 + $0x78] sm:$0xff] %vm28, 0.0
  $region29: #{forward.28} parent=0 // pred_fallthru
    _
  %v45 = vld [vmem:[%s0] sm:$0xf]
  %v46 = vld [vmem:[%s0 + $0x4] sm:$0xf]
  %v47 = vld [vmem:[%s0 + $0x8] sm:$0xf]
  %v48 = vld [vmem:[%s0 + $0xc] sm:$0xf]
  %v49 = vld [vmem:[%s0 + $0x10] sm:$0xf]
  %v50 = vld [vmem:[%s0 + $0x14] sm:$0xf]
  %v51 = vld [vmem:[%s0 + $0x18] sm:$0xf]
  %v52 = vld [vmem:[%s0 + $0x1c] sm:$0xf]
  %v53 = vld [vmem:[%s0 + $0x20] sm:$0xf]
  %v54 = vld [vmem:[%s0 + $0x24] sm:$0xf]
  %v55 = vld [vmem:[%s0 + $0x28] sm:$0xf]
  %v56 = vld [vmem:[%s0 + $0x2c] sm:$0xf]
  %v57 = vld [vmem:[%s0 + $0x30] sm:$0xf]
  %v58 = vld [vmem:[%s0 + $0x34] sm:$0xf]
  %v59 = vld [vmem:[%s0 + $0x38] sm:$0xf]
  %v60 = vld [vmem:[%s0 + $0x3c] sm:$0xf]
  %v61 = vunpack.c.l.bf16 %v45
  %v62 = vunpack.c.l.bf16 %v46
  %v63 = vunpack.c.l.bf16 %v47
  %v64 = vunpack.c.l.bf16 %v48
  %v65 = vunpack.c.l.bf16 %v49
  %v66 = vunpack.c.l.bf16 %v50
  %v67 = vunpack.c.l.bf16 %v51
  %v68 = vunpack.c.l.bf16 %v52
  %v69 = vunpack.c.l.bf16 %v53
  %v70 = vunpack.c.l.bf16 %v54
  %v71 = vunpack.c.l.bf16 %v55
  %v72 = vunpack.c.l.bf16 %v56
  %v73 = vunpack.c.l.bf16 %v57
  %v74 = vunpack.c.l.bf16 %v58
  %v75 = vunpack.c.l.bf16 %v59
  %v76 = vunpack.c.l.bf16 %v60
  %v77 = vld [vmem:[%s2] sm:$0x1]
  %v79 = vlaneseq
  %v80 = vshrl.u32 %v79, 7
  %v81 = vsub.s32 0, %v80
  %v82 = vrot.slane %v77, %v81
  %v84 = vmul.f32 %v61, %v82
  %v85 = vmul.f32 %v62, %v82
  %v86 = vmul.f32 %v63, %v82
  %v87 = vmul.f32 %v64, %v82
  %v88 = vmul.f32 %v65, %v82
  %v89 = vmul.f32 %v66, %v82
  %v90 = vmul.f32 %v67, %v82
  %v91 = vmul.f32 %v68, %v82
  %v92 = vmul.f32 %v69, %v82
  %v93 = vmul.f32 %v70, %v82
  %v94 = vmul.f32 %v71, %v82
  %v95 = vmul.f32 %v72, %v82
  %v96 = vmul.f32 %v73, %v82
  %v97 = vmul.f32 %v74, %v82
  %v98 = vmul.f32 %v75, %v82
  %v99 = vmul.f32 %v76, %v82
  %v100 = vld [vmem:[%s3] sm:$0x1]
  %v102 = vlaneseq
  %v103 = vshrl.u32 %v102, 7
  %v104 = vsub.s32 0, %v103
  %v105 = vrot.slane %v100, %v104
  %v107 = vadd.f32 %v84, %v105
  %v108 = vadd.f32 %v85, %v105
  %v109 = vadd.f32 %v86, %v105
  %v110 = vadd.f32 %v87, %v105
  %v111 = vadd.f32 %v88, %v105
  %v112 = vadd.f32 %v89, %v105
  %v113 = vadd.f32 %v90, %v105
  %v114 = vadd.f32 %v91, %v105
  %v115 = vadd.f32 %v92, %v105
  %v116 = vadd.f32 %v93, %v105
  %v117 = vadd.f32 %v94, %v105
  %v118 = vadd.f32 %v95, %v105
  %v119 = vadd.f32 %v96, %v105
  %v120 = vadd.f32 %v97, %v105
  %v121 = vadd.f32 %v98, %v105
  %v122 = vadd.f32 %v99, %v105
  %v123 = vmax.f32 %v107, 0.0
  %v124 = vmax.f32 %v108, 0.0
  %v125 = vmax.f32 %v109, 0.0
  %v126 = vmax.f32 %v110, 0.0
  %v127 = vmax.f32 %v111, 0.0
  %v128 = vmax.f32 %v112, 0.0
  %v129 = vmax.f32 %v113, 0.0
  %v130 = vmax.f32 %v114, 0.0
  %v131 = vmax.f32 %v115, 0.0
  %v132 = vmax.f32 %v116, 0.0
  %v133 = vmax.f32 %v117, 0.0
  %v134 = vmax.f32 %v118, 0.0
  %v135 = vmax.f32 %v119, 0.0
  %v136 = vmax.f32 %v120, 0.0
  %v137 = vmax.f32 %v121, 0.0
  %v138 = vmax.f32 %v122, 0.0
  %v139 = vpack.c.bf16 %v124, %v123
  %v140 = vpack.c.bf16 %v126, %v125
  %v141 = vpack.c.bf16 %v128, %v127
  %v142 = vpack.c.bf16 %v130, %v129
  %v143 = vpack.c.bf16 %v132, %v131
  %v144 = vpack.c.bf16 %v134, %v133
  %v145 = vpack.c.bf16 %v136, %v135
  %v146 = vpack.c.bf16 %v138, %v137
  %v147 = vld [vmem:[#allocation2] sm:$0xff]
  %v148 = vld [vmem:[#allocation2 + $0x8] sm:$0xff]
  %v149 = vld [vmem:[#allocation2 + $0x10] sm:$0xff]
  %v150 = vld [vmem:[#allocation2 + $0x18] sm:$0xff]
  %v151 = vld [vmem:[#allocation2 + $0x20] sm:$0xff]
  %v152 = vld [vmem:[#allocation2 + $0x28] sm:$0xff]
  %v153 = vld [vmem:[#allocation2 + $0x30] sm:$0xff]
  %v154 = vld [vmem:[#allocation2 + $0x38] sm:$0xff]
  %v155 = vld [vmem:[#allocation2 + $0x40] sm:$0xff]
  %v156 = vld [vmem:[#allocation2 + $0x48] sm:$0xff]
  %v157 = vld [vmem:[#allocation2 + $0x50] sm:$0xff]
  %v158 = vld [vmem:[#allocation2 + $0x58] sm:$0xff]
  %v159 = vld [vmem:[#allocation2 + $0x60] sm:$0xff]
  %v160 = vld [vmem:[#allocation2 + $0x68] sm:$0xff]
  %v161 = vld [vmem:[#allocation2 + $0x70] sm:$0xff]
  %v162 = vld [vmem:[#allocation2 + $0x78] sm:$0xff]
  %v163 = vld [vmem:[%s1] sm:$0xf]
  %v164 = vld [vmem:[%s1 + $0x4] sm:$0xf]
  %v167 = vunpack.c.l.b16 %v163
  %v168 = vunpack.c.l.b16 %v164
  %v169 = vpack.c.b16 %v168, %v167
  %vm171 = vcmask 130048
  %v173 = vsel %vm171, %v139, 0
  %v176 = vsel %vm171, %v140, 0
  %v179 = vsel %vm171, %v141, 0
  %v182 = vsel %vm171, %v142, 0
  %v185 = vsel %vm171, %v143, 0
  %v188 = vsel %vm171, %v144, 0
  %v191 = vsel %vm171, %v145, 0
  %v194 = vsel %vm171, %v146, 0
  %196 = vmatprep.subr.bf16.mxu0 0
  %197 = vmatpush1.bf16.msra.mxu0 %v169
  %198 = vmatprep.subr.bf16.mxu0 0
  %199 = vmatpush1.bf16.msra.mxu0 0
  %200 = vmatprep.subr.bf16.mxu0 0
  %201 = vmatpush1.bf16.msra.mxu0 0
  %202 = vmatprep.subr.bf16.mxu0 0
  %203 = vmatpush1.bf16.msra.mxu0 0
  %204 = vmatprep.subr.bf16.mxu0 0
  %205 = vmatpush1.bf16.msra.mxu0 0
  %206 = vmatprep.subr.bf16.mxu0 0
  %207 = vmatpush1.bf16.msra.mxu0 0
  %208 = vmatprep.subr.bf16.mxu0 0
  %209 = vmatpush1.bf16.msra.mxu0 0
  %210 = vmatprep.subr.bf16.mxu0 0
  %211 = vmatpush1.bf16.msra.mxu0 0
  %212 = vmatprep.subr.bf16.mxu0 0
  %213 = vmatpush1.bf16.msra.mxu0 0
  %214 = vmatprep.subr.bf16.mxu0 0
  %215 = vmatpush1.bf16.msra.mxu0 0
  %216 = vmatprep.subr.bf16.mxu0 0
  %217 = vmatpush1.bf16.msra.mxu0 0
  %218 = vmatprep.subr.bf16.mxu0 0
  %219 = vmatpush1.bf16.msra.mxu0 0
  %220 = vmatprep.subr.bf16.mxu0 0
  %221 = vmatpush1.bf16.msra.mxu0 0
  %222 = vmatprep.subr.bf16.mxu0 0
  %223 = vmatpush1.bf16.msra.mxu0 0
  %224 = vmatprep.subr.bf16.mxu0 0
  %225 = vmatpush1.bf16.msra.mxu0 0
  %226 = vmatprep.subr.bf16.mxu0 0
  %227 = vmatpush1.bf16.msra.mxu0 0
  %228 = vmatprep.mubr.bf16.mxu0 0
  %229 = vmatmul.mubr.bf16.gmra.mrb[0].mxu0 %v173
  %v230 = vpop.f32.mrb[0].mxu0
  %v231 = vadd.f32 0.0, %v230
  %v232 = vpop.f32.mrb[0].mxu0
  %v233 = vpop.f32.mrb[0].mxu0
  %v234 = vadd.f32 0.0, %v233
  %v235 = vpop.f32.mrb[0].mxu0
  %236 = vmatprep.mubr.bf16.mxu0 0
  %237 = vmatmul.mubr.bf16.gmra.mrb[0].mxu0 %v176
  %v238 = vpop.f32.mrb[0].mxu0
  %v239 = vadd.f32 0.0, %v238
  %v240 = vpop.f32.mrb[0].mxu0
  %v241 = vpop.f32.mrb[0].mxu0
  %v242 = vadd.f32 0.0, %v241
  %v243 = vpop.f32.mrb[0].mxu0
  %244 = vmatprep.mubr.bf16.mxu0 0
  %245 = vmatmul.mubr.bf16.gmra.mrb[0].mxu0 %v179
  %v246 = vpop.f32.mrb[0].mxu0
  %v247 = vadd.f32 0.0, %v246
  %v248 = vpop.f32.mrb[0].mxu0
  %v249 = vpop.f32.mrb[0].mxu0
  %v250 = vadd.f32 0.0, %v249
  %v251 = vpop.f32.mrb[0].mxu0
  %252 = vmatprep.mubr.bf16.mxu0 0
  %253 = vmatmul.mubr.bf16.gmra.mrb[0].mxu0 %v182
  %v254 = vpop.f32.mrb[0].mxu0
  %v255 = vadd.f32 0.0, %v254
  %v256 = vpop.f32.mrb[0].mxu0
  %v257 = vpop.f32.mrb[0].mxu0
  %v258 = vadd.f32 0.0, %v257
  %v259 = vpop.f32.mrb[0].mxu0
  %260 = vmatprep.mubr.bf16.mxu0 0
  %261 = vmatmul.mubr.bf16.gmra.mrb[0].mxu0 %v185
  %v262 = vpop.f32.mrb[0].mxu0
  %v263 = vadd.f32 0.0, %v262
  %v264 = vpop.f32.mrb[0].mxu0
  %v265 = vpop.f32.mrb[0].mxu0
  %v266 = vadd.f32 0.0, %v265
  %v267 = vpop.f32.mrb[0].mxu0
  %268 = vmatprep.mubr.bf16.mxu0 0
  %269 = vmatmul.mubr.bf16.gmra.mrb[0].mxu0 %v188
  %v270 = vpop.f32.mrb[0].mxu0
  %v271 = vadd.f32 0.0, %v270
  %v272 = vpop.f32.mrb[0].mxu0
  %v273 = vpop.f32.mrb[0].mxu0
  %v274 = vadd.f32 0.0, %v273
  %v275 = vpop.f32.mrb[0].mxu0
  %276 = vmatprep.mubr.bf16.mxu0 0
  %277 = vmatmul.mubr.bf16.gmra.mrb[0].mxu0 %v191
  %v278 = vpop.f32.mrb[0].mxu0
  %v279 = vadd.f32 0.0, %v278
  %v280 = vpop.f32.mrb[0].mxu0
  %v281 = vpop.f32.mrb[0].mxu0
  %v282 = vadd.f32 0.0, %v281
  %v283 = vpop.f32.mrb[0].mxu0
  %284 = vmatprep.mubr.bf16.mxu0 0
  %285 = vmatmul.mubr.bf16.gmra.mrb[0].mxu0 %v194
  %v286 = vpop.f32.mrb[0].mxu0
  %v287 = vadd.f32 0.0, %v286
  %v288 = vpop.f32.mrb[0].mxu0
  %v289 = vpop.f32.mrb[0].mxu0
  %v290 = vadd.f32 0.0, %v289
  %v291 = vpop.f32.mrb[0].mxu0
  %292 = vdwg.mxu0
  %v293 = vadd.f32 %v147, %v231
  %v294 = vadd.f32 %v148, %v234
  %v295 = vadd.f32 %v149, %v239
  %v296 = vadd.f32 %v150, %v242
  %v297 = vadd.f32 %v151, %v247
  %v298 = vadd.f32 %v152, %v250
  %v299 = vadd.f32 %v153, %v255
  %v300 = vadd.f32 %v154, %v258
  %v301 = vadd.f32 %v155, %v263
  %v302 = vadd.f32 %v156, %v266
  %v303 = vadd.f32 %v157, %v271
  %v304 = vadd.f32 %v158, %v274
  %v305 = vadd.f32 %v159, %v279
  %v306 = vadd.f32 %v160, %v282
  %v307 = vadd.f32 %v161, %v287
  %v308 = vadd.f32 %v162, %v290
  %vm309 = vcmask 261120
  %310 = vst.msk [vmem:[#allocation2] sm:$0xff] %vm309, %v293
  %311 = vst.msk [vmem:[#allocation2 + $0x8] sm:$0xff] %vm309, %v294
  %312 = vst.msk [vmem:[#allocation2 + $0x10] sm:$0xff] %vm309, %v295
  %313 = vst.msk [vmem:[#allocation2 + $0x18] sm:$0xff] %vm309, %v296
  %314 = vst.msk [vmem:[#allocation2 + $0x20] sm:$0xff] %vm309, %v297
  %315 = vst.msk [vmem:[#allocation2 + $0x28] sm:$0xff] %vm309, %v298
  %316 = vst.msk [vmem:[#allocation2 + $0x30] sm:$0xff] %vm309, %v299
  %317 = vst.msk [vmem:[#allocation2 + $0x38] sm:$0xff] %vm309, %v300
  %318 = vst.msk [vmem:[#allocation2 + $0x40] sm:$0xff] %vm309, %v301
  %319 = vst.msk [vmem:[#allocation2 + $0x48] sm:$0xff] %vm309, %v302
  %320 = vst.msk [vmem:[#allocation2 + $0x50] sm:$0xff] %vm309, %v303
  %321 = vst.msk [vmem:[#allocation2 + $0x58] sm:$0xff] %vm309, %v304
  %322 = vst.msk [vmem:[#allocation2 + $0x60] sm:$0xff] %vm309, %v305
  %323 = vst.msk [vmem:[#allocation2 + $0x68] sm:$0xff] %vm309, %v306
  %324 = vst.msk [vmem:[#allocation2 + $0x70] sm:$0xff] %vm309, %v307
  %325 = vst.msk [vmem:[#allocation2 + $0x78] sm:$0xff] %vm309, %v308
  // Predicated region
  $region30: #{forward.28} parent=0 // pred_check
    %p326 = pneg %p24
  $region31: #{forward.28} parent=0 // pred_check_branch
    %328 = sbr.rel (%p326) target = $region33
  $region32: #{forward.28} parent=0 // pred_region
    %v329 = vld [vmem:[#allocation2] sm:$0xff]
    %v330 = vld [vmem:[#allocation2 + $0x8] sm:$0xff]
    %v331 = vld [vmem:[#allocation2 + $0x10] sm:$0xff]
    %v332 = vld [vmem:[#allocation2 + $0x18] sm:$0xff]
    %v333 = vld [vmem:[#allocation2 + $0x20] sm:$0xff]
    %v334 = vld [vmem:[#allocation2 + $0x28] sm:$0xff]
    %v335 = vld [vmem:[#allocation2 + $0x30] sm:$0xff]
    %v336 = vld [vmem:[#allocation2 + $0x38] sm:$0xff]
    %v337 = vld [vmem:[#allocation2 + $0x40] sm:$0xff]
    %v338 = vld [vmem:[#allocation2 + $0x48] sm:$0xff]
    %v339 = vld [vmem:[#allocation2 + $0x50] sm:$0xff]
    %v340 = vld [vmem:[#allocation2 + $0x58] sm:$0xff]
    %v341 = vld [vmem:[#allocation2 + $0x60] sm:$0xff]
    %v342 = vld [vmem:[#allocation2 + $0x68] sm:$0xff]
    %v343 = vld [vmem:[#allocation2 + $0x70] sm:$0xff]
    %v344 = vld [vmem:[#allocation2 + $0x78] sm:$0xff]
    %v345 = vld [vmem:[%s4] sm:$0x1]
    %v347 = vlaneseq
    %v348 = vshrl.u32 %v347, 7
    %v349 = vsub.s32 0, %v348
    %v350 = vrot.slane %v345, %v349
    %v352 = vmul.f32 %v329, %v350
    %v353 = vmul.f32 %v330, %v350
    %v354 = vmul.f32 %v331, %v350
    %v355 = vmul.f32 %v332, %v350
    %v356 = vmul.f32 %v333, %v350
    %v357 = vmul.f32 %v334, %v350
    %v358 = vmul.f32 %v335, %v350
    %v359 = vmul.f32 %v336, %v350
    %v360 = vmul.f32 %v337, %v350
    %v361 = vmul.f32 %v338, %v350
    %v362 = vmul.f32 %v339, %v350
    %v363 = vmul.f32 %v340, %v350
    %v364 = vmul.f32 %v341, %v350
    %v365 = vmul.f32 %v342, %v350
    %v366 = vmul.f32 %v343, %v350
    %v367 = vmul.f32 %v344, %v350
    %v368 = vld [vmem:[%s5] sm:$0x1]
    %v370 = vlaneseq
    %v371 = vshrl.u32 %v370, 7
    %v372 = vsub.s32 0, %v371
    %v373 = vrot.slane %v368, %v372
    %v375 = vadd.f32 %v352, %v373
    %v376 = vadd.f32 %v353, %v373
    %v377 = vadd.f32 %v354, %v373
    %v378 = vadd.f32 %v355, %v373
    %v379 = vadd.f32 %v356, %v373
    %v380 = vadd.f32 %v357, %v373
    %v381 = vadd.f32 %v358, %v373
    %v382 = vadd.f32 %v359, %v373
    %v383 = vadd.f32 %v360, %v373
    %v384 = vadd.f32 %v361, %v373
    %v385 = vadd.f32 %v362, %v373
    %v386 = vadd.f32 %v363, %v373
    %v387 = vadd.f32 %v364, %v373
    %v388 = vadd.f32 %v365, %v373
    %v389 = vadd.f32 %v366, %v373
    %v390 = vadd.f32 %v367, %v373
    %v391 = vmax.f32 %v375, 0.0
    %v392 = vmax.f32 %v376, 0.0
    %v393 = vmax.f32 %v377, 0.0
    %v394 = vmax.f32 %v378, 0.0
    %v395 = vmax.f32 %v379, 0.0
    %v396 = vmax.f32 %v380, 0.0
    %v397 = vmax.f32 %v381, 0.0
    %v398 = vmax.f32 %v382, 0.0
    %v399 = vmax.f32 %v383, 0.0
    %v400 = vmax.f32 %v384, 0.0
    %v401 = vmax.f32 %v385, 0.0
    %v402 = vmax.f32 %v386, 0.0
    %v403 = vmax.f32 %v387, 0.0
    %v404 = vmax.f32 %v388, 0.0
    %v405 = vmax.f32 %v389, 0.0
    %v406 = vmax.f32 %v390, 0.0
    %v407 = vpack.c.bf16 %v392, %v391
    %v408 = vpack.c.bf16 %v394, %v393
    %v409 = vpack.c.bf16 %v396, %v395
    %v410 = vpack.c.bf16 %v398, %v397
    %v411 = vpack.c.bf16 %v400, %v399
    %v412 = vpack.c.bf16 %v402, %v401
    %v413 = vpack.c.bf16 %v404, %v403
    %v414 = vpack.c.bf16 %v406, %v405
    %v423 = vunpack.c.l.b16 %v407
    %v424 = vunpack.c.h.b16 %v407
    %v425 = vunpack.c.l.b16 %v408
    %v426 = vunpack.c.h.b16 %v408
    %v427 = vunpack.c.l.b16 %v409
    %v428 = vunpack.c.h.b16 %v409
    %v429 = vunpack.c.l.b16 %v410
    %v430 = vunpack.c.h.b16 %v410
    %v431 = vunpack.c.l.b16 %v411
    %v432 = vunpack.c.h.b16 %v411
    %v433 = vunpack.c.l.b16 %v412
    %v434 = vunpack.c.h.b16 %v412
    %v435 = vunpack.c.l.b16 %v413
    %v436 = vunpack.c.h.b16 %v413
    %v437 = vunpack.c.l.b16 %v414
    %v438 = vunpack.c.h.b16 %v414
    %v439 = vpack.c.b16 %v423, %v423
    %v440 = vpack.c.b16 %v424, %v424
    %v441 = vpack.c.b16 %v425, %v425
    %v442 = vpack.c.b16 %v426, %v426
    %v443 = vpack.c.b16 %v427, %v427
    %v444 = vpack.c.b16 %v428, %v428
    %v445 = vpack.c.b16 %v429, %v429
    %v446 = vpack.c.b16 %v430, %v430
    %v447 = vpack.c.b16 %v431, %v431
    %v448 = vpack.c.b16 %v432, %v432
    %v449 = vpack.c.b16 %v433, %v433
    %v450 = vpack.c.b16 %v434, %v434
    %v451 = vpack.c.b16 %v435, %v435
    %v452 = vpack.c.b16 %v436, %v436
    %v453 = vpack.c.b16 %v437, %v437
    %v454 = vpack.c.b16 %v438, %v438
    %vm471 = vcmask 257024
    %472 = vst.msk [vmem:[%s6] sm:$0xf] %vm471, %v439
    %473 = vst.msk [vmem:[%s6 + $0x4] sm:$0xf] %vm471, %v440
    %474 = vst.msk [vmem:[%s6 + $0x8] sm:$0xf] %vm471, %v441
    %475 = vst.msk [vmem:[%s6 + $0xc] sm:$0xf] %vm471, %v442
    %476 = vst.msk [vmem:[%s6 + $0x10] sm:$0xf] %vm471, %v443
    %477 = vst.msk [vmem:[%s6 + $0x14] sm:$0xf] %vm471, %v444
    %478 = vst.msk [vmem:[%s6 + $0x18] sm:$0xf] %vm471, %v445
    %479 = vst.msk [vmem:[%s6 + $0x1c] sm:$0xf] %vm471, %v446
    %480 = vst.msk [vmem:[%s6 + $0x20] sm:$0xf] %vm471, %v447
    %481 = vst.msk [vmem:[%s6 + $0x24] sm:$0xf] %vm471, %v448
    %482 = vst.msk [vmem:[%s6 + $0x28] sm:$0xf] %vm471, %v449
    %483 = vst.msk [vmem:[%s6 + $0x2c] sm:$0xf] %vm471, %v450
    %484 = vst.msk [vmem:[%s6 + $0x30] sm:$0xf] %vm471, %v451
    %485 = vst.msk [vmem:[%s6 + $0x34] sm:$0xf] %vm471, %v452
    %486 = vst.msk [vmem:[%s6 + $0x38] sm:$0xf] %vm471, %v453
    %487 = vst.msk [vmem:[%s6 + $0x3c] sm:$0xf] %vm471, %v454
  $region33: #{forward.28} parent=0 // pred_fallthru
    _
  // Predicated region
  $region34: #{forward.28} parent=0 // pred_check
    _
  $region35: #{forward.28} parent=0 // pred_check_branch
    %489 = sbr.rel (0) target = $region37
  $region36: #{forward.28} parent=0 // pred_region
    _
  $region37: #{forward.28} parent=0 // pred_fallthru
    _
  // Predicated region
  $region38: #{forward.28} parent=0 // pred_check
    _
  $region39: #{forward.28} parent=0 // pred_check_branch
    %491 = sbr.rel (0) target = $region41
  $region40: #{forward.28} parent=0 // pred_region
    _
  $region41: #{forward.28} parent=0 // pred_fallthru
    _

// kernel: forward.29
$region0: #{forward.29}
  #allocation0 [shape = 'u32[]', space=smem, size = 0x4, offset = 0x4, fixed_abs, tag = 'smem constant byte address 0x4 - core index']
  #allocation1 [shape = 'u32[144,128]{1,0:T(1,128)}', space=vmem, size = 0x12000, scoped, tag = 'internal scratch']
  #allocation2 [shape = 'f32[128,8]{1,0:T(8,128)}', space=vmem, size = 0x10000, scoped, tag = 'scratch operand']
  %s0 = inlined_call_operand.vmem [shape: bf16[128,288], index: 0, kind: input, shape index: {}]
  %s1 = inlined_call_operand.vmem [shape: bf16[288,8], index: 1, kind: input, shape index: {}]
  %s2 = inlined_call_operand.vmem [shape: f32[1,8], index: 2, kind: input, shape index: {}]
  %s3 = inlined_call_operand.vmem [shape: f32[1,8], index: 3, kind: input, shape index: {}]
  %s4 = inlined_call_operand.vmem [shape: bf16[128,8], index: 4, kind: output, shape index: {}]
  %s5 = sld [smem:[#allocation0]]
  $region34: #{forward.29} parent=0
    _
  %s7 = ssub.s32 1, %s5
  %s8 = scalar_select 0, %s7, %s5
  // Predicated region
  $region2: #{forward.29} parent=0 // pred_check
    _
  $region3: #{forward.29} parent=0 // pred_check_branch
    %10 = sbr.rel (0) target = $region5
  $region4: #{forward.29} parent=0 // pred_region
    _
  $region5: #{forward.29} parent=0 // pred_fallthru
    _
  // Predicated region
  $region6: #{forward.29} parent=0 // pred_check
    _
  $region7: #{forward.29} parent=0 // pred_check_branch
    %12 = sbr.rel (0) target = $region9
  $region8: #{forward.29} parent=0 // pred_region
    _
  $region9: #{forward.29} parent=0 // pred_fallthru
    _
  // Predicated region
  $region10: #{forward.29} parent=0 // pred_check
    _
  $region11: #{forward.29} parent=0 // pred_check_branch
    %14 = sbr.rel (0) target = $region13
  $region12: #{forward.29} parent=0 // pred_region
    _
  $region13: #{forward.29} parent=0 // pred_fallthru
    _
  // Predicated region
  $region14: #{forward.29} parent=0 // pred_check
    _
  $region15: #{forward.29} parent=0 // pred_check_branch
    %16 = sbr.rel (0) target = $region17
  $region16: #{forward.29} parent=0 // pred_region
    _
  $region17: #{forward.29} parent=0 // pred_fallthru
    _
  %p18 = scmp.eq.s32.totalorder 0, 0
  // Predicated region
  $region18: #{forward.29} parent=0 // pred_check
    %p19 = pneg %p18
  $region19: #{forward.29} parent=0 // pred_check_branch
    %21 = sbr.rel (%p19) target = $region21
  $region20: #{forward.29} parent=0 // pred_region
    %vm22 = vcmask 64512
    %23 = vst.msk [vmem:[#allocation2] sm:$0xff] %vm22, 0.0
    %24 = vst.msk [vmem:[#allocation2 + $0x8] sm:$0xff] %vm22, 0.0
    %25 = vst.msk [vmem:[#allocation2 + $0x10] sm:$0xff] %vm22, 0.0
    %26 = vst.msk [vmem:[#allocation2 + $0x18] sm:$0xff] %vm22, 0.0
    %27 = vst.msk [vmem:[#allocation2 + $0x20] sm:$0xff] %vm22, 0.0
    %28 = vst.msk [vmem:[#allocation2 + $0x28] sm:$0xff] %vm22, 0.0
    %29 = vst.msk [vmem:[#allocation2 + $0x30] sm:$0xff] %vm22, 0.0
    %30 = vst.msk [vmem:[#allocation2 + $0x38] sm:$0xff] %vm22, 0.0
    %31 = vst.msk [vmem:[#allocation2 + $0x40] sm:$0xff] %vm22, 0.0
    %32 = vst.msk [vmem:[#allocation2 + $0x48] sm:$0xff] %vm22, 0.0
    %33 = vst.msk [vmem:[#allocation2 + $0x50] sm:$0xff] %vm22, 0.0
    %34 = vst.msk [vmem:[#allocation2 + $0x58] sm:$0xff] %vm22, 0.0
    %35 = vst.msk [vmem:[#allocation2 + $0x60] sm:$0xff] %vm22, 0.0
    %36 = vst.msk [vmem:[#allocation2 + $0x68] sm:$0xff] %vm22, 0.0
    %37 = vst.msk [vmem:[#allocation2 + $0x70] sm:$0xff] %vm22, 0.0
    %38 = vst.msk [vmem:[#allocation2 + $0x78] sm:$0xff] %vm22, 0.0
  $region21: #{forward.29} parent=0 // pred_fallthru
    _
  %v39 = vld [vmem:[%s0] sm:$0xff]
  %v40 = vld [vmem:[%s0 + $0x8] sm:$0xf]
  %v41 = vld [vmem:[%s0 + $0xc] sm:$0xff]
  %v42 = vld [vmem:[%s0 + $0x14] sm:$0xf]
  %v43 = vld [vmem:[%s0 + $0x18] sm:$0xff]
  %v44 = vld [vmem:[%s0 + $0x20] sm:$0xf]
  %v45 = vld [vmem:[%s0 + $0x24] sm:$0xff]
  %v46 = vld [vmem:[%s0 + $0x2c] sm:$0xf]
  %v47 = vld [vmem:[%s0 + $0x30] sm:$0xff]
  %v48 = vld [vmem:[%s0 + $0x38] sm:$0xf]
  %v49 = vld [vmem:[%s0 + $0x3c] sm:$0xff]
  %v50 = vld [vmem:[%s0 + $0x44] sm:$0xf]
  %v51 = vld [vmem:[%s0 + $0x48] sm:$0xff]
  %v52 = vld [vmem:[%s0 + $0x50] sm:$0xf]
  %v53 = vld [vmem:[%s0 + $0x54] sm:$0xff]
  %v54 = vld [vmem:[%s0 + $0x5c] sm:$0xf]
  %v55 = vld [vmem:[%s0 + $0x60] sm:$0xff]
  %v56 = vld [vmem:[%s0 + $0x68] sm:$0xf]
  %v57 = vld [vmem:[%s0 + $0x6c] sm:$0xff]
  %v58 = vld [vmem:[%s0 + $0x74] sm:$0xf]
  %v59 = vld [vmem:[%s0 + $0x78] sm:$0xff]
  %v60 = vld [vmem:[%s0 + $0x80] sm:$0xf]
  %v61 = vld [vmem:[%s0 + $0x84] sm:$0xff]
  %v62 = vld [vmem:[%s0 + $0x8c] sm:$0xf]
  %v63 = vld [vmem:[%s0 + $0x90] sm:$0xff]
  %v64 = vld [vmem:[%s0 + $0x98] sm:$0xf]
  %v65 = vld [vmem:[%s0 + $0x9c] sm:$0xff]
  %v66 = vld [vmem:[%s0 + $0xa4] sm:$0xf]
  %v67 = vld [vmem:[%s0 + $0xa8] sm:$0xff]
  %v68 = vld [vmem:[%s0 + $0xb0] sm:$0xf]
  %v69 = vld [vmem:[%s0 + $0xb4] sm:$0xff]
  %v70 = vld [vmem:[%s0 + $0xbc] sm:$0xf]
  %v71 = vld [vmem:[#allocation2] sm:$0xff]
  %v72 = vld [vmem:[#allocation2 + $0x8] sm:$0xff]
  %v73 = vld [vmem:[#allocation2 + $0x10] sm:$0xff]
  %v74 = vld [vmem:[#allocation2 + $0x18] sm:$0xff]
  %v75 = vld [vmem:[#allocation2 + $0x20] sm:$0xff]
  %v76 = vld [vmem:[#allocation2 + $0x28] sm:$0xff]
  %v77 = vld [vmem:[#allocation2 + $0x30] sm:$0xff]
  %v78 = vld [vmem:[#allocation2 + $0x38] sm:$0xff]
  %v79 = vld [vmem:[#allocation2 + $0x40] sm:$0xff]
  %v80 = vld [vmem:[#allocation2 + $0x48] sm:$0xff]
  %v81 = vld [vmem:[#allocation2 + $0x50] sm:$0xff]
  %v82 = vld [vmem:[#allocation2 + $0x58] sm:$0xff]
  %v83 = vld [vmem:[#allocation2 + $0x60] sm:$0xff]
  %v84 = vld [vmem:[#allocation2 + $0x68] sm:$0xff]
  %v85 = vld [vmem:[#allocation2 + $0x70] sm:$0xff]
  %v86 = vld [vmem:[#allocation2 + $0x78] sm:$0xff]
  %v87 = vld [vmem:[%s1] sm:$0xf]
  %v88 = vld [vmem:[%s1 + $0x4] sm:$0xf]
  %v89 = vld [vmem:[%s1 + $0x8] sm:$0xf]
  %v90 = vld [vmem:[%s1 + $0xc] sm:$0xf]
  %v91 = vld [vmem:[%s1 + $0x10] sm:$0xf]
  %v92 = vld [vmem:[%s1 + $0x14] sm:$0xf]
  %v93 = vld [vmem:[%s1 + $0x18] sm:$0xf]
  %v94 = vld [vmem:[%s1 + $0x1c] sm:$0xf]
  %v95 = vld [vmem:[%s1 + $0x20] sm:$0xf]
  %v96 = vld [vmem:[%s1 + $0x24] sm:$0xf]
  %v97 = vld [vmem:[%s1 + $0x28] sm:$0xf]
  %v98 = vld [vmem:[%s1 + $0x2c] sm:$0xf]
  %v99 = vld [vmem:[%s1 + $0x30] sm:$0xf]
  %v100 = vld [vmem:[%s1 + $0x34] sm:$0xf]
  %v101 = vld [vmem:[%s1 + $0x38] sm:$0xf]
  %v102 = vld [vmem:[%s1 + $0x3c] sm:$0xf]
  %v103 = vld [vmem:[%s1 + $0x40] sm:$0xf]
  %v104 = vld [vmem:[%s1 + $0x44] sm:$0xf]
  %v105 = vld [vmem:[%s1 + $0x48] sm:$0xf]
  %v106 = vld [vmem:[%s1 + $0x4c] sm:$0xf]
  %v107 = vld [vmem:[%s1 + $0x50] sm:$0xf]
  %v108 = vld [vmem:[%s1 + $0x54] sm:$0xf]
  %v109 = vld [vmem:[%s1 + $0x58] sm:$0xf]
  %v110 = vld [vmem:[%s1 + $0x5c] sm:$0xf]
  %v111 = vld [vmem:[%s1 + $0x60] sm:$0xf]
  %v112 = vld [vmem:[%s1 + $0x64] sm:$0xf]
  %v113 = vld [vmem:[%s1 + $0x68] sm:$0xf]
  %v114 = vld [vmem:[%s1 + $0x6c] sm:$0xf]
  %v115 = vld [vmem:[%s1 + $0x70] sm:$0xf]
  %v116 = vld [vmem:[%s1 + $0x74] sm:$0xf]
  %v117 = vld [vmem:[%s1 + $0x78] sm:$0xf]
  %v118 = vld [vmem:[%s1 + $0x7c] sm:$0xf]
  %v119 = vld [vmem:[%s1 + $0x80] sm:$0xf]
  %v120 = vld [vmem:[%s1 + $0x84] sm:$0xf]
  %v121 = vld [vmem:[%s1 + $0x88] sm:$0xf]
  %v122 = vld [vmem:[%s1 + $0x8c] sm:$0xf]
  %v155 = vunpack.c.l.b16 %v39
  %v156 = vunpack.c.h.b16 %v39
  %v157 = vunpack.c.l.b16 %v40
  %v158 = vunpack.c.l.b16 %v41
  %v159 = vunpack.c.h.b16 %v41
  %v160 = vunpack.c.l.b16 %v42
  %v161 = vunpack.c.l.b16 %v43
  %v162 = vunpack.c.h.b16 %v43
  %v163 = vunpack.c.l.b16 %v44
  %v164 = vunpack.c.l.b16 %v45
  %v165 = vunpack.c.h.b16 %v45
  %v166 = vunpack.c.l.b16 %v46
  %v167 = vunpack.c.l.b16 %v47
  %v168 = vunpack.c.h.b16 %v47
  %v169 = vunpack.c.l.b16 %v48
  %v170 = vunpack.c.l.b16 %v49
  %v171 = vunpack.c.h.b16 %v49
  %v172 = vunpack.c.l.b16 %v50
  %v173 = vunpack.c.l.b16 %v51
  %v174 = vunpack.c.h.b16 %v51
  %v175 = vunpack.c.l.b16 %v52
  %v176 = vunpack.c.l.b16 %v53
  %v177 = vunpack.c.h.b16 %v53
  %v178 = vunpack.c.l.b16 %v54
  %v179 = vunpack.c.l.b16 %v55
  %v180 = vunpack.c.h.b16 %v55
  %v181 = vunpack.c.l.b16 %v56
  %v182 = vunpack.c.l.b16 %v57
  %v183 = vunpack.c.h.b16 %v57
  %v184 = vunpack.c.l.b16 %v58
  %v185 = vunpack.c.l.b16 %v59
  %v186 = vunpack.c.h.b16 %v59
  %v187 = vunpack.c.l.b16 %v60
  %v188 = vunpack.c.l.b16 %v61
  %v189 = vunpack.c.h.b16 %v61
  %v190 = vunpack.c.l.b16 %v62
  %v191 = vunpack.c.l.b16 %v63
  %v192 = vunpack.c.h.b16 %v63
  %v193 = vunpack.c.l.b16 %v64
  %v194 = vunpack.c.l.b16 %v65
  %v195 = vunpack.c.h.b16 %v65
  %v196 = vunpack.c.l.b16 %v66
  %v197 = vunpack.c.l.b16 %v67
  %v198 = vunpack.c.h.b16 %v67
  %v199 = vunpack.c.l.b16 %v68
  %v200 = vunpack.c.l.b16 %v69
  %v201 = vunpack.c.h.b16 %v69
  %v202 = vunpack.c.l.b16 %v70
  %v203 = vpack.c.b16 %v158, %v155
  %v204 = vpack.c.b16 %v159, %v156
  %v205 = vpack.c.b16 %v160, %v157
  %v206 = vpack.c.b16 %v164, %v161
  %v207 = vpack.c.b16 %v165, %v162
  %v208 = vpack.c.b16 %v166, %v163
  %v209 = vpack.c.b16 %v170, %v167
  %v210 = vpack.c.b16 %v171, %v168
  %v211 = vpack.c.b16 %v172, %v169
  %v212 = vpack.c.b16 %v176, %v173
  %v213 = vpack.c.b16 %v177, %v174
  %v214 = vpack.c.b16 %v178, %v175
  %v215 = vpack.c.b16 %v182, %v179
  %v216 = vpack.c.b16 %v183, %v180
  %v217 = vpack.c.b16 %v184, %v181
  %v218 = vpack.c.b16 %v188, %v185
  %v219 = vpack.c.b16 %v189, %v186
  %v220 = vpack.c.b16 %v190, %v187
  %v221 = vpack.c.b16 %v194, %v191
  %v222 = vpack.c.b16 %v195, %v192
  %v223 = vpack.c.b16 %v196, %v193
  %v224 = vpack.c.b16 %v200, %v197
  %v225 = vpack.c.b16 %v201, %v198
  %v226 = vpack.c.b16 %v202, %v199
  %v279 = vunpack.c.l.b16 %v87
  %v280 = vunpack.c.l.b16 %v88
  %v281 = vunpack.c.l.b16 %v89
  %v282 = vunpack.c.l.b16 %v90
  %v283 = vunpack.c.l.b16 %v91
  %v284 = vunpack.c.l.b16 %v92
  %v285 = vunpack.c.l.b16 %v93
  %v286 = vunpack.c.l.b16 %v94
  %v287 = vunpack.c.l.b16 %v95
  %v288 = vunpack.c.l.b16 %v96
  %v289 = vunpack.c.l.b16 %v97
  %v290 = vunpack.c.l.b16 %v98
  %v291 = vunpack.c.l.b16 %v99
  %v292 = vunpack.c.l.b16 %v100
  %v293 = vunpack.c.l.b16 %v101
  %v294 = vunpack.c.l.b16 %v102
  %v295 = vunpack.c.l.b16 %v103
  %v296 = vunpack.c.l.b16 %v104
  %v297 = vunpack.c.l.b16 %v105
  %v298 = vunpack.c.l.b16 %v106
  %v299 = vunpack.c.l.b16 %v107
  %v300 = vunpack.c.l.b16 %v108
  %v301 = vunpack.c.l.b16 %v109
  %v302 = vunpack.c.l.b16 %v110
  %v303 = vunpack.c.l.b16 %v111
  %v304 = vunpack.c.l.b16 %v112
  %v305 = vunpack.c.l.b16 %v113
  %v306 = vunpack.c.l.b16 %v114
  %v307 = vunpack.c.l.b16 %v115
  %v308 = vunpack.c.l.b16 %v116
  %v309 = vunpack.c.l.b16 %v117
  %v310 = vunpack.c.l.b16 %v118
  %v311 = vunpack.c.l.b16 %v119
  %v312 = vunpack.c.l.b16 %v120
  %v313 = vunpack.c.l.b16 %v121
  %v314 = vunpack.c.l.b16 %v122
  %v315 = vpack.c.b16 %v280, %v279
  %v316 = vpack.c.b16 %v282, %v281
  %v317 = vpack.c.b16 %v284, %v283
  %v318 = vpack.c.b16 %v286, %v285
  %v319 = vpack.c.b16 %v288, %v287
  %v320 = vpack.c.b16 %v290, %v289
  %v321 = vpack.c.b16 %v292, %v291
  %v322 = vpack.c.b16 %v294, %v293
  %v323 = vpack.c.b16 %v296, %v295
  %v324 = vpack.c.b16 %v298, %v297
  %v325 = vpack.c.b16 %v300, %v299
  %v326 = vpack.c.b16 %v302, %v301
  %v327 = vpack.c.b16 %v304, %v303
  %v328 = vpack.c.b16 %v306, %v305
  %v329 = vpack.c.b16 %v308, %v307
  %v330 = vpack.c.b16 %v310, %v309
  %v331 = vpack.c.b16 %v312, %v311
  %v332 = vpack.c.b16 %v314, %v313
  %vm351 = vcmask 261120
  %v353 = vsel %vm351, %v205, 0
  %v356 = vsel %vm351, %v208, 0
  %v359 = vsel %vm351, %v211, 0
  %v362 = vsel %vm351, %v214, 0
  %v365 = vsel %vm351, %v217, 0
  %v368 = vsel %vm351, %v220, 0
  %v371 = vsel %vm351, %v223, 0
  %v374 = vsel %vm351, %v226, 0
  %376 = vmatprep.subr.bf16.mxu0 0
  %377 = vmatpush1.bf16.msra.mxu0 %v315
  %378 = vmatprep.subr.bf16.mxu0 0
  %379 = vmatpush1.bf16.msra.mxu0 %v316
  %380 = vmatprep.subr.bf16.mxu0 0
  %381 = vmatpush1.bf16.msra.mxu0 %v317
  %382 = vmatprep.subr.bf16.mxu0 0
  %383 = vmatpush1.bf16.msra.mxu0 %v318
  %384 = vmatprep.subr.bf16.mxu0 0
  %385 = vmatpush1.bf16.msra.mxu0 %v319
  %386 = vmatprep.subr.bf16.mxu0 0
  %387 = vmatpush1.bf16.msra.mxu0 %v320
  %388 = vmatprep.subr.bf16.mxu0 0
  %389 = vmatpush1.bf16.msra.mxu0 %v321
  %390 = vmatprep.subr.bf16.mxu0 0
  %391 = vmatpush1.bf16.msra.mxu0 %v322
  %392 = vmatprep.subr.bf16.mxu0 0
  %393 = vmatpush1.bf16.msra.mxu0 %v323
  %394 = vmatprep.subr.bf16.mxu0 0
  %395 = vmatpush1.bf16.msra.mxu0 %v324
  %396 = vmatprep.subr.bf16.mxu0 0
  %397 = vmatpush1.bf16.msra.mxu0 %v325
  %398 = vmatprep.subr.bf16.mxu0 0
  %399 = vmatpush1.bf16.msra.mxu0 %v326
  %400 = vmatprep.subr.bf16.mxu0 0
  %401 = vmatpush1.bf16.msra.mxu0 %v327
  %402 = vmatprep.subr.bf16.mxu0 0
  %403 = vmatpush1.bf16.msra.mxu0 %v328
  %404 = vmatprep.subr.bf16.mxu0 0
  %405 = vmatpush1.bf16.msra.mxu0 %v329
  %406 = vmatprep.subr.bf16.mxu0 0
  %407 = vmatpush1.bf16.msra.mxu0 %v330
  %408 = vmatprep.mubr.bf16.mxu0 %v204
  %409 = vmatmul.mubr.bf16.gmra.mrb[0].mxu0 %v203
  %v410 = vpop.f32.mrb[0].mxu0
  %v411 = vadd.f32 0.0, %v410
  %v412 = vpop.f32.mrb[0].mxu0
  %v413 = vpop.f32.mrb[0].mxu0
  %v414 = vadd.f32 0.0, %v413
  %v415 = vpop.f32.mrb[0].mxu0
  %416 = vmatprep.mubr.bf16.mxu0 %v207
  %417 = vmatmul.mubr.bf16.gmra.mrb[0].mxu0 %v206
  %v418 = vpop.f32.mrb[0].mxu0
  %v419 = vadd.f32 0.0, %v418
  %v420 = vpop.f32.mrb[0].mxu0
  %v421 = vpop.f32.mrb[0].mxu0
  %v422 = vadd.f32 0.0, %v421
  %v423 = vpop.f32.mrb[0].mxu0
  %424 = vmatprep.mubr.bf16.mxu0 %v210
  %425 = vmatmul.mubr.bf16.gmra.mrb[0].mxu0 %v209
  %v426 = vpop.f32.mrb[0].mxu0
  %v427 = vadd.f32 0.0, %v426
  %v428 = vpop.f32.mrb[0].mxu0
  %v429 = vpop.f32.mrb[0].mxu0
  %v430 = vadd.f32 0.0, %v429
  %v431 = vpop.f32.mrb[0].mxu0
  %432 = vmatprep.mubr.bf16.mxu0 %v213
  %433 = vmatmul.mubr.bf16.gmra.mrb[0].mxu0 %v212
  %v434 = vpop.f32.mrb[0].mxu0
  %v435 = vadd.f32 0.0, %v434
  %v436 = vpop.f32.mrb[0].mxu0
  %v437 = vpop.f32.mrb[0].mxu0
  %v438 = vadd.f32 0.0, %v437
  %v439 = vpop.f32.mrb[0].mxu0
  %440 = vmatprep.mubr.bf16.mxu0 %v216
  %441 = vmatmul.mubr.bf16.gmra.mrb[0].mxu0 %v215
  %v442 = vpop.f32.mrb[0].mxu0
  %v443 = vadd.f32 0.0, %v442
  %v444 = vpop.f32.mrb[0].mxu0
  %v445 = vpop.f32.mrb[0].mxu0
  %v446 = vadd.f32 0.0, %v445
  %v447 = vpop.f32.mrb[0].mxu0
  %448 = vmatprep.mubr.bf16.mxu0 %v219
  %449 = vmatmul.mubr.bf16.gmra.mrb[0].mxu0 %v218
  %v450 = vpop.f32.mrb[0].mxu0
  %v451 = vadd.f32 0.0, %v450
  %v452 = vpop.f32.mrb[0].mxu0
  %v453 = vpop.f32.mrb[0].mxu0
  %v454 = vadd.f32 0.0, %v453
  %v455 = vpop.f32.mrb[0].mxu0
  %456 = vmatprep.mubr.bf16.mxu0 %v222
  %457 = vmatmul.mubr.bf16.gmra.mrb[0].mxu0 %v221
  %v458 = vpop.f32.mrb[0].mxu0
  %v459 = vadd.f32 0.0, %v458
  %v460 = vpop.f32.mrb[0].mxu0
  %v461 = vpop.f32.mrb[0].mxu0
  %v462 = vadd.f32 0.0, %v461
  %v463 = vpop.f32.mrb[0].mxu0
  %464 = vmatprep.mubr.bf16.mxu0 %v225
  %465 = vmatmul.mubr.bf16.gmra.mrb[0].mxu0 %v224
  %v466 = vpop.f32.mrb[0].mxu0
  %v467 = vadd.f32 0.0, %v466
  %v468 = vpop.f32.mrb[0].mxu0
  %v469 = vpop.f32.mrb[0].mxu0
  %v470 = vadd.f32 0.0, %v469
  %v471 = vpop.f32.mrb[0].mxu0
  %472 = vdwg.mxu0
  %473 = vmatprep.subr.bf16.mxu0 0
  %474 = vmatpush1.bf16.msra.mxu0 %v331
  %475 = vmatprep.subr.bf16.mxu0 0
  %476 = vmatpush1.bf16.msra.mxu0 %v332
  %477 = vmatprep.subr.bf16.mxu0 0
  %478 = vmatpush1.bf16.msra.mxu0 0
  %479 = vmatprep.subr.bf16.mxu0 0
  %480 = vmatpush1.bf16.msra.mxu0 0
  %481 = vmatprep.subr.bf16.mxu0 0
  %482 = vmatpush1.bf16.msra.mxu0 0
  %483 = vmatprep.subr.bf16.mxu0 0
  %484 = vmatpush1.bf16.msra.mxu0 0
  %485 = vmatprep.subr.bf16.mxu0 0
  %486 = vmatpush1.bf16.msra.mxu0 0
  %487 = vmatprep.subr.bf16.mxu0 0
  %488 = vmatpush1.bf16.msra.mxu0 0
  %489 = vmatprep.subr.bf16.mxu0 0
  %490 = vmatpush1.bf16.msra.mxu0 0
  %491 = vmatprep.subr.bf16.mxu0 0
  %492 = vmatpush1.bf16.msra.mxu0 0
  %493 = vmatprep.subr.bf16.mxu0 0
  %494 = vmatpush1.bf16.msra.mxu0 0
  %495 = vmatprep.subr.bf16.mxu0 0
  %496 = vmatpush1.bf16.msra.mxu0 0
  %497 = vmatprep.subr.bf16.mxu0 0
  %498 = vmatpush1.bf16.msra.mxu0 0
  %499 = vmatprep.subr.bf16.mxu0 0
  %500 = vmatpush1.bf16.msra.mxu0 0
  %501 = vmatprep.subr.bf16.mxu0 0
  %502 = vmatpush1.bf16.msra.mxu0 0
  %503 = vmatprep.subr.bf16.mxu0 0
  %504 = vmatpush1.bf16.msra.mxu0 0
  %505 = vmatprep.mubr.bf16.mxu0 0
  %506 = vmatmul.mubr.bf16.gmra.mrb[0].mxu0 %v353
  %v507 = vpop.f32.mrb[0].mxu0
  %v508 = vadd.f32 %v411, %v507
  %v509 = vpop.f32.mrb[0].mxu0
  %v510 = vpop.f32.mrb[0].mxu0
  %v511 = vadd.f32 %v414, %v510
  %v512 = vpop.f32.mrb[0].mxu0
  %513 = vmatprep.mubr.bf16.mxu0 0
  %514 = vmatmul.mubr.bf16.gmra.mrb[0].mxu0 %v356
  %v515 = vpop.f32.mrb[0].mxu0
  %v516 = vadd.f32 %v419, %v515
  %v517 = vpop.f32.mrb[0].mxu0
  %v518 = vpop.f32.mrb[0].mxu0
  %v519 = vadd.f32 %v422, %v518
  %v520 = vpop.f32.mrb[0].mxu0
  %521 = vmatprep.mubr.bf16.mxu0 0
  %522 = vmatmul.mubr.bf16.gmra.mrb[0].mxu0 %v359
  %v523 = vpop.f32.mrb[0].mxu0
  %v524 = vadd.f32 %v427, %v523
  %v525 = vpop.f32.mrb[0].mxu0
  %v526 = vpop.f32.mrb[0].mxu0
  %v527 = vadd.f32 %v430, %v526
  %v528 = vpop.f32.mrb[0].mxu0
  %529 = vmatprep.mubr.bf16.mxu0 0
  %530 = vmatmul.mubr.bf16.gmra.mrb[0].mxu0 %v362
  %v531 = vpop.f32.mrb[0].mxu0
  %v532 = vadd.f32 %v435, %v531
  %v533 = vpop.f32.mrb[0].mxu0
  %v534 = vpop.f32.mrb[0].mxu0
  %v535 = vadd.f32 %v438, %v534
  %v536 = vpop.f32.mrb[0].mxu0
  %537 = vmatprep.mubr.bf16.mxu0 0
  %538 = vmatmul.mubr.bf16.gmra.mrb[0].mxu0 %v365
  %v539 = vpop.f32.mrb[0].mxu0
  %v540 = vadd.f32 %v443, %v539
  %v541 = vpop.f32.mrb[0].mxu0
  %v542 = vpop.f32.mrb[0].mxu0
  %v543 = vadd.f32 %v446, %v542
  %v544 = vpop.f32.mrb[0].mxu0
  %545 = vmatprep.mubr.bf16.mxu0 0
  %546 = vmatmul.mubr.bf16.gmra.mrb[0].mxu0 %v368
  %v547 = vpop.f32.mrb[0].mxu0
  %v548 = vadd.f32 %v451, %v547
  %v549 = vpop.f32.mrb[0].mxu0
  %v550 = vpop.f32.mrb[0].mxu0
  %v551 = vadd.f32 %v454, %v550
  %v552 = vpop.f32.mrb[0].mxu0
  %553 = vmatprep.mubr.bf16.mxu0 0
  %554 = vmatmul.mubr.bf16.gmra.mrb[0].mxu0 %v371
  %v555 = vpop.f32.mrb[0].mxu0
  %v556 = vadd.f32 %v459, %v555
  %v557 = vpop.f32.mrb[0].mxu0
  %v558 = vpop.f32.mrb[0].mxu0
  %v559 = vadd.f32 %v462, %v558
  %v560 = vpop.f32.mrb[0].mxu0
  %561 = vmatprep.mubr.bf16.mxu0 0
  %562 = vmatmul.mubr.bf16.gmra.mrb[0].mxu0 %v374
  %v563 = vpop.f32.mrb[0].mxu0
  %v564 = vadd.f32 %v467, %v563
  %v565 = vpop.f32.mrb[0].mxu0
  %v566 = vpop.f32.mrb[0].mxu0
  %v567 = vadd.f32 %v470, %v566
  %v568 = vpop.f32.mrb[0].mxu0
  %569 = vdwg.mxu0
  %v570 = vadd.f32 %v71, %v508
  %v571 = vadd.f32 %v72, %v511
  %v572 = vadd.f32 %v73, %v516
  %v573 = vadd.f32 %v74, %v519
  %v574 = vadd.f32 %v75, %v524
  %v575 = vadd.f32 %v76, %v527
  %v576 = vadd.f32 %v77, %v532
  %v577 = vadd.f32 %v78, %v535
  %v578 = vadd.f32 %v79, %v540
  %v579 = vadd.f32 %v80, %v543
  %v580 = vadd.f32 %v81, %v548
  %v581 = vadd.f32 %v82, %v551
  %v582 = vadd.f32 %v83, %v556
  %v583 = vadd.f32 %v84, %v559
  %v584 = vadd.f32 %v85, %v564
  %v585 = vadd.f32 %v86, %v567
  %vm586 = vcmask 64512
  %587 = vst.msk [vmem:[#allocation2] sm:$0xff] %vm586, %v570
  %588 = vst.msk [vmem:[#allocation2 + $0x8] sm:$0xff] %vm586, %v571
  %589 = vst.msk [vmem:[#allocation2 + $0x10] sm:$0xff] %vm586, %v572
  %590 = vst.msk [vmem:[#allocation2 + $0x18] sm:$0xff] %vm586, %v573
  %591 = vst.msk [vmem:[#allocation2 + $0x20] sm:$0xff] %vm586, %v574
  %592 = vst.msk [vmem:[#allocation2 + $0x28] sm:$0xff] %vm586, %v575
  %593 = vst.msk [vmem:[#allocation2 + $0x30] sm:$0xff] %vm586, %v576
  %594 = vst.msk [vmem:[#allocation2 + $0x38] sm:$0xff] %vm586, %v577
  %595 = vst.msk [vmem:[#allocation2 + $0x40] sm:$0xff] %vm586, %v578
  %596 = vst.msk [vmem:[#allocation2 + $0x48] sm:$0xff] %vm586, %v579
  %597 = vst.msk [vmem:[#allocation2 + $0x50] sm:$0xff] %vm586, %v580
  %598 = vst.msk [vmem:[#allocation2 + $0x58] sm:$0xff] %vm586, %v581
  %599 = vst.msk [vmem:[#allocation2 + $0x60] sm:$0xff] %vm586, %v582
  %600 = vst.msk [vmem:[#allocation2 + $0x68] sm:$0xff] %vm586, %v583
  %601 = vst.msk [vmem:[#allocation2 + $0x70] sm:$0xff] %vm586, %v584
  %602 = vst.msk [vmem:[#allocation2 + $0x78] sm:$0xff] %vm586, %v585
  // Predicated region
  $region22: #{forward.29} parent=0 // pred_check
    %p603 = pneg %p18
  $region23: #{forward.29} parent=0 // pred_check_branch
    %605 = sbr.rel (%p603) target = $region25
  $region24: #{forward.29} parent=0 // pred_region
    %v606 = vld [vmem:[#allocation2] sm:$0xff]
    %v607 = vld [vmem:[#allocation2 + $0x8] sm:$0xff]
    %v608 = vld [vmem:[#allocation2 + $0x10] sm:$0xff]
    %v609 = vld [vmem:[#allocation2 + $0x18] sm:$0xff]
    %v610 = vld [vmem:[#allocation2 + $0x20] sm:$0xff]
    %v611 = vld [vmem:[#allocation2 + $0x28] sm:$0xff]
    %v612 = vld [vmem:[#allocation2 + $0x30] sm:$0xff]
    %v613 = vld [vmem:[#allocation2 + $0x38] sm:$0xff]
    %v614 = vld [vmem:[#allocation2 + $0x40] sm:$0xff]
    %v615 = vld [vmem:[#allocation2 + $0x48] sm:$0xff]
    %v616 = vld [vmem:[#allocation2 + $0x50] sm:$0xff]
    %v617 = vld [vmem:[#allocation2 + $0x58] sm:$0xff]
    %v618 = vld [vmem:[#allocation2 + $0x60] sm:$0xff]
    %v619 = vld [vmem:[#allocation2 + $0x68] sm:$0xff]
    %v620 = vld [vmem:[#allocation2 + $0x70] sm:$0xff]
    %v621 = vld [vmem:[#allocation2 + $0x78] sm:$0xff]
    %v622 = vld [vmem:[%s2] sm:$0x1]
    %v624 = vlaneseq
    %v625 = vshrl.u32 %v624, 7
    %v626 = vsub.s32 0, %v625
    %v627 = vrot.slane %v622, %v626
    %v629 = vmul.f32 %v606, %v627
    %v630 = vmul.f32 %v607, %v627
    %v631 = vmul.f32 %v608, %v627
    %v632 = vmul.f32 %v609, %v627
    %v633 = vmul.f32 %v610, %v627
    %v634 = vmul.f32 %v611, %v627
    %v635 = vmul.f32 %v612, %v627
    %v636 = vmul.f32 %v613, %v627
    %v637 = vmul.f32 %v614, %v627
    %v638 = vmul.f32 %v615, %v627
    %v639 = vmul.f32 %v616, %v627
    %v640 = vmul.f32 %v617, %v627
    %v641 = vmul.f32 %v618, %v627
    %v642 = vmul.f32 %v619, %v627
    %v643 = vmul.f32 %v620, %v627
    %v644 = vmul.f32 %v621, %v627
    %v645 = vld [vmem:[%s3] sm:$0x1]
    %v647 = vlaneseq
    %v648 = vshrl.u32 %v647, 7
    %v649 = vsub.s32 0, %v648
    %v650 = vrot.slane %v645, %v649
    %v652 = vadd.f32 %v629, %v650
    %v653 = vadd.f32 %v630, %v650
    %v654 = vadd.f32 %v631, %v650
    %v655 = vadd.f32 %v632, %v650
    %v656 = vadd.f32 %v633, %v650
    %v657 = vadd.f32 %v634, %v650
    %v658 = vadd.f32 %v635, %v650
    %v659 = vadd.f32 %v636, %v650
    %v660 = vadd.f32 %v637, %v650
    %v661 = vadd.f32 %v638, %v650
    %v662 = vadd.f32 %v639, %v650
    %v663 = vadd.f32 %v640, %v650
    %v664 = vadd.f32 %v641, %v650
    %v665 = vadd.f32 %v642, %v650
    %v666 = vadd.f32 %v643, %v650
    %v667 = vadd.f32 %v644, %v650
    %v668 = vpack.c.bf16 %v653, %v652
    %v669 = vpack.c.bf16 %v655, %v654
    %v670 = vpack.c.bf16 %v657, %v656
    %v671 = vpack.c.bf16 %v659, %v658
    %v672 = vpack.c.bf16 %v661, %v660
    %v673 = vpack.c.bf16 %v663, %v662
    %v674 = vpack.c.bf16 %v665, %v664
    %v675 = vpack.c.bf16 %v667, %v666
    %v684 = vunpack.c.l.b16 %v668
    %v685 = vunpack.c.h.b16 %v668
    %v686 = vunpack.c.l.b16 %v669
    %v687 = vunpack.c.h.b16 %v669
    %v688 = vunpack.c.l.b16 %v670
    %v689 = vunpack.c.h.b16 %v670
    %v690 = vunpack.c.l.b16 %v671
    %v691 = vunpack.c.h.b16 %v671
    %v692 = vunpack.c.l.b16 %v672
    %v693 = vunpack.c.h.b16 %v672
    %v694 = vunpack.c.l.b16 %v673
    %v695 = vunpack.c.h.b16 %v673
    %v696 = vunpack.c.l.b16 %v674
    %v697 = vunpack.c.h.b16 %v674
    %v698 = vunpack.c.l.b16 %v675
    %v699 = vunpack.c.h.b16 %v675
    %v700 = vpack.c.b16 %v684, %v684
    %v701 = vpack.c.b16 %v685, %v685
    %v702 = vpack.c.b16 %v686, %v686
    %v703 = vpack.c.b16 %v687, %v687
    %v704 = vpack.c.b16 %v688, %v688
    %v705 = vpack.c.b16 %v689, %v689
    %v706 = vpack.c.b16 %v690, %v690
    %v707 = vpack.c.b16 %v691, %v691
    %v708 = vpack.c.b16 %v692, %v692
    %v709 = vpack.c.b16 %v693, %v693
    %v710 = vpack.c.b16 %v694, %v694
    %v711 = vpack.c.b16 %v695, %v695
    %v712 = vpack.c.b16 %v696, %v696
    %v713 = vpack.c.b16 %v697, %v697
    %v714 = vpack.c.b16 %v698, %v698
    %v715 = vpack.c.b16 %v699, %v699
    %vm732 = vcmask 60416
    %733 = vst.msk [vmem:[%s4] sm:$0xf] %vm732, %v700
    %734 = vst.msk [vmem:[%s4 + $0x4] sm:$0xf] %vm732, %v701
    %735 = vst.msk [vmem:[%s4 + $0x8] sm:$0xf] %vm732, %v702
    %736 = vst.msk [vmem:[%s4 + $0xc] sm:$0xf] %vm732, %v703
    %737 = vst.msk [vmem:[%s4 + $0x10] sm:$0xf] %vm732, %v704
    %738 = vst.msk [vmem:[%s4 + $0x14] sm:$0xf] %vm732, %v705
    %739 = vst.msk [vmem:[%s4 + $0x18] sm:$0xf] %vm732, %v706
    %740 = vst.msk [vmem:[%s4 + $0x1c] sm:$0xf] %vm732, %v707
    %741 = vst.msk [vmem:[%s4 + $0x20] sm:$0xf] %vm732, %v708
    %742 = vst.msk [vmem:[%s4 + $0x24] sm:$0xf] %vm732, %v709
    %743 = vst.msk [vmem:[%s4 + $0x28] sm:$0xf] %vm732, %v710
    %744 = vst.msk [vmem:[%s4 + $0x2c] sm:$0xf] %vm732, %v711
    %745 = vst.msk [vmem:[%s4 + $0x30] sm:$0xf] %vm732, %v712
    %746 = vst.msk [vmem:[%s4 + $0x34] sm:$0xf] %vm732, %v713
    %747 = vst.msk [vmem:[%s4 + $0x38] sm:$0xf] %vm732, %v714
    %748 = vst.msk [vmem:[%s4 + $0x3c] sm:$0xf] %vm732, %v715
  $region25: #{forward.29} parent=0 // pred_fallthru
    _
  // Predicated region
  $region26: #{forward.29} parent=0 // pred_check
    _
  $region27: #{forward.29} parent=0 // pred_check_branch
    %750 = sbr.rel (0) target = $region29
  $region28: #{forward.29} parent=0 // pred_region
    _
  $region29: #{forward.29} parent=0 // pred_fallthru
    _
  // Predicated region
  $region30: #{forward.29} parent=0 // pred_check
    _
  $region31: #{forward.29} parent=0 // pred_check_branch
    %752 = sbr.rel (0) target = $region33
  $region32: #{forward.29} parent=0 // pred_region
    _
  $region33: #{forward.29} parent=0 // pred_fallthru
    _

// kernel: forward.30
$region0: #{forward.30}
  #allocation0 [shape = 'u32[]', space=smem, size = 0x4, offset = 0x4, fixed_abs, tag = 'smem constant byte address 0x4 - core index']
  #allocation1 [shape = 'u32[144,128]{1,0:T(1,128)}', space=vmem, size = 0x12000, scoped, tag = 'internal scratch']
  #allocation2 [shape = 'f32[128,32]{1,0:T(8,128)}', space=vmem, size = 0x10000, scoped, tag = 'scratch operand']
  %s0 = inlined_call_operand.vmem [shape: bf16[128,24], index: 0, kind: input, shape index: {}]
  %s1 = inlined_call_operand.vmem [shape: bf16[24,32], index: 1, kind: input, shape index: {}]
  %s2 = inlined_call_operand.vmem [shape: f32[1,24], index: 2, kind: input, shape index: {}]
  %s3 = inlined_call_operand.vmem [shape: f32[1,24], index: 3, kind: input, shape index: {}]
  %s4 = inlined_call_operand.vmem [shape: f32[1,32], index: 4, kind: input, shape index: {}]
  %s5 = inlined_call_operand.vmem [shape: f32[1,32], index: 5, kind: input, shape index: {}]
  %s6 = inlined_call_operand.vmem [shape: bf16[128,32], index: 6, kind: output, shape index: {}]
  %s7 = sld [smem:[#allocation0]]
  $region42: #{forward.30} parent=0
    _
  %s9 = ssub.s32 1, %s7
  %s10 = scalar_select 0, %s9, %s7
  // Predicated region
  $region2: #{forward.30} parent=0 // pred_check
    _
  $region3: #{forward.30} parent=0 // pred_check_branch
    %12 = sbr.rel (0) target = $region5
  $region4: #{forward.30} parent=0 // pred_region
    _
  $region5: #{forward.30} parent=0 // pred_fallthru
    _
  // Predicated region
  $region6: #{forward.30} parent=0 // pred_check
    _
  $region7: #{forward.30} parent=0 // pred_check_branch
    %14 = sbr.rel (0) target = $region9
  $region8: #{forward.30} parent=0 // pred_region
    _
  $region9: #{forward.30} parent=0 // pred_fallthru
    _
  // Predicated region
  $region10: #{forward.30} parent=0 // pred_check
    _
  $region11: #{forward.30} parent=0 // pred_check_branch
    %16 = sbr.rel (0) target = $region13
  $region12: #{forward.30} parent=0 // pred_region
    _
  $region13: #{forward.30} parent=0 // pred_fallthru
    _
  // Predicated region
  $region14: #{forward.30} parent=0 // pred_check
    _
  $region15: #{forward.30} parent=0 // pred_check_branch
    %18 = sbr.rel (0) target = $region17
  $region16: #{forward.30} parent=0 // pred_region
    _
  $region17: #{forward.30} parent=0 // pred_fallthru
    _
  // Predicated region
  $region18: #{forward.30} parent=0 // pred_check
    _
  $region19: #{forward.30} parent=0 // pred_check_branch
    %20 = sbr.rel (0) target = $region21
  $region20: #{forward.30} parent=0 // pred_region
    _
  $region21: #{forward.30} parent=0 // pred_fallthru
    _
  // Predicated region
  $region22: #{forward.30} parent=0 // pred_check
    _
  $region23: #{forward.30} parent=0 // pred_check_branch
    %22 = sbr.rel (0) target = $region25
  $region24: #{forward.30} parent=0 // pred_region
    _
  $region25: #{forward.30} parent=0 // pred_fallthru
    _
  %p24 = scmp.eq.s32.totalorder 0, 0
  // Predicated region
  $region26: #{forward.30} parent=0 // pred_check
    %p25 = pneg %p24
  $region27: #{forward.30} parent=0 // pred_check_branch
    %27 = sbr.rel (%p25) target = $region29
  $region28: #{forward.30} parent=0 // pred_region
    %vm28 = vcmask 261120
    %29 = vst.msk [vmem:[#allocation2] sm:$0xff] %vm28, 0.0
    %30 = vst.msk [vmem:[#allocation2 + $0x8] sm:$0xff] %vm28, 0.0
    %31 = vst.msk [vmem:[#allocation2 + $0x10] sm:$0xff] %vm28, 0.0
    %32 = vst.msk [vmem:[#allocation2 + $0x18] sm:$0xff] %vm28, 0.0
    %33 = vst.msk [vmem:[#allocation2 + $0x20] sm:$0xff] %vm28, 0.0
    %34 = vst.msk [vmem:[#allocation2 + $0x28] sm:$0xff] %vm28, 0.0
    %35 = vst.msk [vmem:[#allocation2 + $0x30] sm:$0xff] %vm28, 0.0
    %36 = vst.msk [vmem:[#allocation2 + $0x38] sm:$0xff] %vm28, 0.0
    %37 = vst.msk [vmem:[#allocation2 + $0x40] sm:$0xff] %vm28, 0.0
    %38 = vst.msk [vmem:[#allocation2 + $0x48] sm:$0xff] %vm28, 0.0
    %39 = vst.msk [vmem:[#allocation2 + $0x50] sm:$0xff] %vm28, 0.0
    %40 = vst.msk [vmem:[#allocation2 + $0x58] sm:$0xff] %vm28, 0.0
    %41 = vst.msk [vmem:[#allocation2 + $0x60] sm:$0xff] %vm28, 0.0
    %42 = vst.msk [vmem:[#allocation2 + $0x68] sm:$0xff] %vm28, 0.0
    %43 = vst.msk [vmem:[#allocation2 + $0x70] sm:$0xff] %vm28, 0.0
    %44 = vst.msk [vmem:[#allocation2 + $0x78] sm:$0xff] %vm28, 0.0
  $region29: #{forward.30} parent=0 // pred_fallthru
    _
  %v45 = vld [vmem:[%s0] sm:$0xf]
  %v46 = vld [vmem:[%s0 + $0x4] sm:$0xf]
  %v47 = vld [vmem:[%s0 + $0x8] sm:$0xf]
  %v48 = vld [vmem:[%s0 + $0xc] sm:$0xf]
  %v49 = vld [vmem:[%s0 + $0x10] sm:$0xf]
  %v50 = vld [vmem:[%s0 + $0x14] sm:$0xf]
  %v51 = vld [vmem:[%s0 + $0x18] sm:$0xf]
  %v52 = vld [vmem:[%s0 + $0x1c] sm:$0xf]
  %v53 = vld [vmem:[%s0 + $0x20] sm:$0xf]
  %v54 = vld [vmem:[%s0 + $0x24] sm:$0xf]
  %v55 = vld [vmem:[%s0 + $0x28] sm:$0xf]
  %v56 = vld [vmem:[%s0 + $0x2c] sm:$0xf]
  %v57 = vld [vmem:[%s0 + $0x30] sm:$0xf]
  %v58 = vld [vmem:[%s0 + $0x34] sm:$0xf]
  %v59 = vld [vmem:[%s0 + $0x38] sm:$0xf]
  %v60 = vld [vmem:[%s0 + $0x3c] sm:$0xf]
  %v61 = vunpack.c.l.bf16 %v45
  %v62 = vunpack.c.l.bf16 %v46
  %v63 = vunpack.c.l.bf16 %v47
  %v64 = vunpack.c.l.bf16 %v48
  %v65 = vunpack.c.l.bf16 %v49
  %v66 = vunpack.c.l.bf16 %v50
  %v67 = vunpack.c.l.bf16 %v51
  %v68 = vunpack.c.l.bf16 %v52
  %v69 = vunpack.c.l.bf16 %v53
  %v70 = vunpack.c.l.bf16 %v54
  %v71 = vunpack.c.l.bf16 %v55
  %v72 = vunpack.c.l.bf16 %v56
  %v73 = vunpack.c.l.bf16 %v57
  %v74 = vunpack.c.l.bf16 %v58
  %v75 = vunpack.c.l.bf16 %v59
  %v76 = vunpack.c.l.bf16 %v60
  %v77 = vld [vmem:[%s2] sm:$0x1]
  %v79 = vlaneseq
  %v80 = vshrl.u32 %v79, 7
  %v81 = vsub.s32 0, %v80
  %v82 = vrot.slane %v77, %v81
  %v84 = vmul.f32 %v61, %v82
  %v85 = vmul.f32 %v62, %v82
  %v86 = vmul.f32 %v63, %v82
  %v87 = vmul.f32 %v64, %v82
  %v88 = vmul.f32 %v65, %v82
  %v89 = vmul.f32 %v66, %v82
  %v90 = vmul.f32 %v67, %v82
  %v91 = vmul.f32 %v68, %v82
  %v92 = vmul.f32 %v69, %v82
  %v93 = vmul.f32 %v70, %v82
  %v94 = vmul.f32 %v71, %v82
  %v95 = vmul.f32 %v72, %v82
  %v96 = vmul.f32 %v73, %v82
  %v97 = vmul.f32 %v74, %v82
  %v98 = vmul.f32 %v75, %v82
  %v99 = vmul.f32 %v76, %v82
  %v100 = vld [vmem:[%s3] sm:$0x1]
  %v102 = vlaneseq
  %v103 = vshrl.u32 %v102, 7
  %v104 = vsub.s32 0, %v103
  %v105 = vrot.slane %v100, %v104
  %v107 = vadd.f32 %v84, %v105
  %v108 = vadd.f32 %v85, %v105
  %v109 = vadd.f32 %v86, %v105
  %v110 = vadd.f32 %v87, %v105
  %v111 = vadd.f32 %v88, %v105
  %v112 = vadd.f32 %v89, %v105
  %v113 = vadd.f32 %v90, %v105
  %v114 = vadd.f32 %v91, %v105
  %v115 = vadd.f32 %v92, %v105
  %v116 = vadd.f32 %v93, %v105
  %v117 = vadd.f32 %v94, %v105
  %v118 = vadd.f32 %v95, %v105
  %v119 = vadd.f32 %v96, %v105
  %v120 = vadd.f32 %v97, %v105
  %v121 = vadd.f32 %v98, %v105
  %v122 = vadd.f32 %v99, %v105
  %v123 = vmax.f32 %v107, 0.0
  %v124 = vmax.f32 %v108, 0.0
  %v125 = vmax.f32 %v109, 0.0
  %v126 = vmax.f32 %v110, 0.0
  %v127 = vmax.f32 %v111, 0.0
  %v128 = vmax.f32 %v112, 0.0
  %v129 = vmax.f32 %v113, 0.0
  %v130 = vmax.f32 %v114, 0.0
  %v131 = vmax.f32 %v115, 0.0
  %v132 = vmax.f32 %v116, 0.0
  %v133 = vmax.f32 %v117, 0.0
  %v134 = vmax.f32 %v118, 0.0
  %v135 = vmax.f32 %v119, 0.0
  %v136 = vmax.f32 %v120, 0.0
  %v137 = vmax.f32 %v121, 0.0
  %v138 = vmax.f32 %v122, 0.0
  %v139 = vpack.c.bf16 %v124, %v123
  %v140 = vpack.c.bf16 %v126, %v125
  %v141 = vpack.c.bf16 %v128, %v127
  %v142 = vpack.c.bf16 %v130, %v129
  %v143 = vpack.c.bf16 %v132, %v131
  %v144 = vpack.c.bf16 %v134, %v133
  %v145 = vpack.c.bf16 %v136, %v135
  %v146 = vpack.c.bf16 %v138, %v137
  %v147 = vld [vmem:[#allocation2] sm:$0xff]
  %v148 = vld [vmem:[#allocation2 + $0x8] sm:$0xff]
  %v149 = vld [vmem:[#allocation2 + $0x10] sm:$0xff]
  %v150 = vld [vmem:[#allocation2 + $0x18] sm:$0xff]
  %v151 = vld [vmem:[#allocation2 + $0x20] sm:$0xff]
  %v152 = vld [vmem:[#allocation2 + $0x28] sm:$0xff]
  %v153 = vld [vmem:[#allocation2 + $0x30] sm:$0xff]
  %v154 = vld [vmem:[#allocation2 + $0x38] sm:$0xff]
  %v155 = vld [vmem:[#allocation2 + $0x40] sm:$0xff]
  %v156 = vld [vmem:[#allocation2 + $0x48] sm:$0xff]
  %v157 = vld [vmem:[#allocation2 + $0x50] sm:$0xff]
  %v158 = vld [vmem:[#allocation2 + $0x58] sm:$0xff]
  %v159 = vld [vmem:[#allocation2 + $0x60] sm:$0xff]
  %v160 = vld [vmem:[#allocation2 + $0x68] sm:$0xff]
  %v161 = vld [vmem:[#allocation2 + $0x70] sm:$0xff]
  %v162 = vld [vmem:[#allocation2 + $0x78] sm:$0xff]
  %v163 = vld [vmem:[%s1] sm:$0xf]
  %v164 = vld [vmem:[%s1 + $0x4] sm:$0xf]
  %v165 = vld [vmem:[%s1 + $0x8] sm:$0xf]
  %v169 = vunpack.c.l.b16 %v163
  %v170 = vunpack.c.l.b16 %v164
  %v171 = vunpack.c.l.b16 %v165
  %v172 = vpack.c.b16 %v170, %v169
  %v173 = vpack.c.b16 %v171, %v171
  %vm175 = vcmask 195584
  %v177 = vsel %vm175, %v139, 0
  %v180 = vsel %vm175, %v140, 0
  %v183 = vsel %vm175, %v141, 0
  %v186 = vsel %vm175, %v142, 0
  %v189 = vsel %vm175, %v143, 0
  %v192 = vsel %vm175, %v144, 0
  %v195 = vsel %vm175, %v145, 0
  %v198 = vsel %vm175, %v146, 0
  %vm200 = vcmask 1043456
  %v202 = vsel %vm200, %v173, 0
  %204 = vmatprep.subr.bf16.mxu0 0
  %205 = vmatpush1.bf16.msra.mxu0 %v172
  %206 = vmatprep.subr.bf16.mxu0 0
  %207 = vmatpush1.bf16.msra.mxu0 %v202
  %208 = vmatprep.subr.bf16.mxu0 0
  %209 = vmatpush1.bf16.msra.mxu0 0
  %210 = vmatprep.subr.bf16.mxu0 0
  %211 = vmatpush1.bf16.msra.mxu0 0
  %212 = vmatprep.subr.bf16.mxu0 0
  %213 = vmatpush1.bf16.msra.mxu0 0
  %214 = vmatprep.subr.bf16.mxu0 0
  %215 = vmatpush1.bf16.msra.mxu0 0
  %216 = vmatprep.subr.bf16.mxu0 0
  %217 = vmatpush1.bf16.msra.mxu0 0
  %218 = vmatprep.subr.bf16.mxu0 0
  %219 = vmatpush1.bf16.msra.mxu0 0
  %220 = vmatprep.subr.bf16.mxu0 0
  %221 = vmatpush1.bf16.msra.mxu0 0
  %222 = vmatprep.subr.bf16.mxu0 0
  %223 = vmatpush1.bf16.msra.mxu0 0
  %224 = vmatprep.subr.bf16.mxu0 0
  %225 = vmatpush1.bf16.msra.mxu0 0
  %226 = vmatprep.subr.bf16.mxu0 0
  %227 = vmatpush1.bf16.msra.mxu0 0
  %228 = vmatprep.subr.bf16.mxu0 0
  %229 = vmatpush1.bf16.msra.mxu0 0
  %230 = vmatprep.subr.bf16.mxu0 0
  %231 = vmatpush1.bf16.msra.mxu0 0
  %232 = vmatprep.subr.bf16.mxu0 0
  %233 = vmatpush1.bf16.msra.mxu0 0
  %234 = vmatprep.subr.bf16.mxu0 0
  %235 = vmatpush1.bf16.msra.mxu0 0
  %236 = vmatprep.mubr.bf16.mxu0 0
  %237 = vmatmul.mubr.bf16.gmra.mrb[0].mxu0 %v177
  %v238 = vpop.f32.mrb[0].mxu0
  %v239 = vadd.f32 0.0, %v238
  %v240 = vpop.f32.mrb[0].mxu0
  %v241 = vpop.f32.mrb[0].mxu0
  %v242 = vadd.f32 0.0, %v241
  %v243 = vpop.f32.mrb[0].mxu0
  %244 = vmatprep.mubr.bf16.mxu0 0
  %245 = vmatmul.mubr.bf16.gmra.mrb[0].mxu0 %v180
  %v246 = vpop.f32.mrb[0].mxu0
  %v247 = vadd.f32 0.0, %v246
  %v248 = vpop.f32.mrb[0].mxu0
  %v249 = vpop.f32.mrb[0].mxu0
  %v250 = vadd.f32 0.0, %v249
  %v251 = vpop.f32.mrb[0].mxu0
  %252 = vmatprep.mubr.bf16.mxu0 0
  %253 = vmatmul.mubr.bf16.gmra.mrb[0].mxu0 %v183
  %v254 = vpop.f32.mrb[0].mxu0
  %v255 = vadd.f32 0.0, %v254
  %v256 = vpop.f32.mrb[0].mxu0
  %v257 = vpop.f32.mrb[0].mxu0
  %v258 = vadd.f32 0.0, %v257
  %v259 = vpop.f32.mrb[0].mxu0
  %260 = vmatprep.mubr.bf16.mxu0 0
  %261 = vmatmul.mubr.bf16.gmra.mrb[0].mxu0 %v186
  %v262 = vpop.f32.mrb[0].mxu0
  %v263 = vadd.f32 0.0, %v262
  %v264 = vpop.f32.mrb[0].mxu0
  %v265 = vpop.f32.mrb[0].mxu0
  %v266 = vadd.f32 0.0, %v265
  %v267 = vpop.f32.mrb[0].mxu0
  %268 = vmatprep.mubr.bf16.mxu0 0
  %269 = vmatmul.mubr.bf16.gmra.mrb[0].mxu0 %v189
  %v270 = vpop.f32.mrb[0].mxu0
  %v271 = vadd.f32 0.0, %v270
  %v272 = vpop.f32.mrb[0].mxu0
  %v273 = vpop.f32.mrb[0].mxu0
  %v274 = vadd.f32 0.0, %v273
  %v275 = vpop.f32.mrb[0].mxu0
  %276 = vmatprep.mubr.bf16.mxu0 0
  %277 = vmatmul.mubr.bf16.gmra.mrb[0].mxu0 %v192
  %v278 = vpop.f32.mrb[0].mxu0
  %v279 = vadd.f32 0.0, %v278
  %v280 = vpop.f32.mrb[0].mxu0
  %v281 = vpop.f32.mrb[0].mxu0
  %v282 = vadd.f32 0.0, %v281
  %v283 = vpop.f32.mrb[0].mxu0
  %284 = vmatprep.mubr.bf16.mxu0 0
  %285 = vmatmul.mubr.bf16.gmra.mrb[0].mxu0 %v195
  %v286 = vpop.f32.mrb[0].mxu0
  %v287 = vadd.f32 0.0, %v286
  %v288 = vpop.f32.mrb[0].mxu0
  %v289 = vpop.f32.mrb[0].mxu0
  %v290 = vadd.f32 0.0, %v289
  %v291 = vpop.f32.mrb[0].mxu0
  %292 = vmatprep.mubr.bf16.mxu0 0
  %293 = vmatmul.mubr.bf16.gmra.mrb[0].mxu0 %v198
  %v294 = vpop.f32.mrb[0].mxu0
  %v295 = vadd.f32 0.0, %v294
  %v296 = vpop.f32.mrb[0].mxu0
  %v297 = vpop.f32.mrb[0].mxu0
  %v298 = vadd.f32 0.0, %v297
  %v299 = vpop.f32.mrb[0].mxu0
  %300 = vdwg.mxu0
  %v301 = vadd.f32 %v147, %v239
  %v302 = vadd.f32 %v148, %v242
  %v303 = vadd.f32 %v149, %v247
  %v304 = vadd.f32 %v150, %v250
  %v305 = vadd.f32 %v151, %v255
  %v306 = vadd.f32 %v152, %v258
  %v307 = vadd.f32 %v153, %v263
  %v308 = vadd.f32 %v154, %v266
  %v309 = vadd.f32 %v155, %v271
  %v310 = vadd.f32 %v156, %v274
  %v311 = vadd.f32 %v157, %v279
  %v312 = vadd.f32 %v158, %v282
  %v313 = vadd.f32 %v159, %v287
  %v314 = vadd.f32 %v160, %v290
  %v315 = vadd.f32 %v161, %v295
  %v316 = vadd.f32 %v162, %v298
  %vm317 = vcmask 261120
  %318 = vst.msk [vmem:[#allocation2] sm:$0xff] %vm317, %v301
  %319 = vst.msk [vmem:[#allocation2 + $0x8] sm:$0xff] %vm317, %v302
  %320 = vst.msk [vmem:[#allocation2 + $0x10] sm:$0xff] %vm317, %v303
  %321 = vst.msk [vmem:[#allocation2 + $0x18] sm:$0xff] %vm317, %v304
  %322 = vst.msk [vmem:[#allocation2 + $0x20] sm:$0xff] %vm317, %v305
  %323 = vst.msk [vmem:[#allocation2 + $0x28] sm:$0xff] %vm317, %v306
  %324 = vst.msk [vmem:[#allocation2 + $0x30] sm:$0xff] %vm317, %v307
  %325 = vst.msk [vmem:[#allocation2 + $0x38] sm:$0xff] %vm317, %v308
  %326 = vst.msk [vmem:[#allocation2 + $0x40] sm:$0xff] %vm317, %v309
  %327 = vst.msk [vmem:[#allocation2 + $0x48] sm:$0xff] %vm317, %v310
  %328 = vst.msk [vmem:[#allocation2 + $0x50] sm:$0xff] %vm317, %v311
  %329 = vst.msk [vmem:[#allocation2 + $0x58] sm:$0xff] %vm317, %v312
  %330 = vst.msk [vmem:[#allocation2 + $0x60] sm:$0xff] %vm317, %v313
  %331 = vst.msk [vmem:[#allocation2 + $0x68] sm:$0xff] %vm317, %v314
  %332 = vst.msk [vmem:[#allocation2 + $0x70] sm:$0xff] %vm317, %v315
  %333 = vst.msk [vmem:[#allocation2 + $0x78] sm:$0xff] %vm317, %v316
  // Predicated region
  $region30: #{forward.30} parent=0 // pred_check
    %p334 = pneg %p24
  $region31: #{forward.30} parent=0 // pred_check_branch
    %336 = sbr.rel (%p334) target = $region33
  $region32: #{forward.30} parent=0 // pred_region
    %v337 = vld [vmem:[#allocation2] sm:$0xff]
    %v338 = vld [vmem:[#allocation2 + $0x8] sm:$0xff]
    %v339 = vld [vmem:[#allocation2 + $0x10] sm:$0xff]
    %v340 = vld [vmem:[#allocation2 + $0x18] sm:$0xff]
    %v341 = vld [vmem:[#allocation2 + $0x20] sm:$0xff]
    %v342 = vld [vmem:[#allocation2 + $0x28] sm:$0xff]
    %v343 = vld [vmem:[#allocation2 + $0x30] sm:$0xff]
    %v344 = vld [vmem:[#allocation2 + $0x38] sm:$0xff]
    %v345 = vld [vmem:[#allocation2 + $0x40] sm:$0xff]
    %v346 = vld [vmem:[#allocation2 + $0x48] sm:$0xff]
    %v347 = vld [vmem:[#allocation2 + $0x50] sm:$0xff]
    %v348 = vld [vmem:[#allocation2 + $0x58] sm:$0xff]
    %v349 = vld [vmem:[#allocation2 + $0x60] sm:$0xff]
    %v350 = vld [vmem:[#allocation2 + $0x68] sm:$0xff]
    %v351 = vld [vmem:[#allocation2 + $0x70] sm:$0xff]
    %v352 = vld [vmem:[#allocation2 + $0x78] sm:$0xff]
    %v353 = vld [vmem:[%s4] sm:$0x1]
    %v355 = vlaneseq
    %v356 = vshrl.u32 %v355, 7
    %v357 = vsub.s32 0, %v356
    %v358 = vrot.slane %v353, %v357
    %v360 = vmul.f32 %v337, %v358
    %v361 = vmul.f32 %v338, %v358
    %v362 = vmul.f32 %v339, %v358
    %v363 = vmul.f32 %v340, %v358
    %v364 = vmul.f32 %v341, %v358
    %v365 = vmul.f32 %v342, %v358
    %v366 = vmul.f32 %v343, %v358
    %v367 = vmul.f32 %v344, %v358
    %v368 = vmul.f32 %v345, %v358
    %v369 = vmul.f32 %v346, %v358
    %v370 = vmul.f32 %v347, %v358
    %v371 = vmul.f32 %v348, %v358
    %v372 = vmul.f32 %v349, %v358
    %v373 = vmul.f32 %v350, %v358
    %v374 = vmul.f32 %v351, %v358
    %v375 = vmul.f32 %v352, %v358
    %v376 = vld [vmem:[%s5] sm:$0x1]
    %v378 = vlaneseq
    %v379 = vshrl.u32 %v378, 7
    %v380 = vsub.s32 0, %v379
    %v381 = vrot.slane %v376, %v380
    %v383 = vadd.f32 %v360, %v381
    %v384 = vadd.f32 %v361, %v381
    %v385 = vadd.f32 %v362, %v381
    %v386 = vadd.f32 %v363, %v381
    %v387 = vadd.f32 %v364, %v381
    %v388 = vadd.f32 %v365, %v381
    %v389 = vadd.f32 %v366, %v381
    %v390 = vadd.f32 %v367, %v381
    %v391 = vadd.f32 %v368, %v381
    %v392 = vadd.f32 %v369, %v381
    %v393 = vadd.f32 %v370, %v381
    %v394 = vadd.f32 %v371, %v381
    %v395 = vadd.f32 %v372, %v381
    %v396 = vadd.f32 %v373, %v381
    %v397 = vadd.f32 %v374, %v381
    %v398 = vadd.f32 %v375, %v381
    %v399 = vmax.f32 %v383, 0.0
    %v400 = vmax.f32 %v384, 0.0
    %v401 = vmax.f32 %v385, 0.0
    %v402 = vmax.f32 %v386, 0.0
    %v403 = vmax.f32 %v387, 0.0
    %v404 = vmax.f32 %v388, 0.0
    %v405 = vmax.f32 %v389, 0.0
    %v406 = vmax.f32 %v390, 0.0
    %v407 = vmax.f32 %v391, 0.0
    %v408 = vmax.f32 %v392, 0.0
    %v409 = vmax.f32 %v393, 0.0
    %v410 = vmax.f32 %v394, 0.0
    %v411 = vmax.f32 %v395, 0.0
    %v412 = vmax.f32 %v396, 0.0
    %v413 = vmax.f32 %v397, 0.0
    %v414 = vmax.f32 %v398, 0.0
    %v415 = vpack.c.bf16 %v400, %v399
    %v416 = vpack.c.bf16 %v402, %v401
    %v417 = vpack.c.bf16 %v404, %v403
    %v418 = vpack.c.bf16 %v406, %v405
    %v419 = vpack.c.bf16 %v408, %v407
    %v420 = vpack.c.bf16 %v410, %v409
    %v421 = vpack.c.bf16 %v412, %v411
    %v422 = vpack.c.bf16 %v414, %v413
    %v431 = vunpack.c.l.b16 %v415
    %v432 = vunpack.c.h.b16 %v415
    %v433 = vunpack.c.l.b16 %v416
    %v434 = vunpack.c.h.b16 %v416
    %v435 = vunpack.c.l.b16 %v417
    %v436 = vunpack.c.h.b16 %v417
    %v437 = vunpack.c.l.b16 %v418
    %v438 = vunpack.c.h.b16 %v418
    %v439 = vunpack.c.l.b16 %v419
    %v440 = vunpack.c.h.b16 %v419
    %v441 = vunpack.c.l.b16 %v420
    %v442 = vunpack.c.h.b16 %v420
    %v443 = vunpack.c.l.b16 %v421
    %v444 = vunpack.c.h.b16 %v421
    %v445 = vunpack.c.l.b16 %v422
    %v446 = vunpack.c.h.b16 %v422
    %v447 = vpack.c.b16 %v431, %v431
    %v448 = vpack.c.b16 %v432, %v432
    %v449 = vpack.c.b16 %v433, %v433
    %v450 = vpack.c.b16 %v434, %v434
    %v451 = vpack.c.b16 %v435, %v435
    %v452 = vpack.c.b16 %v436, %v436
    %v453 = vpack.c.b16 %v437, %v437
    %v454 = vpack.c.b16 %v438, %v438
    %v455 = vpack.c.b16 %v439, %v439
    %v456 = vpack.c.b16 %v440, %v440
    %v457 = vpack.c.b16 %v441, %v441
    %v458 = vpack.c.b16 %v442, %v442
    %v459 = vpack.c.b16 %v443, %v443
    %v460 = vpack.c.b16 %v444, %v444
    %v461 = vpack.c.b16 %v445, %v445
    %v462 = vpack.c.b16 %v446, %v446
    %vm479 = vcmask 257024
    %480 = vst.msk [vmem:[%s6] sm:$0xf] %vm479, %v447
    %481 = vst.msk [vmem:[%s6 + $0x4] sm:$0xf] %vm479, %v448
    %482 = vst.msk [vmem:[%s6 + $0x8] sm:$0xf] %vm479, %v449
    %483 = vst.msk [vmem:[%s6 + $0xc] sm:$0xf] %vm479, %v450
    %484 = vst.msk [vmem:[%s6 + $0x10] sm:$0xf] %vm479, %v451
    %485 = vst.msk [vmem:[%s6 + $0x14] sm:$0xf] %vm479, %v452
    %486 = vst.msk [vmem:[%s6 + $0x18] sm:$0xf] %vm479, %v453
    %487 = vst.msk [vmem:[%s6 + $0x1c] sm:$0xf] %vm479, %v454
    %488 = vst.msk [vmem:[%s6 + $0x20] sm:$0xf] %vm479, %v455
    %489 = vst.msk [vmem:[%s6 + $0x24] sm:$0xf] %vm479, %v456
    %490 = vst.msk [vmem:[%s6 + $0x28] sm:$0xf] %vm479, %v457
    %491 = vst.msk [vmem:[%s6 + $0x2c] sm:$0xf] %vm479, %v458
    %492 = vst.msk [vmem:[%s6 + $0x30] sm:$0xf] %vm479, %v459
    %493 = vst.msk [vmem:[%s6 + $0x34] sm:$0xf] %vm479, %v460
    %494 = vst.msk [vmem:[%s6 + $0x38] sm:$0xf] %vm479, %v461
    %495 = vst.msk [vmem:[%s6 + $0x3c] sm:$0xf] %vm479, %v462
  $region33: #{forward.30} parent=0 // pred_fallthru
    _
  // Predicated region
  $region34: #{forward.30} parent=0 // pred_check
    _
  $region35: #{forward.30} parent=0 // pred_check_branch
    %497 = sbr.rel (0) target = $region37
  $region36: #{forward.30} parent=0 // pred_region
    _
  $region37: #{forward.30} parent=0 // pred_fallthru
    _
  // Predicated region
  $region38: #{forward.30} parent=0 // pred_check
    _
  $region39: #{forward.30} parent=0 // pred_check_branch
    %499 = sbr.rel (0) target = $region41
  $region40: #{forward.30} parent=0 // pred_region
    _
  $region41: #{forward.30} parent=0 // pred_fallthru
    _

// kernel: forward.32
$region0: #{forward.32}
  #allocation0 [shape = 'u32[]', space=smem, size = 0x4, offset = 0x4, fixed_abs, tag = 'smem constant byte address 0x4 - core index']
  #allocation1 [shape = 'u32[144,128]{1,0:T(1,128)}', space=vmem, size = 0x12000, scoped, tag = 'internal scratch']
  #allocation2 [shape = 'f32[128,16]{1,0:T(8,128)}', space=vmem, size = 0x10000, scoped, tag = 'scratch operand']
  %s0 = inlined_call_operand.vmem [shape: bf16[128,32], index: 0, kind: input, shape index: {}]
  %s1 = inlined_call_operand.vmem [shape: bf16[32,16], index: 1, kind: input, shape index: {}]
  %s2 = inlined_call_operand.vmem [shape: f32[1,32], index: 2, kind: input, shape index: {}]
  %s3 = inlined_call_operand.vmem [shape: f32[1,32], index: 3, kind: input, shape index: {}]
  %s4 = inlined_call_operand.vmem [shape: f32[1,16], index: 4, kind: input, shape index: {}]
  %s5 = inlined_call_operand.vmem [shape: f32[1,16], index: 5, kind: input, shape index: {}]
  %s6 = inlined_call_operand.vmem [shape: bf16[128,16], index: 6, kind: output, shape index: {}]
  %s7 = sld [smem:[#allocation0]]
  $region42: #{forward.32} parent=0
    _
  %s9 = ssub.s32 1, %s7
  %s10 = scalar_select 0, %s9, %s7
  // Predicated region
  $region2: #{forward.32} parent=0 // pred_check
    _
  $region3: #{forward.32} parent=0 // pred_check_branch
    %12 = sbr.rel (0) target = $region5
  $region4: #{forward.32} parent=0 // pred_region
    _
  $region5: #{forward.32} parent=0 // pred_fallthru
    _
  // Predicated region
  $region6: #{forward.32} parent=0 // pred_check
    _
  $region7: #{forward.32} parent=0 // pred_check_branch
    %14 = sbr.rel (0) target = $region9
  $region8: #{forward.32} parent=0 // pred_region
    _
  $region9: #{forward.32} parent=0 // pred_fallthru
    _
  // Predicated region
  $region10: #{forward.32} parent=0 // pred_check
    _
  $region11: #{forward.32} parent=0 // pred_check_branch
    %16 = sbr.rel (0) target = $region13
  $region12: #{forward.32} parent=0 // pred_region
    _
  $region13: #{forward.32} parent=0 // pred_fallthru
    _
  // Predicated region
  $region14: #{forward.32} parent=0 // pred_check
    _
  $region15: #{forward.32} parent=0 // pred_check_branch
    %18 = sbr.rel (0) target = $region17
  $region16: #{forward.32} parent=0 // pred_region
    _
  $region17: #{forward.32} parent=0 // pred_fallthru
    _
  // Predicated region
  $region18: #{forward.32} parent=0 // pred_check
    _
  $region19: #{forward.32} parent=0 // pred_check_branch
    %20 = sbr.rel (0) target = $region21
  $region20: #{forward.32} parent=0 // pred_region
    _
  $region21: #{forward.32} parent=0 // pred_fallthru
    _
  // Predicated region
  $region22: #{forward.32} parent=0 // pred_check
    _
  $region23: #{forward.32} parent=0 // pred_check_branch
    %22 = sbr.rel (0) target = $region25
  $region24: #{forward.32} parent=0 // pred_region
    _
  $region25: #{forward.32} parent=0 // pred_fallthru
    _
  %p24 = scmp.eq.s32.totalorder 0, 0
  // Predicated region
  $region26: #{forward.32} parent=0 // pred_check
    %p25 = pneg %p24
  $region27: #{forward.32} parent=0 // pred_check_branch
    %27 = sbr.rel (%p25) target = $region29
  $region28: #{forward.32} parent=0 // pred_region
    %vm28 = vcmask 130048
    %29 = vst.msk [vmem:[#allocation2] sm:$0xff] %vm28, 0.0
    %30 = vst.msk [vmem:[#allocation2 + $0x8] sm:$0xff] %vm28, 0.0
    %31 = vst.msk [vmem:[#allocation2 + $0x10] sm:$0xff] %vm28, 0.0
    %32 = vst.msk [vmem:[#allocation2 + $0x18] sm:$0xff] %vm28, 0.0
    %33 = vst.msk [vmem:[#allocation2 + $0x20] sm:$0xff] %vm28, 0.0
    %34 = vst.msk [vmem:[#allocation2 + $0x28] sm:$0xff] %vm28, 0.0
    %35 = vst.msk [vmem:[#allocation2 + $0x30] sm:$0xff] %vm28, 0.0
    %36 = vst.msk [vmem:[#allocation2 + $0x38] sm:$0xff] %vm28, 0.0
    %37 = vst.msk [vmem:[#allocation2 + $0x40] sm:$0xff] %vm28, 0.0
    %38 = vst.msk [vmem:[#allocation2 + $0x48] sm:$0xff] %vm28, 0.0
    %39 = vst.msk [vmem:[#allocation2 + $0x50] sm:$0xff] %vm28, 0.0
    %40 = vst.msk [vmem:[#allocation2 + $0x58] sm:$0xff] %vm28, 0.0
    %41 = vst.msk [vmem:[#allocation2 + $0x60] sm:$0xff] %vm28, 0.0
    %42 = vst.msk [vmem:[#allocation2 + $0x68] sm:$0xff] %vm28, 0.0
    %43 = vst.msk [vmem:[#allocation2 + $0x70] sm:$0xff] %vm28, 0.0
    %44 = vst.msk [vmem:[#allocation2 + $0x78] sm:$0xff] %vm28, 0.0
  $region29: #{forward.32} parent=0 // pred_fallthru
    _
  %v45 = vld [vmem:[%s0] sm:$0xf]
  %v46 = vld [vmem:[%s0 + $0x4] sm:$0xf]
  %v47 = vld [vmem:[%s0 + $0x8] sm:$0xf]
  %v48 = vld [vmem:[%s0 + $0xc] sm:$0xf]
  %v49 = vld [vmem:[%s0 + $0x10] sm:$0xf]
  %v50 = vld [vmem:[%s0 + $0x14] sm:$0xf]
  %v51 = vld [vmem:[%s0 + $0x18] sm:$0xf]
  %v52 = vld [vmem:[%s0 + $0x1c] sm:$0xf]
  %v53 = vld [vmem:[%s0 + $0x20] sm:$0xf]
  %v54 = vld [vmem:[%s0 + $0x24] sm:$0xf]
  %v55 = vld [vmem:[%s0 + $0x28] sm:$0xf]
  %v56 = vld [vmem:[%s0 + $0x2c] sm:$0xf]
  %v57 = vld [vmem:[%s0 + $0x30] sm:$0xf]
  %v58 = vld [vmem:[%s0 + $0x34] sm:$0xf]
  %v59 = vld [vmem:[%s0 + $0x38] sm:$0xf]
  %v60 = vld [vmem:[%s0 + $0x3c] sm:$0xf]
  %v61 = vunpack.c.l.bf16 %v45
  %v62 = vunpack.c.l.bf16 %v46
  %v63 = vunpack.c.l.bf16 %v47
  %v64 = vunpack.c.l.bf16 %v48
  %v65 = vunpack.c.l.bf16 %v49
  %v66 = vunpack.c.l.bf16 %v50
  %v67 = vunpack.c.l.bf16 %v51
  %v68 = vunpack.c.l.bf16 %v52
  %v69 = vunpack.c.l.bf16 %v53
  %v70 = vunpack.c.l.bf16 %v54
  %v71 = vunpack.c.l.bf16 %v55
  %v72 = vunpack.c.l.bf16 %v56
  %v73 = vunpack.c.l.bf16 %v57
  %v74 = vunpack.c.l.bf16 %v58
  %v75 = vunpack.c.l.bf16 %v59
  %v76 = vunpack.c.l.bf16 %v60
  %v77 = vld [vmem:[%s2] sm:$0x1]
  %v79 = vlaneseq
  %v80 = vshrl.u32 %v79, 7
  %v81 = vsub.s32 0, %v80
  %v82 = vrot.slane %v77, %v81
  %v84 = vmul.f32 %v61, %v82
  %v85 = vmul.f32 %v62, %v82
  %v86 = vmul.f32 %v63, %v82
  %v87 = vmul.f32 %v64, %v82
  %v88 = vmul.f32 %v65, %v82
  %v89 = vmul.f32 %v66, %v82
  %v90 = vmul.f32 %v67, %v82
  %v91 = vmul.f32 %v68, %v82
  %v92 = vmul.f32 %v69, %v82
  %v93 = vmul.f32 %v70, %v82
  %v94 = vmul.f32 %v71, %v82
  %v95 = vmul.f32 %v72, %v82
  %v96 = vmul.f32 %v73, %v82
  %v97 = vmul.f32 %v74, %v82
  %v98 = vmul.f32 %v75, %v82
  %v99 = vmul.f32 %v76, %v82
  %v100 = vld [vmem:[%s3] sm:$0x1]
  %v102 = vlaneseq
  %v103 = vshrl.u32 %v102, 7
  %v104 = vsub.s32 0, %v103
  %v105 = vrot.slane %v100, %v104
  %v107 = vadd.f32 %v84, %v105
  %v108 = vadd.f32 %v85, %v105
  %v109 = vadd.f32 %v86, %v105
  %v110 = vadd.f32 %v87, %v105
  %v111 = vadd.f32 %v88, %v105
  %v112 = vadd.f32 %v89, %v105
  %v113 = vadd.f32 %v90, %v105
  %v114 = vadd.f32 %v91, %v105
  %v115 = vadd.f32 %v92, %v105
  %v116 = vadd.f32 %v93, %v105
  %v117 = vadd.f32 %v94, %v105
  %v118 = vadd.f32 %v95, %v105
  %v119 = vadd.f32 %v96, %v105
  %v120 = vadd.f32 %v97, %v105
  %v121 = vadd.f32 %v98, %v105
  %v122 = vadd.f32 %v99, %v105
  %v123 = vmax.f32 %v107, 0.0
  %v124 = vmax.f32 %v108, 0.0
  %v125 = vmax.f32 %v109, 0.0
  %v126 = vmax.f32 %v110, 0.0
  %v127 = vmax.f32 %v111, 0.0
  %v128 = vmax.f32 %v112, 0.0
  %v129 = vmax.f32 %v113, 0.0
  %v130 = vmax.f32 %v114, 0.0
  %v131 = vmax.f32 %v115, 0.0
  %v132 = vmax.f32 %v116, 0.0
  %v133 = vmax.f32 %v117, 0.0
  %v134 = vmax.f32 %v118, 0.0
  %v135 = vmax.f32 %v119, 0.0
  %v136 = vmax.f32 %v120, 0.0
  %v137 = vmax.f32 %v121, 0.0
  %v138 = vmax.f32 %v122, 0.0
  %v139 = vpack.c.bf16 %v124, %v123
  %v140 = vpack.c.bf16 %v126, %v125
  %v141 = vpack.c.bf16 %v128, %v127
  %v142 = vpack.c.bf16 %v130, %v129
  %v143 = vpack.c.bf16 %v132, %v131
  %v144 = vpack.c.bf16 %v134, %v133
  %v145 = vpack.c.bf16 %v136, %v135
  %v146 = vpack.c.bf16 %v138, %v137
  %v147 = vld [vmem:[#allocation2] sm:$0xff]
  %v148 = vld [vmem:[#allocation2 + $0x8] sm:$0xff]
  %v149 = vld [vmem:[#allocation2 + $0x10] sm:$0xff]
  %v150 = vld [vmem:[#allocation2 + $0x18] sm:$0xff]
  %v151 = vld [vmem:[#allocation2 + $0x20] sm:$0xff]
  %v152 = vld [vmem:[#allocation2 + $0x28] sm:$0xff]
  %v153 = vld [vmem:[#allocation2 + $0x30] sm:$0xff]
  %v154 = vld [vmem:[#allocation2 + $0x38] sm:$0xff]
  %v155 = vld [vmem:[#allocation2 + $0x40] sm:$0xff]
  %v156 = vld [vmem:[#allocation2 + $0x48] sm:$0xff]
  %v157 = vld [vmem:[#allocation2 + $0x50] sm:$0xff]
  %v158 = vld [vmem:[#allocation2 + $0x58] sm:$0xff]
  %v159 = vld [vmem:[#allocation2 + $0x60] sm:$0xff]
  %v160 = vld [vmem:[#allocation2 + $0x68] sm:$0xff]
  %v161 = vld [vmem:[#allocation2 + $0x70] sm:$0xff]
  %v162 = vld [vmem:[#allocation2 + $0x78] sm:$0xff]
  %v163 = vld [vmem:[%s1] sm:$0xf]
  %v164 = vld [vmem:[%s1 + $0x4] sm:$0xf]
  %v165 = vld [vmem:[%s1 + $0x8] sm:$0xf]
  %v166 = vld [vmem:[%s1 + $0xc] sm:$0xf]
  %v171 = vunpack.c.l.b16 %v163
  %v172 = vunpack.c.l.b16 %v164
  %v173 = vunpack.c.l.b16 %v165
  %v174 = vunpack.c.l.b16 %v166
  %v175 = vpack.c.b16 %v172, %v171
  %v176 = vpack.c.b16 %v174, %v173
  %vm179 = vcmask 261120
  %v181 = vsel %vm179, %v139, 0
  %v184 = vsel %vm179, %v140, 0
  %v187 = vsel %vm179, %v141, 0
  %v190 = vsel %vm179, %v142, 0
  %v193 = vsel %vm179, %v143, 0
  %v196 = vsel %vm179, %v144, 0
  %v199 = vsel %vm179, %v145, 0
  %v202 = vsel %vm179, %v146, 0
  %204 = vmatprep.subr.bf16.mxu0 0
  %205 = vmatpush1.bf16.msra.mxu0 %v175
  %206 = vmatprep.subr.bf16.mxu0 0
  %207 = vmatpush1.bf16.msra.mxu0 %v176
  %208 = vmatprep.subr.bf16.mxu0 0
  %209 = vmatpush1.bf16.msra.mxu0 0
  %210 = vmatprep.subr.bf16.mxu0 0
  %211 = vmatpush1.bf16.msra.mxu0 0
  %212 = vmatprep.subr.bf16.mxu0 0
  %213 = vmatpush1.bf16.msra.mxu0 0
  %214 = vmatprep.subr.bf16.mxu0 0
  %215 = vmatpush1.bf16.msra.mxu0 0
  %216 = vmatprep.subr.bf16.mxu0 0
  %217 = vmatpush1.bf16.msra.mxu0 0
  %218 = vmatprep.subr.bf16.mxu0 0
  %219 = vmatpush1.bf16.msra.mxu0 0
  %220 = vmatprep.subr.bf16.mxu0 0
  %221 = vmatpush1.bf16.msra.mxu0 0
  %222 = vmatprep.subr.bf16.mxu0 0
  %223 = vmatpush1.bf16.msra.mxu0 0
  %224 = vmatprep.subr.bf16.mxu0 0
  %225 = vmatpush1.bf16.msra.mxu0 0
  %226 = vmatprep.subr.bf16.mxu0 0
  %227 = vmatpush1.bf16.msra.mxu0 0
  %228 = vmatprep.subr.bf16.mxu0 0
  %229 = vmatpush1.bf16.msra.mxu0 0
  %230 = vmatprep.subr.bf16.mxu0 0
  %231 = vmatpush1.bf16.msra.mxu0 0
  %232 = vmatprep.subr.bf16.mxu0 0
  %233 = vmatpush1.bf16.msra.mxu0 0
  %234 = vmatprep.subr.bf16.mxu0 0
  %235 = vmatpush1.bf16.msra.mxu0 0
  %236 = vmatprep.mubr.bf16.mxu0 0
  %237 = vmatmul.mubr.bf16.gmra.mrb[0].mxu0 %v181
  %v238 = vpop.f32.mrb[0].mxu0
  %v239 = vadd.f32 0.0, %v238
  %v240 = vpop.f32.mrb[0].mxu0
  %v241 = vpop.f32.mrb[0].mxu0
  %v242 = vadd.f32 0.0, %v241
  %v243 = vpop.f32.mrb[0].mxu0
  %244 = vmatprep.mubr.bf16.mxu0 0
  %245 = vmatmul.mubr.bf16.gmra.mrb[0].mxu0 %v184
  %v246 = vpop.f32.mrb[0].mxu0
  %v247 = vadd.f32 0.0, %v246
  %v248 = vpop.f32.mrb[0].mxu0
  %v249 = vpop.f32.mrb[0].mxu0
  %v250 = vadd.f32 0.0, %v249
  %v251 = vpop.f32.mrb[0].mxu0
  %252 = vmatprep.mubr.bf16.mxu0 0
  %253 = vmatmul.mubr.bf16.gmra.mrb[0].mxu0 %v187
  %v254 = vpop.f32.mrb[0].mxu0
  %v255 = vadd.f32 0.0, %v254
  %v256 = vpop.f32.mrb[0].mxu0
  %v257 = vpop.f32.mrb[0].mxu0
  %v258 = vadd.f32 0.0, %v257
  %v259 = vpop.f32.mrb[0].mxu0
  %260 = vmatprep.mubr.bf16.mxu0 0
  %261 = vmatmul.mubr.bf16.gmra.mrb[0].mxu0 %v190
  %v262 = vpop.f32.mrb[0].mxu0
  %v263 = vadd.f32 0.0, %v262
  %v264 = vpop.f32.mrb[0].mxu0
  %v265 = vpop.f32.mrb[0].mxu0
  %v266 = vadd.f32 0.0, %v265
  %v267 = vpop.f32.mrb[0].mxu0
  %268 = vmatprep.mubr.bf16.mxu0 0
  %269 = vmatmul.mubr.bf16.gmra.mrb[0].mxu0 %v193
  %v270 = vpop.f32.mrb[0].mxu0
  %v271 = vadd.f32 0.0, %v270
  %v272 = vpop.f32.mrb[0].mxu0
  %v273 = vpop.f32.mrb[0].mxu0
  %v274 = vadd.f32 0.0, %v273
  %v275 = vpop.f32.mrb[0].mxu0
  %276 = vmatprep.mubr.bf16.mxu0 0
  %277 = vmatmul.mubr.bf16.gmra.mrb[0].mxu0 %v196
  %v278 = vpop.f32.mrb[0].mxu0
  %v279 = vadd.f32 0.0, %v278
  %v280 = vpop.f32.mrb[0].mxu0
  %v281 = vpop.f32.mrb[0].mxu0
  %v282 = vadd.f32 0.0, %v281
  %v283 = vpop.f32.mrb[0].mxu0
  %284 = vmatprep.mubr.bf16.mxu0 0
  %285 = vmatmul.mubr.bf16.gmra.mrb[0].mxu0 %v199
  %v286 = vpop.f32.mrb[0].mxu0
  %v287 = vadd.f32 0.0, %v286
  %v288 = vpop.f32.mrb[0].mxu0
  %v289 = vpop.f32.mrb[0].mxu0
  %v290 = vadd.f32 0.0, %v289
  %v291 = vpop.f32.mrb[0].mxu0
  %292 = vmatprep.mubr.bf16.mxu0 0
  %293 = vmatmul.mubr.bf16.gmra.mrb[0].mxu0 %v202
  %v294 = vpop.f32.mrb[0].mxu0
  %v295 = vadd.f32 0.0, %v294
  %v296 = vpop.f32.mrb[0].mxu0
  %v297 = vpop.f32.mrb[0].mxu0
  %v298 = vadd.f32 0.0, %v297
  %v299 = vpop.f32.mrb[0].mxu0
  %300 = vdwg.mxu0
  %v301 = vadd.f32 %v147, %v239
  %v302 = vadd.f32 %v148, %v242
  %v303 = vadd.f32 %v149, %v247
  %v304 = vadd.f32 %v150, %v250
  %v305 = vadd.f32 %v151, %v255
  %v306 = vadd.f32 %v152, %v258
  %v307 = vadd.f32 %v153, %v263
  %v308 = vadd.f32 %v154, %v266
  %v309 = vadd.f32 %v155, %v271
  %v310 = vadd.f32 %v156, %v274
  %v311 = vadd.f32 %v157, %v279
  %v312 = vadd.f32 %v158, %v282
  %v313 = vadd.f32 %v159, %v287
  %v314 = vadd.f32 %v160, %v290
  %v315 = vadd.f32 %v161, %v295
  %v316 = vadd.f32 %v162, %v298
  %vm317 = vcmask 130048
  %318 = vst.msk [vmem:[#allocation2] sm:$0xff] %vm317, %v301
  %319 = vst.msk [vmem:[#allocation2 + $0x8] sm:$0xff] %vm317, %v302
  %320 = vst.msk [vmem:[#allocation2 + $0x10] sm:$0xff] %vm317, %v303
  %321 = vst.msk [vmem:[#allocation2 + $0x18] sm:$0xff] %vm317, %v304
  %322 = vst.msk [vmem:[#allocation2 + $0x20] sm:$0xff] %vm317, %v305
  %323 = vst.msk [vmem:[#allocation2 + $0x28] sm:$0xff] %vm317, %v306
  %324 = vst.msk [vmem:[#allocation2 + $0x30] sm:$0xff] %vm317, %v307
  %325 = vst.msk [vmem:[#allocation2 + $0x38] sm:$0xff] %vm317, %v308
  %326 = vst.msk [vmem:[#allocation2 + $0x40] sm:$0xff] %vm317, %v309
  %327 = vst.msk [vmem:[#allocation2 + $0x48] sm:$0xff] %vm317, %v310
  %328 = vst.msk [vmem:[#allocation2 + $0x50] sm:$0xff] %vm317, %v311
  %329 = vst.msk [vmem:[#allocation2 + $0x58] sm:$0xff] %vm317, %v312
  %330 = vst.msk [vmem:[#allocation2 + $0x60] sm:$0xff] %vm317, %v313
  %331 = vst.msk [vmem:[#allocation2 + $0x68] sm:$0xff] %vm317, %v314
  %332 = vst.msk [vmem:[#allocation2 + $0x70] sm:$0xff] %vm317, %v315
  %333 = vst.msk [vmem:[#allocation2 + $0x78] sm:$0xff] %vm317, %v316
  // Predicated region
  $region30: #{forward.32} parent=0 // pred_check
    %p334 = pneg %p24
  $region31: #{forward.32} parent=0 // pred_check_branch
    %336 = sbr.rel (%p334) target = $region33
  $region32: #{forward.32} parent=0 // pred_region
    %v337 = vld [vmem:[#allocation2] sm:$0xff]
    %v338 = vld [vmem:[#allocation2 + $0x8] sm:$0xff]
    %v339 = vld [vmem:[#allocation2 + $0x10] sm:$0xff]
    %v340 = vld [vmem:[#allocation2 + $0x18] sm:$0xff]
    %v341 = vld [vmem:[#allocation2 + $0x20] sm:$0xff]
    %v342 = vld [vmem:[#allocation2 + $0x28] sm:$0xff]
    %v343 = vld [vmem:[#allocation2 + $0x30] sm:$0xff]
    %v344 = vld [vmem:[#allocation2 + $0x38] sm:$0xff]
    %v345 = vld [vmem:[#allocation2 + $0x40] sm:$0xff]
    %v346 = vld [vmem:[#allocation2 + $0x48] sm:$0xff]
    %v347 = vld [vmem:[#allocation2 + $0x50] sm:$0xff]
    %v348 = vld [vmem:[#allocation2 + $0x58] sm:$0xff]
    %v349 = vld [vmem:[#allocation2 + $0x60] sm:$0xff]
    %v350 = vld [vmem:[#allocation2 + $0x68] sm:$0xff]
    %v351 = vld [vmem:[#allocation2 + $0x70] sm:$0xff]
    %v352 = vld [vmem:[#allocation2 + $0x78] sm:$0xff]
    %v353 = vld [vmem:[%s4] sm:$0x1]
    %v355 = vlaneseq
    %v356 = vshrl.u32 %v355, 7
    %v357 = vsub.s32 0, %v356
    %v358 = vrot.slane %v353, %v357
    %v360 = vmul.f32 %v337, %v358
    %v361 = vmul.f32 %v338, %v358
    %v362 = vmul.f32 %v339, %v358
    %v363 = vmul.f32 %v340, %v358
    %v364 = vmul.f32 %v341, %v358
    %v365 = vmul.f32 %v342, %v358
    %v366 = vmul.f32 %v343, %v358
    %v367 = vmul.f32 %v344, %v358
    %v368 = vmul.f32 %v345, %v358
    %v369 = vmul.f32 %v346, %v358
    %v370 = vmul.f32 %v347, %v358
    %v371 = vmul.f32 %v348, %v358
    %v372 = vmul.f32 %v349, %v358
    %v373 = vmul.f32 %v350, %v358
    %v374 = vmul.f32 %v351, %v358
    %v375 = vmul.f32 %v352, %v358
    %v376 = vld [vmem:[%s5] sm:$0x1]
    %v378 = vlaneseq
    %v379 = vshrl.u32 %v378, 7
    %v380 = vsub.s32 0, %v379
    %v381 = vrot.slane %v376, %v380
    %v383 = vadd.f32 %v360, %v381
    %v384 = vadd.f32 %v361, %v381
    %v385 = vadd.f32 %v362, %v381
    %v386 = vadd.f32 %v363, %v381
    %v387 = vadd.f32 %v364, %v381
    %v388 = vadd.f32 %v365, %v381
    %v389 = vadd.f32 %v366, %v381
    %v390 = vadd.f32 %v367, %v381
    %v391 = vadd.f32 %v368, %v381
    %v392 = vadd.f32 %v369, %v381
    %v393 = vadd.f32 %v370, %v381
    %v394 = vadd.f32 %v371, %v381
    %v395 = vadd.f32 %v372, %v381
    %v396 = vadd.f32 %v373, %v381
    %v397 = vadd.f32 %v374, %v381
    %v398 = vadd.f32 %v375, %v381
    %v399 = vpack.c.bf16 %v384, %v383
    %v400 = vpack.c.bf16 %v386, %v385
    %v401 = vpack.c.bf16 %v388, %v387
    %v402 = vpack.c.bf16 %v390, %v389
    %v403 = vpack.c.bf16 %v392, %v391
    %v404 = vpack.c.bf16 %v394, %v393
    %v405 = vpack.c.bf16 %v396, %v395
    %v406 = vpack.c.bf16 %v398, %v397
    %v415 = vunpack.c.l.b16 %v399
    %v416 = vunpack.c.h.b16 %v399
    %v417 = vunpack.c.l.b16 %v400
    %v418 = vunpack.c.h.b16 %v400
    %v419 = vunpack.c.l.b16 %v401
    %v420 = vunpack.c.h.b16 %v401
    %v421 = vunpack.c.l.b16 %v402
    %v422 = vunpack.c.h.b16 %v402
    %v423 = vunpack.c.l.b16 %v403
    %v424 = vunpack.c.h.b16 %v403
    %v425 = vunpack.c.l.b16 %v404
    %v426 = vunpack.c.h.b16 %v404
    %v427 = vunpack.c.l.b16 %v405
    %v428 = vunpack.c.h.b16 %v405
    %v429 = vunpack.c.l.b16 %v406
    %v430 = vunpack.c.h.b16 %v406
    %v431 = vpack.c.b16 %v415, %v415
    %v432 = vpack.c.b16 %v416, %v416
    %v433 = vpack.c.b16 %v417, %v417
    %v434 = vpack.c.b16 %v418, %v418
    %v435 = vpack.c.b16 %v419, %v419
    %v436 = vpack.c.b16 %v420, %v420
    %v437 = vpack.c.b16 %v421, %v421
    %v438 = vpack.c.b16 %v422, %v422
    %v439 = vpack.c.b16 %v423, %v423
    %v440 = vpack.c.b16 %v424, %v424
    %v441 = vpack.c.b16 %v425, %v425
    %v442 = vpack.c.b16 %v426, %v426
    %v443 = vpack.c.b16 %v427, %v427
    %v444 = vpack.c.b16 %v428, %v428
    %v445 = vpack.c.b16 %v429, %v429
    %v446 = vpack.c.b16 %v430, %v430
    %vm463 = vcmask 125952
    %464 = vst.msk [vmem:[%s6] sm:$0xf] %vm463, %v431
    %465 = vst.msk [vmem:[%s6 + $0x4] sm:$0xf] %vm463, %v432
    %466 = vst.msk [vmem:[%s6 + $0x8] sm:$0xf] %vm463, %v433
    %467 = vst.msk [vmem:[%s6 + $0xc] sm:$0xf] %vm463, %v434
    %468 = vst.msk [vmem:[%s6 + $0x10] sm:$0xf] %vm463, %v435
    %469 = vst.msk [vmem:[%s6 + $0x14] sm:$0xf] %vm463, %v436
    %470 = vst.msk [vmem:[%s6 + $0x18] sm:$0xf] %vm463, %v437
    %471 = vst.msk [vmem:[%s6 + $0x1c] sm:$0xf] %vm463, %v438
    %472 = vst.msk [vmem:[%s6 + $0x20] sm:$0xf] %vm463, %v439
    %473 = vst.msk [vmem:[%s6 + $0x24] sm:$0xf] %vm463, %v440
    %474 = vst.msk [vmem:[%s6 + $0x28] sm:$0xf] %vm463, %v441
    %475 = vst.msk [vmem:[%s6 + $0x2c] sm:$0xf] %vm463, %v442
    %476 = vst.msk [vmem:[%s6 + $0x30] sm:$0xf] %vm463, %v443
    %477 = vst.msk [vmem:[%s6 + $0x34] sm:$0xf] %vm463, %v444
    %478 = vst.msk [vmem:[%s6 + $0x38] sm:$0xf] %vm463, %v445
    %479 = vst.msk [vmem:[%s6 + $0x3c] sm:$0xf] %vm463, %v446
  $region33: #{forward.32} parent=0 // pred_fallthru
    _
  // Predicated region
  $region34: #{forward.32} parent=0 // pred_check
    _
  $region35: #{forward.32} parent=0 // pred_check_branch
    %481 = sbr.rel (0) target = $region37
  $region36: #{forward.32} parent=0 // pred_region
    _
  $region37: #{forward.32} parent=0 // pred_fallthru
    _
  // Predicated region
  $region38: #{forward.32} parent=0 // pred_check
    _
  $region39: #{forward.32} parent=0 // pred_check_branch
    %483 = sbr.rel (0) target = $region41
  $region40: #{forward.32} parent=0 // pred_region
    _
  $region41: #{forward.32} parent=0 // pred_fallthru
    _

// kernel: forward.33
$region0: #{forward.33}
  #allocation0 [shape = 'u32[]', space=smem, size = 0x4, offset = 0x4, fixed_abs, tag = 'smem constant byte address 0x4 - core index']
  #allocation1 [shape = 'u32[144,128]{1,0:T(1,128)}', space=vmem, size = 0x12000, scoped, tag = 'internal scratch']
  #allocation2 [shape = 'f32[32,16]{1,0:T(8,128)}', space=vmem, size = 0x4000, scoped, tag = 'scratch operand']
  %s0 = inlined_call_operand.vmem [shape: bf16[4,32,16], index: 0, kind: input, shape index: {}]
  %s1 = inlined_call_operand.vmem [shape: bf16[32,16], index: 1, kind: output, shape index: {}]
  %s2 = sld [smem:[#allocation0]]
  $region49: #{forward.33} parent=0
    _
  %s4 = ssub.s32 1, %s2
  %s5 = scalar_select 0, %s4, %s2
  loop: start=0, step=1, limit=6
  $region2: #{forward.33} parent=0 // loop_pre_header
    _
  $region3: #{forward.33} parent=0 // loop_header
    %s7 = sphi 0, %s11
    %p8 = scmp.ge.s32.totalorder %s7, 6
    %s14 = sphi 0, %s26
    %s15 = sphi 0, %s22
    %s16 = sphi 0, %s14
    %s17 = sphi 0, %s15
    %s18 = sphi 0, %s16
    %s19 = sphi 0, %s17
    %s31 = sphi 0, %s33
    %s34 = sphi 0, %s31
    %s35 = sphi 0, %s34
    %s51 = sphi 0, %s35
    %s57 = sphi 0, %s59
    %s60 = sphi 0, %s57
    %s61 = sphi 0, %s60
    %s77 = sphi 0, %s61
  $region4: #{forward.33} parent=0 // loop_header_branch
    %10 = sbr.rel (%p8) target = $region8
  $region5: #{forward.33} parent=0 // loop_body
    %s12 = ssub.s32 %s7, 1
    %s13 = ssub.s32 %s7, 2
    %s20 = sadd.s32 1, %s15
    %p21 = scmp.ge.s32.totalorder %s20, 4
    %s22 = scalar_select %p21, 0, %s20
    %s23 = sadd.s32 1, %s14
    %s24 = scalar_select %p21, %s23, %s14
    %p25 = scmp.ge.s32.totalorder %s24, 1
    %s26 = scalar_select %p25, 0, %s24
    %s27 = ssub.s32 %s15, %s22
    %s28 = ssub.s32 %s14, %s26
    %s29 = sor.u32 %s27, %s28
    %p30 = scmp.eq.s32.totalorder %s29, 0
    %s32 = sadd.s32 %s31, 1
    %s33 = scalar_select %p30, %s31, %s32
    %p36 = pneg %p30
    %p37 = scmp.eq.s32.totalorder %s7, 3
    %p38 = por %p36, %p37
    %p39 = scmp.ne.s32.totalorder %s31, %s34
    %p40 = scmp.eq.s32.totalorder %s7, 0
    %p41 = por %p39, %p40
    %p42 = scmp.ne.s32.totalorder %s31, %s34
    %p43 = scmp.eq.s32.totalorder %s12, 3
    %p44 = por %p42, %p43
    %p45 = scmp.ne.s32.totalorder %s34, %s35
    %p46 = scmp.eq.s32.totalorder %s12, 0
    %p47 = por %p45, %p46
    %p48 = scmp.ne.s32.totalorder %s34, %s35
    %p49 = scmp.eq.s32.totalorder %s13, 3
    %p50 = por %p48, %p49
    %p52 = scmp.ne.s32.totalorder %s35, %s51
    %p53 = scmp.eq.s32.totalorder %s13, 0
    %p54 = por %p52, %p53
    %s55 = ssub.s32 %s14, %s26
    %p56 = scmp.eq.s32.totalorder %s55, 0
    %s58 = sadd.s32 %s57, 1
    %s59 = scalar_select %p56, %s57, %s58
    %p62 = pneg %p56
    %p63 = scmp.eq.s32.totalorder %s7, 3
    %p64 = por %p62, %p63
    %p65 = scmp.ne.s32.totalorder %s57, %s60
    %p66 = scmp.eq.s32.totalorder %s7, 0
    %p67 = por %p65, %p66
    %p68 = scmp.ne.s32.totalorder %s57, %s60
    %p69 = scmp.eq.s32.totalorder %s12, 3
    %p70 = por %p68, %p69
    %p71 = scmp.ne.s32.totalorder %s60, %s61
    %p72 = scmp.eq.s32.totalorder %s12, 0
    %p73 = por %p71, %p72
    %p74 = scmp.ne.s32.totalorder %s60, %s61
    %p75 = scmp.eq.s32.totalorder %s13, 3
    %p76 = por %p74, %p75
    %p78 = scmp.ne.s32.totalorder %s61, %s77
    %p79 = scmp.eq.s32.totalorder %s13, 0
    %p80 = por %p78, %p79
    %p81 = scmp.le.s32.totalorder 1, %s7
    %p82 = scmp.lt.s32.totalorder %s7, 5
    %p83 = pnand %p81, %p82
    %p84 = pneg %p83
    // Predicated region
    $region9: #{forward.33} parent=5 // pred_check
      _
    $region10: #{forward.33} parent=5 // pred_check_branch
      %86 = sbr.rel (%p83) target = $region12
    $region11: #{forward.33} parent=5 // pred_region
      %s87 = ssub.s32 %s7, 1
    $region12: #{forward.33} parent=5 // pred_fallthru
      _
    %p88 = scmp.lt.s32.totalorder %s7, 4
    // Predicated region
    $region13: #{forward.33} parent=5 // pred_check
      %p89 = pneg %p88
    $region14: #{forward.33} parent=5 // pred_check_branch
      %91 = sbr.rel (%p89) target = $region16
    $region15: #{forward.33} parent=5 // pred_region
      // Predicated region
      $region17: #{forward.33} parent=15 // pred_check
        %p92 = pneg %p41
      $region18: #{forward.33} parent=15 // pred_check_branch
        %94 = sbr.rel (%p92) target = $region20
      $region19: #{forward.33} parent=15 // pred_region
        %s95 = smul.u32 4, %s14
        %p96 = scmp.lt.s32.totalorder %s15, 3
        %s97 = scalar_select %p96, %s15, 3
        %p98 = scmp.lt.s32.totalorder %s95, 3
        %s99 = scalar_select %p98, %s95, 3
        %s100 = smul.addr %s97, 4
        %s101 = sadd.s32 %s99, %s100
        %s102 = smul.addr %s101, 4
        %s103 = scalar_lea.vmem %s0, %s102
        %s104 = smul.u32 4, %s14
      $region20: #{forward.33} parent=15 // pred_fallthru
        _
    $region16: #{forward.33} parent=5 // pred_fallthru
      _
    %p105 = scmp.le.s32.totalorder 1, %s7
    %p106 = scmp.lt.s32.totalorder %s7, 5
    %p107 = pnand %p105, %p106
    %p108 = pneg %p107
    // Predicated region
    $region21: #{forward.33} parent=5 // pred_check
      _
    $region22: #{forward.33} parent=5 // pred_check_branch
      %110 = sbr.rel (%p107) target = $region24
    $region23: #{forward.33} parent=5 // pred_region
      %s111 = ssub.s32 %s7, 1
      %s112 = smul.u32 4, %s16
      %p113 = scmp.lt.s32.totalorder %s17, 3
      %s114 = scalar_select %p113, %s17, 3
      %p115 = scmp.lt.s32.totalorder %s112, 3
      %s116 = scalar_select %p115, %s112, 3
      %s117 = smul.addr %s114, 4
      %s118 = sadd.s32 %s116, %s117
      %s119 = smul.addr %s118, 4
      %s120 = scalar_lea.vmem %s0, %s119
      %p121 = pneg %p47
      %p122 = pneg %p44
      %p123 = pneg %p73
      %p124 = pneg %p70
      %s125 = smul.u32 4, %s16
      %p126 = scmp.lt.s32.totalorder %s125, 3
      %s127 = scalar_select %p126, %s125, 3
      %s128 = smul.addr %s127, 4
      %s129 = scalar_lea.vmem %s1, %s128
      %s130 = smul.u32 4, %s16
      %p131 = scmp.lt.s32.totalorder %s17, 3
      %s132 = scalar_select %p131, %s17, 3
      %p133 = scmp.lt.s32.totalorder %s130, 3
      %s134 = scalar_select %p133, %s130, 3
      %s135 = smul.addr %s132, 4
      %s136 = sadd.s32 %s134, %s135
      %s137 = smul.addr %s136, 4
      %s138 = scalar_lea.vmem %s0, %s137
      %s139 = smul.u32 4, %s16
      %s140 = smul.u32 4, %s16
      %p141 = scmp.lt.s32.totalorder %s140, 3
      %s142 = scalar_select %p141, %s140, 3
      %s143 = smul.addr %s142, 4
      %s144 = scalar_lea.vmem %s1, %s143
      %s145 = smul.u32 4, %s16
      %v146 = vld [vmem:[%s138] sm:$0xf]
      %v147 = vld [vmem:[%s138 + $0x4] sm:$0xf]
      %v148 = vld [vmem:[%s138 + $0x8] sm:$0xf]
      %v149 = vld [vmem:[%s138 + $0xc] sm:$0xf]
      %v150 = vunpack.c.l.bf16 %v146
      %v151 = vunpack.c.l.bf16 %v147
      %v152 = vunpack.c.l.bf16 %v148
      %v153 = vunpack.c.l.bf16 %v149
      %p154 = scmp.eq.s32.totalorder %s17, 0
      // Predicated region
      $region25: #{forward.33} parent=23 // pred_check
        %p155 = pneg %p154
      $region26: #{forward.33} parent=23 // pred_check_branch
        %157 = sbr.rel (%p155) target = $region28
      $region27: #{forward.33} parent=23 // pred_region
        %vm158 = vcmask 130048
        %159 = vst.msk [vmem:[#allocation2] sm:$0xff] %vm158, %v150
        %160 = vst.msk [vmem:[#allocation2 + $0x8] sm:$0xff] %vm158, %v151
        %161 = vst.msk [vmem:[#allocation2 + $0x10] sm:$0xff] %vm158, %v152
        %162 = vst.msk [vmem:[#allocation2 + $0x18] sm:$0xff] %vm158, %v153
      $region28: #{forward.33} parent=23 // pred_fallthru
        _
      %p163 = scmp.gt.s32.totalorder %s17, 0
      // Predicated region
      $region29: #{forward.33} parent=23 // pred_check
        %p164 = pneg %p163
      $region30: #{forward.33} parent=23 // pred_check_branch
        %166 = sbr.rel (%p164) target = $region32
      $region31: #{forward.33} parent=23 // pred_region
        %v167 = vld [vmem:[#allocation2] sm:$0xff]
        %v168 = vld [vmem:[#allocation2 + $0x8] sm:$0xff]
        %v169 = vld [vmem:[#allocation2 + $0x10] sm:$0xff]
        %v170 = vld [vmem:[#allocation2 + $0x18] sm:$0xff]
        %v171 = vadd.f32 %v167, %v150
        %v172 = vadd.f32 %v168, %v151
        %v173 = vadd.f32 %v169, %v152
        %v174 = vadd.f32 %v170, %v153
        %vm175 = vcmask 130048
        %176 = vst.msk [vmem:[#allocation2] sm:$0xff] %vm175, %v171
        %177 = vst.msk [vmem:[#allocation2 + $0x8] sm:$0xff] %vm175, %v172
        %178 = vst.msk [vmem:[#allocation2 + $0x10] sm:$0xff] %vm175, %v173
        %179 = vst.msk [vmem:[#allocation2 + $0x18] sm:$0xff] %vm175, %v174
      $region32: #{forward.33} parent=23 // pred_fallthru
        _
      %p180 = scmp.eq.s32.totalorder %s17, 3
      // Predicated region
      $region33: #{forward.33} parent=23 // pred_check
        %p181 = pneg %p180
      $region34: #{forward.33} parent=23 // pred_check_branch
        %183 = sbr.rel (%p181) target = $region36
      $region35: #{forward.33} parent=23 // pred_region
        %v184 = vld [vmem:[#allocation2] sm:$0xff]
        %v185 = vld [vmem:[#allocation2 + $0x8] sm:$0xff]
        %v186 = vld [vmem:[#allocation2 + $0x10] sm:$0xff]
        %v187 = vld [vmem:[#allocation2 + $0x18] sm:$0xff]
        %v188 = vpack.c.bf16 %v185, %v184
        %v189 = vpack.c.bf16 %v187, %v186
        %v192 = vunpack.c.l.b16 %v188
        %v193 = vunpack.c.h.b16 %v188
        %v194 = vunpack.c.l.b16 %v189
        %v195 = vunpack.c.h.b16 %v189
        %v196 = vpack.c.b16 %v192, %v192
        %v197 = vpack.c.b16 %v193, %v193
        %v198 = vpack.c.b16 %v194, %v194
        %v199 = vpack.c.b16 %v195, %v195
        %vm204 = vcmask 125952
        %205 = vst.msk [vmem:[%s144] sm:$0xf] %vm204, %v196
        %206 = vst.msk [vmem:[%s144 + $0x4] sm:$0xf] %vm204, %v197
        %207 = vst.msk [vmem:[%s144 + $0x8] sm:$0xf] %vm204, %v198
        %208 = vst.msk [vmem:[%s144 + $0xc] sm:$0xf] %vm204, %v199
      $region36: #{forward.33} parent=23 // pred_fallthru
        _
      %s209 = smul.u32 4, %s16
      %p210 = scmp.lt.s32.totalorder %s209, 3
      %s211 = scalar_select %p210, %s209, 3
      %s212 = smul.addr %s211, 4
      %s213 = scalar_lea.vmem %s1, %s212
      // Predicated region
      $region37: #{forward.33} parent=23 // pred_check
        %p214 = pneg %p70
      $region38: #{forward.33} parent=23 // pred_check_branch
        %216 = sbr.rel (%p214) target = $region40
      $region39: #{forward.33} parent=23 // pred_region
        %s217 = smul.u32 4, %s16
      $region40: #{forward.33} parent=23 // pred_fallthru
        _
      // Predicated region
      $region41: #{forward.33} parent=23 // pred_check
        %p218 = pneg %p70
      $region42: #{forward.33} parent=23 // pred_check_branch
        %220 = sbr.rel (%p218) target = $region44
      $region43: #{forward.33} parent=23 // pred_region
        %s221 = smul.u32 4, %s16
        %p222 = scmp.lt.s32.totalorder %s221, 3
        %s223 = scalar_select %p222, %s221, 3
        %s224 = smul.addr %s223, 4
        %s225 = scalar_lea.vmem %s1, %s224
      $region44: #{forward.33} parent=23 // pred_fallthru
        _
    $region24: #{forward.33} parent=5 // pred_fallthru
      _
    %p226 = scmp.le.s32.totalorder 2, %s7
    // Predicated region
    $region45: #{forward.33} parent=5 // pred_check
      %p227 = pneg %p226
    $region46: #{forward.33} parent=5 // pred_check_branch
      %229 = sbr.rel (%p227) target = $region48
    $region47: #{forward.33} parent=5 // pred_region
      %s230 = ssub.s32 %s7, 2
    $region48: #{forward.33} parent=5 // pred_fallthru
      _
  $region6: #{forward.33} parent=0 // loop_footer
    %s11 = sadd.s32 1, %s7
  $region7: #{forward.33} parent=0 // loop_footer_branch
    %6 = sbr.rel target = $region3
  $region8: #{forward.33} parent=0 // loop_exit
    _

// kernel: forward.34
$region0: #{forward.34}
  #allocation0 [shape = 'u32[]', space=smem, size = 0x4, offset = 0x4, fixed_abs, tag = 'smem constant byte address 0x4 - core index']
  #allocation1 [shape = 'u32[144,128]{1,0:T(1,128)}', space=vmem, size = 0x12000, scoped, tag = 'internal scratch']
  #allocation2 [shape = 'f32[32,32]{1,0:T(8,128)}', space=vmem, size = 0x4000, scoped, tag = 'scratch operand']
  %s0 = inlined_call_operand.vmem [shape: bf16[32,16], index: 0, kind: input, shape index: {}]
  %s1 = inlined_call_operand.vmem [shape: bf16[16,32], index: 1, kind: input, shape index: {}]
  %s2 = inlined_call_operand.vmem [shape: f32[1,16], index: 2, kind: input, shape index: {}]
  %s3 = inlined_call_operand.vmem [shape: f32[1,16], index: 3, kind: input, shape index: {}]
  %s4 = inlined_call_operand.vmem [shape: f32[1,32], index: 4, kind: input, shape index: {}]
  %s5 = inlined_call_operand.vmem [shape: f32[1,32], index: 5, kind: input, shape index: {}]
  %s6 = inlined_call_operand.vmem [shape: bf16[32,32], index: 6, kind: output, shape index: {}]
  %s7 = sld [smem:[#allocation0]]
  $region42: #{forward.34} parent=0
    _
  %s9 = ssub.s32 1, %s7
  %s10 = scalar_select 0, %s9, %s7
  // Predicated region
  $region2: #{forward.34} parent=0 // pred_check
    _
  $region3: #{forward.34} parent=0 // pred_check_branch
    %12 = sbr.rel (0) target = $region5
  $region4: #{forward.34} parent=0 // pred_region
    _
  $region5: #{forward.34} parent=0 // pred_fallthru
    _
  // Predicated region
  $region6: #{forward.34} parent=0 // pred_check
    _
  $region7: #{forward.34} parent=0 // pred_check_branch
    %14 = sbr.rel (0) target = $region9
  $region8: #{forward.34} parent=0 // pred_region
    _
  $region9: #{forward.34} parent=0 // pred_fallthru
    _
  // Predicated region
  $region10: #{forward.34} parent=0 // pred_check
    _
  $region11: #{forward.34} parent=0 // pred_check_branch
    %16 = sbr.rel (0) target = $region13
  $region12: #{forward.34} parent=0 // pred_region
    _
  $region13: #{forward.34} parent=0 // pred_fallthru
    _
  // Predicated region
  $region14: #{forward.34} parent=0 // pred_check
    _
  $region15: #{forward.34} parent=0 // pred_check_branch
    %18 = sbr.rel (0) target = $region17
  $region16: #{forward.34} parent=0 // pred_region
    _
  $region17: #{forward.34} parent=0 // pred_fallthru
    _
  // Predicated region
  $region18: #{forward.34} parent=0 // pred_check
    _
  $region19: #{forward.34} parent=0 // pred_check_branch
    %20 = sbr.rel (0) target = $region21
  $region20: #{forward.34} parent=0 // pred_region
    _
  $region21: #{forward.34} parent=0 // pred_fallthru
    _
  // Predicated region
  $region22: #{forward.34} parent=0 // pred_check
    _
  $region23: #{forward.34} parent=0 // pred_check_branch
    %22 = sbr.rel (0) target = $region25
  $region24: #{forward.34} parent=0 // pred_region
    _
  $region25: #{forward.34} parent=0 // pred_fallthru
    _
  %p24 = scmp.eq.s32.totalorder 0, 0
  // Predicated region
  $region26: #{forward.34} parent=0 // pred_check
    %p25 = pneg %p24
  $region27: #{forward.34} parent=0 // pred_check_branch
    %27 = sbr.rel (%p25) target = $region29
  $region28: #{forward.34} parent=0 // pred_region
    %vm28 = vcmask 261120
    %29 = vst.msk [vmem:[#allocation2] sm:$0xff] %vm28, 0.0
    %30 = vst.msk [vmem:[#allocation2 + $0x8] sm:$0xff] %vm28, 0.0
    %31 = vst.msk [vmem:[#allocation2 + $0x10] sm:$0xff] %vm28, 0.0
    %32 = vst.msk [vmem:[#allocation2 + $0x18] sm:$0xff] %vm28, 0.0
  $region29: #{forward.34} parent=0 // pred_fallthru
    _
  %v33 = vld [vmem:[%s0] sm:$0xf]
  %v34 = vld [vmem:[%s0 + $0x4] sm:$0xf]
  %v35 = vld [vmem:[%s0 + $0x8] sm:$0xf]
  %v36 = vld [vmem:[%s0 + $0xc] sm:$0xf]
  %v37 = vunpack.c.l.bf16 %v33
  %v38 = vunpack.c.l.bf16 %v34
  %v39 = vunpack.c.l.bf16 %v35
  %v40 = vunpack.c.l.bf16 %v36
  %v41 = vld [vmem:[%s2] sm:$0x1]
  %v43 = vlaneseq
  %v44 = vshrl.u32 %v43, 7
  %v45 = vsub.s32 0, %v44
  %v46 = vrot.slane %v41, %v45
  %v48 = vmul.f32 %v37, %v46
  %v49 = vmul.f32 %v38, %v46
  %v50 = vmul.f32 %v39, %v46
  %v51 = vmul.f32 %v40, %v46
  %v52 = vld [vmem:[%s3] sm:$0x1]
  %v54 = vlaneseq
  %v55 = vshrl.u32 %v54, 7
  %v56 = vsub.s32 0, %v55
  %v57 = vrot.slane %v52, %v56
  %v59 = vadd.f32 %v48, %v57
  %v60 = vadd.f32 %v49, %v57
  %v61 = vadd.f32 %v50, %v57
  %v62 = vadd.f32 %v51, %v57
  %v63 = vmax.f32 %v59, 0.0
  %v64 = vmax.f32 %v60, 0.0
  %v65 = vmax.f32 %v61, 0.0
  %v66 = vmax.f32 %v62, 0.0
  %v67 = vpack.c.bf16 %v64, %v63
  %v68 = vpack.c.bf16 %v66, %v65
  %v69 = vld [vmem:[#allocation2] sm:$0xff]
  %v70 = vld [vmem:[#allocation2 + $0x8] sm:$0xff]
  %v71 = vld [vmem:[#allocation2 + $0x10] sm:$0xff]
  %v72 = vld [vmem:[#allocation2 + $0x18] sm:$0xff]
  %v73 = vld [vmem:[%s1] sm:$0xf]
  %v74 = vld [vmem:[%s1 + $0x4] sm:$0xf]
  %v77 = vunpack.c.l.b16 %v73
  %v78 = vunpack.c.l.b16 %v74
  %v79 = vpack.c.b16 %v78, %v77
  %vm81 = vcmask 130048
  %v83 = vsel %vm81, %v67, 0
  %v86 = vsel %vm81, %v68, 0
  %88 = vmatprep.subr.bf16.mxu0 0
  %89 = vmatpush1.bf16.msra.mxu0 %v79
  %90 = vmatprep.subr.bf16.mxu0 0
  %91 = vmatpush1.bf16.msra.mxu0 0
  %92 = vmatprep.subr.bf16.mxu0 0
  %93 = vmatpush1.bf16.msra.mxu0 0
  %94 = vmatprep.subr.bf16.mxu0 0
  %95 = vmatpush1.bf16.msra.mxu0 0
  %96 = vmatprep.subr.bf16.mxu0 0
  %97 = vmatpush1.bf16.msra.mxu0 0
  %98 = vmatprep.subr.bf16.mxu0 0
  %99 = vmatpush1.bf16.msra.mxu0 0
  %100 = vmatprep.subr.bf16.mxu0 0
  %101 = vmatpush1.bf16.msra.mxu0 0
  %102 = vmatprep.subr.bf16.mxu0 0
  %103 = vmatpush1.bf16.msra.mxu0 0
  %104 = vmatprep.subr.bf16.mxu0 0
  %105 = vmatpush1.bf16.msra.mxu0 0
  %106 = vmatprep.subr.bf16.mxu0 0
  %107 = vmatpush1.bf16.msra.mxu0 0
  %108 = vmatprep.subr.bf16.mxu0 0
  %109 = vmatpush1.bf16.msra.mxu0 0
  %110 = vmatprep.subr.bf16.mxu0 0
  %111 = vmatpush1.bf16.msra.mxu0 0
  %112 = vmatprep.subr.bf16.mxu0 0
  %113 = vmatpush1.bf16.msra.mxu0 0
  %114 = vmatprep.subr.bf16.mxu0 0
  %115 = vmatpush1.bf16.msra.mxu0 0
  %116 = vmatprep.subr.bf16.mxu0 0
  %117 = vmatpush1.bf16.msra.mxu0 0
  %118 = vmatprep.subr.bf16.mxu0 0
  %119 = vmatpush1.bf16.msra.mxu0 0
  %120 = vmatprep.mubr.bf16.mxu0 0
  %121 = vmatmul.mubr.bf16.gmra.mrb[0].mxu0 %v83
  %v122 = vpop.f32.mrb[0].mxu0
  %v123 = vadd.f32 0.0, %v122
  %v124 = vpop.f32.mrb[0].mxu0
  %v125 = vpop.f32.mrb[0].mxu0
  %v126 = vadd.f32 0.0, %v125
  %v127 = vpop.f32.mrb[0].mxu0
  %128 = vmatprep.mubr.bf16.mxu0 0
  %129 = vmatmul.mubr.bf16.gmra.mrb[0].mxu0 %v86
  %v130 = vpop.f32.mrb[0].mxu0
  %v131 = vadd.f32 0.0, %v130
  %v132 = vpop.f32.mrb[0].mxu0
  %v133 = vpop.f32.mrb[0].mxu0
  %v134 = vadd.f32 0.0, %v133
  %v135 = vpop.f32.mrb[0].mxu0
  %136 = vdwg.mxu0
  %v137 = vadd.f32 %v69, %v123
  %v138 = vadd.f32 %v70, %v126
  %v139 = vadd.f32 %v71, %v131
  %v140 = vadd.f32 %v72, %v134
  %vm141 = vcmask 261120
  %142 = vst.msk [vmem:[#allocation2] sm:$0xff] %vm141, %v137
  %143 = vst.msk [vmem:[#allocation2 + $0x8] sm:$0xff] %vm141, %v138
  %144 = vst.msk [vmem:[#allocation2 + $0x10] sm:$0xff] %vm141, %v139
  %145 = vst.msk [vmem:[#allocation2 + $0x18] sm:$0xff] %vm141, %v140
  // Predicated region
  $region30: #{forward.34} parent=0 // pred_check
    %p146 = pneg %p24
  $region31: #{forward.34} parent=0 // pred_check_branch
    %148 = sbr.rel (%p146) target = $region33
  $region32: #{forward.34} parent=0 // pred_region
    %v149 = vld [vmem:[#allocation2] sm:$0xff]
    %v150 = vld [vmem:[#allocation2 + $0x8] sm:$0xff]
    %v151 = vld [vmem:[#allocation2 + $0x10] sm:$0xff]
    %v152 = vld [vmem:[#allocation2 + $0x18] sm:$0xff]
    %v153 = vld [vmem:[%s4] sm:$0x1]
    %v155 = vlaneseq
    %v156 = vshrl.u32 %v155, 7
    %v157 = vsub.s32 0, %v156
    %v158 = vrot.slane %v153, %v157
    %v160 = vmul.f32 %v149, %v158
    %v161 = vmul.f32 %v150, %v158
    %v162 = vmul.f32 %v151, %v158
    %v163 = vmul.f32 %v152, %v158
    %v164 = vld [vmem:[%s5] sm:$0x1]
    %v166 = vlaneseq
    %v167 = vshrl.u32 %v166, 7
    %v168 = vsub.s32 0, %v167
    %v169 = vrot.slane %v164, %v168
    %v171 = vadd.f32 %v160, %v169
    %v172 = vadd.f32 %v161, %v169
    %v173 = vadd.f32 %v162, %v169
    %v174 = vadd.f32 %v163, %v169
    %v175 = vmax.f32 %v171, 0.0
    %v176 = vmax.f32 %v172, 0.0
    %v177 = vmax.f32 %v173, 0.0
    %v178 = vmax.f32 %v174, 0.0
    %v179 = vpack.c.bf16 %v176, %v175
    %v180 = vpack.c.bf16 %v178, %v177
    %v183 = vunpack.c.l.b16 %v179
    %v184 = vunpack.c.h.b16 %v179
    %v185 = vunpack.c.l.b16 %v180
    %v186 = vunpack.c.h.b16 %v180
    %v187 = vpack.c.b16 %v183, %v183
    %v188 = vpack.c.b16 %v184, %v184
    %v189 = vpack.c.b16 %v185, %v185
    %v190 = vpack.c.b16 %v186, %v186
    %vm195 = vcmask 257024
    %196 = vst.msk [vmem:[%s6] sm:$0xf] %vm195, %v187
    %197 = vst.msk [vmem:[%s6 + $0x4] sm:$0xf] %vm195, %v188
    %198 = vst.msk [vmem:[%s6 + $0x8] sm:$0xf] %vm195, %v189
    %199 = vst.msk [vmem:[%s6 + $0xc] sm:$0xf] %vm195, %v190
  $region33: #{forward.34} parent=0 // pred_fallthru
    _
  // Predicated region
  $region34: #{forward.34} parent=0 // pred_check
    _
  $region35: #{forward.34} parent=0 // pred_check_branch
    %201 = sbr.rel (0) target = $region37
  $region36: #{forward.34} parent=0 // pred_region
    _
  $region37: #{forward.34} parent=0 // pred_fallthru
    _
  // Predicated region
  $region38: #{forward.34} parent=0 // pred_check
    _
  $region39: #{forward.34} parent=0 // pred_check_branch
    %203 = sbr.rel (0) target = $region41
  $region40: #{forward.34} parent=0 // pred_region
    _
  $region41: #{forward.34} parent=0 // pred_fallthru
    _

// kernel: forward.36
$region0: #{forward.36}
  #allocation0 [shape = 'u32[]', space=smem, size = 0x4, offset = 0x4, fixed_abs, tag = 'smem constant byte address 0x4 - core index']
  #allocation1 [shape = 'u32[144,128]{1,0:T(1,128)}', space=vmem, size = 0x12000, scoped, tag = 'internal scratch']
  #allocation2 [shape = 'f32[32,32]{1,0:T(8,128)}', space=vmem, size = 0x4000, scoped, tag = 'scratch operand']
  %s0 = inlined_call_operand.vmem [shape: bf16[32,24], index: 0, kind: input, shape index: {}]
  %s1 = inlined_call_operand.vmem [shape: bf16[24,32], index: 1, kind: input, shape index: {}]
  %s2 = inlined_call_operand.vmem [shape: f32[1,24], index: 2, kind: input, shape index: {}]
  %s3 = inlined_call_operand.vmem [shape: f32[1,24], index: 3, kind: input, shape index: {}]
  %s4 = inlined_call_operand.vmem [shape: f32[1,32], index: 4, kind: input, shape index: {}]
  %s5 = inlined_call_operand.vmem [shape: f32[1,32], index: 5, kind: input, shape index: {}]
  %s6 = inlined_call_operand.vmem [shape: bf16[32,32], index: 6, kind: output, shape index: {}]
  %s7 = sld [smem:[#allocation0]]
  $region42: #{forward.36} parent=0
    _
  %s9 = ssub.s32 1, %s7
  %s10 = scalar_select 0, %s9, %s7
  // Predicated region
  $region2: #{forward.36} parent=0 // pred_check
    _
  $region3: #{forward.36} parent=0 // pred_check_branch
    %12 = sbr.rel (0) target = $region5
  $region4: #{forward.36} parent=0 // pred_region
    _
  $region5: #{forward.36} parent=0 // pred_fallthru
    _
  // Predicated region
  $region6: #{forward.36} parent=0 // pred_check
    _
  $region7: #{forward.36} parent=0 // pred_check_branch
    %14 = sbr.rel (0) target = $region9
  $region8: #{forward.36} parent=0 // pred_region
    _
  $region9: #{forward.36} parent=0 // pred_fallthru
    _
  // Predicated region
  $region10: #{forward.36} parent=0 // pred_check
    _
  $region11: #{forward.36} parent=0 // pred_check_branch
    %16 = sbr.rel (0) target = $region13
  $region12: #{forward.36} parent=0 // pred_region
    _
  $region13: #{forward.36} parent=0 // pred_fallthru
    _
  // Predicated region
  $region14: #{forward.36} parent=0 // pred_check
    _
  $region15: #{forward.36} parent=0 // pred_check_branch
    %18 = sbr.rel (0) target = $region17
  $region16: #{forward.36} parent=0 // pred_region
    _
  $region17: #{forward.36} parent=0 // pred_fallthru
    _
  // Predicated region
  $region18: #{forward.36} parent=0 // pred_check
    _
  $region19: #{forward.36} parent=0 // pred_check_branch
    %20 = sbr.rel (0) target = $region21
  $region20: #{forward.36} parent=0 // pred_region
    _
  $region21: #{forward.36} parent=0 // pred_fallthru
    _
  // Predicated region
  $region22: #{forward.36} parent=0 // pred_check
    _
  $region23: #{forward.36} parent=0 // pred_check_branch
    %22 = sbr.rel (0) target = $region25
  $region24: #{forward.36} parent=0 // pred_region
    _
  $region25: #{forward.36} parent=0 // pred_fallthru
    _
  %p24 = scmp.eq.s32.totalorder 0, 0
  // Predicated region
  $region26: #{forward.36} parent=0 // pred_check
    %p25 = pneg %p24
  $region27: #{forward.36} parent=0 // pred_check_branch
    %27 = sbr.rel (%p25) target = $region29
  $region28: #{forward.36} parent=0 // pred_region
    %vm28 = vcmask 261120
    %29 = vst.msk [vmem:[#allocation2] sm:$0xff] %vm28, 0.0
    %30 = vst.msk [vmem:[#allocation2 + $0x8] sm:$0xff] %vm28, 0.0
    %31 = vst.msk [vmem:[#allocation2 + $0x10] sm:$0xff] %vm28, 0.0
    %32 = vst.msk [vmem:[#allocation2 + $0x18] sm:$0xff] %vm28, 0.0
  $region29: #{forward.36} parent=0 // pred_fallthru
    _
  %v33 = vld [vmem:[%s0] sm:$0xf]
  %v34 = vld [vmem:[%s0 + $0x4] sm:$0xf]
  %v35 = vld [vmem:[%s0 + $0x8] sm:$0xf]
  %v36 = vld [vmem:[%s0 + $0xc] sm:$0xf]
  %v37 = vunpack.c.l.bf16 %v33
  %v38 = vunpack.c.l.bf16 %v34
  %v39 = vunpack.c.l.bf16 %v35
  %v40 = vunpack.c.l.bf16 %v36
  %v41 = vld [vmem:[%s2] sm:$0x1]
  %v43 = vlaneseq
  %v44 = vshrl.u32 %v43, 7
  %v45 = vsub.s32 0, %v44
  %v46 = vrot.slane %v41, %v45
  %v48 = vmul.f32 %v37, %v46
  %v49 = vmul.f32 %v38, %v46
  %v50 = vmul.f32 %v39, %v46
  %v51 = vmul.f32 %v40, %v46
  %v52 = vld [vmem:[%s3] sm:$0x1]
  %v54 = vlaneseq
  %v55 = vshrl.u32 %v54, 7
  %v56 = vsub.s32 0, %v55
  %v57 = vrot.slane %v52, %v56
  %v59 = vadd.f32 %v48, %v57
  %v60 = vadd.f32 %v49, %v57
  %v61 = vadd.f32 %v50, %v57
  %v62 = vadd.f32 %v51, %v57
  %v63 = vmax.f32 %v59, 0.0
  %v64 = vmax.f32 %v60, 0.0
  %v65 = vmax.f32 %v61, 0.0
  %v66 = vmax.f32 %v62, 0.0
  %v67 = vpack.c.bf16 %v64, %v63
  %v68 = vpack.c.bf16 %v66, %v65
  %v69 = vld [vmem:[#allocation2] sm:$0xff]
  %v70 = vld [vmem:[#allocation2 + $0x8] sm:$0xff]
  %v71 = vld [vmem:[#allocation2 + $0x10] sm:$0xff]
  %v72 = vld [vmem:[#allocation2 + $0x18] sm:$0xff]
  %v73 = vld [vmem:[%s1] sm:$0xf]
  %v74 = vld [vmem:[%s1 + $0x4] sm:$0xf]
  %v75 = vld [vmem:[%s1 + $0x8] sm:$0xf]
  %v79 = vunpack.c.l.b16 %v73
  %v80 = vunpack.c.l.b16 %v74
  %v81 = vunpack.c.l.b16 %v75
  %v82 = vpack.c.b16 %v80, %v79
  %v83 = vpack.c.b16 %v81, %v81
  %vm85 = vcmask 195584
  %v87 = vsel %vm85, %v67, 0
  %v90 = vsel %vm85, %v68, 0
  %vm92 = vcmask 1043456
  %v94 = vsel %vm92, %v83, 0
  %96 = vmatprep.subr.bf16.mxu0 0
  %97 = vmatpush1.bf16.msra.mxu0 %v82
  %98 = vmatprep.subr.bf16.mxu0 0
  %99 = vmatpush1.bf16.msra.mxu0 %v94
  %100 = vmatprep.subr.bf16.mxu0 0
  %101 = vmatpush1.bf16.msra.mxu0 0
  %102 = vmatprep.subr.bf16.mxu0 0
  %103 = vmatpush1.bf16.msra.mxu0 0
  %104 = vmatprep.subr.bf16.mxu0 0
  %105 = vmatpush1.bf16.msra.mxu0 0
  %106 = vmatprep.subr.bf16.mxu0 0
  %107 = vmatpush1.bf16.msra.mxu0 0
  %108 = vmatprep.subr.bf16.mxu0 0
  %109 = vmatpush1.bf16.msra.mxu0 0
  %110 = vmatprep.subr.bf16.mxu0 0
  %111 = vmatpush1.bf16.msra.mxu0 0
  %112 = vmatprep.subr.bf16.mxu0 0
  %113 = vmatpush1.bf16.msra.mxu0 0
  %114 = vmatprep.subr.bf16.mxu0 0
  %115 = vmatpush1.bf16.msra.mxu0 0
  %116 = vmatprep.subr.bf16.mxu0 0
  %117 = vmatpush1.bf16.msra.mxu0 0
  %118 = vmatprep.subr.bf16.mxu0 0
  %119 = vmatpush1.bf16.msra.mxu0 0
  %120 = vmatprep.subr.bf16.mxu0 0
  %121 = vmatpush1.bf16.msra.mxu0 0
  %122 = vmatprep.subr.bf16.mxu0 0
  %123 = vmatpush1.bf16.msra.mxu0 0
  %124 = vmatprep.subr.bf16.mxu0 0
  %125 = vmatpush1.bf16.msra.mxu0 0
  %126 = vmatprep.subr.bf16.mxu0 0
  %127 = vmatpush1.bf16.msra.mxu0 0
  %128 = vmatprep.mubr.bf16.mxu0 0
  %129 = vmatmul.mubr.bf16.gmra.mrb[0].mxu0 %v87
  %v130 = vpop.f32.mrb[0].mxu0
  %v131 = vadd.f32 0.0, %v130
  %v132 = vpop.f32.mrb[0].mxu0
  %v133 = vpop.f32.mrb[0].mxu0
  %v134 = vadd.f32 0.0, %v133
  %v135 = vpop.f32.mrb[0].mxu0
  %136 = vmatprep.mubr.bf16.mxu0 0
  %137 = vmatmul.mubr.bf16.gmra.mrb[0].mxu0 %v90
  %v138 = vpop.f32.mrb[0].mxu0
  %v139 = vadd.f32 0.0, %v138
  %v140 = vpop.f32.mrb[0].mxu0
  %v141 = vpop.f32.mrb[0].mxu0
  %v142 = vadd.f32 0.0, %v141
  %v143 = vpop.f32.mrb[0].mxu0
  %144 = vdwg.mxu0
  %v145 = vadd.f32 %v69, %v131
  %v146 = vadd.f32 %v70, %v134
  %v147 = vadd.f32 %v71, %v139
  %v148 = vadd.f32 %v72, %v142
  %vm149 = vcmask 261120
  %150 = vst.msk [vmem:[#allocation2] sm:$0xff] %vm149, %v145
  %151 = vst.msk [vmem:[#allocation2 + $0x8] sm:$0xff] %vm149, %v146
  %152 = vst.msk [vmem:[#allocation2 + $0x10] sm:$0xff] %vm149, %v147
  %153 = vst.msk [vmem:[#allocation2 + $0x18] sm:$0xff] %vm149, %v148
  // Predicated region
  $region30: #{forward.36} parent=0 // pred_check
    %p154 = pneg %p24
  $region31: #{forward.36} parent=0 // pred_check_branch
    %156 = sbr.rel (%p154) target = $region33
  $region32: #{forward.36} parent=0 // pred_region
    %v157 = vld [vmem:[#allocation2] sm:$0xff]
    %v158 = vld [vmem:[#allocation2 + $0x8] sm:$0xff]
    %v159 = vld [vmem:[#allocation2 + $0x10] sm:$0xff]
    %v160 = vld [vmem:[#allocation2 + $0x18] sm:$0xff]
    %v161 = vld [vmem:[%s4] sm:$0x1]
    %v163 = vlaneseq
    %v164 = vshrl.u32 %v163, 7
    %v165 = vsub.s32 0, %v164
    %v166 = vrot.slane %v161, %v165
    %v168 = vmul.f32 %v157, %v166
    %v169 = vmul.f32 %v158, %v166
    %v170 = vmul.f32 %v159, %v166
    %v171 = vmul.f32 %v160, %v166
    %v172 = vld [vmem:[%s5] sm:$0x1]
    %v174 = vlaneseq
    %v175 = vshrl.u32 %v174, 7
    %v176 = vsub.s32 0, %v175
    %v177 = vrot.slane %v172, %v176
    %v179 = vadd.f32 %v168, %v177
    %v180 = vadd.f32 %v169, %v177
    %v181 = vadd.f32 %v170, %v177
    %v182 = vadd.f32 %v171, %v177
    %v183 = vmax.f32 %v179, 0.0
    %v184 = vmax.f32 %v180, 0.0
    %v185 = vmax.f32 %v181, 0.0
    %v186 = vmax.f32 %v182, 0.0
    %v187 = vpack.c.bf16 %v184, %v183
    %v188 = vpack.c.bf16 %v186, %v185
    %v191 = vunpack.c.l.b16 %v187
    %v192 = vunpack.c.h.b16 %v187
    %v193 = vunpack.c.l.b16 %v188
    %v194 = vunpack.c.h.b16 %v188
    %v195 = vpack.c.b16 %v191, %v191
    %v196 = vpack.c.b16 %v192, %v192
    %v197 = vpack.c.b16 %v193, %v193
    %v198 = vpack.c.b16 %v194, %v194
    %vm203 = vcmask 257024
    %204 = vst.msk [vmem:[%s6] sm:$0xf] %vm203, %v195
    %205 = vst.msk [vmem:[%s6 + $0x4] sm:$0xf] %vm203, %v196
    %206 = vst.msk [vmem:[%s6 + $0x8] sm:$0xf] %vm203, %v197
    %207 = vst.msk [vmem:[%s6 + $0xc] sm:$0xf] %vm203, %v198
  $region33: #{forward.36} parent=0 // pred_fallthru
    _
  // Predicated region
  $region34: #{forward.36} parent=0 // pred_check
    _
  $region35: #{forward.36} parent=0 // pred_check_branch
    %209 = sbr.rel (0) target = $region37
  $region36: #{forward.36} parent=0 // pred_region
    _
  $region37: #{forward.36} parent=0 // pred_fallthru
    _
  // Predicated region
  $region38: #{forward.36} parent=0 // pred_check
    _
  $region39: #{forward.36} parent=0 // pred_check_branch
    %211 = sbr.rel (0) target = $region41
  $region40: #{forward.36} parent=0 // pred_region
    _
  $region41: #{forward.36} parent=0 // pred_fallthru
    _

// kernel: forward.35
$region0: #{forward.35}
  #allocation0 [shape = 'u32[]', space=smem, size = 0x4, offset = 0x4, fixed_abs, tag = 'smem constant byte address 0x4 - core index']
  #allocation1 [shape = 'u32[144,128]{1,0:T(1,128)}', space=vmem, size = 0x12000, scoped, tag = 'internal scratch']
  #allocation2 [shape = 'f32[32,8]{1,0:T(8,128)}', space=vmem, size = 0x4000, scoped, tag = 'scratch operand']
  %s0 = inlined_call_operand.vmem [shape: bf16[32,288], index: 0, kind: input, shape index: {}]
  %s1 = inlined_call_operand.vmem [shape: bf16[288,8], index: 1, kind: input, shape index: {}]
  %s2 = inlined_call_operand.vmem [shape: f32[1,8], index: 2, kind: input, shape index: {}]
  %s3 = inlined_call_operand.vmem [shape: f32[1,8], index: 3, kind: input, shape index: {}]
  %s4 = inlined_call_operand.vmem [shape: bf16[32,8], index: 4, kind: output, shape index: {}]
  %s5 = sld [smem:[#allocation0]]
  $region34: #{forward.35} parent=0
    _
  %s7 = ssub.s32 1, %s5
  %s8 = scalar_select 0, %s7, %s5
  // Predicated region
  $region2: #{forward.35} parent=0 // pred_check
    _
  $region3: #{forward.35} parent=0 // pred_check_branch
    %10 = sbr.rel (0) target = $region5
  $region4: #{forward.35} parent=0 // pred_region
    _
  $region5: #{forward.35} parent=0 // pred_fallthru
    _
  // Predicated region
  $region6: #{forward.35} parent=0 // pred_check
    _
  $region7: #{forward.35} parent=0 // pred_check_branch
    %12 = sbr.rel (0) target = $region9
  $region8: #{forward.35} parent=0 // pred_region
    _
  $region9: #{forward.35} parent=0 // pred_fallthru
    _
  // Predicated region
  $region10: #{forward.35} parent=0 // pred_check
    _
  $region11: #{forward.35} parent=0 // pred_check_branch
    %14 = sbr.rel (0) target = $region13
  $region12: #{forward.35} parent=0 // pred_region
    _
  $region13: #{forward.35} parent=0 // pred_fallthru
    _
  // Predicated region
  $region14: #{forward.35} parent=0 // pred_check
    _
  $region15: #{forward.35} parent=0 // pred_check_branch
    %16 = sbr.rel (0) target = $region17
  $region16: #{forward.35} parent=0 // pred_region
    _
  $region17: #{forward.35} parent=0 // pred_fallthru
    _
  %p18 = scmp.eq.s32.totalorder 0, 0
  // Predicated region
  $region18: #{forward.35} parent=0 // pred_check
    %p19 = pneg %p18
  $region19: #{forward.35} parent=0 // pred_check_branch
    %21 = sbr.rel (%p19) target = $region21
  $region20: #{forward.35} parent=0 // pred_region
    %vm22 = vcmask 64512
    %23 = vst.msk [vmem:[#allocation2] sm:$0xff] %vm22, 0.0
    %24 = vst.msk [vmem:[#allocation2 + $0x8] sm:$0xff] %vm22, 0.0
    %25 = vst.msk [vmem:[#allocation2 + $0x10] sm:$0xff] %vm22, 0.0
    %26 = vst.msk [vmem:[#allocation2 + $0x18] sm:$0xff] %vm22, 0.0
  $region21: #{forward.35} parent=0 // pred_fallthru
    _
  %v27 = vld [vmem:[%s0] sm:$0xff]
  %v28 = vld [vmem:[%s0 + $0x8] sm:$0xf]
  %v29 = vld [vmem:[%s0 + $0xc] sm:$0xff]
  %v30 = vld [vmem:[%s0 + $0x14] sm:$0xf]
  %v31 = vld [vmem:[%s0 + $0x18] sm:$0xff]
  %v32 = vld [vmem:[%s0 + $0x20] sm:$0xf]
  %v33 = vld [vmem:[%s0 + $0x24] sm:$0xff]
  %v34 = vld [vmem:[%s0 + $0x2c] sm:$0xf]
  %v35 = vld [vmem:[#allocation2] sm:$0xff]
  %v36 = vld [vmem:[#allocation2 + $0x8] sm:$0xff]
  %v37 = vld [vmem:[#allocation2 + $0x10] sm:$0xff]
  %v38 = vld [vmem:[#allocation2 + $0x18] sm:$0xff]
  %v39 = vld [vmem:[%s1] sm:$0xf]
  %v40 = vld [vmem:[%s1 + $0x4] sm:$0xf]
  %v41 = vld [vmem:[%s1 + $0x8] sm:$0xf]
  %v42 = vld [vmem:[%s1 + $0xc] sm:$0xf]
  %v43 = vld [vmem:[%s1 + $0x10] sm:$0xf]
  %v44 = vld [vmem:[%s1 + $0x14] sm:$0xf]
  %v45 = vld [vmem:[%s1 + $0x18] sm:$0xf]
  %v46 = vld [vmem:[%s1 + $0x1c] sm:$0xf]
  %v47 = vld [vmem:[%s1 + $0x20] sm:$0xf]
  %v48 = vld [vmem:[%s1 + $0x24] sm:$0xf]
  %v49 = vld [vmem:[%s1 + $0x28] sm:$0xf]
  %v50 = vld [vmem:[%s1 + $0x2c] sm:$0xf]
  %v51 = vld [vmem:[%s1 + $0x30] sm:$0xf]
  %v52 = vld [vmem:[%s1 + $0x34] sm:$0xf]
  %v53 = vld [vmem:[%s1 + $0x38] sm:$0xf]
  %v54 = vld [vmem:[%s1 + $0x3c] sm:$0xf]
  %v55 = vld [vmem:[%s1 + $0x40] sm:$0xf]
  %v56 = vld [vmem:[%s1 + $0x44] sm:$0xf]
  %v57 = vld [vmem:[%s1 + $0x48] sm:$0xf]
  %v58 = vld [vmem:[%s1 + $0x4c] sm:$0xf]
  %v59 = vld [vmem:[%s1 + $0x50] sm:$0xf]
  %v60 = vld [vmem:[%s1 + $0x54] sm:$0xf]
  %v61 = vld [vmem:[%s1 + $0x58] sm:$0xf]
  %v62 = vld [vmem:[%s1 + $0x5c] sm:$0xf]
  %v63 = vld [vmem:[%s1 + $0x60] sm:$0xf]
  %v64 = vld [vmem:[%s1 + $0x64] sm:$0xf]
  %v65 = vld [vmem:[%s1 + $0x68] sm:$0xf]
  %v66 = vld [vmem:[%s1 + $0x6c] sm:$0xf]
  %v67 = vld [vmem:[%s1 + $0x70] sm:$0xf]
  %v68 = vld [vmem:[%s1 + $0x74] sm:$0xf]
  %v69 = vld [vmem:[%s1 + $0x78] sm:$0xf]
  %v70 = vld [vmem:[%s1 + $0x7c] sm:$0xf]
  %v71 = vld [vmem:[%s1 + $0x80] sm:$0xf]
  %v72 = vld [vmem:[%s1 + $0x84] sm:$0xf]
  %v73 = vld [vmem:[%s1 + $0x88] sm:$0xf]
  %v74 = vld [vmem:[%s1 + $0x8c] sm:$0xf]
  %v83 = vunpack.c.l.b16 %v27
  %v84 = vunpack.c.h.b16 %v27
  %v85 = vunpack.c.l.b16 %v28
  %v86 = vunpack.c.l.b16 %v29
  %v87 = vunpack.c.h.b16 %v29
  %v88 = vunpack.c.l.b16 %v30
  %v89 = vunpack.c.l.b16 %v31
  %v90 = vunpack.c.h.b16 %v31
  %v91 = vunpack.c.l.b16 %v32
  %v92 = vunpack.c.l.b16 %v33
  %v93 = vunpack.c.h.b16 %v33
  %v94 = vunpack.c.l.b16 %v34
  %v95 = vpack.c.b16 %v86, %v83
  %v96 = vpack.c.b16 %v87, %v84
  %v97 = vpack.c.b16 %v88, %v85
  %v98 = vpack.c.b16 %v92, %v89
  %v99 = vpack.c.b16 %v93, %v90
  %v100 = vpack.c.b16 %v94, %v91
  %v141 = vunpack.c.l.b16 %v39
  %v142 = vunpack.c.l.b16 %v40
  %v143 = vunpack.c.l.b16 %v41
  %v144 = vunpack.c.l.b16 %v42
  %v145 = vunpack.c.l.b16 %v43
  %v146 = vunpack.c.l.b16 %v44
  %v147 = vunpack.c.l.b16 %v45
  %v148 = vunpack.c.l.b16 %v46
  %v149 = vunpack.c.l.b16 %v47
  %v150 = vunpack.c.l.b16 %v48
  %v151 = vunpack.c.l.b16 %v49
  %v152 = vunpack.c.l.b16 %v50
  %v153 = vunpack.c.l.b16 %v51
  %v154 = vunpack.c.l.b16 %v52
  %v155 = vunpack.c.l.b16 %v53
  %v156 = vunpack.c.l.b16 %v54
  %v157 = vunpack.c.l.b16 %v55
  %v158 = vunpack.c.l.b16 %v56
  %v159 = vunpack.c.l.b16 %v57
  %v160 = vunpack.c.l.b16 %v58
  %v161 = vunpack.c.l.b16 %v59
  %v162 = vunpack.c.l.b16 %v60
  %v163 = vunpack.c.l.b16 %v61
  %v164 = vunpack.c.l.b16 %v62
  %v165 = vunpack.c.l.b16 %v63
  %v166 = vunpack.c.l.b16 %v64
  %v167 = vunpack.c.l.b16 %v65
  %v168 = vunpack.c.l.b16 %v66
  %v169 = vunpack.c.l.b16 %v67
  %v170 = vunpack.c.l.b16 %v68
  %v171 = vunpack.c.l.b16 %v69
  %v172 = vunpack.c.l.b16 %v70
  %v173 = vunpack.c.l.b16 %v71
  %v174 = vunpack.c.l.b16 %v72
  %v175 = vunpack.c.l.b16 %v73
  %v176 = vunpack.c.l.b16 %v74
  %v177 = vpack.c.b16 %v142, %v141
  %v178 = vpack.c.b16 %v144, %v143
  %v179 = vpack.c.b16 %v146, %v145
  %v180 = vpack.c.b16 %v148, %v147
  %v181 = vpack.c.b16 %v150, %v149
  %v182 = vpack.c.b16 %v152, %v151
  %v183 = vpack.c.b16 %v154, %v153
  %v184 = vpack.c.b16 %v156, %v155
  %v185 = vpack.c.b16 %v158, %v157
  %v186 = vpack.c.b16 %v160, %v159
  %v187 = vpack.c.b16 %v162, %v161
  %v188 = vpack.c.b16 %v164, %v163
  %v189 = vpack.c.b16 %v166, %v165
  %v190 = vpack.c.b16 %v168, %v167
  %v191 = vpack.c.b16 %v170, %v169
  %v192 = vpack.c.b16 %v172, %v171
  %v193 = vpack.c.b16 %v174, %v173
  %v194 = vpack.c.b16 %v176, %v175
  %vm213 = vcmask 261120
  %v215 = vsel %vm213, %v97, 0
  %v218 = vsel %vm213, %v100, 0
  %220 = vmatprep.subr.bf16.mxu0 0
  %221 = vmatpush1.bf16.msra.mxu0 %v177
  %222 = vmatprep.subr.bf16.mxu0 0
  %223 = vmatpush1.bf16.msra.mxu0 %v178
  %224 = vmatprep.subr.bf16.mxu0 0
  %225 = vmatpush1.bf16.msra.mxu0 %v179
  %226 = vmatprep.subr.bf16.mxu0 0
  %227 = vmatpush1.bf16.msra.mxu0 %v180
  %228 = vmatprep.subr.bf16.mxu0 0
  %229 = vmatpush1.bf16.msra.mxu0 %v181
  %230 = vmatprep.subr.bf16.mxu0 0
  %231 = vmatpush1.bf16.msra.mxu0 %v182
  %232 = vmatprep.subr.bf16.mxu0 0
  %233 = vmatpush1.bf16.msra.mxu0 %v183
  %234 = vmatprep.subr.bf16.mxu0 0
  %235 = vmatpush1.bf16.msra.mxu0 %v184
  %236 = vmatprep.subr.bf16.mxu0 0
  %237 = vmatpush1.bf16.msra.mxu0 %v185
  %238 = vmatprep.subr.bf16.mxu0 0
  %239 = vmatpush1.bf16.msra.mxu0 %v186
  %240 = vmatprep.subr.bf16.mxu0 0
  %241 = vmatpush1.bf16.msra.mxu0 %v187
  %242 = vmatprep.subr.bf16.mxu0 0
  %243 = vmatpush1.bf16.msra.mxu0 %v188
  %244 = vmatprep.subr.bf16.mxu0 0
  %245 = vmatpush1.bf16.msra.mxu0 %v189
  %246 = vmatprep.subr.bf16.mxu0 0
  %247 = vmatpush1.bf16.msra.mxu0 %v190
  %248 = vmatprep.subr.bf16.mxu0 0
  %249 = vmatpush1.bf16.msra.mxu0 %v191
  %250 = vmatprep.subr.bf16.mxu0 0
  %251 = vmatpush1.bf16.msra.mxu0 %v192
  %252 = vmatprep.mubr.bf16.mxu0 %v96
  %253 = vmatmul.mubr.bf16.gmra.mrb[0].mxu0 %v95
  %v254 = vpop.f32.mrb[0].mxu0
  %v255 = vadd.f32 0.0, %v254
  %v256 = vpop.f32.mrb[0].mxu0
  %v257 = vpop.f32.mrb[0].mxu0
  %v258 = vadd.f32 0.0, %v257
  %v259 = vpop.f32.mrb[0].mxu0
  %260 = vmatprep.mubr.bf16.mxu0 %v99
  %261 = vmatmul.mubr.bf16.gmra.mrb[0].mxu0 %v98
  %v262 = vpop.f32.mrb[0].mxu0
  %v263 = vadd.f32 0.0, %v262
  %v264 = vpop.f32.mrb[0].mxu0
  %v265 = vpop.f32.mrb[0].mxu0
  %v266 = vadd.f32 0.0, %v265
  %v267 = vpop.f32.mrb[0].mxu0
  %268 = vdwg.mxu0
  %269 = vmatprep.subr.bf16.mxu0 0
  %270 = vmatpush1.bf16.msra.mxu0 %v193
  %271 = vmatprep.subr.bf16.mxu0 0
  %272 = vmatpush1.bf16.msra.mxu0 %v194
  %273 = vmatprep.subr.bf16.mxu0 0
  %274 = vmatpush1.bf16.msra.mxu0 0
  %275 = vmatprep.subr.bf16.mxu0 0
  %276 = vmatpush1.bf16.msra.mxu0 0
  %277 = vmatprep.subr.bf16.mxu0 0
  %278 = vmatpush1.bf16.msra.mxu0 0
  %279 = vmatprep.subr.bf16.mxu0 0
  %280 = vmatpush1.bf16.msra.mxu0 0
  %281 = vmatprep.subr.bf16.mxu0 0
  %282 = vmatpush1.bf16.msra.mxu0 0
  %283 = vmatprep.subr.bf16.mxu0 0
  %284 = vmatpush1.bf16.msra.mxu0 0
  %285 = vmatprep.subr.bf16.mxu0 0
  %286 = vmatpush1.bf16.msra.mxu0 0
  %287 = vmatprep.subr.bf16.mxu0 0
  %288 = vmatpush1.bf16.msra.mxu0 0
  %289 = vmatprep.subr.bf16.mxu0 0
  %290 = vmatpush1.bf16.msra.mxu0 0
  %291 = vmatprep.subr.bf16.mxu0 0
  %292 = vmatpush1.bf16.msra.mxu0 0
  %293 = vmatprep.subr.bf16.mxu0 0
  %294 = vmatpush1.bf16.msra.mxu0 0
  %295 = vmatprep.subr.bf16.mxu0 0
  %296 = vmatpush1.bf16.msra.mxu0 0
  %297 = vmatprep.subr.bf16.mxu0 0
  %298 = vmatpush1.bf16.msra.mxu0 0
  %299 = vmatprep.subr.bf16.mxu0 0
  %300 = vmatpush1.bf16.msra.mxu0 0
  %301 = vmatprep.mubr.bf16.mxu0 0
  %302 = vmatmul.mubr.bf16.gmra.mrb[0].mxu0 %v215
  %v303 = vpop.f32.mrb[0].mxu0
  %v304 = vadd.f32 %v255, %v303
  %v305 = vpop.f32.mrb[0].mxu0
  %v306 = vpop.f32.mrb[0].mxu0
  %v307 = vadd.f32 %v258, %v306
  %v308 = vpop.f32.mrb[0].mxu0
  %309 = vmatprep.mubr.bf16.mxu0 0
  %310 = vmatmul.mubr.bf16.gmra.mrb[0].mxu0 %v218
  %v311 = vpop.f32.mrb[0].mxu0
  %v312 = vadd.f32 %v263, %v311
  %v313 = vpop.f32.mrb[0].mxu0
  %v314 = vpop.f32.mrb[0].mxu0
  %v315 = vadd.f32 %v266, %v314
  %v316 = vpop.f32.mrb[0].mxu0
  %317 = vdwg.mxu0
  %v318 = vadd.f32 %v35, %v304
  %v319 = vadd.f32 %v36, %v307
  %v320 = vadd.f32 %v37, %v312
  %v321 = vadd.f32 %v38, %v315
  %vm322 = vcmask 64512
  %323 = vst.msk [vmem:[#allocation2] sm:$0xff] %vm322, %v318
  %324 = vst.msk [vmem:[#allocation2 + $0x8] sm:$0xff] %vm322, %v319
  %325 = vst.msk [vmem:[#allocation2 + $0x10] sm:$0xff] %vm322, %v320
  %326 = vst.msk [vmem:[#allocation2 + $0x18] sm:$0xff] %vm322, %v321
  // Predicated region
  $region22: #{forward.35} parent=0 // pred_check
    %p327 = pneg %p18
  $region23: #{forward.35} parent=0 // pred_check_branch
    %329 = sbr.rel (%p327) target = $region25
  $region24: #{forward.35} parent=0 // pred_region
    %v330 = vld [vmem:[#allocation2] sm:$0xff]
    %v331 = vld [vmem:[#allocation2 + $0x8] sm:$0xff]
    %v332 = vld [vmem:[#allocation2 + $0x10] sm:$0xff]
    %v333 = vld [vmem:[#allocation2 + $0x18] sm:$0xff]
    %v334 = vld [vmem:[%s2] sm:$0x1]
    %v336 = vlaneseq
    %v337 = vshrl.u32 %v336, 7
    %v338 = vsub.s32 0, %v337
    %v339 = vrot.slane %v334, %v338
    %v341 = vmul.f32 %v330, %v339
    %v342 = vmul.f32 %v331, %v339
    %v343 = vmul.f32 %v332, %v339
    %v344 = vmul.f32 %v333, %v339
    %v345 = vld [vmem:[%s3] sm:$0x1]
    %v347 = vlaneseq
    %v348 = vshrl.u32 %v347, 7
    %v349 = vsub.s32 0, %v348
    %v350 = vrot.slane %v345, %v349
    %v352 = vadd.f32 %v341, %v350
    %v353 = vadd.f32 %v342, %v350
    %v354 = vadd.f32 %v343, %v350
    %v355 = vadd.f32 %v344, %v350
    %v356 = vpack.c.bf16 %v353, %v352
    %v357 = vpack.c.bf16 %v355, %v354
    %v360 = vunpack.c.l.b16 %v356
    %v361 = vunpack.c.h.b16 %v356
    %v362 = vunpack.c.l.b16 %v357
    %v363 = vunpack.c.h.b16 %v357
    %v364 = vpack.c.b16 %v360, %v360
    %v365 = vpack.c.b16 %v361, %v361
    %v366 = vpack.c.b16 %v362, %v362
    %v367 = vpack.c.b16 %v363, %v363
    %vm372 = vcmask 60416
    %373 = vst.msk [vmem:[%s4] sm:$0xf] %vm372, %v364
    %374 = vst.msk [vmem:[%s4 + $0x4] sm:$0xf] %vm372, %v365
    %375 = vst.msk [vmem:[%s4 + $0x8] sm:$0xf] %vm372, %v366
    %376 = vst.msk [vmem:[%s4 + $0xc] sm:$0xf] %vm372, %v367
  $region25: #{forward.35} parent=0 // pred_fallthru
    _
  // Predicated region
  $region26: #{forward.35} parent=0 // pred_check
    _
  $region27: #{forward.35} parent=0 // pred_check_branch
    %378 = sbr.rel (0) target = $region29
  $region28: #{forward.35} parent=0 // pred_region
    _
  $region29: #{forward.35} parent=0 // pred_fallthru
    _
  // Predicated region
  $region30: #{forward.35} parent=0 // pred_check
    _
  $region31: #{forward.35} parent=0 // pred_check_branch
    %380 = sbr.rel (0) target = $region33
  $region32: #{forward.35} parent=0 // pred_region
    _
  $region33: #{forward.35} parent=0 // pred_fallthru
    _

// kernel: forward.38
$region0: #{forward.38}
  #allocation0 [shape = 'u32[]', space=smem, size = 0x4, offset = 0x4, fixed_abs, tag = 'smem constant byte address 0x4 - core index']
  #allocation1 [shape = 'u32[144,128]{1,0:T(1,128)}', space=vmem, size = 0x12000, scoped, tag = 'internal scratch']
  #allocation2 [shape = 'f32[32,16]{1,0:T(8,128)}', space=vmem, size = 0x4000, scoped, tag = 'scratch operand']
  %s0 = inlined_call_operand.vmem [shape: bf16[32,32], index: 0, kind: input, shape index: {}]
  %s1 = inlined_call_operand.vmem [shape: bf16[32,16], index: 1, kind: input, shape index: {}]
  %s2 = inlined_call_operand.vmem [shape: f32[1,32], index: 2, kind: input, shape index: {}]
  %s3 = inlined_call_operand.vmem [shape: f32[1,32], index: 3, kind: input, shape index: {}]
  %s4 = inlined_call_operand.vmem [shape: f32[1,16], index: 4, kind: input, shape index: {}]
  %s5 = inlined_call_operand.vmem [shape: f32[1,16], index: 5, kind: input, shape index: {}]
  %s6 = inlined_call_operand.vmem [shape: bf16[32,16], index: 6, kind: output, shape index: {}]
  %s7 = sld [smem:[#allocation0]]
  $region42: #{forward.38} parent=0
    _
  %s9 = ssub.s32 1, %s7
  %s10 = scalar_select 0, %s9, %s7
  // Predicated region
  $region2: #{forward.38} parent=0 // pred_check
    _
  $region3: #{forward.38} parent=0 // pred_check_branch
    %12 = sbr.rel (0) target = $region5
  $region4: #{forward.38} parent=0 // pred_region
    _
  $region5: #{forward.38} parent=0 // pred_fallthru
    _
  // Predicated region
  $region6: #{forward.38} parent=0 // pred_check
    _
  $region7: #{forward.38} parent=0 // pred_check_branch
    %14 = sbr.rel (0) target = $region9
  $region8: #{forward.38} parent=0 // pred_region
    _
  $region9: #{forward.38} parent=0 // pred_fallthru
    _
  // Predicated region
  $region10: #{forward.38} parent=0 // pred_check
    _
  $region11: #{forward.38} parent=0 // pred_check_branch
    %16 = sbr.rel (0) target = $region13
  $region12: #{forward.38} parent=0 // pred_region
    _
  $region13: #{forward.38} parent=0 // pred_fallthru
    _
  // Predicated region
  $region14: #{forward.38} parent=0 // pred_check
    _
  $region15: #{forward.38} parent=0 // pred_check_branch
    %18 = sbr.rel (0) target = $region17
  $region16: #{forward.38} parent=0 // pred_region
    _
  $region17: #{forward.38} parent=0 // pred_fallthru
    _
  // Predicated region
  $region18: #{forward.38} parent=0 // pred_check
    _
  $region19: #{forward.38} parent=0 // pred_check_branch
    %20 = sbr.rel (0) target = $region21
  $region20: #{forward.38} parent=0 // pred_region
    _
  $region21: #{forward.38} parent=0 // pred_fallthru
    _
  // Predicated region
  $region22: #{forward.38} parent=0 // pred_check
    _
  $region23: #{forward.38} parent=0 // pred_check_branch
    %22 = sbr.rel (0) target = $region25
  $region24: #{forward.38} parent=0 // pred_region
    _
  $region25: #{forward.38} parent=0 // pred_fallthru
    _
  %p24 = scmp.eq.s32.totalorder 0, 0
  // Predicated region
  $region26: #{forward.38} parent=0 // pred_check
    %p25 = pneg %p24
  $region27: #{forward.38} parent=0 // pred_check_branch
    %27 = sbr.rel (%p25) target = $region29
  $region28: #{forward.38} parent=0 // pred_region
    %vm28 = vcmask 130048
    %29 = vst.msk [vmem:[#allocation2] sm:$0xff] %vm28, 0.0
    %30 = vst.msk [vmem:[#allocation2 + $0x8] sm:$0xff] %vm28, 0.0
    %31 = vst.msk [vmem:[#allocation2 + $0x10] sm:$0xff] %vm28, 0.0
    %32 = vst.msk [vmem:[#allocation2 + $0x18] sm:$0xff] %vm28, 0.0
  $region29: #{forward.38} parent=0 // pred_fallthru
    _
  %v33 = vld [vmem:[%s0] sm:$0xf]
  %v34 = vld [vmem:[%s0 + $0x4] sm:$0xf]
  %v35 = vld [vmem:[%s0 + $0x8] sm:$0xf]
  %v36 = vld [vmem:[%s0 + $0xc] sm:$0xf]
  %v37 = vunpack.c.l.bf16 %v33
  %v38 = vunpack.c.l.bf16 %v34
  %v39 = vunpack.c.l.bf16 %v35
  %v40 = vunpack.c.l.bf16 %v36
  %v41 = vld [vmem:[%s2] sm:$0x1]
  %v43 = vlaneseq
  %v44 = vshrl.u32 %v43, 7
  %v45 = vsub.s32 0, %v44
  %v46 = vrot.slane %v41, %v45
  %v48 = vmul.f32 %v37, %v46
  %v49 = vmul.f32 %v38, %v46
  %v50 = vmul.f32 %v39, %v46
  %v51 = vmul.f32 %v40, %v46
  %v52 = vld [vmem:[%s3] sm:$0x1]
  %v54 = vlaneseq
  %v55 = vshrl.u32 %v54, 7
  %v56 = vsub.s32 0, %v55
  %v57 = vrot.slane %v52, %v56
  %v59 = vadd.f32 %v48, %v57
  %v60 = vadd.f32 %v49, %v57
  %v61 = vadd.f32 %v50, %v57
  %v62 = vadd.f32 %v51, %v57
  %v63 = vmax.f32 %v59, 0.0
  %v64 = vmax.f32 %v60, 0.0
  %v65 = vmax.f32 %v61, 0.0
  %v66 = vmax.f32 %v62, 0.0
  %v67 = vpack.c.bf16 %v64, %v63
  %v68 = vpack.c.bf16 %v66, %v65
  %v69 = vld [vmem:[#allocation2] sm:$0xff]
  %v70 = vld [vmem:[#allocation2 + $0x8] sm:$0xff]
  %v71 = vld [vmem:[#allocation2 + $0x10] sm:$0xff]
  %v72 = vld [vmem:[#allocation2 + $0x18] sm:$0xff]
  %v73 = vld [vmem:[%s1] sm:$0xf]
  %v74 = vld [vmem:[%s1 + $0x4] sm:$0xf]
  %v75 = vld [vmem:[%s1 + $0x8] sm:$0xf]
  %v76 = vld [vmem:[%s1 + $0xc] sm:$0xf]
  %v81 = vunpack.c.l.b16 %v73
  %v82 = vunpack.c.l.b16 %v74
  %v83 = vunpack.c.l.b16 %v75
  %v84 = vunpack.c.l.b16 %v76
  %v85 = vpack.c.b16 %v82, %v81
  %v86 = vpack.c.b16 %v84, %v83
  %vm89 = vcmask 261120
  %v91 = vsel %vm89, %v67, 0
  %v94 = vsel %vm89, %v68, 0
  %96 = vmatprep.subr.bf16.mxu0 0
  %97 = vmatpush1.bf16.msra.mxu0 %v85
  %98 = vmatprep.subr.bf16.mxu0 0
  %99 = vmatpush1.bf16.msra.mxu0 %v86
  %100 = vmatprep.subr.bf16.mxu0 0
  %101 = vmatpush1.bf16.msra.mxu0 0
  %102 = vmatprep.subr.bf16.mxu0 0
  %103 = vmatpush1.bf16.msra.mxu0 0
  %104 = vmatprep.subr.bf16.mxu0 0
  %105 = vmatpush1.bf16.msra.mxu0 0
  %106 = vmatprep.subr.bf16.mxu0 0
  %107 = vmatpush1.bf16.msra.mxu0 0
  %108 = vmatprep.subr.bf16.mxu0 0
  %109 = vmatpush1.bf16.msra.mxu0 0
  %110 = vmatprep.subr.bf16.mxu0 0
  %111 = vmatpush1.bf16.msra.mxu0 0
  %112 = vmatprep.subr.bf16.mxu0 0
  %113 = vmatpush1.bf16.msra.mxu0 0
  %114 = vmatprep.subr.bf16.mxu0 0
  %115 = vmatpush1.bf16.msra.mxu0 0
  %116 = vmatprep.subr.bf16.mxu0 0
  %117 = vmatpush1.bf16.msra.mxu0 0
  %118 = vmatprep.subr.bf16.mxu0 0
  %119 = vmatpush1.bf16.msra.mxu0 0
  %120 = vmatprep.subr.bf16.mxu0 0
  %121 = vmatpush1.bf16.msra.mxu0 0
  %122 = vmatprep.subr.bf16.mxu0 0
  %123 = vmatpush1.bf16.msra.mxu0 0
  %124 = vmatprep.subr.bf16.mxu0 0
  %125 = vmatpush1.bf16.msra.mxu0 0
  %126 = vmatprep.subr.bf16.mxu0 0
  %127 = vmatpush1.bf16.msra.mxu0 0
  %128 = vmatprep.mubr.bf16.mxu0 0
  %129 = vmatmul.mubr.bf16.gmra.mrb[0].mxu0 %v91
  %v130 = vpop.f32.mrb[0].mxu0
  %v131 = vadd.f32 0.0, %v130
  %v132 = vpop.f32.mrb[0].mxu0
  %v133 = vpop.f32.mrb[0].mxu0
  %v134 = vadd.f32 0.0, %v133
  %v135 = vpop.f32.mrb[0].mxu0
  %136 = vmatprep.mubr.bf16.mxu0 0
  %137 = vmatmul.mubr.bf16.gmra.mrb[0].mxu0 %v94
  %v138 = vpop.f32.mrb[0].mxu0
  %v139 = vadd.f32 0.0, %v138
  %v140 = vpop.f32.mrb[0].mxu0
  %v141 = vpop.f32.mrb[0].mxu0
  %v142 = vadd.f32 0.0, %v141
  %v143 = vpop.f32.mrb[0].mxu0
  %144 = vdwg.mxu0
  %v145 = vadd.f32 %v69, %v131
  %v146 = vadd.f32 %v70, %v134
  %v147 = vadd.f32 %v71, %v139
  %v148 = vadd.f32 %v72, %v142
  %vm149 = vcmask 130048
  %150 = vst.msk [vmem:[#allocation2] sm:$0xff] %vm149, %v145
  %151 = vst.msk [vmem:[#allocation2 + $0x8] sm:$0xff] %vm149, %v146
  %152 = vst.msk [vmem:[#allocation2 + $0x10] sm:$0xff] %vm149, %v147
  %153 = vst.msk [vmem:[#allocation2 + $0x18] sm:$0xff] %vm149, %v148
  // Predicated region
  $region30: #{forward.38} parent=0 // pred_check
    %p154 = pneg %p24
  $region31: #{forward.38} parent=0 // pred_check_branch
    %156 = sbr.rel (%p154) target = $region33
  $region32: #{forward.38} parent=0 // pred_region
    %v157 = vld [vmem:[#allocation2] sm:$0xff]
    %v158 = vld [vmem:[#allocation2 + $0x8] sm:$0xff]
    %v159 = vld [vmem:[#allocation2 + $0x10] sm:$0xff]
    %v160 = vld [vmem:[#allocation2 + $0x18] sm:$0xff]
    %v161 = vld [vmem:[%s4] sm:$0x1]
    %v163 = vlaneseq
    %v164 = vshrl.u32 %v163, 7
    %v165 = vsub.s32 0, %v164
    %v166 = vrot.slane %v161, %v165
    %v168 = vmul.f32 %v157, %v166
    %v169 = vmul.f32 %v158, %v166
    %v170 = vmul.f32 %v159, %v166
    %v171 = vmul.f32 %v160, %v166
    %v172 = vld [vmem:[%s5] sm:$0x1]
    %v174 = vlaneseq
    %v175 = vshrl.u32 %v174, 7
    %v176 = vsub.s32 0, %v175
    %v177 = vrot.slane %v172, %v176
    %v179 = vadd.f32 %v168, %v177
    %v180 = vadd.f32 %v169, %v177
    %v181 = vadd.f32 %v170, %v177
    %v182 = vadd.f32 %v171, %v177
    %v183 = vpack.c.bf16 %v180, %v179
    %v184 = vpack.c.bf16 %v182, %v181
    %v187 = vunpack.c.l.b16 %v183
    %v188 = vunpack.c.h.b16 %v183
    %v189 = vunpack.c.l.b16 %v184
    %v190 = vunpack.c.h.b16 %v184
    %v191 = vpack.c.b16 %v187, %v187
    %v192 = vpack.c.b16 %v188, %v188
    %v193 = vpack.c.b16 %v189, %v189
    %v194 = vpack.c.b16 %v190, %v190
    %vm199 = vcmask 125952
    %200 = vst.msk [vmem:[%s6] sm:$0xf] %vm199, %v191
    %201 = vst.msk [vmem:[%s6 + $0x4] sm:$0xf] %vm199, %v192
    %202 = vst.msk [vmem:[%s6 + $0x8] sm:$0xf] %vm199, %v193
    %203 = vst.msk [vmem:[%s6 + $0xc] sm:$0xf] %vm199, %v194
  $region33: #{forward.38} parent=0 // pred_fallthru
    _
  // Predicated region
  $region34: #{forward.38} parent=0 // pred_check
    _
  $region35: #{forward.38} parent=0 // pred_check_branch
    %205 = sbr.rel (0) target = $region37
  $region36: #{forward.38} parent=0 // pred_region
    _
  $region37: #{forward.38} parent=0 // pred_fallthru
    _
  // Predicated region
  $region38: #{forward.38} parent=0 // pred_check
    _
  $region39: #{forward.38} parent=0 // pred_check_branch
    %207 = sbr.rel (0) target = $region41
  $region40: #{forward.38} parent=0 // pred_region
    _
  $region41: #{forward.38} parent=0 // pred_fallthru
    _

// kernel: forward.40
$region0: #{forward.40}
  #allocation0 [shape = 'u32[]', space=smem, size = 0x4, offset = 0x4, fixed_abs, tag = 'smem constant byte address 0x4 - core index']
  #allocation1 [shape = 'u32[144,128]{1,0:T(1,128)}', space=vmem, size = 0x12000, scoped, tag = 'internal scratch']
  #allocation2 [shape = 'f32[8,32]{1,0:T(8,128)}', space=vmem, size = 0x1000, scoped, tag = 'scratch operand']
  %s0 = inlined_call_operand.vmem [shape: bf16[8,16], index: 0, kind: input, shape index: {}]
  %s1 = inlined_call_operand.vmem [shape: bf16[16,32], index: 1, kind: input, shape index: {}]
  %s2 = inlined_call_operand.vmem [shape: f32[1,16], index: 2, kind: input, shape index: {}]
  %s3 = inlined_call_operand.vmem [shape: f32[1,16], index: 3, kind: input, shape index: {}]
  %s4 = inlined_call_operand.vmem [shape: f32[1,32], index: 4, kind: input, shape index: {}]
  %s5 = inlined_call_operand.vmem [shape: f32[1,32], index: 5, kind: input, shape index: {}]
  %s6 = inlined_call_operand.vmem [shape: bf16[8,32], index: 6, kind: output, shape index: {}]
  %s7 = sld [smem:[#allocation0]]
  $region42: #{forward.40} parent=0
    _
  %s9 = ssub.s32 1, %s7
  %s10 = scalar_select 0, %s9, %s7
  // Predicated region
  $region2: #{forward.40} parent=0 // pred_check
    _
  $region3: #{forward.40} parent=0 // pred_check_branch
    %12 = sbr.rel (0) target = $region5
  $region4: #{forward.40} parent=0 // pred_region
    _
  $region5: #{forward.40} parent=0 // pred_fallthru
    _
  // Predicated region
  $region6: #{forward.40} parent=0 // pred_check
    _
  $region7: #{forward.40} parent=0 // pred_check_branch
    %14 = sbr.rel (0) target = $region9
  $region8: #{forward.40} parent=0 // pred_region
    _
  $region9: #{forward.40} parent=0 // pred_fallthru
    _
  // Predicated region
  $region10: #{forward.40} parent=0 // pred_check
    _
  $region11: #{forward.40} parent=0 // pred_check_branch
    %16 = sbr.rel (0) target = $region13
  $region12: #{forward.40} parent=0 // pred_region
    _
  $region13: #{forward.40} parent=0 // pred_fallthru
    _
  // Predicated region
  $region14: #{forward.40} parent=0 // pred_check
    _
  $region15: #{forward.40} parent=0 // pred_check_branch
    %18 = sbr.rel (0) target = $region17
  $region16: #{forward.40} parent=0 // pred_region
    _
  $region17: #{forward.40} parent=0 // pred_fallthru
    _
  // Predicated region
  $region18: #{forward.40} parent=0 // pred_check
    _
  $region19: #{forward.40} parent=0 // pred_check_branch
    %20 = sbr.rel (0) target = $region21
  $region20: #{forward.40} parent=0 // pred_region
    _
  $region21: #{forward.40} parent=0 // pred_fallthru
    _
  // Predicated region
  $region22: #{forward.40} parent=0 // pred_check
    _
  $region23: #{forward.40} parent=0 // pred_check_branch
    %22 = sbr.rel (0) target = $region25
  $region24: #{forward.40} parent=0 // pred_region
    _
  $region25: #{forward.40} parent=0 // pred_fallthru
    _
  %p24 = scmp.eq.s32.totalorder 0, 0
  // Predicated region
  $region26: #{forward.40} parent=0 // pred_check
    %p25 = pneg %p24
  $region27: #{forward.40} parent=0 // pred_check_branch
    %27 = sbr.rel (%p25) target = $region29
  $region28: #{forward.40} parent=0 // pred_region
    %vm28 = vcmask 261120
    %29 = vst.msk [vmem:[#allocation2] sm:$0xff] %vm28, 0.0
  $region29: #{forward.40} parent=0 // pred_fallthru
    _
  %v30 = vld [vmem:[%s0] sm:$0xf]
  %v31 = vunpack.c.l.bf16 %v30
  %v32 = vld [vmem:[%s2] sm:$0x1]
  %v34 = vlaneseq
  %v35 = vshrl.u32 %v34, 7
  %v36 = vsub.s32 0, %v35
  %v37 = vrot.slane %v32, %v36
  %v39 = vmul.f32 %v31, %v37
  %v40 = vld [vmem:[%s3] sm:$0x1]
  %v42 = vlaneseq
  %v43 = vshrl.u32 %v42, 7
  %v44 = vsub.s32 0, %v43
  %v45 = vrot.slane %v40, %v44
  %v47 = vadd.f32 %v39, %v45
  %v48 = vmax.f32 %v47, 0.0
  %v49 = vpack.c.bf16 %v48, %v48
  %v50 = vld [vmem:[#allocation2] sm:$0xff]
  %v51 = vld [vmem:[%s1] sm:$0xf]
  %v52 = vld [vmem:[%s1 + $0x4] sm:$0xf]
  %v55 = vunpack.c.l.b16 %v51
  %v56 = vunpack.c.l.b16 %v52
  %v57 = vpack.c.b16 %v56, %v55
  %vm59 = vcmask 130048
  %v61 = vsel %vm59, %v49, 0
  %63 = vmatprep.subr.bf16.mxu0 0
  %64 = vmatpush1.bf16.msra.mxu0 %v57
  %65 = vmatprep.subr.bf16.mxu0 0
  %66 = vmatpush1.bf16.msra.mxu0 0
  %67 = vmatprep.subr.bf16.mxu0 0
  %68 = vmatpush1.bf16.msra.mxu0 0
  %69 = vmatprep.subr.bf16.mxu0 0
  %70 = vmatpush1.bf16.msra.mxu0 0
  %71 = vmatprep.subr.bf16.mxu0 0
  %72 = vmatpush1.bf16.msra.mxu0 0
  %73 = vmatprep.subr.bf16.mxu0 0
  %74 = vmatpush1.bf16.msra.mxu0 0
  %75 = vmatprep.subr.bf16.mxu0 0
  %76 = vmatpush1.bf16.msra.mxu0 0
  %77 = vmatprep.subr.bf16.mxu0 0
  %78 = vmatpush1.bf16.msra.mxu0 0
  %79 = vmatprep.subr.bf16.mxu0 0
  %80 = vmatpush1.bf16.msra.mxu0 0
  %81 = vmatprep.subr.bf16.mxu0 0
  %82 = vmatpush1.bf16.msra.mxu0 0
  %83 = vmatprep.subr.bf16.mxu0 0
  %84 = vmatpush1.bf16.msra.mxu0 0
  %85 = vmatprep.subr.bf16.mxu0 0
  %86 = vmatpush1.bf16.msra.mxu0 0
  %87 = vmatprep.subr.bf16.mxu0 0
  %88 = vmatpush1.bf16.msra.mxu0 0
  %89 = vmatprep.subr.bf16.mxu0 0
  %90 = vmatpush1.bf16.msra.mxu0 0
  %91 = vmatprep.subr.bf16.mxu0 0
  %92 = vmatpush1.bf16.msra.mxu0 0
  %93 = vmatprep.subr.bf16.mxu0 0
  %94 = vmatpush1.bf16.msra.mxu0 0
  %95 = vmatprep.mubr.bf16.mxu0 0
  %96 = vmatmul.mubr.bf16.gmra.mrb[0].mxu0 %v61
  %v97 = vpop.f32.mrb[0].mxu0
  %v98 = vadd.f32 0.0, %v97
  %v99 = vpop.f32.mrb[0].mxu0
  %v100 = vpop.f32.mrb[0].mxu0
  %v101 = vpop.f32.mrb[0].mxu0
  %102 = vdwg.mxu0
  %v103 = vadd.f32 %v50, %v98
  %vm104 = vcmask 261120
  %105 = vst.msk [vmem:[#allocation2] sm:$0xff] %vm104, %v103
  // Predicated region
  $region30: #{forward.40} parent=0 // pred_check
    %p106 = pneg %p24
  $region31: #{forward.40} parent=0 // pred_check_branch
    %108 = sbr.rel (%p106) target = $region33
  $region32: #{forward.40} parent=0 // pred_region
    %v109 = vld [vmem:[#allocation2] sm:$0xff]
    %v110 = vld [vmem:[%s4] sm:$0x1]
    %v112 = vlaneseq
    %v113 = vshrl.u32 %v112, 7
    %v114 = vsub.s32 0, %v113
    %v115 = vrot.slane %v110, %v114
    %v117 = vmul.f32 %v109, %v115
    %v118 = vld [vmem:[%s5] sm:$0x1]
    %v120 = vlaneseq
    %v121 = vshrl.u32 %v120, 7
    %v122 = vsub.s32 0, %v121
    %v123 = vrot.slane %v118, %v122
    %v125 = vadd.f32 %v117, %v123
    %v126 = vmax.f32 %v125, 0.0
    %v127 = vpack.c.bf16 %v126, %v126
    %vm128 = vcmask 257024
    %129 = vst.msk [vmem:[%s6] sm:$0xf] %vm128, %v127
  $region33: #{forward.40} parent=0 // pred_fallthru
    _
  // Predicated region
  $region34: #{forward.40} parent=0 // pred_check
    _
  $region35: #{forward.40} parent=0 // pred_check_branch
    %131 = sbr.rel (0) target = $region37
  $region36: #{forward.40} parent=0 // pred_region
    _
  $region37: #{forward.40} parent=0 // pred_fallthru
    _
  // Predicated region
  $region38: #{forward.40} parent=0 // pred_check
    _
  $region39: #{forward.40} parent=0 // pred_check_branch
    %133 = sbr.rel (0) target = $region41
  $region40: #{forward.40} parent=0 // pred_region
    _
  $region41: #{forward.40} parent=0 // pred_fallthru
    _

// kernel: forward.39
$region0: #{forward.39}
  #allocation0 [shape = 'u32[]', space=smem, size = 0x4, offset = 0x4, fixed_abs, tag = 'smem constant byte address 0x4 - core index']
  #allocation1 [shape = 'u32[144,128]{1,0:T(1,128)}', space=vmem, size = 0x12000, scoped, tag = 'internal scratch']
  #allocation2 [shape = 'f32[8,16]{1,0:T(8,128)}', space=vmem, size = 0x1000, scoped, tag = 'scratch operand']
  %s0 = inlined_call_operand.vmem [shape: bf16[4,8,16], index: 0, kind: input, shape index: {}]
  %s1 = inlined_call_operand.vmem [shape: bf16[8,16], index: 1, kind: output, shape index: {}]
  %s2 = sld [smem:[#allocation0]]
  $region49: #{forward.39} parent=0
    _
  %s4 = ssub.s32 1, %s2
  %s5 = scalar_select 0, %s4, %s2
  loop: start=0, step=1, limit=6
  $region2: #{forward.39} parent=0 // loop_pre_header
    _
  $region3: #{forward.39} parent=0 // loop_header
    %s7 = sphi 0, %s11
    %p8 = scmp.ge.s32.totalorder %s7, 6
    %s14 = sphi 0, %s26
    %s15 = sphi 0, %s22
    %s16 = sphi 0, %s14
    %s17 = sphi 0, %s15
    %s18 = sphi 0, %s16
    %s19 = sphi 0, %s17
    %s31 = sphi 0, %s33
    %s34 = sphi 0, %s31
    %s35 = sphi 0, %s34
    %s51 = sphi 0, %s35
    %s57 = sphi 0, %s59
    %s60 = sphi 0, %s57
    %s61 = sphi 0, %s60
    %s77 = sphi 0, %s61
  $region4: #{forward.39} parent=0 // loop_header_branch
    %10 = sbr.rel (%p8) target = $region8
  $region5: #{forward.39} parent=0 // loop_body
    %s12 = ssub.s32 %s7, 1
    %s13 = ssub.s32 %s7, 2
    %s20 = sadd.s32 1, %s15
    %p21 = scmp.ge.s32.totalorder %s20, 4
    %s22 = scalar_select %p21, 0, %s20
    %s23 = sadd.s32 1, %s14
    %s24 = scalar_select %p21, %s23, %s14
    %p25 = scmp.ge.s32.totalorder %s24, 1
    %s26 = scalar_select %p25, 0, %s24
    %s27 = ssub.s32 %s15, %s22
    %s28 = ssub.s32 %s14, %s26
    %s29 = sor.u32 %s27, %s28
    %p30 = scmp.eq.s32.totalorder %s29, 0
    %s32 = sadd.s32 %s31, 1
    %s33 = scalar_select %p30, %s31, %s32
    %p36 = pneg %p30
    %p37 = scmp.eq.s32.totalorder %s7, 3
    %p38 = por %p36, %p37
    %p39 = scmp.ne.s32.totalorder %s31, %s34
    %p40 = scmp.eq.s32.totalorder %s7, 0
    %p41 = por %p39, %p40
    %p42 = scmp.ne.s32.totalorder %s31, %s34
    %p43 = scmp.eq.s32.totalorder %s12, 3
    %p44 = por %p42, %p43
    %p45 = scmp.ne.s32.totalorder %s34, %s35
    %p46 = scmp.eq.s32.totalorder %s12, 0
    %p47 = por %p45, %p46
    %p48 = scmp.ne.s32.totalorder %s34, %s35
    %p49 = scmp.eq.s32.totalorder %s13, 3
    %p50 = por %p48, %p49
    %p52 = scmp.ne.s32.totalorder %s35, %s51
    %p53 = scmp.eq.s32.totalorder %s13, 0
    %p54 = por %p52, %p53
    %s55 = ssub.s32 %s14, %s26
    %p56 = scmp.eq.s32.totalorder %s55, 0
    %s58 = sadd.s32 %s57, 1
    %s59 = scalar_select %p56, %s57, %s58
    %p62 = pneg %p56
    %p63 = scmp.eq.s32.totalorder %s7, 3
    %p64 = por %p62, %p63
    %p65 = scmp.ne.s32.totalorder %s57, %s60
    %p66 = scmp.eq.s32.totalorder %s7, 0
    %p67 = por %p65, %p66
    %p68 = scmp.ne.s32.totalorder %s57, %s60
    %p69 = scmp.eq.s32.totalorder %s12, 3
    %p70 = por %p68, %p69
    %p71 = scmp.ne.s32.totalorder %s60, %s61
    %p72 = scmp.eq.s32.totalorder %s12, 0
    %p73 = por %p71, %p72
    %p74 = scmp.ne.s32.totalorder %s60, %s61
    %p75 = scmp.eq.s32.totalorder %s13, 3
    %p76 = por %p74, %p75
    %p78 = scmp.ne.s32.totalorder %s61, %s77
    %p79 = scmp.eq.s32.totalorder %s13, 0
    %p80 = por %p78, %p79
    %p81 = scmp.le.s32.totalorder 1, %s7
    %p82 = scmp.lt.s32.totalorder %s7, 5
    %p83 = pnand %p81, %p82
    %p84 = pneg %p83
    // Predicated region
    $region9: #{forward.39} parent=5 // pred_check
      _
    $region10: #{forward.39} parent=5 // pred_check_branch
      %86 = sbr.rel (%p83) target = $region12
    $region11: #{forward.39} parent=5 // pred_region
      %s87 = ssub.s32 %s7, 1
    $region12: #{forward.39} parent=5 // pred_fallthru
      _
    %p88 = scmp.lt.s32.totalorder %s7, 4
    // Predicated region
    $region13: #{forward.39} parent=5 // pred_check
      %p89 = pneg %p88
    $region14: #{forward.39} parent=5 // pred_check_branch
      %91 = sbr.rel (%p89) target = $region16
    $region15: #{forward.39} parent=5 // pred_region
      // Predicated region
      $region17: #{forward.39} parent=15 // pred_check
        %p92 = pneg %p41
      $region18: #{forward.39} parent=15 // pred_check_branch
        %94 = sbr.rel (%p92) target = $region20
      $region19: #{forward.39} parent=15 // pred_region
        %p95 = scmp.lt.s32.totalorder %s15, 3
        %s96 = scalar_select %p95, %s15, 3
        %p97 = scmp.lt.s32.totalorder %s14, 0
        %s98 = scalar_select %p97, %s14, 0
        %s99 = sadd.s32 %s98, %s96
        %s100 = smul.addr %s99, 4
        %s101 = scalar_lea.vmem %s0, %s100
      $region20: #{forward.39} parent=15 // pred_fallthru
        _
    $region16: #{forward.39} parent=5 // pred_fallthru
      _
    %p102 = scmp.le.s32.totalorder 1, %s7
    %p103 = scmp.lt.s32.totalorder %s7, 5
    %p104 = pnand %p102, %p103
    %p105 = pneg %p104
    // Predicated region
    $region21: #{forward.39} parent=5 // pred_check
      _
    $region22: #{forward.39} parent=5 // pred_check_branch
      %107 = sbr.rel (%p104) target = $region24
    $region23: #{forward.39} parent=5 // pred_region
      %s108 = ssub.s32 %s7, 1
      %p109 = scmp.lt.s32.totalorder %s17, 3
      %s110 = scalar_select %p109, %s17, 3
      %p111 = scmp.lt.s32.totalorder %s16, 0
      %s112 = scalar_select %p111, %s16, 0
      %s113 = sadd.s32 %s112, %s110
      %s114 = smul.addr %s113, 4
      %s115 = scalar_lea.vmem %s0, %s114
      %p116 = pneg %p47
      %p117 = pneg %p44
      %p118 = pneg %p73
      %p119 = pneg %p70
      %p120 = scmp.lt.s32.totalorder %s16, 0
      %s121 = scalar_select %p120, %s16, 0
      %s122 = smul.addr %s121, 4
      %s123 = scalar_lea.vmem %s1, %s122
      %p124 = scmp.lt.s32.totalorder %s17, 3
      %s125 = scalar_select %p124, %s17, 3
      %p126 = scmp.lt.s32.totalorder %s16, 0
      %s127 = scalar_select %p126, %s16, 0
      %s128 = sadd.s32 %s127, %s125
      %s129 = smul.addr %s128, 4
      %s130 = scalar_lea.vmem %s0, %s129
      %p131 = scmp.lt.s32.totalorder %s16, 0
      %s132 = scalar_select %p131, %s16, 0
      %s133 = smul.addr %s132, 4
      %s134 = scalar_lea.vmem %s1, %s133
      %v135 = vld [vmem:[%s130] sm:$0xf]
      %v136 = vunpack.c.l.bf16 %v135
      %p137 = scmp.eq.s32.totalorder %s17, 0
      // Predicated region
      $region25: #{forward.39} parent=23 // pred_check
        %p138 = pneg %p137
      $region26: #{forward.39} parent=23 // pred_check_branch
        %140 = sbr.rel (%p138) target = $region28
      $region27: #{forward.39} parent=23 // pred_region
        %vm141 = vcmask 130048
        %142 = vst.msk [vmem:[#allocation2] sm:$0xff] %vm141, %v136
      $region28: #{forward.39} parent=23 // pred_fallthru
        _
      %p143 = scmp.gt.s32.totalorder %s17, 0
      // Predicated region
      $region29: #{forward.39} parent=23 // pred_check
        %p144 = pneg %p143
      $region30: #{forward.39} parent=23 // pred_check_branch
        %146 = sbr.rel (%p144) target = $region32
      $region31: #{forward.39} parent=23 // pred_region
        %v147 = vld [vmem:[#allocation2] sm:$0xff]
        %v148 = vadd.f32 %v147, %v136
        %vm149 = vcmask 130048
        %150 = vst.msk [vmem:[#allocation2] sm:$0xff] %vm149, %v148
      $region32: #{forward.39} parent=23 // pred_fallthru
        _
      %p151 = scmp.eq.s32.totalorder %s17, 3
      // Predicated region
      $region33: #{forward.39} parent=23 // pred_check
        %p152 = pneg %p151
      $region34: #{forward.39} parent=23 // pred_check_branch
        %154 = sbr.rel (%p152) target = $region36
      $region35: #{forward.39} parent=23 // pred_region
        %v155 = vld [vmem:[#allocation2] sm:$0xff]
        %v156 = vpack.c.bf16 %v155, %v155
        %vm157 = vcmask 125952
        %158 = vst.msk [vmem:[%s134] sm:$0xf] %vm157, %v156
      $region36: #{forward.39} parent=23 // pred_fallthru
        _
      %p159 = scmp.lt.s32.totalorder %s16, 0
      %s160 = scalar_select %p159, %s16, 0
      %s161 = smul.addr %s160, 4
      %s162 = scalar_lea.vmem %s1, %s161
      // Predicated region
      $region37: #{forward.39} parent=23 // pred_check
        %p163 = pneg %p70
      $region38: #{forward.39} parent=23 // pred_check_branch
        %165 = sbr.rel (%p163) target = $region40
      $region39: #{forward.39} parent=23 // pred_region
        _
      $region40: #{forward.39} parent=23 // pred_fallthru
        _
      // Predicated region
      $region41: #{forward.39} parent=23 // pred_check
        %p166 = pneg %p70
      $region42: #{forward.39} parent=23 // pred_check_branch
        %168 = sbr.rel (%p166) target = $region44
      $region43: #{forward.39} parent=23 // pred_region
        %p169 = scmp.lt.s32.totalorder %s16, 0
        %s170 = scalar_select %p169, %s16, 0
        %s171 = smul.addr %s170, 4
        %s172 = scalar_lea.vmem %s1, %s171
      $region44: #{forward.39} parent=23 // pred_fallthru
        _
    $region24: #{forward.39} parent=5 // pred_fallthru
      _
    %p173 = scmp.le.s32.totalorder 2, %s7
    // Predicated region
    $region45: #{forward.39} parent=5 // pred_check
      %p174 = pneg %p173
    $region46: #{forward.39} parent=5 // pred_check_branch
      %176 = sbr.rel (%p174) target = $region48
    $region47: #{forward.39} parent=5 // pred_region
      %s177 = ssub.s32 %s7, 2
    $region48: #{forward.39} parent=5 // pred_fallthru
      _
  $region6: #{forward.39} parent=0 // loop_footer
    %s11 = sadd.s32 1, %s7
  $region7: #{forward.39} parent=0 // loop_footer_branch
    %6 = sbr.rel target = $region3
  $region8: #{forward.39} parent=0 // loop_exit
    _

// kernel: forward.44
$region0: #{forward.44}
  #allocation0 [shape = 'u32[]', space=smem, size = 0x4, offset = 0x4, fixed_abs, tag = 'smem constant byte address 0x4 - core index']
  #allocation1 [shape = 'u32[144,128]{1,0:T(1,128)}', space=vmem, size = 0x12000, scoped, tag = 'internal scratch']
  #allocation2 [shape = 'f32[8,16]{1,0:T(8,128)}', space=vmem, size = 0x1000, scoped, tag = 'scratch operand']
  %s0 = inlined_call_operand.vmem [shape: bf16[8,32], index: 0, kind: input, shape index: {}]
  %s1 = inlined_call_operand.vmem [shape: bf16[32,16], index: 1, kind: input, shape index: {}]
  %s2 = inlined_call_operand.vmem [shape: f32[1,32], index: 2, kind: input, shape index: {}]
  %s3 = inlined_call_operand.vmem [shape: f32[1,32], index: 3, kind: input, shape index: {}]
  %s4 = inlined_call_operand.vmem [shape: f32[1,16], index: 4, kind: input, shape index: {}]
  %s5 = inlined_call_operand.vmem [shape: f32[1,16], index: 5, kind: input, shape index: {}]
  %s6 = inlined_call_operand.vmem [shape: bf16[8,16], index: 6, kind: output, shape index: {}]
  %s7 = sld [smem:[#allocation0]]
  $region42: #{forward.44} parent=0
    _
  %s9 = ssub.s32 1, %s7
  %s10 = scalar_select 0, %s9, %s7
  // Predicated region
  $region2: #{forward.44} parent=0 // pred_check
    _
  $region3: #{forward.44} parent=0 // pred_check_branch
    %12 = sbr.rel (0) target = $region5
  $region4: #{forward.44} parent=0 // pred_region
    _
  $region5: #{forward.44} parent=0 // pred_fallthru
    _
  // Predicated region
  $region6: #{forward.44} parent=0 // pred_check
    _
  $region7: #{forward.44} parent=0 // pred_check_branch
    %14 = sbr.rel (0) target = $region9
  $region8: #{forward.44} parent=0 // pred_region
    _
  $region9: #{forward.44} parent=0 // pred_fallthru
    _
  // Predicated region
  $region10: #{forward.44} parent=0 // pred_check
    _
  $region11: #{forward.44} parent=0 // pred_check_branch
    %16 = sbr.rel (0) target = $region13
  $region12: #{forward.44} parent=0 // pred_region
    _
  $region13: #{forward.44} parent=0 // pred_fallthru
    _
  // Predicated region
  $region14: #{forward.44} parent=0 // pred_check
    _
  $region15: #{forward.44} parent=0 // pred_check_branch
    %18 = sbr.rel (0) target = $region17
  $region16: #{forward.44} parent=0 // pred_region
    _
  $region17: #{forward.44} parent=0 // pred_fallthru
    _
  // Predicated region
  $region18: #{forward.44} parent=0 // pred_check
    _
  $region19: #{forward.44} parent=0 // pred_check_branch
    %20 = sbr.rel (0) target = $region21
  $region20: #{forward.44} parent=0 // pred_region
    _
  $region21: #{forward.44} parent=0 // pred_fallthru
    _
  // Predicated region
  $region22: #{forward.44} parent=0 // pred_check
    _
  $region23: #{forward.44} parent=0 // pred_check_branch
    %22 = sbr.rel (0) target = $region25
  $region24: #{forward.44} parent=0 // pred_region
    _
  $region25: #{forward.44} parent=0 // pred_fallthru
    _
  %p24 = scmp.eq.s32.totalorder 0, 0
  // Predicated region
  $region26: #{forward.44} parent=0 // pred_check
    %p25 = pneg %p24
  $region27: #{forward.44} parent=0 // pred_check_branch
    %27 = sbr.rel (%p25) target = $region29
  $region28: #{forward.44} parent=0 // pred_region
    %vm28 = vcmask 130048
    %29 = vst.msk [vmem:[#allocation2] sm:$0xff] %vm28, 0.0
  $region29: #{forward.44} parent=0 // pred_fallthru
    _
  %v30 = vld [vmem:[%s0] sm:$0xf]
  %v31 = vunpack.c.l.bf16 %v30
  %v32 = vld [vmem:[%s2] sm:$0x1]
  %v34 = vlaneseq
  %v35 = vshrl.u32 %v34, 7
  %v36 = vsub.s32 0, %v35
  %v37 = vrot.slane %v32, %v36
  %v39 = vmul.f32 %v31, %v37
  %v40 = vld [vmem:[%s3] sm:$0x1]
  %v42 = vlaneseq
  %v43 = vshrl.u32 %v42, 7
  %v44 = vsub.s32 0, %v43
  %v45 = vrot.slane %v40, %v44
  %v47 = vadd.f32 %v39, %v45
  %v48 = vmax.f32 %v47, 0.0
  %v49 = vpack.c.bf16 %v48, %v48
  %v50 = vld [vmem:[#allocation2] sm:$0xff]
  %v51 = vld [vmem:[%s1] sm:$0xf]
  %v52 = vld [vmem:[%s1 + $0x4] sm:$0xf]
  %v53 = vld [vmem:[%s1 + $0x8] sm:$0xf]
  %v54 = vld [vmem:[%s1 + $0xc] sm:$0xf]
  %v59 = vunpack.c.l.b16 %v51
  %v60 = vunpack.c.l.b16 %v52
  %v61 = vunpack.c.l.b16 %v53
  %v62 = vunpack.c.l.b16 %v54
  %v63 = vpack.c.b16 %v60, %v59
  %v64 = vpack.c.b16 %v62, %v61
  %vm67 = vcmask 261120
  %v69 = vsel %vm67, %v49, 0
  %71 = vmatprep.subr.bf16.mxu0 0
  %72 = vmatpush1.bf16.msra.mxu0 %v63
  %73 = vmatprep.subr.bf16.mxu0 0
  %74 = vmatpush1.bf16.msra.mxu0 %v64
  %75 = vmatprep.subr.bf16.mxu0 0
  %76 = vmatpush1.bf16.msra.mxu0 0
  %77 = vmatprep.subr.bf16.mxu0 0
  %78 = vmatpush1.bf16.msra.mxu0 0
  %79 = vmatprep.subr.bf16.mxu0 0
  %80 = vmatpush1.bf16.msra.mxu0 0
  %81 = vmatprep.subr.bf16.mxu0 0
  %82 = vmatpush1.bf16.msra.mxu0 0
  %83 = vmatprep.subr.bf16.mxu0 0
  %84 = vmatpush1.bf16.msra.mxu0 0
  %85 = vmatprep.subr.bf16.mxu0 0
  %86 = vmatpush1.bf16.msra.mxu0 0
  %87 = vmatprep.subr.bf16.mxu0 0
  %88 = vmatpush1.bf16.msra.mxu0 0
  %89 = vmatprep.subr.bf16.mxu0 0
  %90 = vmatpush1.bf16.msra.mxu0 0
  %91 = vmatprep.subr.bf16.mxu0 0
  %92 = vmatpush1.bf16.msra.mxu0 0
  %93 = vmatprep.subr.bf16.mxu0 0
  %94 = vmatpush1.bf16.msra.mxu0 0
  %95 = vmatprep.subr.bf16.mxu0 0
  %96 = vmatpush1.bf16.msra.mxu0 0
  %97 = vmatprep.subr.bf16.mxu0 0
  %98 = vmatpush1.bf16.msra.mxu0 0
  %99 = vmatprep.subr.bf16.mxu0 0
  %100 = vmatpush1.bf16.msra.mxu0 0
  %101 = vmatprep.subr.bf16.mxu0 0
  %102 = vmatpush1.bf16.msra.mxu0 0
  %103 = vmatprep.mubr.bf16.mxu0 0
  %104 = vmatmul.mubr.bf16.gmra.mrb[0].mxu0 %v69
  %v105 = vpop.f32.mrb[0].mxu0
  %v106 = vadd.f32 0.0, %v105
  %v107 = vpop.f32.mrb[0].mxu0
  %v108 = vpop.f32.mrb[0].mxu0
  %v109 = vpop.f32.mrb[0].mxu0
  %110 = vdwg.mxu0
  %v111 = vadd.f32 %v50, %v106
  %vm112 = vcmask 130048
  %113 = vst.msk [vmem:[#allocation2] sm:$0xff] %vm112, %v111
  // Predicated region
  $region30: #{forward.44} parent=0 // pred_check
    %p114 = pneg %p24
  $region31: #{forward.44} parent=0 // pred_check_branch
    %116 = sbr.rel (%p114) target = $region33
  $region32: #{forward.44} parent=0 // pred_region
    %v117 = vld [vmem:[#allocation2] sm:$0xff]
    %v118 = vld [vmem:[%s4] sm:$0x1]
    %v120 = vlaneseq
    %v121 = vshrl.u32 %v120, 7
    %v122 = vsub.s32 0, %v121
    %v123 = vrot.slane %v118, %v122
    %v125 = vmul.f32 %v117, %v123
    %v126 = vld [vmem:[%s5] sm:$0x1]
    %v128 = vlaneseq
    %v129 = vshrl.u32 %v128, 7
    %v130 = vsub.s32 0, %v129
    %v131 = vrot.slane %v126, %v130
    %v133 = vadd.f32 %v125, %v131
    %v134 = vpack.c.bf16 %v133, %v133
    %vm135 = vcmask 125952
    %136 = vst.msk [vmem:[%s6] sm:$0xf] %vm135, %v134
  $region33: #{forward.44} parent=0 // pred_fallthru
    _
  // Predicated region
  $region34: #{forward.44} parent=0 // pred_check
    _
  $region35: #{forward.44} parent=0 // pred_check_branch
    %138 = sbr.rel (0) target = $region37
  $region36: #{forward.44} parent=0 // pred_region
    _
  $region37: #{forward.44} parent=0 // pred_fallthru
    _
  // Predicated region
  $region38: #{forward.44} parent=0 // pred_check
    _
  $region39: #{forward.44} parent=0 // pred_check_branch
    %140 = sbr.rel (0) target = $region41
  $region40: #{forward.44} parent=0 // pred_region
    _
  $region41: #{forward.44} parent=0 // pred_fallthru
    _

// kernel: forward.41
$region0: #{forward.41}
  #allocation0 [shape = 'u32[]', space=smem, size = 0x4, offset = 0x4, fixed_abs, tag = 'smem constant byte address 0x4 - core index']
  #allocation1 [shape = 'u32[144,128]{1,0:T(1,128)}', space=vmem, size = 0x12000, scoped, tag = 'internal scratch']
  #allocation2 [shape = 'f32[8,8]{1,0:T(8,128)}', space=vmem, size = 0x1000, scoped, tag = 'scratch operand']
  %s0 = inlined_call_operand.vmem [shape: bf16[8,288], index: 0, kind: input, shape index: {}]
  %s1 = inlined_call_operand.vmem [shape: bf16[288,8], index: 1, kind: input, shape index: {}]
  %s2 = inlined_call_operand.vmem [shape: f32[1,8], index: 2, kind: input, shape index: {}]
  %s3 = inlined_call_operand.vmem [shape: f32[1,8], index: 3, kind: input, shape index: {}]
  %s4 = inlined_call_operand.vmem [shape: bf16[8,8], index: 4, kind: output, shape index: {}]
  %s5 = sld [smem:[#allocation0]]
  $region34: #{forward.41} parent=0
    _
  %s7 = ssub.s32 1, %s5
  %s8 = scalar_select 0, %s7, %s5
  // Predicated region
  $region2: #{forward.41} parent=0 // pred_check
    _
  $region3: #{forward.41} parent=0 // pred_check_branch
    %10 = sbr.rel (0) target = $region5
  $region4: #{forward.41} parent=0 // pred_region
    _
  $region5: #{forward.41} parent=0 // pred_fallthru
    _
  // Predicated region
  $region6: #{forward.41} parent=0 // pred_check
    _
  $region7: #{forward.41} parent=0 // pred_check_branch
    %12 = sbr.rel (0) target = $region9
  $region8: #{forward.41} parent=0 // pred_region
    _
  $region9: #{forward.41} parent=0 // pred_fallthru
    _
  // Predicated region
  $region10: #{forward.41} parent=0 // pred_check
    _
  $region11: #{forward.41} parent=0 // pred_check_branch
    %14 = sbr.rel (0) target = $region13
  $region12: #{forward.41} parent=0 // pred_region
    _
  $region13: #{forward.41} parent=0 // pred_fallthru
    _
  // Predicated region
  $region14: #{forward.41} parent=0 // pred_check
    _
  $region15: #{forward.41} parent=0 // pred_check_branch
    %16 = sbr.rel (0) target = $region17
  $region16: #{forward.41} parent=0 // pred_region
    _
  $region17: #{forward.41} parent=0 // pred_fallthru
    _
  %p18 = scmp.eq.s32.totalorder 0, 0
  // Predicated region
  $region18: #{forward.41} parent=0 // pred_check
    %p19 = pneg %p18
  $region19: #{forward.41} parent=0 // pred_check_branch
    %21 = sbr.rel (%p19) target = $region21
  $region20: #{forward.41} parent=0 // pred_region
    %vm22 = vcmask 64512
    %23 = vst.msk [vmem:[#allocation2] sm:$0xff] %vm22, 0.0
  $region21: #{forward.41} parent=0 // pred_fallthru
    _
  %v24 = vld [vmem:[%s0] sm:$0xff]
  %v25 = vld [vmem:[%s0 + $0x8] sm:$0xf]
  %v26 = vld [vmem:[#allocation2] sm:$0xff]
  %v27 = vld [vmem:[%s1] sm:$0xf]
  %v28 = vld [vmem:[%s1 + $0x4] sm:$0xf]
  %v29 = vld [vmem:[%s1 + $0x8] sm:$0xf]
  %v30 = vld [vmem:[%s1 + $0xc] sm:$0xf]
  %v31 = vld [vmem:[%s1 + $0x10] sm:$0xf]
  %v32 = vld [vmem:[%s1 + $0x14] sm:$0xf]
  %v33 = vld [vmem:[%s1 + $0x18] sm:$0xf]
  %v34 = vld [vmem:[%s1 + $0x1c] sm:$0xf]
  %v35 = vld [vmem:[%s1 + $0x20] sm:$0xf]
  %v36 = vld [vmem:[%s1 + $0x24] sm:$0xf]
  %v37 = vld [vmem:[%s1 + $0x28] sm:$0xf]
  %v38 = vld [vmem:[%s1 + $0x2c] sm:$0xf]
  %v39 = vld [vmem:[%s1 + $0x30] sm:$0xf]
  %v40 = vld [vmem:[%s1 + $0x34] sm:$0xf]
  %v41 = vld [vmem:[%s1 + $0x38] sm:$0xf]
  %v42 = vld [vmem:[%s1 + $0x3c] sm:$0xf]
  %v43 = vld [vmem:[%s1 + $0x40] sm:$0xf]
  %v44 = vld [vmem:[%s1 + $0x44] sm:$0xf]
  %v45 = vld [vmem:[%s1 + $0x48] sm:$0xf]
  %v46 = vld [vmem:[%s1 + $0x4c] sm:$0xf]
  %v47 = vld [vmem:[%s1 + $0x50] sm:$0xf]
  %v48 = vld [vmem:[%s1 + $0x54] sm:$0xf]
  %v49 = vld [vmem:[%s1 + $0x58] sm:$0xf]
  %v50 = vld [vmem:[%s1 + $0x5c] sm:$0xf]
  %v51 = vld [vmem:[%s1 + $0x60] sm:$0xf]
  %v52 = vld [vmem:[%s1 + $0x64] sm:$0xf]
  %v53 = vld [vmem:[%s1 + $0x68] sm:$0xf]
  %v54 = vld [vmem:[%s1 + $0x6c] sm:$0xf]
  %v55 = vld [vmem:[%s1 + $0x70] sm:$0xf]
  %v56 = vld [vmem:[%s1 + $0x74] sm:$0xf]
  %v57 = vld [vmem:[%s1 + $0x78] sm:$0xf]
  %v58 = vld [vmem:[%s1 + $0x7c] sm:$0xf]
  %v59 = vld [vmem:[%s1 + $0x80] sm:$0xf]
  %v60 = vld [vmem:[%s1 + $0x84] sm:$0xf]
  %v61 = vld [vmem:[%s1 + $0x88] sm:$0xf]
  %v62 = vld [vmem:[%s1 + $0x8c] sm:$0xf]
  %v65 = vunpack.c.l.b16 %v24
  %v66 = vunpack.c.h.b16 %v24
  %v67 = vunpack.c.l.b16 %v25
  %v68 = vpack.c.b16 %v65, %v65
  %v69 = vpack.c.b16 %v66, %v66
  %v70 = vpack.c.b16 %v67, %v67
  %v109 = vunpack.c.l.b16 %v27
  %v110 = vunpack.c.l.b16 %v28
  %v111 = vunpack.c.l.b16 %v29
  %v112 = vunpack.c.l.b16 %v30
  %v113 = vunpack.c.l.b16 %v31
  %v114 = vunpack.c.l.b16 %v32
  %v115 = vunpack.c.l.b16 %v33
  %v116 = vunpack.c.l.b16 %v34
  %v117 = vunpack.c.l.b16 %v35
  %v118 = vunpack.c.l.b16 %v36
  %v119 = vunpack.c.l.b16 %v37
  %v120 = vunpack.c.l.b16 %v38
  %v121 = vunpack.c.l.b16 %v39
  %v122 = vunpack.c.l.b16 %v40
  %v123 = vunpack.c.l.b16 %v41
  %v124 = vunpack.c.l.b16 %v42
  %v125 = vunpack.c.l.b16 %v43
  %v126 = vunpack.c.l.b16 %v44
  %v127 = vunpack.c.l.b16 %v45
  %v128 = vunpack.c.l.b16 %v46
  %v129 = vunpack.c.l.b16 %v47
  %v130 = vunpack.c.l.b16 %v48
  %v131 = vunpack.c.l.b16 %v49
  %v132 = vunpack.c.l.b16 %v50
  %v133 = vunpack.c.l.b16 %v51
  %v134 = vunpack.c.l.b16 %v52
  %v135 = vunpack.c.l.b16 %v53
  %v136 = vunpack.c.l.b16 %v54
  %v137 = vunpack.c.l.b16 %v55
  %v138 = vunpack.c.l.b16 %v56
  %v139 = vunpack.c.l.b16 %v57
  %v140 = vunpack.c.l.b16 %v58
  %v141 = vunpack.c.l.b16 %v59
  %v142 = vunpack.c.l.b16 %v60
  %v143 = vunpack.c.l.b16 %v61
  %v144 = vunpack.c.l.b16 %v62
  %v145 = vpack.c.b16 %v110, %v109
  %v146 = vpack.c.b16 %v112, %v111
  %v147 = vpack.c.b16 %v114, %v113
  %v148 = vpack.c.b16 %v116, %v115
  %v149 = vpack.c.b16 %v118, %v117
  %v150 = vpack.c.b16 %v120, %v119
  %v151 = vpack.c.b16 %v122, %v121
  %v152 = vpack.c.b16 %v124, %v123
  %v153 = vpack.c.b16 %v126, %v125
  %v154 = vpack.c.b16 %v128, %v127
  %v155 = vpack.c.b16 %v130, %v129
  %v156 = vpack.c.b16 %v132, %v131
  %v157 = vpack.c.b16 %v134, %v133
  %v158 = vpack.c.b16 %v136, %v135
  %v159 = vpack.c.b16 %v138, %v137
  %v160 = vpack.c.b16 %v140, %v139
  %v161 = vpack.c.b16 %v142, %v141
  %v162 = vpack.c.b16 %v144, %v143
  %vm181 = vcmask 261120
  %v183 = vsel %vm181, %v70, 0
  %185 = vmatprep.subr.bf16.mxu0 0
  %186 = vmatpush1.bf16.msra.mxu0 %v145
  %187 = vmatprep.subr.bf16.mxu0 0
  %188 = vmatpush1.bf16.msra.mxu0 %v146
  %189 = vmatprep.subr.bf16.mxu0 0
  %190 = vmatpush1.bf16.msra.mxu0 %v147
  %191 = vmatprep.subr.bf16.mxu0 0
  %192 = vmatpush1.bf16.msra.mxu0 %v148
  %193 = vmatprep.subr.bf16.mxu0 0
  %194 = vmatpush1.bf16.msra.mxu0 %v149
  %195 = vmatprep.subr.bf16.mxu0 0
  %196 = vmatpush1.bf16.msra.mxu0 %v150
  %197 = vmatprep.subr.bf16.mxu0 0
  %198 = vmatpush1.bf16.msra.mxu0 %v151
  %199 = vmatprep.subr.bf16.mxu0 0
  %200 = vmatpush1.bf16.msra.mxu0 %v152
  %201 = vmatprep.subr.bf16.mxu0 0
  %202 = vmatpush1.bf16.msra.mxu0 %v153
  %203 = vmatprep.subr.bf16.mxu0 0
  %204 = vmatpush1.bf16.msra.mxu0 %v154
  %205 = vmatprep.subr.bf16.mxu0 0
  %206 = vmatpush1.bf16.msra.mxu0 %v155
  %207 = vmatprep.subr.bf16.mxu0 0
  %208 = vmatpush1.bf16.msra.mxu0 %v156
  %209 = vmatprep.subr.bf16.mxu0 0
  %210 = vmatpush1.bf16.msra.mxu0 %v157
  %211 = vmatprep.subr.bf16.mxu0 0
  %212 = vmatpush1.bf16.msra.mxu0 %v158
  %213 = vmatprep.subr.bf16.mxu0 0
  %214 = vmatpush1.bf16.msra.mxu0 %v159
  %215 = vmatprep.subr.bf16.mxu0 0
  %216 = vmatpush1.bf16.msra.mxu0 %v160
  %217 = vmatprep.mubr.bf16.mxu0 %v69
  %218 = vmatmul.mubr.bf16.gmra.mrb[0].mxu0 %v68
  %v219 = vpop.f32.mrb[0].mxu0
  %v220 = vadd.f32 0.0, %v219
  %v221 = vpop.f32.mrb[0].mxu0
  %v222 = vpop.f32.mrb[0].mxu0
  %v223 = vpop.f32.mrb[0].mxu0
  %224 = vdwg.mxu0
  %225 = vmatprep.subr.bf16.mxu0 0
  %226 = vmatpush1.bf16.msra.mxu0 %v161
  %227 = vmatprep.subr.bf16.mxu0 0
  %228 = vmatpush1.bf16.msra.mxu0 %v162
  %229 = vmatprep.subr.bf16.mxu0 0
  %230 = vmatpush1.bf16.msra.mxu0 0
  %231 = vmatprep.subr.bf16.mxu0 0
  %232 = vmatpush1.bf16.msra.mxu0 0
  %233 = vmatprep.subr.bf16.mxu0 0
  %234 = vmatpush1.bf16.msra.mxu0 0
  %235 = vmatprep.subr.bf16.mxu0 0
  %236 = vmatpush1.bf16.msra.mxu0 0
  %237 = vmatprep.subr.bf16.mxu0 0
  %238 = vmatpush1.bf16.msra.mxu0 0
  %239 = vmatprep.subr.bf16.mxu0 0
  %240 = vmatpush1.bf16.msra.mxu0 0
  %241 = vmatprep.subr.bf16.mxu0 0
  %242 = vmatpush1.bf16.msra.mxu0 0
  %243 = vmatprep.subr.bf16.mxu0 0
  %244 = vmatpush1.bf16.msra.mxu0 0
  %245 = vmatprep.subr.bf16.mxu0 0
  %246 = vmatpush1.bf16.msra.mxu0 0
  %247 = vmatprep.subr.bf16.mxu0 0
  %248 = vmatpush1.bf16.msra.mxu0 0
  %249 = vmatprep.subr.bf16.mxu0 0
  %250 = vmatpush1.bf16.msra.mxu0 0
  %251 = vmatprep.subr.bf16.mxu0 0
  %252 = vmatpush1.bf16.msra.mxu0 0
  %253 = vmatprep.subr.bf16.mxu0 0
  %254 = vmatpush1.bf16.msra.mxu0 0
  %255 = vmatprep.subr.bf16.mxu0 0
  %256 = vmatpush1.bf16.msra.mxu0 0
  %257 = vmatprep.mubr.bf16.mxu0 0
  %258 = vmatmul.mubr.bf16.gmra.mrb[0].mxu0 %v183
  %v259 = vpop.f32.mrb[0].mxu0
  %v260 = vadd.f32 %v220, %v259
  %v261 = vpop.f32.mrb[0].mxu0
  %v262 = vpop.f32.mrb[0].mxu0
  %v263 = vpop.f32.mrb[0].mxu0
  %264 = vdwg.mxu0
  %v265 = vadd.f32 %v26, %v260
  %vm266 = vcmask 64512
  %267 = vst.msk [vmem:[#allocation2] sm:$0xff] %vm266, %v265
  // Predicated region
  $region22: #{forward.41} parent=0 // pred_check
    %p268 = pneg %p18
  $region23: #{forward.41} parent=0 // pred_check_branch
    %270 = sbr.rel (%p268) target = $region25
  $region24: #{forward.41} parent=0 // pred_region
    %v271 = vld [vmem:[#allocation2] sm:$0xff]
    %v272 = vld [vmem:[%s2] sm:$0x1]
    %v274 = vlaneseq
    %v275 = vshrl.u32 %v274, 7
    %v276 = vsub.s32 0, %v275
    %v277 = vrot.slane %v272, %v276
    %v279 = vmul.f32 %v271, %v277
    %v280 = vld [vmem:[%s3] sm:$0x1]
    %v282 = vlaneseq
    %v283 = vshrl.u32 %v282, 7
    %v284 = vsub.s32 0, %v283
    %v285 = vrot.slane %v280, %v284
    %v287 = vadd.f32 %v279, %v285
    %v288 = vpack.c.bf16 %v287, %v287
    %vm289 = vcmask 60416
    %290 = vst.msk [vmem:[%s4] sm:$0xf] %vm289, %v288
  $region25: #{forward.41} parent=0 // pred_fallthru
    _
  // Predicated region
  $region26: #{forward.41} parent=0 // pred_check
    _
  $region27: #{forward.41} parent=0 // pred_check_branch
    %292 = sbr.rel (0) target = $region29
  $region28: #{forward.41} parent=0 // pred_region
    _
  $region29: #{forward.41} parent=0 // pred_fallthru
    _
  // Predicated region
  $region30: #{forward.41} parent=0 // pred_check
    _
  $region31: #{forward.41} parent=0 // pred_check_branch
    %294 = sbr.rel (0) target = $region33
  $region32: #{forward.41} parent=0 // pred_region
    _
  $region33: #{forward.41} parent=0 // pred_fallthru
    _

// kernel: forward.42
$region0: #{forward.42}
  #allocation0 [shape = 'u32[]', space=smem, size = 0x4, offset = 0x4, fixed_abs, tag = 'smem constant byte address 0x4 - core index']
  #allocation1 [shape = 'u32[144,128]{1,0:T(1,128)}', space=vmem, size = 0x12000, scoped, tag = 'internal scratch']
  #allocation2 [shape = 'f32[8,32]{1,0:T(8,128)}', space=vmem, size = 0x1000, scoped, tag = 'scratch operand']
  %s0 = inlined_call_operand.vmem [shape: bf16[8,24], index: 0, kind: input, shape index: {}]
  %s1 = inlined_call_operand.vmem [shape: bf16[24,32], index: 1, kind: input, shape index: {}]
  %s2 = inlined_call_operand.vmem [shape: f32[1,24], index: 2, kind: input, shape index: {}]
  %s3 = inlined_call_operand.vmem [shape: f32[1,24], index: 3, kind: input, shape index: {}]
  %s4 = inlined_call_operand.vmem [shape: f32[1,32], index: 4, kind: input, shape index: {}]
  %s5 = inlined_call_operand.vmem [shape: f32[1,32], index: 5, kind: input, shape index: {}]
  %s6 = inlined_call_operand.vmem [shape: bf16[8,32], index: 6, kind: output, shape index: {}]
  %s7 = sld [smem:[#allocation0]]
  $region42: #{forward.42} parent=0
    _
  %s9 = ssub.s32 1, %s7
  %s10 = scalar_select 0, %s9, %s7
  // Predicated region
  $region2: #{forward.42} parent=0 // pred_check
    _
  $region3: #{forward.42} parent=0 // pred_check_branch
    %12 = sbr.rel (0) target = $region5
  $region4: #{forward.42} parent=0 // pred_region
    _
  $region5: #{forward.42} parent=0 // pred_fallthru
    _
  // Predicated region
  $region6: #{forward.42} parent=0 // pred_check
    _
  $region7: #{forward.42} parent=0 // pred_check_branch
    %14 = sbr.rel (0) target = $region9
  $region8: #{forward.42} parent=0 // pred_region
    _
  $region9: #{forward.42} parent=0 // pred_fallthru
    _
  // Predicated region
  $region10: #{forward.42} parent=0 // pred_check
    _
  $region11: #{forward.42} parent=0 // pred_check_branch
    %16 = sbr.rel (0) target = $region13
  $region12: #{forward.42} parent=0 // pred_region
    _
  $region13: #{forward.42} parent=0 // pred_fallthru
    _
  // Predicated region
  $region14: #{forward.42} parent=0 // pred_check
    _
  $region15: #{forward.42} parent=0 // pred_check_branch
    %18 = sbr.rel (0) target = $region17
  $region16: #{forward.42} parent=0 // pred_region
    _
  $region17: #{forward.42} parent=0 // pred_fallthru
    _
  // Predicated region
  $region18: #{forward.42} parent=0 // pred_check
    _
  $region19: #{forward.42} parent=0 // pred_check_branch
    %20 = sbr.rel (0) target = $region21
  $region20: #{forward.42} parent=0 // pred_region
    _
  $region21: #{forward.42} parent=0 // pred_fallthru
    _
  // Predicated region
  $region22: #{forward.42} parent=0 // pred_check
    _
  $region23: #{forward.42} parent=0 // pred_check_branch
    %22 = sbr.rel (0) target = $region25
  $region24: #{forward.42} parent=0 // pred_region
    _
  $region25: #{forward.42} parent=0 // pred_fallthru
    _
  %p24 = scmp.eq.s32.totalorder 0, 0
  // Predicated region
  $region26: #{forward.42} parent=0 // pred_check
    %p25 = pneg %p24
  $region27: #{forward.42} parent=0 // pred_check_branch
    %27 = sbr.rel (%p25) target = $region29
  $region28: #{forward.42} parent=0 // pred_region
    %vm28 = vcmask 261120
    %29 = vst.msk [vmem:[#allocation2] sm:$0xff] %vm28, 0.0
  $region29: #{forward.42} parent=0 // pred_fallthru
    _
  %v30 = vld [vmem:[%s0] sm:$0xf]
  %v31 = vunpack.c.l.bf16 %v30
  %v32 = vld [vmem:[%s2] sm:$0x1]
  %v34 = vlaneseq
  %v35 = vshrl.u32 %v34, 7
  %v36 = vsub.s32 0, %v35
  %v37 = vrot.slane %v32, %v36
  %v39 = vmul.f32 %v31, %v37
  %v40 = vld [vmem:[%s3] sm:$0x1]
  %v42 = vlaneseq
  %v43 = vshrl.u32 %v42, 7
  %v44 = vsub.s32 0, %v43
  %v45 = vrot.slane %v40, %v44
  %v47 = vadd.f32 %v39, %v45
  %v48 = vmax.f32 %v47, 0.0
  %v49 = vpack.c.bf16 %v48, %v48
  %v50 = vld [vmem:[#allocation2] sm:$0xff]
  %v51 = vld [vmem:[%s1] sm:$0xf]
  %v52 = vld [vmem:[%s1 + $0x4] sm:$0xf]
  %v53 = vld [vmem:[%s1 + $0x8] sm:$0xf]
  %v57 = vunpack.c.l.b16 %v51
  %v58 = vunpack.c.l.b16 %v52
  %v59 = vunpack.c.l.b16 %v53
  %v60 = vpack.c.b16 %v58, %v57
  %v61 = vpack.c.b16 %v59, %v59
  %vm63 = vcmask 195584
  %v65 = vsel %vm63, %v49, 0
  %vm67 = vcmask 1043456
  %v69 = vsel %vm67, %v61, 0
  %71 = vmatprep.subr.bf16.mxu0 0
  %72 = vmatpush1.bf16.msra.mxu0 %v60
  %73 = vmatprep.subr.bf16.mxu0 0
  %74 = vmatpush1.bf16.msra.mxu0 %v69
  %75 = vmatprep.subr.bf16.mxu0 0
  %76 = vmatpush1.bf16.msra.mxu0 0
  %77 = vmatprep.subr.bf16.mxu0 0
  %78 = vmatpush1.bf16.msra.mxu0 0
  %79 = vmatprep.subr.bf16.mxu0 0
  %80 = vmatpush1.bf16.msra.mxu0 0
  %81 = vmatprep.subr.bf16.mxu0 0
  %82 = vmatpush1.bf16.msra.mxu0 0
  %83 = vmatprep.subr.bf16.mxu0 0
  %84 = vmatpush1.bf16.msra.mxu0 0
  %85 = vmatprep.subr.bf16.mxu0 0
  %86 = vmatpush1.bf16.msra.mxu0 0
  %87 = vmatprep.subr.bf16.mxu0 0
  %88 = vmatpush1.bf16.msra.mxu0 0
  %89 = vmatprep.subr.bf16.mxu0 0
  %90 = vmatpush1.bf16.msra.mxu0 0
  %91 = vmatprep.subr.bf16.mxu0 0
  %92 = vmatpush1.bf16.msra.mxu0 0
  %93 = vmatprep.subr.bf16.mxu0 0
  %94 = vmatpush1.bf16.msra.mxu0 0
  %95 = vmatprep.subr.bf16.mxu0 0
  %96 = vmatpush1.bf16.msra.mxu0 0
  %97 = vmatprep.subr.bf16.mxu0 0
  %98 = vmatpush1.bf16.msra.mxu0 0
  %99 = vmatprep.subr.bf16.mxu0 0
  %100 = vmatpush1.bf16.msra.mxu0 0
  %101 = vmatprep.subr.bf16.mxu0 0
  %102 = vmatpush1.bf16.msra.mxu0 0
  %103 = vmatprep.mubr.bf16.mxu0 0
  %104 = vmatmul.mubr.bf16.gmra.mrb[0].mxu0 %v65
  %v105 = vpop.f32.mrb[0].mxu0
  %v106 = vadd.f32 0.0, %v105
  %v107 = vpop.f32.mrb[0].mxu0
  %v108 = vpop.f32.mrb[0].mxu0
  %v109 = vpop.f32.mrb[0].mxu0
  %110 = vdwg.mxu0
  %v111 = vadd.f32 %v50, %v106
  %vm112 = vcmask 261120
  %113 = vst.msk [vmem:[#allocation2] sm:$0xff] %vm112, %v111
  // Predicated region
  $region30: #{forward.42} parent=0 // pred_check
    %p114 = pneg %p24
  $region31: #{forward.42} parent=0 // pred_check_branch
    %116 = sbr.rel (%p114) target = $region33
  $region32: #{forward.42} parent=0 // pred_region
    %v117 = vld [vmem:[#allocation2] sm:$0xff]
    %v118 = vld [vmem:[%s4] sm:$0x1]
    %v120 = vlaneseq
    %v121 = vshrl.u32 %v120, 7
    %v122 = vsub.s32 0, %v121
    %v123 = vrot.slane %v118, %v122
    %v125 = vmul.f32 %v117, %v123
    %v126 = vld [vmem:[%s5] sm:$0x1]
    %v128 = vlaneseq
    %v129 = vshrl.u32 %v128, 7
    %v130 = vsub.s32 0, %v129
    %v131 = vrot.slane %v126, %v130
    %v133 = vadd.f32 %v125, %v131
    %v134 = vmax.f32 %v133, 0.0
    %v135 = vpack.c.bf16 %v134, %v134
    %vm136 = vcmask 257024
    %137 = vst.msk [vmem:[%s6] sm:$0xf] %vm136, %v135
  $region33: #{forward.42} parent=0 // pred_fallthru
    _
  // Predicated region
  $region34: #{forward.42} parent=0 // pred_check
    _
  $region35: #{forward.42} parent=0 // pred_check_branch
    %139 = sbr.rel (0) target = $region37
  $region36: #{forward.42} parent=0 // pred_region
    _
  $region37: #{forward.42} parent=0 // pred_fallthru
    _
  // Predicated region
  $region38: #{forward.42} parent=0 // pred_check
    _
  $region39: #{forward.42} parent=0 // pred_check_branch
    %141 = sbr.rel (0) target = $region41
  $region40: #{forward.42} parent=0 // pred_region
    _
  $region41: #{forward.42} parent=0 // pred_fallthru
    _

// kernel: forward.45
$region0: #{forward.45}
  #allocation0 [shape = 'u32[]', space=smem, size = 0x4, offset = 0x4, fixed_abs, tag = 'smem constant byte address 0x4 - core index']
  #allocation1 [shape = 'u32[144,128]{1,0:T(1,128)}', space=vmem, size = 0x12000, scoped, tag = 'internal scratch']
  #allocation2 [shape = 'f32[2,16]{1,0:T(2,128)}', space=vmem, size = 0x400, scoped, tag = 'scratch operand']
  %s0 = inlined_call_operand.vmem [shape: bf16[4,2,16], index: 0, kind: input, shape index: {}]
  %s1 = inlined_call_operand.vmem [shape: bf16[2,16], index: 1, kind: output, shape index: {}]
  %s2 = sld [smem:[#allocation0]]
  $region49: #{forward.45} parent=0
    _
  %s4 = ssub.s32 1, %s2
  %s5 = scalar_select 0, %s4, %s2
  loop: start=0, step=1, limit=6
  $region2: #{forward.45} parent=0 // loop_pre_header
    _
  $region3: #{forward.45} parent=0 // loop_header
    %s7 = sphi 0, %s11
    %p8 = scmp.ge.s32.totalorder %s7, 6
    %s14 = sphi 0, %s26
    %s15 = sphi 0, %s22
    %s16 = sphi 0, %s14
    %s17 = sphi 0, %s15
    %s18 = sphi 0, %s16
    %s19 = sphi 0, %s17
    %s31 = sphi 0, %s33
    %s34 = sphi 0, %s31
    %s35 = sphi 0, %s34
    %s51 = sphi 0, %s35
    %s57 = sphi 0, %s59
    %s60 = sphi 0, %s57
    %s61 = sphi 0, %s60
    %s77 = sphi 0, %s61
  $region4: #{forward.45} parent=0 // loop_header_branch
    %10 = sbr.rel (%p8) target = $region8
  $region5: #{forward.45} parent=0 // loop_body
    %s12 = ssub.s32 %s7, 1
    %s13 = ssub.s32 %s7, 2
    %s20 = sadd.s32 1, %s15
    %p21 = scmp.ge.s32.totalorder %s20, 4
    %s22 = scalar_select %p21, 0, %s20
    %s23 = sadd.s32 1, %s14
    %s24 = scalar_select %p21, %s23, %s14
    %p25 = scmp.ge.s32.totalorder %s24, 1
    %s26 = scalar_select %p25, 0, %s24
    %s27 = ssub.s32 %s15, %s22
    %s28 = ssub.s32 %s14, %s26
    %s29 = sor.u32 %s27, %s28
    %p30 = scmp.eq.s32.totalorder %s29, 0
    %s32 = sadd.s32 %s31, 1
    %s33 = scalar_select %p30, %s31, %s32
    %p36 = pneg %p30
    %p37 = scmp.eq.s32.totalorder %s7, 3
    %p38 = por %p36, %p37
    %p39 = scmp.ne.s32.totalorder %s31, %s34
    %p40 = scmp.eq.s32.totalorder %s7, 0
    %p41 = por %p39, %p40
    %p42 = scmp.ne.s32.totalorder %s31, %s34
    %p43 = scmp.eq.s32.totalorder %s12, 3
    %p44 = por %p42, %p43
    %p45 = scmp.ne.s32.totalorder %s34, %s35
    %p46 = scmp.eq.s32.totalorder %s12, 0
    %p47 = por %p45, %p46
    %p48 = scmp.ne.s32.totalorder %s34, %s35
    %p49 = scmp.eq.s32.totalorder %s13, 3
    %p50 = por %p48, %p49
    %p52 = scmp.ne.s32.totalorder %s35, %s51
    %p53 = scmp.eq.s32.totalorder %s13, 0
    %p54 = por %p52, %p53
    %s55 = ssub.s32 %s14, %s26
    %p56 = scmp.eq.s32.totalorder %s55, 0
    %s58 = sadd.s32 %s57, 1
    %s59 = scalar_select %p56, %s57, %s58
    %p62 = pneg %p56
    %p63 = scmp.eq.s32.totalorder %s7, 3
    %p64 = por %p62, %p63
    %p65 = scmp.ne.s32.totalorder %s57, %s60
    %p66 = scmp.eq.s32.totalorder %s7, 0
    %p67 = por %p65, %p66
    %p68 = scmp.ne.s32.totalorder %s57, %s60
    %p69 = scmp.eq.s32.totalorder %s12, 3
    %p70 = por %p68, %p69
    %p71 = scmp.ne.s32.totalorder %s60, %s61
    %p72 = scmp.eq.s32.totalorder %s12, 0
    %p73 = por %p71, %p72
    %p74 = scmp.ne.s32.totalorder %s60, %s61
    %p75 = scmp.eq.s32.totalorder %s13, 3
    %p76 = por %p74, %p75
    %p78 = scmp.ne.s32.totalorder %s61, %s77
    %p79 = scmp.eq.s32.totalorder %s13, 0
    %p80 = por %p78, %p79
    %p81 = scmp.le.s32.totalorder 1, %s7
    %p82 = scmp.lt.s32.totalorder %s7, 5
    %p83 = pnand %p81, %p82
    %p84 = pneg %p83
    // Predicated region
    $region9: #{forward.45} parent=5 // pred_check
      _
    $region10: #{forward.45} parent=5 // pred_check_branch
      %86 = sbr.rel (%p83) target = $region12
    $region11: #{forward.45} parent=5 // pred_region
      %s87 = ssub.s32 %s7, 1
    $region12: #{forward.45} parent=5 // pred_fallthru
      _
    %p88 = scmp.lt.s32.totalorder %s7, 4
    // Predicated region
    $region13: #{forward.45} parent=5 // pred_check
      %p89 = pneg %p88
    $region14: #{forward.45} parent=5 // pred_check_branch
      %91 = sbr.rel (%p89) target = $region16
    $region15: #{forward.45} parent=5 // pred_region
      // Predicated region
      $region17: #{forward.45} parent=15 // pred_check
        %p92 = pneg %p41
      $region18: #{forward.45} parent=15 // pred_check_branch
        %94 = sbr.rel (%p92) target = $region20
      $region19: #{forward.45} parent=15 // pred_region
        %p95 = scmp.lt.s32.totalorder %s15, 3
        %s96 = scalar_select %p95, %s15, 3
        %p97 = scmp.lt.s32.totalorder %s14, 0
        %s98 = scalar_select %p97, %s14, 0
        %s99 = sadd.s32 %s98, %s96
        %s100 = scalar_lea.vmem %s0, %s99
      $region20: #{forward.45} parent=15 // pred_fallthru
        _
    $region16: #{forward.45} parent=5 // pred_fallthru
      _
    %p101 = scmp.le.s32.totalorder 1, %s7
    %p102 = scmp.lt.s32.totalorder %s7, 5
    %p103 = pnand %p101, %p102
    %p104 = pneg %p103
    // Predicated region
    $region21: #{forward.45} parent=5 // pred_check
      _
    $region22: #{forward.45} parent=5 // pred_check_branch
      %106 = sbr.rel (%p103) target = $region24
    $region23: #{forward.45} parent=5 // pred_region
      %s107 = ssub.s32 %s7, 1
      %p108 = scmp.lt.s32.totalorder %s17, 3
      %s109 = scalar_select %p108, %s17, 3
      %p110 = scmp.lt.s32.totalorder %s16, 0
      %s111 = scalar_select %p110, %s16, 0
      %s112 = sadd.s32 %s111, %s109
      %s113 = scalar_lea.vmem %s0, %s112
      %p114 = pneg %p47
      %p115 = pneg %p44
      %p116 = pneg %p73
      %p117 = pneg %p70
      %p118 = scmp.lt.s32.totalorder %s16, 0
      %s119 = scalar_select %p118, %s16, 0
      %s120 = scalar_lea.vmem %s1, %s119
      %p121 = scmp.lt.s32.totalorder %s17, 3
      %s122 = scalar_select %p121, %s17, 3
      %p123 = scmp.lt.s32.totalorder %s16, 0
      %s124 = scalar_select %p123, %s16, 0
      %s125 = sadd.s32 %s124, %s122
      %s126 = scalar_lea.vmem %s0, %s125
      %p127 = scmp.lt.s32.totalorder %s16, 0
      %s128 = scalar_select %p127, %s16, 0
      %s129 = scalar_lea.vmem %s1, %s128
      %v130 = vld [vmem:[%s126] sm:$0x1]
      %v131 = vunpack.c.l.bf16 %v130
      %p132 = scmp.eq.s32.totalorder %s17, 0
      // Predicated region
      $region25: #{forward.45} parent=23 // pred_check
        %p133 = pneg %p132
      $region26: #{forward.45} parent=23 // pred_check_branch
        %135 = sbr.rel (%p133) target = $region28
      $region27: #{forward.45} parent=23 // pred_region
        %vm136 = vcmask 123904
        %137 = vst.msk [vmem:[#allocation2] sm:$0x3] %vm136, %v131
      $region28: #{forward.45} parent=23 // pred_fallthru
        _
      %p138 = scmp.gt.s32.totalorder %s17, 0
      // Predicated region
      $region29: #{forward.45} parent=23 // pred_check
        %p139 = pneg %p138
      $region30: #{forward.45} parent=23 // pred_check_branch
        %141 = sbr.rel (%p139) target = $region32
      $region31: #{forward.45} parent=23 // pred_region
        %v142 = vld [vmem:[#allocation2] sm:$0x3]
        %v143 = vadd.f32 %v142, %v131
        %vm144 = vcmask 123904
        %145 = vst.msk [vmem:[#allocation2] sm:$0x3] %vm144, %v143
      $region32: #{forward.45} parent=23 // pred_fallthru
        _
      %p146 = scmp.eq.s32.totalorder %s17, 3
      // Predicated region
      $region33: #{forward.45} parent=23 // pred_check
        %p147 = pneg %p146
      $region34: #{forward.45} parent=23 // pred_check_branch
        %149 = sbr.rel (%p147) target = $region36
      $region35: #{forward.45} parent=23 // pred_region
        %v150 = vld [vmem:[#allocation2] sm:$0x3]
        %v151 = vpack.c.bf16 %v150, %v150
        %vm152 = vcmask 122880
        %153 = vst.msk [vmem:[%s129] sm:$0x1] %vm152, %v151
      $region36: #{forward.45} parent=23 // pred_fallthru
        _
      %p154 = scmp.lt.s32.totalorder %s16, 0
      %s155 = scalar_select %p154, %s16, 0
      %s156 = scalar_lea.vmem %s1, %s155
      // Predicated region
      $region37: #{forward.45} parent=23 // pred_check
        %p157 = pneg %p70
      $region38: #{forward.45} parent=23 // pred_check_branch
        %159 = sbr.rel (%p157) target = $region40
      $region39: #{forward.45} parent=23 // pred_region
        _
      $region40: #{forward.45} parent=23 // pred_fallthru
        _
      // Predicated region
      $region41: #{forward.45} parent=23 // pred_check
        %p160 = pneg %p70
      $region42: #{forward.45} parent=23 // pred_check_branch
        %162 = sbr.rel (%p160) target = $region44
      $region43: #{forward.45} parent=23 // pred_region
        %p163 = scmp.lt.s32.totalorder %s16, 0
        %s164 = scalar_select %p163, %s16, 0
        %s165 = scalar_lea.vmem %s1, %s164
      $region44: #{forward.45} parent=23 // pred_fallthru
        _
    $region24: #{forward.45} parent=5 // pred_fallthru
      _
    %p166 = scmp.le.s32.totalorder 2, %s7
    // Predicated region
    $region45: #{forward.45} parent=5 // pred_check
      %p167 = pneg %p166
    $region46: #{forward.45} parent=5 // pred_check_branch
      %169 = sbr.rel (%p167) target = $region48
    $region47: #{forward.45} parent=5 // pred_region
      %s170 = ssub.s32 %s7, 2
    $region48: #{forward.45} parent=5 // pred_fallthru
      _
  $region6: #{forward.45} parent=0 // loop_footer
    %s11 = sadd.s32 1, %s7
  $region7: #{forward.45} parent=0 // loop_footer_branch
    %6 = sbr.rel target = $region3
  $region8: #{forward.45} parent=0 // loop_exit
    _

// kernel: forward.46
$region0: #{forward.46}
  #allocation0 [shape = 'u32[]', space=smem, size = 0x4, offset = 0x4, fixed_abs, tag = 'smem constant byte address 0x4 - core index']
  #allocation1 [shape = 'u32[144,128]{1,0:T(1,128)}', space=vmem, size = 0x12000, scoped, tag = 'internal scratch']
  #allocation2 [shape = 'f32[2,32]{1,0:T(2,128)}', space=vmem, size = 0x400, scoped, tag = 'scratch operand']
  %s0 = inlined_call_operand.vmem [shape: bf16[2,16], index: 0, kind: input, shape index: {}]
  %s1 = inlined_call_operand.vmem [shape: bf16[16,32], index: 1, kind: input, shape index: {}]
  %s2 = inlined_call_operand.vmem [shape: f32[1,16], index: 2, kind: input, shape index: {}]
  %s3 = inlined_call_operand.vmem [shape: f32[1,16], index: 3, kind: input, shape index: {}]
  %s4 = inlined_call_operand.vmem [shape: f32[1,32], index: 4, kind: input, shape index: {}]
  %s5 = inlined_call_operand.vmem [shape: f32[1,32], index: 5, kind: input, shape index: {}]
  %s6 = inlined_call_operand.vmem [shape: bf16[2,32], index: 6, kind: output, shape index: {}]
  %s7 = sld [smem:[#allocation0]]
  $region42: #{forward.46} parent=0
    _
  %s9 = ssub.s32 1, %s7
  %s10 = scalar_select 0, %s9, %s7
  // Predicated region
  $region2: #{forward.46} parent=0 // pred_check
    _
  $region3: #{forward.46} parent=0 // pred_check_branch
    %12 = sbr.rel (0) target = $region5
  $region4: #{forward.46} parent=0 // pred_region
    _
  $region5: #{forward.46} parent=0 // pred_fallthru
    _
  // Predicated region
  $region6: #{forward.46} parent=0 // pred_check
    _
  $region7: #{forward.46} parent=0 // pred_check_branch
    %14 = sbr.rel (0) target = $region9
  $region8: #{forward.46} parent=0 // pred_region
    _
  $region9: #{forward.46} parent=0 // pred_fallthru
    _
  // Predicated region
  $region10: #{forward.46} parent=0 // pred_check
    _
  $region11: #{forward.46} parent=0 // pred_check_branch
    %16 = sbr.rel (0) target = $region13
  $region12: #{forward.46} parent=0 // pred_region
    _
  $region13: #{forward.46} parent=0 // pred_fallthru
    _
  // Predicated region
  $region14: #{forward.46} parent=0 // pred_check
    _
  $region15: #{forward.46} parent=0 // pred_check_branch
    %18 = sbr.rel (0) target = $region17
  $region16: #{forward.46} parent=0 // pred_region
    _
  $region17: #{forward.46} parent=0 // pred_fallthru
    _
  // Predicated region
  $region18: #{forward.46} parent=0 // pred_check
    _
  $region19: #{forward.46} parent=0 // pred_check_branch
    %20 = sbr.rel (0) target = $region21
  $region20: #{forward.46} parent=0 // pred_region
    _
  $region21: #{forward.46} parent=0 // pred_fallthru
    _
  // Predicated region
  $region22: #{forward.46} parent=0 // pred_check
    _
  $region23: #{forward.46} parent=0 // pred_check_branch
    %22 = sbr.rel (0) target = $region25
  $region24: #{forward.46} parent=0 // pred_region
    _
  $region25: #{forward.46} parent=0 // pred_fallthru
    _
  %p24 = scmp.eq.s32.totalorder 0, 0
  // Predicated region
  $region26: #{forward.46} parent=0 // pred_check
    %p25 = pneg %p24
  $region27: #{forward.46} parent=0 // pred_check_branch
    %27 = sbr.rel (%p25) target = $region29
  $region28: #{forward.46} parent=0 // pred_region
    %vm28 = vcmask 254976
    %29 = vst.msk [vmem:[#allocation2] sm:$0x3] %vm28, 0.0
  $region29: #{forward.46} parent=0 // pred_fallthru
    _
  %v30 = vld [vmem:[%s0] sm:$0x1]
  %v31 = vunpack.c.l.bf16 %v30
  %v32 = vld [vmem:[%s2] sm:$0x1]
  %v34 = vlaneseq
  %v35 = vshrl.u32 %v34, 7
  %v36 = vsub.s32 0, %v35
  %v37 = vrot.slane %v32, %v36
  %v39 = vmul.f32 %v31, %v37
  %v40 = vld [vmem:[%s3] sm:$0x1]
  %v42 = vlaneseq
  %v43 = vshrl.u32 %v42, 7
  %v44 = vsub.s32 0, %v43
  %v45 = vrot.slane %v40, %v44
  %v47 = vadd.f32 %v39, %v45
  %v48 = vmax.f32 %v47, 0.0
  %v49 = vpack.c.bf16 %v48, %v48
  %v50 = vld [vmem:[#allocation2] sm:$0x3]
  %v51 = vld [vmem:[%s1] sm:$0xf]
  %v52 = vld [vmem:[%s1 + $0x4] sm:$0xf]
  %v55 = vunpack.c.l.b16 %v51
  %v56 = vunpack.c.l.b16 %v52
  %v57 = vpack.c.b16 %v56, %v55
  %vm59 = vcmask 130048
  %v61 = vsel %vm59, %v49, 0
  %63 = vmatprep.subr.bf16.mxu0 0
  %64 = vmatpush1.bf16.msra.mxu0 %v57
  %65 = vmatprep.subr.bf16.mxu0 0
  %66 = vmatpush1.bf16.msra.mxu0 0
  %67 = vmatprep.subr.bf16.mxu0 0
  %68 = vmatpush1.bf16.msra.mxu0 0
  %69 = vmatprep.subr.bf16.mxu0 0
  %70 = vmatpush1.bf16.msra.mxu0 0
  %71 = vmatprep.subr.bf16.mxu0 0
  %72 = vmatpush1.bf16.msra.mxu0 0
  %73 = vmatprep.subr.bf16.mxu0 0
  %74 = vmatpush1.bf16.msra.mxu0 0
  %75 = vmatprep.subr.bf16.mxu0 0
  %76 = vmatpush1.bf16.msra.mxu0 0
  %77 = vmatprep.subr.bf16.mxu0 0
  %78 = vmatpush1.bf16.msra.mxu0 0
  %79 = vmatprep.subr.bf16.mxu0 0
  %80 = vmatpush1.bf16.msra.mxu0 0
  %81 = vmatprep.subr.bf16.mxu0 0
  %82 = vmatpush1.bf16.msra.mxu0 0
  %83 = vmatprep.subr.bf16.mxu0 0
  %84 = vmatpush1.bf16.msra.mxu0 0
  %85 = vmatprep.subr.bf16.mxu0 0
  %86 = vmatpush1.bf16.msra.mxu0 0
  %87 = vmatprep.subr.bf16.mxu0 0
  %88 = vmatpush1.bf16.msra.mxu0 0
  %89 = vmatprep.subr.bf16.mxu0 0
  %90 = vmatpush1.bf16.msra.mxu0 0
  %91 = vmatprep.subr.bf16.mxu0 0
  %92 = vmatpush1.bf16.msra.mxu0 0
  %93 = vmatprep.subr.bf16.mxu0 0
  %94 = vmatpush1.bf16.msra.mxu0 0
  %95 = vmatprep.mubr.bf16.mxu0 0
  %96 = vmatmul.mubr.bf16.gmra.mrb[0].mxu0 %v61
  %v97 = vpop.f32.mrb[0].mxu0
  %v98 = vadd.f32 0.0, %v97
  %v99 = vpop.f32.mrb[0].mxu0
  %v100 = vpop.f32.mrb[0].mxu0
  %v101 = vpop.f32.mrb[0].mxu0
  %102 = vdwg.mxu0
  %v103 = vadd.f32 %v50, %v98
  %vm104 = vcmask 254976
  %105 = vst.msk [vmem:[#allocation2] sm:$0x3] %vm104, %v103
  // Predicated region
  $region30: #{forward.46} parent=0 // pred_check
    %p106 = pneg %p24
  $region31: #{forward.46} parent=0 // pred_check_branch
    %108 = sbr.rel (%p106) target = $region33
  $region32: #{forward.46} parent=0 // pred_region
    %v109 = vld [vmem:[#allocation2] sm:$0x3]
    %v110 = vld [vmem:[%s4] sm:$0x1]
    %v112 = vlaneseq
    %v113 = vshrl.u32 %v112, 7
    %v114 = vsub.s32 0, %v113
    %v115 = vrot.slane %v110, %v114
    %v117 = vmul.f32 %v109, %v115
    %v118 = vld [vmem:[%s5] sm:$0x1]
    %v120 = vlaneseq
    %v121 = vshrl.u32 %v120, 7
    %v122 = vsub.s32 0, %v121
    %v123 = vrot.slane %v118, %v122
    %v125 = vadd.f32 %v117, %v123
    %v126 = vmax.f32 %v125, 0.0
    %v127 = vpack.c.bf16 %v126, %v126
    %vm128 = vcmask 253952
    %129 = vst.msk [vmem:[%s6] sm:$0x1] %vm128, %v127
  $region33: #{forward.46} parent=0 // pred_fallthru
    _
  // Predicated region
  $region34: #{forward.46} parent=0 // pred_check
    _
  $region35: #{forward.46} parent=0 // pred_check_branch
    %131 = sbr.rel (0) target = $region37
  $region36: #{forward.46} parent=0 // pred_region
    _
  $region37: #{forward.46} parent=0 // pred_fallthru
    _
  // Predicated region
  $region38: #{forward.46} parent=0 // pred_check
    _
  $region39: #{forward.46} parent=0 // pred_check_branch
    %133 = sbr.rel (0) target = $region41
  $region40: #{forward.46} parent=0 // pred_region
    _
  $region41: #{forward.46} parent=0 // pred_fallthru
    _

// kernel: forward.48
$region0: #{forward.48}
  #allocation0 [shape = 'u32[]', space=smem, size = 0x4, offset = 0x4, fixed_abs, tag = 'smem constant byte address 0x4 - core index']
  #allocation1 [shape = 'u32[144,128]{1,0:T(1,128)}', space=vmem, size = 0x12000, scoped, tag = 'internal scratch']
  #allocation2 [shape = 'f32[2,32]{1,0:T(2,128)}', space=vmem, size = 0x400, scoped, tag = 'scratch operand']
  %s0 = inlined_call_operand.vmem [shape: bf16[2,24], index: 0, kind: input, shape index: {}]
  %s1 = inlined_call_operand.vmem [shape: bf16[24,32], index: 1, kind: input, shape index: {}]
  %s2 = inlined_call_operand.vmem [shape: f32[1,24], index: 2, kind: input, shape index: {}]
  %s3 = inlined_call_operand.vmem [shape: f32[1,24], index: 3, kind: input, shape index: {}]
  %s4 = inlined_call_operand.vmem [shape: f32[1,32], index: 4, kind: input, shape index: {}]
  %s5 = inlined_call_operand.vmem [shape: f32[1,32], index: 5, kind: input, shape index: {}]
  %s6 = inlined_call_operand.vmem [shape: bf16[2,32], index: 6, kind: output, shape index: {}]
  %s7 = sld [smem:[#allocation0]]
  $region42: #{forward.48} parent=0
    _
  %s9 = ssub.s32 1, %s7
  %s10 = scalar_select 0, %s9, %s7
  // Predicated region
  $region2: #{forward.48} parent=0 // pred_check
    _
  $region3: #{forward.48} parent=0 // pred_check_branch
    %12 = sbr.rel (0) target = $region5
  $region4: #{forward.48} parent=0 // pred_region
    _
  $region5: #{forward.48} parent=0 // pred_fallthru
    _
  // Predicated region
  $region6: #{forward.48} parent=0 // pred_check
    _
  $region7: #{forward.48} parent=0 // pred_check_branch
    %14 = sbr.rel (0) target = $region9
  $region8: #{forward.48} parent=0 // pred_region
    _
  $region9: #{forward.48} parent=0 // pred_fallthru
    _
  // Predicated region
  $region10: #{forward.48} parent=0 // pred_check
    _
  $region11: #{forward.48} parent=0 // pred_check_branch
    %16 = sbr.rel (0) target = $region13
  $region12: #{forward.48} parent=0 // pred_region
    _
  $region13: #{forward.48} parent=0 // pred_fallthru
    _
  // Predicated region
  $region14: #{forward.48} parent=0 // pred_check
    _
  $region15: #{forward.48} parent=0 // pred_check_branch
    %18 = sbr.rel (0) target = $region17
  $region16: #{forward.48} parent=0 // pred_region
    _
  $region17: #{forward.48} parent=0 // pred_fallthru
    _
  // Predicated region
  $region18: #{forward.48} parent=0 // pred_check
    _
  $region19: #{forward.48} parent=0 // pred_check_branch
    %20 = sbr.rel (0) target = $region21
  $region20: #{forward.48} parent=0 // pred_region
    _
  $region21: #{forward.48} parent=0 // pred_fallthru
    _
  // Predicated region
  $region22: #{forward.48} parent=0 // pred_check
    _
  $region23: #{forward.48} parent=0 // pred_check_branch
    %22 = sbr.rel (0) target = $region25
  $region24: #{forward.48} parent=0 // pred_region
    _
  $region25: #{forward.48} parent=0 // pred_fallthru
    _
  %p24 = scmp.eq.s32.totalorder 0, 0
  // Predicated region
  $region26: #{forward.48} parent=0 // pred_check
    %p25 = pneg %p24
  $region27: #{forward.48} parent=0 // pred_check_branch
    %27 = sbr.rel (%p25) target = $region29
  $region28: #{forward.48} parent=0 // pred_region
    %vm28 = vcmask 254976
    %29 = vst.msk [vmem:[#allocation2] sm:$0x3] %vm28, 0.0
  $region29: #{forward.48} parent=0 // pred_fallthru
    _
  %v30 = vld [vmem:[%s0] sm:$0x1]
  %v31 = vunpack.c.l.bf16 %v30
  %v32 = vld [vmem:[%s2] sm:$0x1]
  %v34 = vlaneseq
  %v35 = vshrl.u32 %v34, 7
  %v36 = vsub.s32 0, %v35
  %v37 = vrot.slane %v32, %v36
  %v39 = vmul.f32 %v31, %v37
  %v40 = vld [vmem:[%s3] sm:$0x1]
  %v42 = vlaneseq
  %v43 = vshrl.u32 %v42, 7
  %v44 = vsub.s32 0, %v43
  %v45 = vrot.slane %v40, %v44
  %v47 = vadd.f32 %v39, %v45
  %v48 = vmax.f32 %v47, 0.0
  %v49 = vpack.c.bf16 %v48, %v48
  %v50 = vld [vmem:[#allocation2] sm:$0x3]
  %v51 = vld [vmem:[%s1] sm:$0xf]
  %v52 = vld [vmem:[%s1 + $0x4] sm:$0xf]
  %v53 = vld [vmem:[%s1 + $0x8] sm:$0xf]
  %v57 = vunpack.c.l.b16 %v51
  %v58 = vunpack.c.l.b16 %v52
  %v59 = vunpack.c.l.b16 %v53
  %v60 = vpack.c.b16 %v58, %v57
  %v61 = vpack.c.b16 %v59, %v59
  %vm63 = vcmask 195584
  %v65 = vsel %vm63, %v49, 0
  %vm67 = vcmask 1043456
  %v69 = vsel %vm67, %v61, 0
  %71 = vmatprep.subr.bf16.mxu0 0
  %72 = vmatpush1.bf16.msra.mxu0 %v60
  %73 = vmatprep.subr.bf16.mxu0 0
  %74 = vmatpush1.bf16.msra.mxu0 %v69
  %75 = vmatprep.subr.bf16.mxu0 0
  %76 = vmatpush1.bf16.msra.mxu0 0
  %77 = vmatprep.subr.bf16.mxu0 0
  %78 = vmatpush1.bf16.msra.mxu0 0
  %79 = vmatprep.subr.bf16.mxu0 0
  %80 = vmatpush1.bf16.msra.mxu0 0
  %81 = vmatprep.subr.bf16.mxu0 0
  %82 = vmatpush1.bf16.msra.mxu0 0
  %83 = vmatprep.subr.bf16.mxu0 0
  %84 = vmatpush1.bf16.msra.mxu0 0
  %85 = vmatprep.subr.bf16.mxu0 0
  %86 = vmatpush1.bf16.msra.mxu0 0
  %87 = vmatprep.subr.bf16.mxu0 0
  %88 = vmatpush1.bf16.msra.mxu0 0
  %89 = vmatprep.subr.bf16.mxu0 0
  %90 = vmatpush1.bf16.msra.mxu0 0
  %91 = vmatprep.subr.bf16.mxu0 0
  %92 = vmatpush1.bf16.msra.mxu0 0
  %93 = vmatprep.subr.bf16.mxu0 0
  %94 = vmatpush1.bf16.msra.mxu0 0
  %95 = vmatprep.subr.bf16.mxu0 0
  %96 = vmatpush1.bf16.msra.mxu0 0
  %97 = vmatprep.subr.bf16.mxu0 0
  %98 = vmatpush1.bf16.msra.mxu0 0
  %99 = vmatprep.subr.bf16.mxu0 0
  %100 = vmatpush1.bf16.msra.mxu0 0
  %101 = vmatprep.subr.bf16.mxu0 0
  %102 = vmatpush1.bf16.msra.mxu0 0
  %103 = vmatprep.mubr.bf16.mxu0 0
  %104 = vmatmul.mubr.bf16.gmra.mrb[0].mxu0 %v65
  %v105 = vpop.f32.mrb[0].mxu0
  %v106 = vadd.f32 0.0, %v105
  %v107 = vpop.f32.mrb[0].mxu0
  %v108 = vpop.f32.mrb[0].mxu0
  %v109 = vpop.f32.mrb[0].mxu0
  %110 = vdwg.mxu0
  %v111 = vadd.f32 %v50, %v106
  %vm112 = vcmask 254976
  %113 = vst.msk [vmem:[#allocation2] sm:$0x3] %vm112, %v111
  // Predicated region
  $region30: #{forward.48} parent=0 // pred_check
    %p114 = pneg %p24
  $region31: #{forward.48} parent=0 // pred_check_branch
    %116 = sbr.rel (%p114) target = $region33
  $region32: #{forward.48} parent=0 // pred_region
    %v117 = vld [vmem:[#allocation2] sm:$0x3]
    %v118 = vld [vmem:[%s4] sm:$0x1]
    %v120 = vlaneseq
    %v121 = vshrl.u32 %v120, 7
    %v122 = vsub.s32 0, %v121
    %v123 = vrot.slane %v118, %v122
    %v125 = vmul.f32 %v117, %v123
    %v126 = vld [vmem:[%s5] sm:$0x1]
    %v128 = vlaneseq
    %v129 = vshrl.u32 %v128, 7
    %v130 = vsub.s32 0, %v129
    %v131 = vrot.slane %v126, %v130
    %v133 = vadd.f32 %v125, %v131
    %v134 = vmax.f32 %v133, 0.0
    %v135 = vpack.c.bf16 %v134, %v134
    %vm136 = vcmask 253952
    %137 = vst.msk [vmem:[%s6] sm:$0x1] %vm136, %v135
  $region33: #{forward.48} parent=0 // pred_fallthru
    _
  // Predicated region
  $region34: #{forward.48} parent=0 // pred_check
    _
  $region35: #{forward.48} parent=0 // pred_check_branch
    %139 = sbr.rel (0) target = $region37
  $region36: #{forward.48} parent=0 // pred_region
    _
  $region37: #{forward.48} parent=0 // pred_fallthru
    _
  // Predicated region
  $region38: #{forward.48} parent=0 // pred_check
    _
  $region39: #{forward.48} parent=0 // pred_check_branch
    %141 = sbr.rel (0) target = $region41
  $region40: #{forward.48} parent=0 // pred_region
    _
  $region41: #{forward.48} parent=0 // pred_fallthru
    _

// kernel: forward.47
$region0: #{forward.47}
  #allocation0 [shape = 'u32[]', space=smem, size = 0x4, offset = 0x4, fixed_abs, tag = 'smem constant byte address 0x4 - core index']
  #allocation1 [shape = 'u32[144,128]{1,0:T(1,128)}', space=vmem, size = 0x12000, scoped, tag = 'internal scratch']
  #allocation2 [shape = 'f32[2,8]{1,0:T(2,128)}', space=vmem, size = 0x400, scoped, tag = 'scratch operand']
  %s0 = inlined_call_operand.vmem [shape: bf16[2,288], index: 0, kind: input, shape index: {}]
  %s1 = inlined_call_operand.vmem [shape: bf16[288,8], index: 1, kind: input, shape index: {}]
  %s2 = inlined_call_operand.vmem [shape: f32[1,8], index: 2, kind: input, shape index: {}]
  %s3 = inlined_call_operand.vmem [shape: f32[1,8], index: 3, kind: input, shape index: {}]
  %s4 = inlined_call_operand.vmem [shape: bf16[2,8], index: 4, kind: output, shape index: {}]
  %s5 = sld [smem:[#allocation0]]
  $region34: #{forward.47} parent=0
    _
  %s7 = ssub.s32 1, %s5
  %s8 = scalar_select 0, %s7, %s5
  // Predicated region
  $region2: #{forward.47} parent=0 // pred_check
    _
  $region3: #{forward.47} parent=0 // pred_check_branch
    %10 = sbr.rel (0) target = $region5
  $region4: #{forward.47} parent=0 // pred_region
    _
  $region5: #{forward.47} parent=0 // pred_fallthru
    _
  // Predicated region
  $region6: #{forward.47} parent=0 // pred_check
    _
  $region7: #{forward.47} parent=0 // pred_check_branch
    %12 = sbr.rel (0) target = $region9
  $region8: #{forward.47} parent=0 // pred_region
    _
  $region9: #{forward.47} parent=0 // pred_fallthru
    _
  // Predicated region
  $region10: #{forward.47} parent=0 // pred_check
    _
  $region11: #{forward.47} parent=0 // pred_check_branch
    %14 = sbr.rel (0) target = $region13
  $region12: #{forward.47} parent=0 // pred_region
    _
  $region13: #{forward.47} parent=0 // pred_fallthru
    _
  // Predicated region
  $region14: #{forward.47} parent=0 // pred_check
    _
  $region15: #{forward.47} parent=0 // pred_check_branch
    %16 = sbr.rel (0) target = $region17
  $region16: #{forward.47} parent=0 // pred_region
    _
  $region17: #{forward.47} parent=0 // pred_fallthru
    _
  %p18 = scmp.eq.s32.totalorder 0, 0
  // Predicated region
  $region18: #{forward.47} parent=0 // pred_check
    %p19 = pneg %p18
  $region19: #{forward.47} parent=0 // pred_check_branch
    %21 = sbr.rel (%p19) target = $region21
  $region20: #{forward.47} parent=0 // pred_region
    %vm22 = vcmask 58368
    %23 = vst.msk [vmem:[#allocation2] sm:$0x3] %vm22, 0.0
  $region21: #{forward.47} parent=0 // pred_fallthru
    _
  %v24 = vld [vmem:[%s0] sm:$0x7]
  %v25 = vld [vmem:[#allocation2] sm:$0x3]
  %v26 = vld [vmem:[%s1] sm:$0xf]
  %v27 = vld [vmem:[%s1 + $0x4] sm:$0xf]
  %v28 = vld [vmem:[%s1 + $0x8] sm:$0xf]
  %v29 = vld [vmem:[%s1 + $0xc] sm:$0xf]
  %v30 = vld [vmem:[%s1 + $0x10] sm:$0xf]
  %v31 = vld [vmem:[%s1 + $0x14] sm:$0xf]
  %v32 = vld [vmem:[%s1 + $0x18] sm:$0xf]
  %v33 = vld [vmem:[%s1 + $0x1c] sm:$0xf]
  %v34 = vld [vmem:[%s1 + $0x20] sm:$0xf]
  %v35 = vld [vmem:[%s1 + $0x24] sm:$0xf]
  %v36 = vld [vmem:[%s1 + $0x28] sm:$0xf]
  %v37 = vld [vmem:[%s1 + $0x2c] sm:$0xf]
  %v38 = vld [vmem:[%s1 + $0x30] sm:$0xf]
  %v39 = vld [vmem:[%s1 + $0x34] sm:$0xf]
  %v40 = vld [vmem:[%s1 + $0x38] sm:$0xf]
  %v41 = vld [vmem:[%s1 + $0x3c] sm:$0xf]
  %v42 = vld [vmem:[%s1 + $0x40] sm:$0xf]
  %v43 = vld [vmem:[%s1 + $0x44] sm:$0xf]
  %v44 = vld [vmem:[%s1 + $0x48] sm:$0xf]
  %v45 = vld [vmem:[%s1 + $0x4c] sm:$0xf]
  %v46 = vld [vmem:[%s1 + $0x50] sm:$0xf]
  %v47 = vld [vmem:[%s1 + $0x54] sm:$0xf]
  %v48 = vld [vmem:[%s1 + $0x58] sm:$0xf]
  %v49 = vld [vmem:[%s1 + $0x5c] sm:$0xf]
  %v50 = vld [vmem:[%s1 + $0x60] sm:$0xf]
  %v51 = vld [vmem:[%s1 + $0x64] sm:$0xf]
  %v52 = vld [vmem:[%s1 + $0x68] sm:$0xf]
  %v53 = vld [vmem:[%s1 + $0x6c] sm:$0xf]
  %v54 = vld [vmem:[%s1 + $0x70] sm:$0xf]
  %v55 = vld [vmem:[%s1 + $0x74] sm:$0xf]
  %v56 = vld [vmem:[%s1 + $0x78] sm:$0xf]
  %v57 = vld [vmem:[%s1 + $0x7c] sm:$0xf]
  %v58 = vld [vmem:[%s1 + $0x80] sm:$0xf]
  %v59 = vld [vmem:[%s1 + $0x84] sm:$0xf]
  %v60 = vld [vmem:[%s1 + $0x88] sm:$0xf]
  %v61 = vld [vmem:[%s1 + $0x8c] sm:$0xf]
  %v64 = vunpack.c.l.s4 1966171168
  %v65 = vunpack.c.0.s8 %v64
  %v66 = vlaneseq
  %v67 = vshrl.u32 %v66, 7
  %v68 = vsub.s32 %v65, %v67
  %v69 = vrot.slane %v24, %v68
  %v70 = vcombine.high %v69, %v69
  %v72 = vunpack.c.l.s4 1966171168
  %v73 = vunpack.c.0.s8 %v72
  %v74 = vlaneseq
  %v75 = vshrl.u32 %v74, 7
  %v76 = vsub.s32 %v73, %v75
  %v77 = vrot.slane %v69, %v76
  %v79 = vunpack.c.l.s4 1966171168
  %v80 = vunpack.c.0.s8 %v79
  %v81 = vlaneseq
  %v82 = vshrl.u32 %v81, 7
  %v83 = vsub.s32 %v80, %v82
  %v84 = vrot.slane %v70, %v83
  %v85 = vcombine.high %v77, %v77
  %v124 = vunpack.c.l.b16 %v26
  %v125 = vunpack.c.l.b16 %v27
  %v126 = vunpack.c.l.b16 %v28
  %v127 = vunpack.c.l.b16 %v29
  %v128 = vunpack.c.l.b16 %v30
  %v129 = vunpack.c.l.b16 %v31
  %v130 = vunpack.c.l.b16 %v32
  %v131 = vunpack.c.l.b16 %v33
  %v132 = vunpack.c.l.b16 %v34
  %v133 = vunpack.c.l.b16 %v35
  %v134 = vunpack.c.l.b16 %v36
  %v135 = vunpack.c.l.b16 %v37
  %v136 = vunpack.c.l.b16 %v38
  %v137 = vunpack.c.l.b16 %v39
  %v138 = vunpack.c.l.b16 %v40
  %v139 = vunpack.c.l.b16 %v41
  %v140 = vunpack.c.l.b16 %v42
  %v141 = vunpack.c.l.b16 %v43
  %v142 = vunpack.c.l.b16 %v44
  %v143 = vunpack.c.l.b16 %v45
  %v144 = vunpack.c.l.b16 %v46
  %v145 = vunpack.c.l.b16 %v47
  %v146 = vunpack.c.l.b16 %v48
  %v147 = vunpack.c.l.b16 %v49
  %v148 = vunpack.c.l.b16 %v50
  %v149 = vunpack.c.l.b16 %v51
  %v150 = vunpack.c.l.b16 %v52
  %v151 = vunpack.c.l.b16 %v53
  %v152 = vunpack.c.l.b16 %v54
  %v153 = vunpack.c.l.b16 %v55
  %v154 = vunpack.c.l.b16 %v56
  %v155 = vunpack.c.l.b16 %v57
  %v156 = vunpack.c.l.b16 %v58
  %v157 = vunpack.c.l.b16 %v59
  %v158 = vunpack.c.l.b16 %v60
  %v159 = vunpack.c.l.b16 %v61
  %v160 = vpack.c.b16 %v125, %v124
  %v161 = vpack.c.b16 %v127, %v126
  %v162 = vpack.c.b16 %v129, %v128
  %v163 = vpack.c.b16 %v131, %v130
  %v164 = vpack.c.b16 %v133, %v132
  %v165 = vpack.c.b16 %v135, %v134
  %v166 = vpack.c.b16 %v137, %v136
  %v167 = vpack.c.b16 %v139, %v138
  %v168 = vpack.c.b16 %v141, %v140
  %v169 = vpack.c.b16 %v143, %v142
  %v170 = vpack.c.b16 %v145, %v144
  %v171 = vpack.c.b16 %v147, %v146
  %v172 = vpack.c.b16 %v149, %v148
  %v173 = vpack.c.b16 %v151, %v150
  %v174 = vpack.c.b16 %v153, %v152
  %v175 = vpack.c.b16 %v155, %v154
  %v176 = vpack.c.b16 %v157, %v156
  %v177 = vpack.c.b16 %v159, %v158
  %vm196 = vcmask 261120
  %v198 = vsel %vm196, %v85, 0
  %200 = vmatprep.subr.bf16.mxu0 0
  %201 = vmatpush1.bf16.msra.mxu0 %v160
  %202 = vmatprep.subr.bf16.mxu0 0
  %203 = vmatpush1.bf16.msra.mxu0 %v161
  %204 = vmatprep.subr.bf16.mxu0 0
  %205 = vmatpush1.bf16.msra.mxu0 %v162
  %206 = vmatprep.subr.bf16.mxu0 0
  %207 = vmatpush1.bf16.msra.mxu0 %v163
  %208 = vmatprep.subr.bf16.mxu0 0
  %209 = vmatpush1.bf16.msra.mxu0 %v164
  %210 = vmatprep.subr.bf16.mxu0 0
  %211 = vmatpush1.bf16.msra.mxu0 %v165
  %212 = vmatprep.subr.bf16.mxu0 0
  %213 = vmatpush1.bf16.msra.mxu0 %v166
  %214 = vmatprep.subr.bf16.mxu0 0
  %215 = vmatpush1.bf16.msra.mxu0 %v167
  %216 = vmatprep.subr.bf16.mxu0 0
  %217 = vmatpush1.bf16.msra.mxu0 %v168
  %218 = vmatprep.subr.bf16.mxu0 0
  %219 = vmatpush1.bf16.msra.mxu0 %v169
  %220 = vmatprep.subr.bf16.mxu0 0
  %221 = vmatpush1.bf16.msra.mxu0 %v170
  %222 = vmatprep.subr.bf16.mxu0 0
  %223 = vmatpush1.bf16.msra.mxu0 %v171
  %224 = vmatprep.subr.bf16.mxu0 0
  %225 = vmatpush1.bf16.msra.mxu0 %v172
  %226 = vmatprep.subr.bf16.mxu0 0
  %227 = vmatpush1.bf16.msra.mxu0 %v173
  %228 = vmatprep.subr.bf16.mxu0 0
  %229 = vmatpush1.bf16.msra.mxu0 %v174
  %230 = vmatprep.subr.bf16.mxu0 0
  %231 = vmatpush1.bf16.msra.mxu0 %v175
  %232 = vmatprep.mubr.bf16.mxu0 %v84
  %233 = vmatmul.mubr.bf16.gmra.mrb[0].mxu0 %v77
  %v234 = vpop.f32.mrb[0].mxu0
  %v235 = vadd.f32 0.0, %v234
  %v236 = vpop.f32.mrb[0].mxu0
  %v237 = vpop.f32.mrb[0].mxu0
  %v238 = vpop.f32.mrb[0].mxu0
  %239 = vdwg.mxu0
  %240 = vmatprep.subr.bf16.mxu0 0
  %241 = vmatpush1.bf16.msra.mxu0 %v176
  %242 = vmatprep.subr.bf16.mxu0 0
  %243 = vmatpush1.bf16.msra.mxu0 %v177
  %244 = vmatprep.subr.bf16.mxu0 0
  %245 = vmatpush1.bf16.msra.mxu0 0
  %246 = vmatprep.subr.bf16.mxu0 0
  %247 = vmatpush1.bf16.msra.mxu0 0
  %248 = vmatprep.subr.bf16.mxu0 0
  %249 = vmatpush1.bf16.msra.mxu0 0
  %250 = vmatprep.subr.bf16.mxu0 0
  %251 = vmatpush1.bf16.msra.mxu0 0
  %252 = vmatprep.subr.bf16.mxu0 0
  %253 = vmatpush1.bf16.msra.mxu0 0
  %254 = vmatprep.subr.bf16.mxu0 0
  %255 = vmatpush1.bf16.msra.mxu0 0
  %256 = vmatprep.subr.bf16.mxu0 0
  %257 = vmatpush1.bf16.msra.mxu0 0
  %258 = vmatprep.subr.bf16.mxu0 0
  %259 = vmatpush1.bf16.msra.mxu0 0
  %260 = vmatprep.subr.bf16.mxu0 0
  %261 = vmatpush1.bf16.msra.mxu0 0
  %262 = vmatprep.subr.bf16.mxu0 0
  %263 = vmatpush1.bf16.msra.mxu0 0
  %264 = vmatprep.subr.bf16.mxu0 0
  %265 = vmatpush1.bf16.msra.mxu0 0
  %266 = vmatprep.subr.bf16.mxu0 0
  %267 = vmatpush1.bf16.msra.mxu0 0
  %268 = vmatprep.subr.bf16.mxu0 0
  %269 = vmatpush1.bf16.msra.mxu0 0
  %270 = vmatprep.subr.bf16.mxu0 0
  %271 = vmatpush1.bf16.msra.mxu0 0
  %272 = vmatprep.mubr.bf16.mxu0 0
  %273 = vmatmul.mubr.bf16.gmra.mrb[0].mxu0 %v198
  %v274 = vpop.f32.mrb[0].mxu0
  %v275 = vadd.f32 %v235, %v274
  %v276 = vpop.f32.mrb[0].mxu0
  %v277 = vpop.f32.mrb[0].mxu0
  %v278 = vpop.f32.mrb[0].mxu0
  %279 = vdwg.mxu0
  %v280 = vadd.f32 %v25, %v275
  %vm281 = vcmask 58368
  %282 = vst.msk [vmem:[#allocation2] sm:$0x3] %vm281, %v280
  // Predicated region
  $region22: #{forward.47} parent=0 // pred_check
    %p283 = pneg %p18
  $region23: #{forward.47} parent=0 // pred_check_branch
    %285 = sbr.rel (%p283) target = $region25
  $region24: #{forward.47} parent=0 // pred_region
    %v286 = vld [vmem:[#allocation2] sm:$0x3]
    %v287 = vld [vmem:[%s2] sm:$0x1]
    %v289 = vlaneseq
    %v290 = vshrl.u32 %v289, 7
    %v291 = vsub.s32 0, %v290
    %v292 = vrot.slane %v287, %v291
    %v294 = vmul.f32 %v286, %v292
    %v295 = vld [vmem:[%s3] sm:$0x1]
    %v297 = vlaneseq
    %v298 = vshrl.u32 %v297, 7
    %v299 = vsub.s32 0, %v298
    %v300 = vrot.slane %v295, %v299
    %v302 = vadd.f32 %v294, %v300
    %v303 = vpack.c.bf16 %v302, %v302
    %vm304 = vcmask 57344
    %305 = vst.msk [vmem:[%s4] sm:$0x1] %vm304, %v303
  $region25: #{forward.47} parent=0 // pred_fallthru
    _
  // Predicated region
  $region26: #{forward.47} parent=0 // pred_check
    _
  $region27: #{forward.47} parent=0 // pred_check_branch
    %307 = sbr.rel (0) target = $region29
  $region28: #{forward.47} parent=0 // pred_region
    _
  $region29: #{forward.47} parent=0 // pred_fallthru
    _
  // Predicated region
  $region30: #{forward.47} parent=0 // pred_check
    _
  $region31: #{forward.47} parent=0 // pred_check_branch
    %309 = sbr.rel (0) target = $region33
  $region32: #{forward.47} parent=0 // pred_region
    _
  $region33: #{forward.47} parent=0 // pred_fallthru
    _

// kernel: forward.50
$region0: #{forward.50}
  #allocation0 [shape = 'u32[]', space=smem, size = 0x4, offset = 0x4, fixed_abs, tag = 'smem constant byte address 0x4 - core index']
  #allocation1 [shape = 'u32[144,128]{1,0:T(1,128)}', space=vmem, size = 0x12000, scoped, tag = 'internal scratch']
  #allocation2 [shape = 'f32[2,256]{1,0:T(2,128)}', space=vmem, size = 0x800, scoped, tag = 'scratch operand']
  %s0 = inlined_call_operand.vmem [shape: bf16[2,32], index: 0, kind: input, shape index: {}]
  %s1 = inlined_call_operand.vmem [shape: bf16[32,512], index: 1, kind: input, shape index: {}]
  %s2 = inlined_call_operand.vmem [shape: f32[1,32], index: 2, kind: input, shape index: {}]
  %s3 = inlined_call_operand.vmem [shape: f32[1,32], index: 3, kind: input, shape index: {}]
  %s4 = inlined_call_operand.vmem [shape: f32[1,512], index: 4, kind: input, shape index: {}]
  %s5 = inlined_call_operand.vmem [shape: f32[1,512], index: 5, kind: input, shape index: {}]
  %s6 = inlined_call_operand.vmem [shape: bf16[2,512], index: 6, kind: output, shape index: {}]
  %s7 = sld [smem:[#allocation0]]
  $region103: #{forward.50} parent=0
    _
  %s9 = ssub.s32 1, %s7
  %s10 = scalar_select 0, %s9, %s7
  $region1: #{forward.50} parent=0
    #allocation3 [shape = 'u8[32768]{0}', space=vmem, size = 0x8000, scoped, tag = 'input window, operand 1']
    loop: start=0, step=1, limit=4
    $region2: #{forward.50} parent=1 // loop_pre_header
      _
    $region3: #{forward.50} parent=1 // loop_header
      %s12 = sphi 0, %s16
      %p13 = scmp.ge.s32.totalorder %s12, 4
      %s19 = sphi 0, %s38
      %s20 = sphi 0, %s34
      %s21 = sphi 0, %s30
      %s22 = sphi 0, %s19
      %s23 = sphi 0, %s20
      %s24 = sphi 0, %s21
      %s25 = sphi 0, %s22
      %s26 = sphi 0, %s23
      %s27 = sphi 0, %s24
      %s43 = sphi 0, %s45
      %s46 = sphi 0, %s43
      %s47 = sphi 0, %s46
      %s63 = sphi 0, %s47
      %s71 = sphi 0, %s73
      %s74 = sphi 0, %s71
      %s75 = sphi 0, %s74
      %s91 = sphi 0, %s75
      %s97 = sphi 0, %s99
      %s100 = sphi 0, %s97
      %s101 = sphi 0, %s100
      %s117 = sphi 0, %s101
      %s123 = sphi 0, %s125
      %s126 = sphi 0, %s123
      %s127 = sphi 0, %s126
      %s143 = sphi 0, %s127
      %s149 = sphi 0, %s151
      %s152 = sphi 0, %s149
      %s153 = sphi 0, %s152
      %s169 = sphi 0, %s153
      %s175 = sphi 0, %s177
      %s178 = sphi 0, %s175
      %s179 = sphi 0, %s178
      %s195 = sphi 0, %s179
      %s203 = sphi 0, %s205
      %s206 = sphi 0, %s203
      %s207 = sphi 0, %s206
      %s223 = sphi 0, %s207
    $region4: #{forward.50} parent=1 // loop_header_branch
      %15 = sbr.rel (%p13) target = $region8
    $region5: #{forward.50} parent=1 // loop_body
      %s17 = ssub.s32 %s12, 1
      %s18 = ssub.s32 %s12, 2
      %s28 = sadd.s32 1, %s21
      %p29 = scmp.ge.s32.totalorder %s28, 1
      %s30 = scalar_select %p29, 0, %s28
      %s31 = sadd.s32 1, %s20
      %s32 = scalar_select %p29, %s31, %s20
      %p33 = scmp.ge.s32.totalorder %s32, 2
      %s34 = scalar_select %p33, 0, %s32
      %s35 = sadd.s32 1, %s19
      %s36 = scalar_select %p33, %s35, %s19
      %p37 = scmp.ge.s32.totalorder %s36, 1
      %s38 = scalar_select %p37, 0, %s36
      %s39 = ssub.s32 %s19, %s38
      %s40 = ssub.s32 %s21, %s30
      %s41 = sor.u32 %s39, %s40
      %p42 = scmp.eq.s32.totalorder %s41, 0
      %s44 = sadd.s32 %s43, 1
      %s45 = scalar_select %p42, %s43, %s44
      %p48 = pneg %p42
      %p49 = scmp.eq.s32.totalorder %s12, 1
      %p50 = por %p48, %p49
      %p51 = scmp.ne.s32.totalorder %s43, %s46
      %p52 = scmp.eq.s32.totalorder %s12, 0
      %p53 = por %p51, %p52
      %p54 = scmp.ne.s32.totalorder %s43, %s46
      %p55 = scmp.eq.s32.totalorder %s17, 1
      %p56 = por %p54, %p55
      %p57 = scmp.ne.s32.totalorder %s46, %s47
      %p58 = scmp.eq.s32.totalorder %s17, 0
      %p59 = por %p57, %p58
      %p60 = scmp.ne.s32.totalorder %s46, %s47
      %p61 = scmp.eq.s32.totalorder %s18, 1
      %p62 = por %p60, %p61
      %p64 = scmp.ne.s32.totalorder %s47, %s63
      %p65 = scmp.eq.s32.totalorder %s18, 0
      %p66 = por %p64, %p65
      %s67 = ssub.s32 %s21, %s30
      %s68 = ssub.s32 %s20, %s34
      %s69 = sor.u32 %s67, %s68
      %p70 = scmp.eq.s32.totalorder %s69, 0
      %s72 = sadd.s32 %s71, 1
      %s73 = scalar_select %p70, %s71, %s72
      %p76 = pneg %p70
      %p77 = scmp.eq.s32.totalorder %s12, 1
      %p78 = por %p76, %p77
      %p79 = scmp.ne.s32.totalorder %s71, %s74
      %p80 = scmp.eq.s32.totalorder %s12, 0
      %p81 = por %p79, %p80
      %p82 = scmp.ne.s32.totalorder %s71, %s74
      %p83 = scmp.eq.s32.totalorder %s17, 1
      %p84 = por %p82, %p83
      %p85 = scmp.ne.s32.totalorder %s74, %s75
      %p86 = scmp.eq.s32.totalorder %s17, 0
      %p87 = por %p85, %p86
      %p88 = scmp.ne.s32.totalorder %s74, %s75
      %p89 = scmp.eq.s32.totalorder %s18, 1
      %p90 = por %p88, %p89
      %p92 = scmp.ne.s32.totalorder %s75, %s91
      %p93 = scmp.eq.s32.totalorder %s18, 0
      %p94 = por %p92, %p93
      %s95 = ssub.s32 %s21, %s30
      %p96 = scmp.eq.s32.totalorder %s95, 0
      %s98 = sadd.s32 %s97, 1
      %s99 = scalar_select %p96, %s97, %s98
      %p102 = pneg %p96
      %p103 = scmp.eq.s32.totalorder %s12, 1
      %p104 = por %p102, %p103
      %p105 = scmp.ne.s32.totalorder %s97, %s100
      %p106 = scmp.eq.s32.totalorder %s12, 0
      %p107 = por %p105, %p106
      %p108 = scmp.ne.s32.totalorder %s97, %s100
      %p109 = scmp.eq.s32.totalorder %s17, 1
      %p110 = por %p108, %p109
      %p111 = scmp.ne.s32.totalorder %s100, %s101
      %p112 = scmp.eq.s32.totalorder %s17, 0
      %p113 = por %p111, %p112
      %p114 = scmp.ne.s32.totalorder %s100, %s101
      %p115 = scmp.eq.s32.totalorder %s18, 1
      %p116 = por %p114, %p115
      %p118 = scmp.ne.s32.totalorder %s101, %s117
      %p119 = scmp.eq.s32.totalorder %s18, 0
      %p120 = por %p118, %p119
      %s121 = ssub.s32 %s21, %s30
      %p122 = scmp.eq.s32.totalorder %s121, 0
      %s124 = sadd.s32 %s123, 1
      %s125 = scalar_select %p122, %s123, %s124
      %p128 = pneg %p122
      %p129 = scmp.eq.s32.totalorder %s12, 1
      %p130 = por %p128, %p129
      %p131 = scmp.ne.s32.totalorder %s123, %s126
      %p132 = scmp.eq.s32.totalorder %s12, 0
      %p133 = por %p131, %p132
      %p134 = scmp.ne.s32.totalorder %s123, %s126
      %p135 = scmp.eq.s32.totalorder %s17, 1
      %p136 = por %p134, %p135
      %p137 = scmp.ne.s32.totalorder %s126, %s127
      %p138 = scmp.eq.s32.totalorder %s17, 0
      %p139 = por %p137, %p138
      %p140 = scmp.ne.s32.totalorder %s126, %s127
      %p141 = scmp.eq.s32.totalorder %s18, 1
      %p142 = por %p140, %p141
      %p144 = scmp.ne.s32.totalorder %s127, %s143
      %p145 = scmp.eq.s32.totalorder %s18, 0
      %p146 = por %p144, %p145
      %s147 = ssub.s32 %s20, %s34
      %p148 = scmp.eq.s32.totalorder %s147, 0
      %s150 = sadd.s32 %s149, 1
      %s151 = scalar_select %p148, %s149, %s150
      %p154 = pneg %p148
      %p155 = scmp.eq.s32.totalorder %s12, 1
      %p156 = por %p154, %p155
      %p157 = scmp.ne.s32.totalorder %s149, %s152
      %p158 = scmp.eq.s32.totalorder %s12, 0
      %p159 = por %p157, %p158
      %p160 = scmp.ne.s32.totalorder %s149, %s152
      %p161 = scmp.eq.s32.totalorder %s17, 1
      %p162 = por %p160, %p161
      %p163 = scmp.ne.s32.totalorder %s152, %s153
      %p164 = scmp.eq.s32.totalorder %s17, 0
      %p165 = por %p163, %p164
      %p166 = scmp.ne.s32.totalorder %s152, %s153
      %p167 = scmp.eq.s32.totalorder %s18, 1
      %p168 = por %p166, %p167
      %p170 = scmp.ne.s32.totalorder %s153, %s169
      %p171 = scmp.eq.s32.totalorder %s18, 0
      %p172 = por %p170, %p171
      %s173 = ssub.s32 %s20, %s34
      %p174 = scmp.eq.s32.totalorder %s173, 0
      %s176 = sadd.s32 %s175, 1
      %s177 = scalar_select %p174, %s175, %s176
      %p180 = pneg %p174
      %p181 = scmp.eq.s32.totalorder %s12, 1
      %p182 = por %p180, %p181
      %p183 = scmp.ne.s32.totalorder %s175, %s178
      %p184 = scmp.eq.s32.totalorder %s12, 0
      %p185 = por %p183, %p184
      %p186 = scmp.ne.s32.totalorder %s175, %s178
      %p187 = scmp.eq.s32.totalorder %s17, 1
      %p188 = por %p186, %p187
      %p189 = scmp.ne.s32.totalorder %s178, %s179
      %p190 = scmp.eq.s32.totalorder %s17, 0
      %p191 = por %p189, %p190
      %p192 = scmp.ne.s32.totalorder %s178, %s179
      %p193 = scmp.eq.s32.totalorder %s18, 1
      %p194 = por %p192, %p193
      %p196 = scmp.ne.s32.totalorder %s179, %s195
      %p197 = scmp.eq.s32.totalorder %s18, 0
      %p198 = por %p196, %p197
      %s199 = ssub.s32 %s19, %s38
      %s200 = ssub.s32 %s20, %s34
      %s201 = sor.u32 %s199, %s200
      %p202 = scmp.eq.s32.totalorder %s201, 0
      %s204 = sadd.s32 %s203, 1
      %s205 = scalar_select %p202, %s203, %s204
      %p208 = pneg %p202
      %p209 = scmp.eq.s32.totalorder %s12, 1
      %p210 = por %p208, %p209
      %p211 = scmp.ne.s32.totalorder %s203, %s206
      %p212 = scmp.eq.s32.totalorder %s12, 0
      %p213 = por %p211, %p212
      %p214 = scmp.ne.s32.totalorder %s203, %s206
      %p215 = scmp.eq.s32.totalorder %s17, 1
      %p216 = por %p214, %p215
      %p217 = scmp.ne.s32.totalorder %s206, %s207
      %p218 = scmp.eq.s32.totalorder %s17, 0
      %p219 = por %p217, %p218
      %p220 = scmp.ne.s32.totalorder %s206, %s207
      %p221 = scmp.eq.s32.totalorder %s18, 1
      %p222 = por %p220, %p221
      %p224 = scmp.ne.s32.totalorder %s207, %s223
      %p225 = scmp.eq.s32.totalorder %s18, 0
      %p226 = por %p224, %p225
      %p227 = scmp.le.s32.totalorder 1, %s12
      %p228 = scmp.lt.s32.totalorder %s12, 3
      %p229 = pnand %p227, %p228
      %p230 = pneg %p229
      // Predicated region
      $region9: #{forward.50} parent=5 // pred_check
        _
      $region10: #{forward.50} parent=5 // pred_check_branch
        %232 = sbr.rel (%p229) target = $region12
      $region11: #{forward.50} parent=5 // pred_region
        %s233 = ssub.s32 %s12, 1
        // Predicated region
        $region13: #{forward.50} parent=11 // pred_check
          %p234 = pneg %p59
        $region14: #{forward.50} parent=11 // pred_check_branch
          %236 = sbr.rel (%p234) target = $region16
        $region15: #{forward.50} parent=11 // pred_region
          %p237 = scmp.lt.s32.totalorder %s22, 0
          %s238 = scalar_select %p237, %s22, 0
          %p239 = scmp.lt.s32.totalorder %s24, 0
          %s240 = scalar_select %p239, %s24, 0
          %s241 = sadd.s32 %s240, %s238
          %s242 = scalar_lea.vmem %s0, %s241
        $region16: #{forward.50} parent=11 // pred_fallthru
          _
        // Predicated region
        $region17: #{forward.50} parent=11 // pred_check
          %p243 = pneg %p113
        $region18: #{forward.50} parent=11 // pred_check_branch
          %245 = sbr.rel (%p243) target = $region20
        $region19: #{forward.50} parent=11 // pred_region
          %p246 = scmp.lt.s32.totalorder %s24, 0
          %s247 = scalar_select %p246, %s24, 0
          %s248 = scalar_lea.vmem %s2, %s247
        $region20: #{forward.50} parent=11 // pred_fallthru
          _
        // Predicated region
        $region21: #{forward.50} parent=11 // pred_check
          %p249 = pneg %p139
        $region22: #{forward.50} parent=11 // pred_check_branch
          %251 = sbr.rel (%p249) target = $region24
        $region23: #{forward.50} parent=11 // pred_region
          %p252 = scmp.lt.s32.totalorder %s24, 0
          %s253 = scalar_select %p252, %s24, 0
          %s254 = scalar_lea.vmem %s3, %s253
        $region24: #{forward.50} parent=11 // pred_fallthru
          _
      $region12: #{forward.50} parent=5 // pred_fallthru
        _
      %p255 = scmp.lt.s32.totalorder %s12, 2
      // Predicated region
      $region25: #{forward.50} parent=5 // pred_check
        %p256 = pneg %p255
      $region26: #{forward.50} parent=5 // pred_check_branch
        %258 = sbr.rel (%p256) target = $region28
      $region27: #{forward.50} parent=5 // pred_region
        // Predicated region
        $region29: #{forward.50} parent=27 // pred_check
          %p259 = pneg %p81
        $region30: #{forward.50} parent=27 // pred_check_branch
          %261 = sbr.rel (%p259) target = $region32
        $region31: #{forward.50} parent=27 // pred_region
          %s262 = sand.u32 %s71, 1
          %s263 = sand.u32 %s71, 1
          %s264 = smul.addr %s263, 32
          %s265 = scalar_lea.vmem [#allocation3], %s264
          %s266 = smul.u32 4, %s21
          %s267 = smul.u32 2, %s20
          %s268 = smul.addr %s266, 4
          %s269 = sadd.s32 %s267, %s268
          %s270 = smul.addr %s269, 4
          %s271 = scalar_lea.vmem %s1, %s270
          // Predicated region
          $region33: #{forward.50} parent=31 // pred_check
            _
          $region34: #{forward.50} parent=31 // pred_check_branch
            %273 = sbr.rel (0) target = $region36
          $region35: #{forward.50} parent=31 // pred_region
            // Predicated region
            $region37: #{forward.50} parent=35 // pred_check
              _
            $region38: #{forward.50} parent=35 // pred_check_branch
              %275 = sbr.rel (0) target = $region40
            $region39: #{forward.50} parent=35 // pred_region
              // Predicated region
              $region52: #{forward.50} parent=39 // pred_check
                _
              $region53: #{forward.50} parent=39 // pred_check_branch
                %296 = sbr.rel (0) target = $region55
              $region54: #{forward.50} parent=39 // pred_region
                loop: start=0, step=1, limit=1
                $region56: #{forward.50} parent=54 // loop_pre_header
                  _
                $region57: #{forward.50} parent=54 // loop_header
                  %s298 = sphi 0, %s302
                  %p299 = scmp.ge.s32.totalorder %s298, 1
                  %s303 = sphi %s271, %s271
                  %s304 = sphi %s265, %s265
                $region58: #{forward.50} parent=54 // loop_header_branch
                  %301 = sbr.rel (%p299) target = $region62
                $region59: #{forward.50} parent=54 // loop_body
                  %v305 = vld [vmem:[%s303] sm:$0xff]
                  %306 = vst [vmem:[%s304] sm:$0xff] %v305
                  %v307 = vld [vmem:[%s303 + $0x10] sm:$0xff]
                  %308 = vst [vmem:[%s304 + $0x8] sm:$0xff] %v307
                  %v309 = vld [vmem:[%s303 + $0x20] sm:$0xff]
                  %310 = vst [vmem:[%s304 + $0x10] sm:$0xff] %v309
                  %v311 = vld [vmem:[%s303 + $0x30] sm:$0xff]
                  %312 = vst [vmem:[%s304 + $0x18] sm:$0xff] %v311
                $region60: #{forward.50} parent=54 // loop_footer
                  %s302 = sadd.s32 1, %s298
                $region61: #{forward.50} parent=54 // loop_footer_branch
                  %297 = sbr.rel target = $region57
                $region62: #{forward.50} parent=54 // loop_exit
                  _
              $region55: #{forward.50} parent=39 // pred_fallthru
                _
              // Predicated region
              $region63: #{forward.50} parent=39 // pred_check
                _
              $region64: #{forward.50} parent=39 // pred_check_branch
                %314 = sbr.rel target = $region66
              $region65: #{forward.50} parent=39 // pred_region
                _
              $region66: #{forward.50} parent=39 // pred_fallthru
                _
            $region40: #{forward.50} parent=35 // pred_fallthru
              _
            // Predicated region
            $region41: #{forward.50} parent=35 // pred_check
              _
            $region42: #{forward.50} parent=35 // pred_check_branch
              %277 = sbr.rel target = $region44
            $region43: #{forward.50} parent=35 // pred_region
              loop: start=0, step=1, limit=1
              $region45: #{forward.50} parent=43 // loop_pre_header
                _
              $region46: #{forward.50} parent=43 // loop_header
                %s280 = sphi 0, %s284
                %p281 = scmp.ge.s32.totalorder %s280, 1
                %s285 = sphi %s271, %s271
                %s286 = sphi %s265, %s265
              $region47: #{forward.50} parent=43 // loop_header_branch
                %283 = sbr.rel (%p281) target = $region51
              $region48: #{forward.50} parent=43 // loop_body
                %v287 = vld [vmem:[%s285] sm:$0xff]
                %288 = vst [vmem:[%s286] sm:$0xff] %v287
                %v289 = vld [vmem:[%s285 + $0x10] sm:$0xff]
                %290 = vst [vmem:[%s286 + $0x8] sm:$0xff] %v289
                %v291 = vld [vmem:[%s285 + $0x20] sm:$0xff]
                %292 = vst [vmem:[%s286 + $0x10] sm:$0xff] %v291
                %v293 = vld [vmem:[%s285 + $0x30] sm:$0xff]
                %294 = vst [vmem:[%s286 + $0x18] sm:$0xff] %v293
              $region49: #{forward.50} parent=43 // loop_footer
                %s284 = sadd.s32 1, %s280
              $region50: #{forward.50} parent=43 // loop_footer_branch
                %279 = sbr.rel target = $region46
              $region51: #{forward.50} parent=43 // loop_exit
                _
            $region44: #{forward.50} parent=35 // pred_fallthru
              _
          $region36: #{forward.50} parent=31 // pred_fallthru
            _
          %315 = vnop
        $region32: #{forward.50} parent=27 // pred_fallthru
          _
        // Predicated region
        $region67: #{forward.50} parent=27 // pred_check
          %p316 = pneg %p159
        $region68: #{forward.50} parent=27 // pred_check_branch
          %318 = sbr.rel (%p316) target = $region70
        $region69: #{forward.50} parent=27 // pred_region
          %s319 = smul.u32 2, %s20
          %p320 = scmp.lt.s32.totalorder %s319, 3
          %s321 = scalar_select %p320, %s319, 3
          %s322 = scalar_lea.vmem %s4, %s321
          %s323 = smul.u32 2, %s20
        $region70: #{forward.50} parent=27 // pred_fallthru
          _
        // Predicated region
        $region71: #{forward.50} parent=27 // pred_check
          %p324 = pneg %p185
        $region72: #{forward.50} parent=27 // pred_check_branch
          %326 = sbr.rel (%p324) target = $region74
        $region73: #{forward.50} parent=27 // pred_region
          %s327 = smul.u32 2, %s20
          %p328 = scmp.lt.s32.totalorder %s327, 3
          %s329 = scalar_select %p328, %s327, 3
          %s330 = scalar_lea.vmem %s5, %s329
          %s331 = smul.u32 2, %s20
        $region74: #{forward.50} parent=27 // pred_fallthru
          _
      $region28: #{forward.50} parent=5 // pred_fallthru
        _
      %p332 = scmp.le.s32.totalorder 1, %s12
      %p333 = scmp.lt.s32.totalorder %s12, 3
      %p334 = pnand %p332, %p333
      %p335 = pneg %p334
      // Predicated region
      $region75: #{forward.50} parent=5 // pred_check
        _
      $region76: #{forward.50} parent=5 // pred_check_branch
        %337 = sbr.rel (%p334) target = $region78
      $region77: #{forward.50} parent=5 // pred_region
        %s338 = ssub.s32 %s12, 1
        %s339 = sand.u32 %s74, 1
        %s340 = sand.u32 %s74, 1
        %s341 = smul.addr %s340, 32
        %s342 = scalar_lea.vmem [#allocation3], %s341
        // Predicated region
        $region79: #{forward.50} parent=77 // pred_check
          %p343 = pneg %p87
        $region80: #{forward.50} parent=77 // pred_check_branch
          %345 = sbr.rel (%p343) target = $region82
        $region81: #{forward.50} parent=77 // pred_region
          _
        $region82: #{forward.50} parent=77 // pred_fallthru
          _
        %p346 = scmp.lt.s32.totalorder %s22, 0
        %s347 = scalar_select %p346, %s22, 0
        %p348 = scmp.lt.s32.totalorder %s24, 0
        %s349 = scalar_select %p348, %s24, 0
        %s350 = sadd.s32 %s349, %s347
        %s351 = scalar_lea.vmem %s0, %s350
        %p352 = pneg %p59
        %p353 = pneg %p56
        %s354 = sand.u32 %s74, 1
        %s355 = sand.u32 %s74, 1
        %s356 = smul.addr %s355, 32
        %s357 = scalar_lea.vmem [#allocation3], %s356
        %p358 = pneg %p87
        %p359 = pneg %p84
        %p360 = scmp.lt.s32.totalorder %s24, 0
        %s361 = scalar_select %p360, %s24, 0
        %s362 = scalar_lea.vmem %s2, %s361
        %p363 = pneg %p113
        %p364 = pneg %p110
        %p365 = scmp.lt.s32.totalorder %s24, 0
        %s366 = scalar_select %p365, %s24, 0
        %s367 = scalar_lea.vmem %s3, %s366
        %p368 = pneg %p139
        %p369 = pneg %p136
        %s370 = smul.u32 2, %s23
        %p371 = scmp.lt.s32.totalorder %s370, 3
        %s372 = scalar_select %p371, %s370, 3
        %s373 = scalar_lea.vmem %s4, %s372
        %p374 = pneg %p165
        %p375 = pneg %p162
        %s376 = smul.u32 2, %s23
        %p377 = scmp.lt.s32.totalorder %s376, 3
        %s378 = scalar_select %p377, %s376, 3
        %s379 = scalar_lea.vmem %s5, %s378
        %p380 = pneg %p191
        %p381 = pneg %p188
        %p382 = pneg %p219
        %p383 = pneg %p216
        %s384 = smul.u32 2, %s23
        %p385 = scmp.lt.s32.totalorder %s22, 0
        %s386 = scalar_select %p385, %s22, 0
        %p387 = scmp.lt.s32.totalorder %s384, 3
        %s388 = scalar_select %p387, %s384, 3
        %s389 = smul.addr %s386, 4
        %s390 = sadd.s32 %s388, %s389
        %s391 = scalar_lea.vmem %s6, %s390
        %p392 = scmp.lt.s32.totalorder %s22, 0
        %s393 = scalar_select %p392, %s22, 0
        %p394 = scmp.lt.s32.totalorder %s24, 0
        %s395 = scalar_select %p394, %s24, 0
        %s396 = sadd.s32 %s395, %s393
        %s397 = scalar_lea.vmem %s0, %s396
        %s398 = smul.u32 4, %s24
        %s399 = smul.u32 2, %s23
        %p400 = scmp.lt.s32.totalorder %s24, 0
        %s401 = scalar_select %p400, %s24, 0
        %s402 = scalar_lea.vmem %s2, %s401
        %p403 = scmp.lt.s32.totalorder %s24, 0
        %s404 = scalar_select %p403, %s24, 0
        %s405 = scalar_lea.vmem %s3, %s404
        %s406 = smul.u32 2, %s23
        %p407 = scmp.lt.s32.totalorder %s406, 3
        %s408 = scalar_select %p407, %s406, 3
        %s409 = scalar_lea.vmem %s4, %s408
        %s410 = smul.u32 2, %s23
        %s411 = smul.u32 2, %s23
        %p412 = scmp.lt.s32.totalorder %s411, 3
        %s413 = scalar_select %p412, %s411, 3
        %s414 = scalar_lea.vmem %s5, %s413
        %s415 = smul.u32 2, %s23
        %s416 = smul.u32 2, %s23
        %p417 = scmp.lt.s32.totalorder %s22, 0
        %s418 = scalar_select %p417, %s22, 0
        %p419 = scmp.lt.s32.totalorder %s416, 3
        %s420 = scalar_select %p419, %s416, 3
        %s421 = smul.addr %s418, 4
        %s422 = sadd.s32 %s420, %s421
        %s423 = scalar_lea.vmem %s6, %s422
        %s424 = smul.u32 2, %s23
        %p426 = scmp.eq.s32.totalorder %s24, 0
        // Predicated region
        $region83: #{forward.50} parent=77 // pred_check
          %p427 = pneg %p426
        $region84: #{forward.50} parent=77 // pred_check_branch
          %429 = sbr.rel (%p427) target = $region86
        $region85: #{forward.50} parent=77 // pred_region
          %430 = vst [vmem:[#allocation2] sm:$0xf] 0.0
        $region86: #{forward.50} parent=77 // pred_fallthru
          _
        %v431 = vld [vmem:[%s397] sm:$0x1]
        %v432 = vunpack.c.l.bf16 %v431
        %v433 = vld [vmem:[%s402] sm:$0x1]
        %v435 = vlaneseq
        %v436 = vshrl.u32 %v435, 7
        %v437 = vsub.s32 0, %v436
        %v438 = vrot.slane %v433, %v437
        %v440 = vmul.f32 %v432, %v438
        %v441 = vld [vmem:[%s405] sm:$0x1]
        %v443 = vlaneseq
        %v444 = vshrl.u32 %v443, 7
        %v445 = vsub.s32 0, %v444
        %v446 = vrot.slane %v441, %v445
        %v448 = vadd.f32 %v440, %v446
        %v449 = vpack.c.bf16 %v448, %v448
        %v450 = vld [vmem:[#allocation2] sm:$0xf]
        %v451 = vld [vmem:[%s342] sm:$0xff]
        %v452 = vld [vmem:[%s342 + $0x8] sm:$0xff]
        %v453 = vld [vmem:[%s342 + $0x10] sm:$0xff]
        %v454 = vld [vmem:[%s342 + $0x18] sm:$0xff]
        %v459 = vunpack.c.l.b16 %v451
        %v460 = vunpack.c.h.b16 %v451
        %v461 = vunpack.c.l.b16 %v452
        %v462 = vunpack.c.h.b16 %v452
        %v463 = vunpack.c.l.b16 %v453
        %v464 = vunpack.c.h.b16 %v453
        %v465 = vunpack.c.l.b16 %v454
        %v466 = vunpack.c.h.b16 %v454
        %v467 = vpack.c.b16 %v461, %v459
        %v468 = vpack.c.b16 %v462, %v460
        %v469 = vpack.c.b16 %v465, %v463
        %v470 = vpack.c.b16 %v466, %v464
        %vm475 = vcmask 261120
        %v477 = vsel %vm475, %v449, 0
        %479 = vmatprep.subr.bf16.mxu0 %v468
        %480 = vmatpush1.bf16.msra.mxu0 %v467
        %481 = vmatprep.subr.bf16.mxu0 %v470
        %482 = vmatpush1.bf16.msra.mxu0 %v469
        %483 = vmatprep.subr.bf16.mxu0 0
        %484 = vmatpush1.bf16.msra.mxu0 0
        %485 = vmatprep.subr.bf16.mxu0 0
        %486 = vmatpush1.bf16.msra.mxu0 0
        %487 = vmatprep.subr.bf16.mxu0 0
        %488 = vmatpush1.bf16.msra.mxu0 0
        %489 = vmatprep.subr.bf16.mxu0 0
        %490 = vmatpush1.bf16.msra.mxu0 0
        %491 = vmatprep.subr.bf16.mxu0 0
        %492 = vmatpush1.bf16.msra.mxu0 0
        %493 = vmatprep.subr.bf16.mxu0 0
        %494 = vmatpush1.bf16.msra.mxu0 0
        %495 = vmatprep.subr.bf16.mxu0 0
        %496 = vmatpush1.bf16.msra.mxu0 0
        %497 = vmatprep.subr.bf16.mxu0 0
        %498 = vmatpush1.bf16.msra.mxu0 0
        %499 = vmatprep.subr.bf16.mxu0 0
        %500 = vmatpush1.bf16.msra.mxu0 0
        %501 = vmatprep.subr.bf16.mxu0 0
        %502 = vmatpush1.bf16.msra.mxu0 0
        %503 = vmatprep.subr.bf16.mxu0 0
        %504 = vmatpush1.bf16.msra.mxu0 0
        %505 = vmatprep.subr.bf16.mxu0 0
        %506 = vmatpush1.bf16.msra.mxu0 0
        %507 = vmatprep.subr.bf16.mxu0 0
        %508 = vmatpush1.bf16.msra.mxu0 0
        %509 = vmatprep.subr.bf16.mxu0 0
        %510 = vmatpush1.bf16.msra.mxu0 0
        %511 = vmatprep.mubr.bf16.mxu0 0
        %512 = vmatmul.mubr.bf16.gmra.mrb[0].mxu0 %v477
        %v513 = vpop.f32.mrb[0].mxu0
        %v514 = vadd.f32 0.0, %v513
        %v515 = vpop.f32.mrb[0].mxu0
        %v516 = vadd.f32 0.0, %v515
        %v517 = vpop.f32.mrb[0].mxu0
        %v518 = vpop.f32.mrb[0].mxu0
        %519 = vdwg.mxu0
        %v522 = vcombine.low %v514, %v516
        %v524 = vunpack.c.l.s4 1983009808
        %v525 = vunpack.c.0.s8 %v524
        %v526 = vlaneseq
        %v527 = vshrl.u32 %v526, 7
        %v528 = vsub.s32 %v525, %v527
        %v529 = vrot.slane %v522, %v528
        %v531 = vadd.f32 %v450, %v529
        %532 = vst [vmem:[#allocation2] sm:$0xf] %v531
        // Predicated region
        $region87: #{forward.50} parent=77 // pred_check
          %p533 = pneg %p426
        $region88: #{forward.50} parent=77 // pred_check_branch
          %535 = sbr.rel (%p533) target = $region90
        $region89: #{forward.50} parent=77 // pred_region
          %v536 = vld [vmem:[#allocation2] sm:$0xf]
          %v537 = vld [vmem:[%s409] sm:$0x3]
          %v539 = vlaneseq
          %v540 = vshrl.u32 %v539, 7
          %v541 = vsub.s32 0, %v540
          %v542 = vrot.slane %v537, %v541
          %v543 = vlaneseq
          %v544 = vshrl.u32 %v543, 7
          %v545 = vsub.s32 1, %v544
          %v546 = vrot.slane %v537, %v545
          %v547 = vcombine.low %v542, %v546
          %v549 = vunpack.c.l.s4 1983009808
          %v550 = vunpack.c.0.s8 %v549
          %v551 = vlaneseq
          %v552 = vshrl.u32 %v551, 7
          %v553 = vsub.s32 %v550, %v552
          %v554 = vrot.slane %v547, %v553
          %v556 = vmul.f32 %v536, %v554
          %v557 = vld [vmem:[%s414] sm:$0x3]
          %v559 = vlaneseq
          %v560 = vshrl.u32 %v559, 7
          %v561 = vsub.s32 0, %v560
          %v562 = vrot.slane %v557, %v561
          %v563 = vlaneseq
          %v564 = vshrl.u32 %v563, 7
          %v565 = vsub.s32 1, %v564
          %v566 = vrot.slane %v557, %v565
          %v567 = vcombine.low %v562, %v566
          %v569 = vunpack.c.l.s4 1983009808
          %v570 = vunpack.c.0.s8 %v569
          %v571 = vlaneseq
          %v572 = vshrl.u32 %v571, 7
          %v573 = vsub.s32 %v570, %v572
          %v574 = vrot.slane %v567, %v573
          %v576 = vadd.f32 %v556, %v574
          %v577 = vmax.f32 %v576, 0.0
          %v580 = vunpack.c.l.s4 1983009808
          %v581 = vunpack.c.0.s8 %v580
          %v582 = vlaneseq
          %v583 = vshrl.u32 %v582, 7
          %v584 = vsub.s32 %v581, %v583
          %v585 = vrot.slane %v577, %v584
          %v586 = vcombine.high %v585, %v585
          %v589 = vpack.c.bf16 %v585, %v585
          %v590 = vpack.c.bf16 %v586, %v586
          %v593 = vcombine.low %v589, %v590
          %v595 = vunpack.c.l.s4 1966171168
          %v596 = vunpack.c.0.s8 %v595
          %v597 = vlaneseq
          %v598 = vshrl.u32 %v597, 7
          %v599 = vsub.s32 %v596, %v598
          %v600 = vrot.slane %v593, %v599
          %v602 = vunpack.c.l.s4 1966171168
          %v603 = vunpack.c.0.s8 %v602
          %v604 = vlaneseq
          %v605 = vshrl.u32 %v604, 7
          %v606 = vsub.s32 %v603, %v605
          %v607 = vrot.slane %v600, %v606
          %609 = vst [vmem:[%s423] sm:$0x3] %v607
        $region90: #{forward.50} parent=77 // pred_fallthru
          _
        %s610 = smul.u32 2, %s23
        %p611 = scmp.lt.s32.totalorder %s22, 0
        %s612 = scalar_select %p611, %s22, 0
        %p613 = scmp.lt.s32.totalorder %s610, 3
        %s614 = scalar_select %p613, %s610, 3
        %s615 = smul.addr %s612, 4
        %s616 = sadd.s32 %s614, %s615
        %s617 = scalar_lea.vmem %s6, %s616
        // Predicated region
        $region91: #{forward.50} parent=77 // pred_check
          %p618 = pneg %p216
        $region92: #{forward.50} parent=77 // pred_check_branch
          %620 = sbr.rel (%p618) target = $region94
        $region93: #{forward.50} parent=77 // pred_region
          %s621 = smul.u32 2, %s23
        $region94: #{forward.50} parent=77 // pred_fallthru
          _
      $region78: #{forward.50} parent=5 // pred_fallthru
        _
      %p622 = scmp.le.s32.totalorder 2, %s12
      // Predicated region
      $region95: #{forward.50} parent=5 // pred_check
        %p623 = pneg %p622
      $region96: #{forward.50} parent=5 // pred_check_branch
        %625 = sbr.rel (%p623) target = $region98
      $region97: #{forward.50} parent=5 // pred_region
        %s626 = ssub.s32 %s12, 2
        // Predicated region
        $region99: #{forward.50} parent=97 // pred_check
          %p627 = pneg %p222
        $region100: #{forward.50} parent=97 // pred_check_branch
          %629 = sbr.rel (%p627) target = $region102
        $region101: #{forward.50} parent=97 // pred_region
          %s630 = smul.u32 2, %s26
          %p631 = scmp.lt.s32.totalorder %s25, 0
          %s632 = scalar_select %p631, %s25, 0
          %p633 = scmp.lt.s32.totalorder %s630, 3
          %s634 = scalar_select %p633, %s630, 3
          %s635 = smul.addr %s632, 4
          %s636 = sadd.s32 %s634, %s635
          %s637 = scalar_lea.vmem %s6, %s636
        $region102: #{forward.50} parent=97 // pred_fallthru
          _
      $region98: #{forward.50} parent=5 // pred_fallthru
        _
    $region6: #{forward.50} parent=1 // loop_footer
      %s16 = sadd.s32 1, %s12
    $region7: #{forward.50} parent=1 // loop_footer_branch
      %11 = sbr.rel target = $region3
    $region8: #{forward.50} parent=1 // loop_exit
      _

// kernel: forward.51
$region0: #{forward.51}
  #allocation0 [shape = 'u32[]', space=smem, size = 0x4, offset = 0x4, fixed_abs, tag = 'smem constant byte address 0x4 - core index']
  #allocation1 [shape = 'u32[144,128]{1,0:T(1,128)}', space=vmem, size = 0x12000, scoped, tag = 'internal scratch']
  #allocation2 [shape = 'f32[2,40]{1,0:T(2,128)}', space=vmem, size = 0x400, scoped, tag = 'scratch operand']
  %s0 = inlined_call_operand.vmem [shape: bf16[2,512], index: 0, kind: input, shape index: {}]
  %s1 = inlined_call_operand.vmem [shape: bf16[512,40], index: 1, kind: input, shape index: {}]
  %s2 = inlined_call_operand.vmem [shape: f32[1,40], index: 2, kind: input, shape index: {}]
  %s3 = inlined_call_operand.vmem [shape: f32[1,40], index: 3, kind: input, shape index: {}]
  %s4 = inlined_call_operand.vmem [shape: f32[2,40], index: 4, kind: output, shape index: {}]
  %s5 = sld [smem:[#allocation0]]
  $region34: #{forward.51} parent=0
    _
  %s7 = ssub.s32 1, %s5
  %s8 = scalar_select 0, %s7, %s5
  // Predicated region
  $region2: #{forward.51} parent=0 // pred_check
    _
  $region3: #{forward.51} parent=0 // pred_check_branch
    %10 = sbr.rel (0) target = $region5
  $region4: #{forward.51} parent=0 // pred_region
    _
  $region5: #{forward.51} parent=0 // pred_fallthru
    _
  // Predicated region
  $region6: #{forward.51} parent=0 // pred_check
    _
  $region7: #{forward.51} parent=0 // pred_check_branch
    %12 = sbr.rel (0) target = $region9
  $region8: #{forward.51} parent=0 // pred_region
    _
  $region9: #{forward.51} parent=0 // pred_fallthru
    _
  // Predicated region
  $region10: #{forward.51} parent=0 // pred_check
    _
  $region11: #{forward.51} parent=0 // pred_check_branch
    %14 = sbr.rel (0) target = $region13
  $region12: #{forward.51} parent=0 // pred_region
    _
  $region13: #{forward.51} parent=0 // pred_fallthru
    _
  // Predicated region
  $region14: #{forward.51} parent=0 // pred_check
    _
  $region15: #{forward.51} parent=0 // pred_check_branch
    %16 = sbr.rel (0) target = $region17
  $region16: #{forward.51} parent=0 // pred_region
    _
  $region17: #{forward.51} parent=0 // pred_fallthru
    _
  %p18 = scmp.eq.s32.totalorder 0, 0
  // Predicated region
  $region18: #{forward.51} parent=0 // pred_check
    %p19 = pneg %p18
  $region19: #{forward.51} parent=0 // pred_check_branch
    %21 = sbr.rel (%p19) target = $region21
  $region20: #{forward.51} parent=0 // pred_region
    %vm22 = vcmask 320512
    %23 = vst.msk [vmem:[#allocation2] sm:$0x3] %vm22, 0.0
  $region21: #{forward.51} parent=0 // pred_fallthru
    _
  %v24 = vld [vmem:[%s0] sm:$0xf]
  %v25 = vld [vmem:[#allocation2] sm:$0x3]
  %v26 = vld [vmem:[%s1] sm:$0xf]
  %v27 = vld [vmem:[%s1 + $0x4] sm:$0xf]
  %v28 = vld [vmem:[%s1 + $0x8] sm:$0xf]
  %v29 = vld [vmem:[%s1 + $0xc] sm:$0xf]
  %v30 = vld [vmem:[%s1 + $0x10] sm:$0xf]
  %v31 = vld [vmem:[%s1 + $0x14] sm:$0xf]
  %v32 = vld [vmem:[%s1 + $0x18] sm:$0xf]
  %v33 = vld [vmem:[%s1 + $0x1c] sm:$0xf]
  %v34 = vld [vmem:[%s1 + $0x20] sm:$0xf]
  %v35 = vld [vmem:[%s1 + $0x24] sm:$0xf]
  %v36 = vld [vmem:[%s1 + $0x28] sm:$0xf]
  %v37 = vld [vmem:[%s1 + $0x2c] sm:$0xf]
  %v38 = vld [vmem:[%s1 + $0x30] sm:$0xf]
  %v39 = vld [vmem:[%s1 + $0x34] sm:$0xf]
  %v40 = vld [vmem:[%s1 + $0x38] sm:$0xf]
  %v41 = vld [vmem:[%s1 + $0x3c] sm:$0xf]
  %v42 = vld [vmem:[%s1 + $0x40] sm:$0xf]
  %v43 = vld [vmem:[%s1 + $0x44] sm:$0xf]
  %v44 = vld [vmem:[%s1 + $0x48] sm:$0xf]
  %v45 = vld [vmem:[%s1 + $0x4c] sm:$0xf]
  %v46 = vld [vmem:[%s1 + $0x50] sm:$0xf]
  %v47 = vld [vmem:[%s1 + $0x54] sm:$0xf]
  %v48 = vld [vmem:[%s1 + $0x58] sm:$0xf]
  %v49 = vld [vmem:[%s1 + $0x5c] sm:$0xf]
  %v50 = vld [vmem:[%s1 + $0x60] sm:$0xf]
  %v51 = vld [vmem:[%s1 + $0x64] sm:$0xf]
  %v52 = vld [vmem:[%s1 + $0x68] sm:$0xf]
  %v53 = vld [vmem:[%s1 + $0x6c] sm:$0xf]
  %v54 = vld [vmem:[%s1 + $0x70] sm:$0xf]
  %v55 = vld [vmem:[%s1 + $0x74] sm:$0xf]
  %v56 = vld [vmem:[%s1 + $0x78] sm:$0xf]
  %v57 = vld [vmem:[%s1 + $0x7c] sm:$0xf]
  %v58 = vld [vmem:[%s1 + $0x80] sm:$0xf]
  %v59 = vld [vmem:[%s1 + $0x84] sm:$0xf]
  %v60 = vld [vmem:[%s1 + $0x88] sm:$0xf]
  %v61 = vld [vmem:[%s1 + $0x8c] sm:$0xf]
  %v62 = vld [vmem:[%s1 + $0x90] sm:$0xf]
  %v63 = vld [vmem:[%s1 + $0x94] sm:$0xf]
  %v64 = vld [vmem:[%s1 + $0x98] sm:$0xf]
  %v65 = vld [vmem:[%s1 + $0x9c] sm:$0xf]
  %v66 = vld [vmem:[%s1 + $0xa0] sm:$0xf]
  %v67 = vld [vmem:[%s1 + $0xa4] sm:$0xf]
  %v68 = vld [vmem:[%s1 + $0xa8] sm:$0xf]
  %v69 = vld [vmem:[%s1 + $0xac] sm:$0xf]
  %v70 = vld [vmem:[%s1 + $0xb0] sm:$0xf]
  %v71 = vld [vmem:[%s1 + $0xb4] sm:$0xf]
  %v72 = vld [vmem:[%s1 + $0xb8] sm:$0xf]
  %v73 = vld [vmem:[%s1 + $0xbc] sm:$0xf]
  %v74 = vld [vmem:[%s1 + $0xc0] sm:$0xf]
  %v75 = vld [vmem:[%s1 + $0xc4] sm:$0xf]
  %v76 = vld [vmem:[%s1 + $0xc8] sm:$0xf]
  %v77 = vld [vmem:[%s1 + $0xcc] sm:$0xf]
  %v78 = vld [vmem:[%s1 + $0xd0] sm:$0xf]
  %v79 = vld [vmem:[%s1 + $0xd4] sm:$0xf]
  %v80 = vld [vmem:[%s1 + $0xd8] sm:$0xf]
  %v81 = vld [vmem:[%s1 + $0xdc] sm:$0xf]
  %v82 = vld [vmem:[%s1 + $0xe0] sm:$0xf]
  %v83 = vld [vmem:[%s1 + $0xe4] sm:$0xf]
  %v84 = vld [vmem:[%s1 + $0xe8] sm:$0xf]
  %v85 = vld [vmem:[%s1 + $0xec] sm:$0xf]
  %v86 = vld [vmem:[%s1 + $0xf0] sm:$0xf]
  %v87 = vld [vmem:[%s1 + $0xf4] sm:$0xf]
  %v88 = vld [vmem:[%s1 + $0xf8] sm:$0xf]
  %v89 = vld [vmem:[%s1 + $0xfc] sm:$0xf]
  %v92 = vunpack.c.l.s4 1966171168
  %v93 = vunpack.c.0.s8 %v92
  %v94 = vlaneseq
  %v95 = vshrl.u32 %v94, 7
  %v96 = vsub.s32 %v93, %v95
  %v97 = vrot.slane %v24, %v96
  %v98 = vcombine.high %v97, %v97
  %v100 = vunpack.c.l.s4 1966171168
  %v101 = vunpack.c.0.s8 %v100
  %v102 = vlaneseq
  %v103 = vshrl.u32 %v102, 7
  %v104 = vsub.s32 %v101, %v103
  %v105 = vrot.slane %v97, %v104
  %v107 = vunpack.c.l.s4 1966171168
  %v108 = vunpack.c.0.s8 %v107
  %v109 = vlaneseq
  %v110 = vshrl.u32 %v109, 7
  %v111 = vsub.s32 %v108, %v110
  %v112 = vrot.slane %v98, %v111
  %v113 = vcombine.high %v105, %v105
  %v114 = vcombine.high %v112, %v112
  %v183 = vunpack.c.l.b16 %v26
  %v184 = vunpack.c.l.b16 %v27
  %v185 = vunpack.c.l.b16 %v28
  %v186 = vunpack.c.l.b16 %v29
  %v187 = vunpack.c.l.b16 %v30
  %v188 = vunpack.c.l.b16 %v31
  %v189 = vunpack.c.l.b16 %v32
  %v190 = vunpack.c.l.b16 %v33
  %v191 = vunpack.c.l.b16 %v34
  %v192 = vunpack.c.l.b16 %v35
  %v193 = vunpack.c.l.b16 %v36
  %v194 = vunpack.c.l.b16 %v37
  %v195 = vunpack.c.l.b16 %v38
  %v196 = vunpack.c.l.b16 %v39
  %v197 = vunpack.c.l.b16 %v40
  %v198 = vunpack.c.l.b16 %v41
  %v199 = vunpack.c.l.b16 %v42
  %v200 = vunpack.c.l.b16 %v43
  %v201 = vunpack.c.l.b16 %v44
  %v202 = vunpack.c.l.b16 %v45
  %v203 = vunpack.c.l.b16 %v46
  %v204 = vunpack.c.l.b16 %v47
  %v205 = vunpack.c.l.b16 %v48
  %v206 = vunpack.c.l.b16 %v49
  %v207 = vunpack.c.l.b16 %v50
  %v208 = vunpack.c.l.b16 %v51
  %v209 = vunpack.c.l.b16 %v52
  %v210 = vunpack.c.l.b16 %v53
  %v211 = vunpack.c.l.b16 %v54
  %v212 = vunpack.c.l.b16 %v55
  %v213 = vunpack.c.l.b16 %v56
  %v214 = vunpack.c.l.b16 %v57
  %v215 = vunpack.c.l.b16 %v58
  %v216 = vunpack.c.l.b16 %v59
  %v217 = vunpack.c.l.b16 %v60
  %v218 = vunpack.c.l.b16 %v61
  %v219 = vunpack.c.l.b16 %v62
  %v220 = vunpack.c.l.b16 %v63
  %v221 = vunpack.c.l.b16 %v64
  %v222 = vunpack.c.l.b16 %v65
  %v223 = vunpack.c.l.b16 %v66
  %v224 = vunpack.c.l.b16 %v67
  %v225 = vunpack.c.l.b16 %v68
  %v226 = vunpack.c.l.b16 %v69
  %v227 = vunpack.c.l.b16 %v70
  %v228 = vunpack.c.l.b16 %v71
  %v229 = vunpack.c.l.b16 %v72
  %v230 = vunpack.c.l.b16 %v73
  %v231 = vunpack.c.l.b16 %v74
  %v232 = vunpack.c.l.b16 %v75
  %v233 = vunpack.c.l.b16 %v76
  %v234 = vunpack.c.l.b16 %v77
  %v235 = vunpack.c.l.b16 %v78
  %v236 = vunpack.c.l.b16 %v79
  %v237 = vunpack.c.l.b16 %v80
  %v238 = vunpack.c.l.b16 %v81
  %v239 = vunpack.c.l.b16 %v82
  %v240 = vunpack.c.l.b16 %v83
  %v241 = vunpack.c.l.b16 %v84
  %v242 = vunpack.c.l.b16 %v85
  %v243 = vunpack.c.l.b16 %v86
  %v244 = vunpack.c.l.b16 %v87
  %v245 = vunpack.c.l.b16 %v88
  %v246 = vunpack.c.l.b16 %v89
  %v247 = vpack.c.b16 %v184, %v183
  %v248 = vpack.c.b16 %v186, %v185
  %v249 = vpack.c.b16 %v188, %v187
  %v250 = vpack.c.b16 %v190, %v189
  %v251 = vpack.c.b16 %v192, %v191
  %v252 = vpack.c.b16 %v194, %v193
  %v253 = vpack.c.b16 %v196, %v195
  %v254 = vpack.c.b16 %v198, %v197
  %v255 = vpack.c.b16 %v200, %v199
  %v256 = vpack.c.b16 %v202, %v201
  %v257 = vpack.c.b16 %v204, %v203
  %v258 = vpack.c.b16 %v206, %v205
  %v259 = vpack.c.b16 %v208, %v207
  %v260 = vpack.c.b16 %v210, %v209
  %v261 = vpack.c.b16 %v212, %v211
  %v262 = vpack.c.b16 %v214, %v213
  %v263 = vpack.c.b16 %v216, %v215
  %v264 = vpack.c.b16 %v218, %v217
  %v265 = vpack.c.b16 %v220, %v219
  %v266 = vpack.c.b16 %v222, %v221
  %v267 = vpack.c.b16 %v224, %v223
  %v268 = vpack.c.b16 %v226, %v225
  %v269 = vpack.c.b16 %v228, %v227
  %v270 = vpack.c.b16 %v230, %v229
  %v271 = vpack.c.b16 %v232, %v231
  %v272 = vpack.c.b16 %v234, %v233
  %v273 = vpack.c.b16 %v236, %v235
  %v274 = vpack.c.b16 %v238, %v237
  %v275 = vpack.c.b16 %v240, %v239
  %v276 = vpack.c.b16 %v242, %v241
  %v277 = vpack.c.b16 %v244, %v243
  %v278 = vpack.c.b16 %v246, %v245
  %311 = vmatprep.subr.bf16.mxu0 0
  %312 = vmatpush1.bf16.msra.mxu0 %v247
  %313 = vmatprep.subr.bf16.mxu0 0
  %314 = vmatpush1.bf16.msra.mxu0 %v248
  %315 = vmatprep.subr.bf16.mxu0 0
  %316 = vmatpush1.bf16.msra.mxu0 %v249
  %317 = vmatprep.subr.bf16.mxu0 0
  %318 = vmatpush1.bf16.msra.mxu0 %v250
  %319 = vmatprep.subr.bf16.mxu0 0
  %320 = vmatpush1.bf16.msra.mxu0 %v251
  %321 = vmatprep.subr.bf16.mxu0 0
  %322 = vmatpush1.bf16.msra.mxu0 %v252
  %323 = vmatprep.subr.bf16.mxu0 0
  %324 = vmatpush1.bf16.msra.mxu0 %v253
  %325 = vmatprep.subr.bf16.mxu0 0
  %326 = vmatpush1.bf16.msra.mxu0 %v254
  %327 = vmatprep.subr.bf16.mxu0 0
  %328 = vmatpush1.bf16.msra.mxu0 %v255
  %329 = vmatprep.subr.bf16.mxu0 0
  %330 = vmatpush1.bf16.msra.mxu0 %v256
  %331 = vmatprep.subr.bf16.mxu0 0
  %332 = vmatpush1.bf16.msra.mxu0 %v257
  %333 = vmatprep.subr.bf16.mxu0 0
  %334 = vmatpush1.bf16.msra.mxu0 %v258
  %335 = vmatprep.subr.bf16.mxu0 0
  %336 = vmatpush1.bf16.msra.mxu0 %v259
  %337 = vmatprep.subr.bf16.mxu0 0
  %338 = vmatpush1.bf16.msra.mxu0 %v260
  %339 = vmatprep.subr.bf16.mxu0 0
  %340 = vmatpush1.bf16.msra.mxu0 %v261
  %341 = vmatprep.subr.bf16.mxu0 0
  %342 = vmatpush1.bf16.msra.mxu0 %v262
  %343 = vmatprep.mubr.bf16.mxu0 %v112
  %344 = vmatmul.mubr.bf16.gmra.mrb[0].mxu0 %v105
  %v345 = vpop.f32.mrb[0].mxu0
  %v346 = vadd.f32 0.0, %v345
  %v347 = vpop.f32.mrb[0].mxu0
  %v348 = vpop.f32.mrb[0].mxu0
  %v349 = vpop.f32.mrb[0].mxu0
  %350 = vdwg.mxu0
  %351 = vmatprep.subr.bf16.mxu0 0
  %352 = vmatpush1.bf16.msra.mxu0 %v263
  %353 = vmatprep.subr.bf16.mxu0 0
  %354 = vmatpush1.bf16.msra.mxu0 %v264
  %355 = vmatprep.subr.bf16.mxu0 0
  %356 = vmatpush1.bf16.msra.mxu0 %v265
  %357 = vmatprep.subr.bf16.mxu0 0
  %358 = vmatpush1.bf16.msra.mxu0 %v266
  %359 = vmatprep.subr.bf16.mxu0 0
  %360 = vmatpush1.bf16.msra.mxu0 %v267
  %361 = vmatprep.subr.bf16.mxu0 0
  %362 = vmatpush1.bf16.msra.mxu0 %v268
  %363 = vmatprep.subr.bf16.mxu0 0
  %364 = vmatpush1.bf16.msra.mxu0 %v269
  %365 = vmatprep.subr.bf16.mxu0 0
  %366 = vmatpush1.bf16.msra.mxu0 %v270
  %367 = vmatprep.subr.bf16.mxu0 0
  %368 = vmatpush1.bf16.msra.mxu0 %v271
  %369 = vmatprep.subr.bf16.mxu0 0
  %370 = vmatpush1.bf16.msra.mxu0 %v272
  %371 = vmatprep.subr.bf16.mxu0 0
  %372 = vmatpush1.bf16.msra.mxu0 %v273
  %373 = vmatprep.subr.bf16.mxu0 0
  %374 = vmatpush1.bf16.msra.mxu0 %v274
  %375 = vmatprep.subr.bf16.mxu0 0
  %376 = vmatpush1.bf16.msra.mxu0 %v275
  %377 = vmatprep.subr.bf16.mxu0 0
  %378 = vmatpush1.bf16.msra.mxu0 %v276
  %379 = vmatprep.subr.bf16.mxu0 0
  %380 = vmatpush1.bf16.msra.mxu0 %v277
  %381 = vmatprep.subr.bf16.mxu0 0
  %382 = vmatpush1.bf16.msra.mxu0 %v278
  %383 = vmatprep.mubr.bf16.mxu0 %v114
  %384 = vmatmul.mubr.bf16.gmra.mrb[0].mxu0 %v113
  %v385 = vpop.f32.mrb[0].mxu0
  %v386 = vadd.f32 %v346, %v385
  %v387 = vpop.f32.mrb[0].mxu0
  %v388 = vpop.f32.mrb[0].mxu0
  %v389 = vpop.f32.mrb[0].mxu0
  %390 = vdwg.mxu0
  %v391 = vadd.f32 %v25, %v386
  %vm392 = vcmask 320512
  %393 = vst.msk [vmem:[#allocation2] sm:$0x3] %vm392, %v391
  // Predicated region
  $region22: #{forward.51} parent=0 // pred_check
    %p394 = pneg %p18
  $region23: #{forward.51} parent=0 // pred_check_branch
    %396 = sbr.rel (%p394) target = $region25
  $region24: #{forward.51} parent=0 // pred_region
    %v397 = vld [vmem:[#allocation2] sm:$0x3]
    %v398 = vld [vmem:[%s2] sm:$0x1]
    %v400 = vlaneseq
    %v401 = vshrl.u32 %v400, 7
    %v402 = vsub.s32 0, %v401
    %v403 = vrot.slane %v398, %v402
    %v405 = vmul.f32 %v397, %v403
    %v406 = vld [vmem:[%s3] sm:$0x1]
    %v408 = vlaneseq
    %v409 = vshrl.u32 %v408, 7
    %v410 = vsub.s32 0, %v409
    %v411 = vrot.slane %v406, %v410
    %v413 = vadd.f32 %v405, %v411
    %414 = vst.msk [vmem:[%s4] sm:$0x3] %vm392, %v413
  $region25: #{forward.51} parent=0 // pred_fallthru
    _
  // Predicated region
  $region26: #{forward.51} parent=0 // pred_check
    _
  $region27: #{forward.51} parent=0 // pred_check_branch
    %416 = sbr.rel (0) target = $region29
  $region28: #{forward.51} parent=0 // pred_region
    _
  $region29: #{forward.51} parent=0 // pred_fallthru
    _
  // Predicated region
  $region30: #{forward.51} parent=0 // pred_check
    _
  $region31: #{forward.51} parent=0 // pred_check_branch
    %418 = sbr.rel (0) target = $region33
  $region32: #{forward.51} parent=0 // pred_region
    _
  $region33: #{forward.51} parent=0 // pred_fallthru
    _

</llo_original>
